<compile_context>
chip_gen: v6e
topology: v6e:2x2x1
jax: 0.10.0
libtpu: 0.0.40
codegen_flags: <defaults>
</compile_context>

<pallas_src>
import functools

import jax
import jax.numpy as jnp
from jax.experimental import pallas as pl
from jax.experimental.pallas import tpu as pltpu


# -----------------------------------------------------------------------------
# Pallas kernels
# -----------------------------------------------------------------------------
def _conv_pool_relu_kernel(a_ref, w_ref, b_ref, o_ref, *, m):
    """Fused conv-as-matmul + 2x2 max-pool + bias + ReLU.

    a_ref : (4*m, K) bf16 -- phase-major im2col rows: rows [p*m, (p+1)*m) hold
                             pool phase p of every pooled output pixel.
    w_ref : (K, Cout)  bf16
    b_ref : (1, Cout)  f32
    o_ref : (m, Cout)  bf16 -- pooled + ReLU'd output rows (NHWC row order)
    """
    # One contiguous MXU stream for all 4 pool phases (perf review item #1).
    acc = jnp.dot(a_ref[...], w_ref[...], preferred_element_type=jnp.float32)
    # 4-way pool max via sublane-aligned static slices (m is a multiple of 8).
    p0 = acc[0 * m:1 * m]
    p1 = acc[1 * m:2 * m]
    p2 = acc[2 * m:3 * m]
    p3 = acc[3 * m:4 * m]
    pooled = jnp.maximum(jnp.maximum(p0, p1), jnp.maximum(p2, p3))
    # bias is constant across the 4 pool phases -> add once after the max.
    pooled = pooled + b_ref[...]
    o_ref[...] = jnp.maximum(pooled, 0.0).astype(o_ref.dtype)


def _mlp_head_kernel(h_ref, w1_ref, b1_ref, w2_ref, b2_ref, w3_ref, b3_ref,
                     o_ref):
    """Fused classifier: Linear+ReLU -> Linear+ReLU -> Linear (all in VMEM)."""
    h1 = jnp.dot(h_ref[...], w1_ref[...], preferred_element_type=jnp.float32)
    h1 = jnp.maximum(h1 + b1_ref[...], 0.0).astype(jnp.bfloat16)
    h2 = jnp.dot(h1, w2_ref[...], preferred_element_type=jnp.float32)
    h2 = jnp.maximum(h2 + b2_ref[...], 0.0).astype(jnp.bfloat16)
    o_ref[...] = (jnp.dot(h2, w3_ref[...], preferred_element_type=jnp.float32)
                  + b3_ref[...])


# -----------------------------------------------------------------------------
# Wrappers (single grid step per call; all blocks are tiny vs. VMEM)
# -----------------------------------------------------------------------------
def conv_pool_relu_pallas(a, w, b, *, cout):
    """a: (4*M, K) bf16 phase-major, w: (K, cout) bf16, b: (cout,) f32."""
    M4, K = a.shape
    M = M4 // 4
    return pl.pallas_call(
        functools.partial(_conv_pool_relu_kernel, m=M),
        out_shape=jax.ShapeDtypeStruct((M, cout), jnp.bfloat16),
        grid_spec=pltpu.PrefetchScalarGridSpec(
            num_scalar_prefetch=0,
            grid=(1,),
            in_specs=[
                pl.BlockSpec((M4, K), lambda i: (0, 0)),
                pl.BlockSpec((K, cout), lambda i: (0, 0)),
                pl.BlockSpec((1, cout), lambda i: (0, 0)),
            ],
            out_specs=pl.BlockSpec((M, cout), lambda i: (0, 0)),
        ),
        compiler_params=pltpu.CompilerParams(
            dimension_semantics=("arbitrary",)),
    )(a, w, b.reshape(1, cout))


def mlp_head_pallas(h, w1, b1, w2, b2, w3, b3):
    """h: (M, 1024) bf16 (M multiple of 16); returns (M, 133) f32."""
    M, K1 = h.shape
    N1 = w1.shape[1]
    N2 = w2.shape[1]
    N3 = w3.shape[1]
    return pl.pallas_call(
        _mlp_head_kernel,
        out_shape=jax.ShapeDtypeStruct((M, N3), jnp.float32),
        grid_spec=pltpu.PrefetchScalarGridSpec(
            num_scalar_prefetch=0,
            grid=(1,),
            in_specs=[
                pl.BlockSpec((M, K1), lambda i: (0, 0)),
                pl.BlockSpec((K1, N1), lambda i: (0, 0)),
                pl.BlockSpec((1, N1), lambda i: (0, 0)),
                pl.BlockSpec((N1, N2), lambda i: (0, 0)),
                pl.BlockSpec((1, N2), lambda i: (0, 0)),
                pl.BlockSpec((N2, N3), lambda i: (0, 0)),
                pl.BlockSpec((1, N3), lambda i: (0, 0)),
            ],
            out_specs=pl.BlockSpec((M, N3), lambda i: (0, 0)),
        ),
        compiler_params=pltpu.CompilerParams(
            dimension_semantics=("arbitrary",)),
    )(h, w1, b1.reshape(1, N1), w2, b2.reshape(1, N2), w3, b3.reshape(1, N3))


# -----------------------------------------------------------------------------
# Glue: phase-major im2col (data movement only; fuses into one XLA copy/layer)
# -----------------------------------------------------------------------------
def pool_phase_im2col(x, *, ksize=3, stride=1, pad=1):
    """x: (N, H, W, C) -> (4*N*Hq*Wq, ksize*ksize*C), phase-major rows.

    Row block p = 2*pi + pj holds, for every pooled output pixel (i, j), the
    conv patch whose conv-output coordinate is (2*i + pi, 2*j + pj); the
    in-kernel max over the 4 blocks implements MaxPool2d(2).  Assumes the conv
    output has even H and W (true for this network with 64x64 inputs).
    Contraction-dim order is (kh, kw, cin); real PyTorch weights
    (cout, cin, kh, kw) would need a permute before reshaping to this layout.
    """
    N, H, W, C = x.shape
    xp = jnp.pad(x, ((0, 0), (pad, pad), (pad, pad), (0, 0)))
    Ho = (H + 2 * pad - ksize) // stride + 1
    Wo = (W + 2 * pad - ksize) // stride + 1
    Hq, Wq = Ho // 2, Wo // 2
    s2 = 2 * stride
    phases = []
    for pi in range(2):
        for pj in range(2):
            taps = []
            for kh in range(ksize):
                for kw in range(ksize):
                    h0 = pi * stride + kh
                    w0 = pj * stride + kw
                    taps.append(xp[:, h0:h0 + s2 * (Hq - 1) + 1:s2,
                                   w0:w0 + s2 * (Wq - 1) + 1:s2, :])
            a = jnp.stack(taps, axis=-2).reshape(N * Hq * Wq, ksize * ksize * C)
            phases.append(a)
    return jnp.concatenate(phases, axis=0), (N, Hq, Wq)


# -----------------------------------------------------------------------------
# Parameters (deterministic synthetic init; matmul weights stored in bf16)
# -----------------------------------------------------------------------------
def init_params(key):
    conv_cfg = [(3, 32), (32, 64), (64, 128), (128, 256)]      # (Cin, Cout)
    fc_cfg = [(256 * 2 * 2, 1024), (1024, 512), (512, 133)]    # (in, out)
    params = {}
    keys = jax.random.split(key, len(conv_cfg) + len(fc_cfg))
    for idx, (cin, cout) in enumerate(conv_cfg):
        k_real = 9 * cin
        k_pad = ((k_real + 7) // 8) * 8        # 27 -> 32; rest already aligned
        kw_, kb_ = jax.random.split(keys[idx])
        w = (jax.random.normal(kw_, (k_real, cout), jnp.float32)
             / jnp.sqrt(k_real))
        w = jnp.pad(w, ((0, k_pad - k_real), (0, 0)))
        params[f"conv{idx+1}_w"] = w.astype(jnp.bfloat16)
        params[f"conv{idx+1}_b"] = (
            jax.random.normal(kb_, (cout,), jnp.float32) * 0.01)
    for idx, (fin, fout) in enumerate(fc_cfg):
        kw_, kb_ = jax.random.split(keys[len(conv_cfg) + idx])
        params[f"fc{idx+1}_w"] = (
            jax.random.normal(kw_, (fin, fout), jnp.float32)
            / jnp.sqrt(fin)).astype(jnp.bfloat16)
        params[f"fc{idx+1}_b"] = (
            jax.random.normal(kb_, (fout,), jnp.float32) * 0.01)
    return params


# -----------------------------------------------------------------------------
# Forward pass (matches Net.forward in eval mode)
# -----------------------------------------------------------------------------
def net_forward(x_nchw, params):
    x = jnp.transpose(x_nchw, (0, 2, 3, 1)).astype(jnp.bfloat16)  # NHWC bf16

    conv_specs = [
        ("conv1", 2, 32),
        ("conv2", 1, 64),
        ("conv3", 1, 128),
        ("conv4", 1, 256),
    ]
    for name, stride, cout in conv_specs:
        a, (N, Hq, Wq) = pool_phase_im2col(x, ksize=3, stride=stride, pad=1)
        w = params[f"{name}_w"]
        kpad = w.shape[0]
        if a.shape[-1] < kpad:   # zero-pad contraction dim (conv1: 27 -> 32)
            a = jnp.pad(a, ((0, 0), (0, kpad - a.shape[-1])))
        y = conv_pool_relu_pallas(a, w, params[f"{name}_b"], cout=cout)
        x = y.reshape(N, Hq, Wq, cout)        # free reshape, same layout

    # PyTorch x.view(N, -1) flattens in NCHW (C, H, W) order.
    N = x.shape[0]
    h = jnp.transpose(x, (0, 3, 1, 2)).reshape(N, -1)      # (N, 1024) bf16

    # Pad the batch rows once (2 -> 16, the bf16 packed sublane tile) so the
    # fused classifier kernel runs with a clean packed layout.
    Mp = max(16, ((N + 15) // 16) * 16)
    h = jnp.pad(h, ((0, Mp - N), (0, 0)))

    # TODO(synk): nn.Dropout(0.5) is identity in eval mode; training-mode
    # dropout (stochastic masking) is not implemented here.
    out = mlp_head_pallas(h,
                          params["fc1_w"], params["fc1_b"],
                          params["fc2_w"], params["fc2_b"],
                          params["fc3_w"], params["fc3_b"])
    return out[:N]  # (N, 133) f32


if __name__ == "__main__":
    key = jax.random.PRNGKey(0)
    k_param, k_x = jax.random.split(key)
    params = init_params(k_param)
    # Classifier expects 256*2*2 features -> input spatial size must be 64.
    x = jax.random.normal(k_x, (2, 3, 64, 64), jnp.float32)  # NCHW like PyTorch

    out = jax.jit(net_forward)(x, params)
    out = jax.block_until_ready(out)
    assert out.shape == (2, 133), out.shape
    assert out.dtype == jnp.float32
    print("KERNEL_OK")
</pallas_src>

<mosaic_0001>
module attributes {stable_mosaic.version = 11 : i64} {
  func.func @_conv_pool_relu_kernel(%arg0: i32, %arg1: memref<2048x32xbf16, #tpu.memory_space<vmem>>, %arg2: memref<32x32xbf16, #tpu.memory_space<vmem>>, %arg3: memref<1x32xf32, #tpu.memory_space<vmem>>, %arg4: memref<512x32xbf16, #tpu.memory_space<vmem>>) attributes {dimension_semantics = [#tpu.dimension_semantics<arbitrary>], iteration_bounds = array<i64: 1>, scalar_prefetch = 0 : i64, scratch_operands = 0 : i64, tpu.core_type = #tpu.core_type<tc>, window_params = [{pipeline_mode = #tpu.pipeline_mode<synchronous>, transform_indices = @transform_0, window_bounds = array<i64: 2048, 32>}, {pipeline_mode = #tpu.pipeline_mode<synchronous>, transform_indices = @transform_1, window_bounds = array<i64: 32, 32>}, {pipeline_mode = #tpu.pipeline_mode<synchronous>, transform_indices = @transform_2, window_bounds = array<i64: 1, 32>}, {pipeline_mode = #tpu.pipeline_mode<synchronous>, transform_indices = @transform_3, window_bounds = array<i64: 512, 32>}]} {
    %c0 = arith.constant 0 : index
    %c0_0 = arith.constant 0 : index
    %0 = vector.load %arg1[%c0, %c0_0] : memref<2048x32xbf16, #tpu.memory_space<vmem>>, vector<2048x32xbf16>
    %c0_1 = arith.constant 0 : index
    %c0_2 = arith.constant 0 : index
    %1 = vector.load %arg2[%c0_1, %c0_2] : memref<32x32xbf16, #tpu.memory_space<vmem>>, vector<32x32xbf16>
    %cst = arith.constant dense<0.000000e+00> : vector<2048x32xf32>
    %2 = tpu.matmul %0, %1, %cst {dimension_numbers = #tpu.dot_dimension_numbers<[1], [0], [0], [1], [0, 0, 1, 1], [], []>} : vector<2048x32xbf16>, vector<32x32xbf16>, vector<2048x32xf32> -> vector<2048x32xf32>
    %3 = vector.extract_strided_slice %2 {offsets = [0, 0], sizes = [512, 32], strides = [1, 1]} : vector<2048x32xf32> to vector<512x32xf32>
    %4 = vector.extract_strided_slice %2 {offsets = [512, 0], sizes = [512, 32], strides = [1, 1]} : vector<2048x32xf32> to vector<512x32xf32>
    %5 = vector.extract_strided_slice %2 {offsets = [1024, 0], sizes = [512, 32], strides = [1, 1]} : vector<2048x32xf32> to vector<512x32xf32>
    %6 = vector.extract_strided_slice %2 {offsets = [1536, 0], sizes = [512, 32], strides = [1, 1]} : vector<2048x32xf32> to vector<512x32xf32>
    %7 = arith.maximumf %3, %4 : vector<512x32xf32>
    %8 = arith.maximumf %5, %6 : vector<512x32xf32>
    %9 = arith.maximumf %7, %8 : vector<512x32xf32>
    %c0_3 = arith.constant 0 : index
    %c0_4 = arith.constant 0 : index
    %10 = vector.load %arg3[%c0_3, %c0_4] : memref<1x32xf32, #tpu.memory_space<vmem>>, vector<1x32xf32>
    %11 = vector.broadcast %10 : vector<1x32xf32> to vector<512x32xf32>
    %12 = arith.addf %9, %11 : vector<512x32xf32>
    %cst_5 = arith.constant 0.000000e+00 : f32
    %13 = vector.broadcast %cst_5 : f32 to vector<512x32xf32>
    %14 = arith.maximumf %12, %13 : vector<512x32xf32>
    %15 = arith.truncf %14 : vector<512x32xf32> to vector<512x32xbf16>
    %c0_6 = arith.constant 0 : index
    %c0_7 = arith.constant 0 : index
    %16 = vector.load %arg4[%c0_6, %c0_7] : memref<512x32xbf16, #tpu.memory_space<vmem>>, vector<512x32xbf16>
    tpu.vector_store %arg4[%c0_6, %c0_7], %15 {strides = array<i32>} : memref<512x32xbf16, #tpu.memory_space<vmem>>, vector<512x32xbf16>,
    return
  }
  func.func @transform_0(%arg0: i32) -> (i32, i32) {
    %c0_i32 = arith.constant 0 : i32
    %c0_i32_0 = arith.constant 0 : i32
    %c0_i32_1 = arith.constant 0 : i32
    return %c0_i32, %c0_i32_0 : i32, i32
  }
  func.func @transform_1(%arg0: i32) -> (i32, i32) {
    %c0_i32 = arith.constant 0 : i32
    %c0_i32_0 = arith.constant 0 : i32
    %c0_i32_1 = arith.constant 0 : i32
    return %c0_i32, %c0_i32_0 : i32, i32
  }
  func.func @transform_2(%arg0: i32) -> (i32, i32) {
    %c0_i32 = arith.constant 0 : i32
    %c0_i32_0 = arith.constant 0 : i32
    %c0_i32_1 = arith.constant 0 : i32
    return %c0_i32, %c0_i32_0 : i32, i32
  }
  func.func @transform_3(%arg0: i32) -> (i32, i32) {
    %c0_i32 = arith.constant 0 : i32
    %c0_i32_0 = arith.constant 0 : i32
    %c0_i32_1 = arith.constant 0 : i32
    return %c0_i32, %c0_i32_0 : i32, i32
  }
}

module attributes {stable_mosaic.version = 11 : i64} {
  func.func @_conv_pool_relu_kernel(%arg0: i32, %arg1: memref<512x288xbf16, #tpu.memory_space<vmem>>, %arg2: memref<288x64xbf16, #tpu.memory_space<vmem>>, %arg3: memref<1x64xf32, #tpu.memory_space<vmem>>, %arg4: memref<128x64xbf16, #tpu.memory_space<vmem>>) attributes {dimension_semantics = [#tpu.dimension_semantics<arbitrary>], iteration_bounds = array<i64: 1>, scalar_prefetch = 0 : i64, scratch_operands = 0 : i64, tpu.core_type = #tpu.core_type<tc>, window_params = [{pipeline_mode = #tpu.pipeline_mode<synchronous>, transform_indices = @transform_0, window_bounds = array<i64: 512, 288>}, {pipeline_mode = #tpu.pipeline_mode<synchronous>, transform_indices = @transform_1, window_bounds = array<i64: 288, 64>}, {pipeline_mode = #tpu.pipeline_mode<synchronous>, transform_indices = @transform_2, window_bounds = array<i64: 1, 64>}, {pipeline_mode = #tpu.pipeline_mode<synchronous>, transform_indices = @transform_3, window_bounds = array<i64: 128, 64>}]} {
    %c0 = arith.constant 0 : index
    %c0_0 = arith.constant 0 : index
    %0 = vector.load %arg1[%c0, %c0_0] : memref<512x288xbf16, #tpu.memory_space<vmem>>, vector<512x288xbf16>
    %c0_1 = arith.constant 0 : index
    %c0_2 = arith.constant 0 : index
    %1 = vector.load %arg2[%c0_1, %c0_2] : memref<288x64xbf16, #tpu.memory_space<vmem>>, vector<288x64xbf16>
    %cst = arith.constant dense<0.000000e+00> : vector<512x64xf32>
    %2 = tpu.matmul %0, %1, %cst {dimension_numbers = #tpu.dot_dimension_numbers<[1], [0], [0], [1], [0, 0, 1, 1], [], []>} : vector<512x288xbf16>, vector<288x64xbf16>, vector<512x64xf32> -> vector<512x64xf32>
    %3 = vector.extract_strided_slice %2 {offsets = [0, 0], sizes = [128, 64], strides = [1, 1]} : vector<512x64xf32> to vector<128x64xf32>
    %4 = vector.extract_strided_slice %2 {offsets = [128, 0], sizes = [128, 64], strides = [1, 1]} : vector<512x64xf32> to vector<128x64xf32>
    %5 = vector.extract_strided_slice %2 {offsets = [256, 0], sizes = [128, 64], strides = [1, 1]} : vector<512x64xf32> to vector<128x64xf32>
    %6 = vector.extract_strided_slice %2 {offsets = [384, 0], sizes = [128, 64], strides = [1, 1]} : vector<512x64xf32> to vector<128x64xf32>
    %7 = arith.maximumf %3, %4 : vector<128x64xf32>
    %8 = arith.maximumf %5, %6 : vector<128x64xf32>
    %9 = arith.maximumf %7, %8 : vector<128x64xf32>
    %c0_3 = arith.constant 0 : index
    %c0_4 = arith.constant 0 : index
    %10 = vector.load %arg3[%c0_3, %c0_4] : memref<1x64xf32, #tpu.memory_space<vmem>>, vector<1x64xf32>
    %11 = vector.broadcast %10 : vector<1x64xf32> to vector<128x64xf32>
    %12 = arith.addf %9, %11 : vector<128x64xf32>
    %cst_5 = arith.constant 0.000000e+00 : f32
    %13 = vector.broadcast %cst_5 : f32 to vector<128x64xf32>
    %14 = arith.maximumf %12, %13 : vector<128x64xf32>
    %15 = arith.truncf %14 : vector<128x64xf32> to vector<128x64xbf16>
    %c0_6 = arith.constant 0 : index
    %c0_7 = arith.constant 0 : index
    %16 = vector.load %arg4[%c0_6, %c0_7] : memref<128x64xbf16, #tpu.memory_space<vmem>>, vector<128x64xbf16>
    tpu.vector_store %arg4[%c0_6, %c0_7], %15 {strides = array<i32>} : memref<128x64xbf16, #tpu.memory_space<vmem>>, vector<128x64xbf16>,
    return
  }
  func.func @transform_0(%arg0: i32) -> (i32, i32) {
    %c0_i32 = arith.constant 0 : i32
    %c0_i32_0 = arith.constant 0 : i32
    %c0_i32_1 = arith.constant 0 : i32
    return %c0_i32, %c0_i32_0 : i32, i32
  }
  func.func @transform_1(%arg0: i32) -> (i32, i32) {
    %c0_i32 = arith.constant 0 : i32
    %c0_i32_0 = arith.constant 0 : i32
    %c0_i32_1 = arith.constant 0 : i32
    return %c0_i32, %c0_i32_0 : i32, i32
  }
  func.func @transform_2(%arg0: i32) -> (i32, i32) {
    %c0_i32 = arith.constant 0 : i32
    %c0_i32_0 = arith.constant 0 : i32
    %c0_i32_1 = arith.constant 0 : i32
    return %c0_i32, %c0_i32_0 : i32, i32
  }
  func.func @transform_3(%arg0: i32) -> (i32, i32) {
    %c0_i32 = arith.constant 0 : i32
    %c0_i32_0 = arith.constant 0 : i32
    %c0_i32_1 = arith.constant 0 : i32
    return %c0_i32, %c0_i32_0 : i32, i32
  }
}

module attributes {stable_mosaic.version = 11 : i64} {
  func.func @_conv_pool_relu_kernel(%arg0: i32, %arg1: memref<128x576xbf16, #tpu.memory_space<vmem>>, %arg2: memref<576x128xbf16, #tpu.memory_space<vmem>>, %arg3: memref<1x128xf32, #tpu.memory_space<vmem>>, %arg4: memref<32x128xbf16, #tpu.memory_space<vmem>>) attributes {dimension_semantics = [#tpu.dimension_semantics<arbitrary>], iteration_bounds = array<i64: 1>, scalar_prefetch = 0 : i64, scratch_operands = 0 : i64, tpu.core_type = #tpu.core_type<tc>, window_params = [{pipeline_mode = #tpu.pipeline_mode<synchronous>, transform_indices = @transform_0, window_bounds = array<i64: 128, 576>}, {pipeline_mode = #tpu.pipeline_mode<synchronous>, transform_indices = @transform_1, window_bounds = array<i64: 576, 128>}, {pipeline_mode = #tpu.pipeline_mode<synchronous>, transform_indices = @transform_2, window_bounds = array<i64: 1, 128>}, {pipeline_mode = #tpu.pipeline_mode<synchronous>, transform_indices = @transform_3, window_bounds = array<i64: 32, 128>}]} {
    %c0 = arith.constant 0 : index
    %c0_0 = arith.constant 0 : index
    %0 = vector.load %arg1[%c0, %c0_0] : memref<128x576xbf16, #tpu.memory_space<vmem>>, vector<128x576xbf16>
    %c0_1 = arith.constant 0 : index
    %c0_2 = arith.constant 0 : index
    %1 = vector.load %arg2[%c0_1, %c0_2] : memref<576x128xbf16, #tpu.memory_space<vmem>>, vector<576x128xbf16>
    %cst = arith.constant dense<0.000000e+00> : vector<128x128xf32>
    %2 = tpu.matmul %0, %1, %cst {dimension_numbers = #tpu.dot_dimension_numbers<[1], [0], [0], [1], [0, 0, 1, 1], [], []>} : vector<128x576xbf16>, vector<576x128xbf16>, vector<128x128xf32> -> vector<128x128xf32>
    %3 = vector.extract_strided_slice %2 {offsets = [0, 0], sizes = [32, 128], strides = [1, 1]} : vector<128x128xf32> to vector<32x128xf32>
    %4 = vector.extract_strided_slice %2 {offsets = [32, 0], sizes = [32, 128], strides = [1, 1]} : vector<128x128xf32> to vector<32x128xf32>
    %5 = vector.extract_strided_slice %2 {offsets = [64, 0], sizes = [32, 128], strides = [1, 1]} : vector<128x128xf32> to vector<32x128xf32>
    %6 = vector.extract_strided_slice %2 {offsets = [96, 0], sizes = [32, 128], strides = [1, 1]} : vector<128x128xf32> to vector<32x128xf32>
    %7 = arith.maximumf %3, %4 : vector<32x128xf32>
    %8 = arith.maximumf %5, %6 : vector<32x128xf32>
    %9 = arith.maximumf %7, %8 : vector<32x128xf32>
    %c0_3 = arith.constant 0 : index
    %c0_4 = arith.constant 0 : index
    %10 = vector.load %arg3[%c0_3, %c0_4] : memref<1x128xf32, #tpu.memory_space<vmem>>, vector<1x128xf32>
    %11 = vector.broadcast %10 : vector<1x128xf32> to vector<32x128xf32>
    %12 = arith.addf %9, %11 : vector<32x128xf32>
    %cst_5 = arith.constant 0.000000e+00 : f32
    %13 = vector.broadcast %cst_5 : f32 to vector<32x128xf32>
    %14 = arith.maximumf %12, %13 : vector<32x128xf32>
    %15 = arith.truncf %14 : vector<32x128xf32> to vector<32x128xbf16>
    %c0_6 = arith.constant 0 : index
    %c0_7 = arith.constant 0 : index
    %16 = vector.load %arg4[%c0_6, %c0_7] : memref<32x128xbf16, #tpu.memory_space<vmem>>, vector<32x128xbf16>
    tpu.vector_store %arg4[%c0_6, %c0_7], %15 {strides = array<i32>} : memref<32x128xbf16, #tpu.memory_space<vmem>>, vector<32x128xbf16>,
    return
  }
  func.func @transform_0(%arg0: i32) -> (i32, i32) {
    %c0_i32 = arith.constant 0 : i32
    %c0_i32_0 = arith.constant 0 : i32
    %c0_i32_1 = arith.constant 0 : i32
    return %c0_i32, %c0_i32_0 : i32, i32
  }
  func.func @transform_1(%arg0: i32) -> (i32, i32) {
    %c0_i32 = arith.constant 0 : i32
    %c0_i32_0 = arith.constant 0 : i32
    %c0_i32_1 = arith.constant 0 : i32
    return %c0_i32, %c0_i32_0 : i32, i32
  }
  func.func @transform_2(%arg0: i32) -> (i32, i32) {
    %c0_i32 = arith.constant 0 : i32
    %c0_i32_0 = arith.constant 0 : i32
    %c0_i32_1 = arith.constant 0 : i32
    return %c0_i32, %c0_i32_0 : i32, i32
  }
  func.func @transform_3(%arg0: i32) -> (i32, i32) {
    %c0_i32 = arith.constant 0 : i32
    %c0_i32_0 = arith.constant 0 : i32
    %c0_i32_1 = arith.constant 0 : i32
    return %c0_i32, %c0_i32_0 : i32, i32
  }
}

module attributes {stable_mosaic.version = 11 : i64} {
  func.func @_conv_pool_relu_kernel(%arg0: i32, %arg1: memref<32x1152xbf16, #tpu.memory_space<vmem>>, %arg2: memref<1152x256xbf16, #tpu.memory_space<vmem>>, %arg3: memref<1x256xf32, #tpu.memory_space<vmem>>, %arg4: memref<8x256xbf16, #tpu.memory_space<vmem>>) attributes {dimension_semantics = [#tpu.dimension_semantics<arbitrary>], iteration_bounds = array<i64: 1>, scalar_prefetch = 0 : i64, scratch_operands = 0 : i64, tpu.core_type = #tpu.core_type<tc>, window_params = [{pipeline_mode = #tpu.pipeline_mode<synchronous>, transform_indices = @transform_0, window_bounds = array<i64: 32, 1152>}, {pipeline_mode = #tpu.pipeline_mode<synchronous>, transform_indices = @transform_1, window_bounds = array<i64: 1152, 256>}, {pipeline_mode = #tpu.pipeline_mode<synchronous>, transform_indices = @transform_2, window_bounds = array<i64: 1, 256>}, {pipeline_mode = #tpu.pipeline_mode<synchronous>, transform_indices = @transform_3, window_bounds = array<i64: 8, 256>}]} {
    %c0 = arith.constant 0 : index
    %c0_0 = arith.constant 0 : index
    %0 = vector.load %arg1[%c0, %c0_0] : memref<32x1152xbf16, #tpu.memory_space<vmem>>, vector<32x1152xbf16>
    %c0_1 = arith.constant 0 : index
    %c0_2 = arith.constant 0 : index
    %1 = vector.load %arg2[%c0_1, %c0_2] : memref<1152x256xbf16, #tpu.memory_space<vmem>>, vector<1152x256xbf16>
    %cst = arith.constant dense<0.000000e+00> : vector<32x256xf32>
    %2 = tpu.matmul %0, %1, %cst {dimension_numbers = #tpu.dot_dimension_numbers<[1], [0], [0], [1], [0, 0, 1, 1], [], []>} : vector<32x1152xbf16>, vector<1152x256xbf16>, vector<32x256xf32> -> vector<32x256xf32>
    %3 = vector.extract_strided_slice %2 {offsets = [0, 0], sizes = [8, 256], strides = [1, 1]} : vector<32x256xf32> to vector<8x256xf32>
    %4 = vector.extract_strided_slice %2 {offsets = [8, 0], sizes = [8, 256], strides = [1, 1]} : vector<32x256xf32> to vector<8x256xf32>
    %5 = vector.extract_strided_slice %2 {offsets = [16, 0], sizes = [8, 256], strides = [1, 1]} : vector<32x256xf32> to vector<8x256xf32>
    %6 = vector.extract_strided_slice %2 {offsets = [24, 0], sizes = [8, 256], strides = [1, 1]} : vector<32x256xf32> to vector<8x256xf32>
    %7 = arith.maximumf %3, %4 : vector<8x256xf32>
    %8 = arith.maximumf %5, %6 : vector<8x256xf32>
    %9 = arith.maximumf %7, %8 : vector<8x256xf32>
    %c0_3 = arith.constant 0 : index
    %c0_4 = arith.constant 0 : index
    %10 = vector.load %arg3[%c0_3, %c0_4] : memref<1x256xf32, #tpu.memory_space<vmem>>, vector<1x256xf32>
    %11 = vector.broadcast %10 : vector<1x256xf32> to vector<8x256xf32>
    %12 = arith.addf %9, %11 : vector<8x256xf32>
    %cst_5 = arith.constant 0.000000e+00 : f32
    %13 = vector.broadcast %cst_5 : f32 to vector<8x256xf32>
    %14 = arith.maximumf %12, %13 : vector<8x256xf32>
    %15 = arith.truncf %14 : vector<8x256xf32> to vector<8x256xbf16>
    %c0_6 = arith.constant 0 : index
    %c0_7 = arith.constant 0 : index
    %16 = vector.load %arg4[%c0_6, %c0_7] : memref<8x256xbf16, #tpu.memory_space<vmem>>, vector<8x256xbf16>
    tpu.vector_store %arg4[%c0_6, %c0_7], %15 {strides = array<i32>} : memref<8x256xbf16, #tpu.memory_space<vmem>>, vector<8x256xbf16>,
    return
  }
  func.func @transform_0(%arg0: i32) -> (i32, i32) {
    %c0_i32 = arith.constant 0 : i32
    %c0_i32_0 = arith.constant 0 : i32
    %c0_i32_1 = arith.constant 0 : i32
    return %c0_i32, %c0_i32_0 : i32, i32
  }
  func.func @transform_1(%arg0: i32) -> (i32, i32) {
    %c0_i32 = arith.constant 0 : i32
    %c0_i32_0 = arith.constant 0 : i32
    %c0_i32_1 = arith.constant 0 : i32
    return %c0_i32, %c0_i32_0 : i32, i32
  }
  func.func @transform_2(%arg0: i32) -> (i32, i32) {
    %c0_i32 = arith.constant 0 : i32
    %c0_i32_0 = arith.constant 0 : i32
    %c0_i32_1 = arith.constant 0 : i32
    return %c0_i32, %c0_i32_0 : i32, i32
  }
  func.func @transform_3(%arg0: i32) -> (i32, i32) {
    %c0_i32 = arith.constant 0 : i32
    %c0_i32_0 = arith.constant 0 : i32
    %c0_i32_1 = arith.constant 0 : i32
    return %c0_i32, %c0_i32_0 : i32, i32
  }
}

module attributes {stable_mosaic.version = 11 : i64} {
  func.func @_mlp_head_kernel(%arg0: i32, %arg1: memref<16x1024xbf16, #tpu.memory_space<vmem>>, %arg2: memref<1024x1024xbf16, #tpu.memory_space<vmem>>, %arg3: memref<1x1024xf32, #tpu.memory_space<vmem>>, %arg4: memref<1024x512xbf16, #tpu.memory_space<vmem>>, %arg5: memref<1x512xf32, #tpu.memory_space<vmem>>, %arg6: memref<512x133xbf16, #tpu.memory_space<vmem>>, %arg7: memref<1x133xf32, #tpu.memory_space<vmem>>, %arg8: memref<16x133xf32, #tpu.memory_space<vmem>>) attributes {dimension_semantics = [#tpu.dimension_semantics<arbitrary>], iteration_bounds = array<i64: 1>, scalar_prefetch = 0 : i64, scratch_operands = 0 : i64, tpu.core_type = #tpu.core_type<tc>, window_params = [{pipeline_mode = #tpu.pipeline_mode<synchronous>, transform_indices = @transform_0, window_bounds = array<i64: 16, 1024>}, {pipeline_mode = #tpu.pipeline_mode<synchronous>, transform_indices = @transform_1, window_bounds = array<i64: 1024, 1024>}, {pipeline_mode = #tpu.pipeline_mode<synchronous>, transform_indices = @transform_2, window_bounds = array<i64: 1, 1024>}, {pipeline_mode = #tpu.pipeline_mode<synchronous>, transform_indices = @transform_3, window_bounds = array<i64: 1024, 512>}, {pipeline_mode = #tpu.pipeline_mode<synchronous>, transform_indices = @transform_4, window_bounds = array<i64: 1, 512>}, {pipeline_mode = #tpu.pipeline_mode<synchronous>, transform_indices = @transform_5, window_bounds = array<i64: 512, 133>}, {pipeline_mode = #tpu.pipeline_mode<synchronous>, transform_indices = @transform_6, window_bounds = array<i64: 1, 133>}, {pipeline_mode = #tpu.pipeline_mode<synchronous>, transform_indices = @transform_7, window_bounds = array<i64: 16, 133>}]} {
    %c0 = arith.constant 0 : index
    %c0_0 = arith.constant 0 : index
    %0 = vector.load %arg1[%c0, %c0_0] : memref<16x1024xbf16, #tpu.memory_space<vmem>>, vector<16x1024xbf16>
    %c0_1 = arith.constant 0 : index
    %c0_2 = arith.constant 0 : index
    %1 = vector.load %arg2[%c0_1, %c0_2] : memref<1024x1024xbf16, #tpu.memory_space<vmem>>, vector<1024x1024xbf16>
    %cst = arith.constant dense<0.000000e+00> : vector<16x1024xf32>
    %2 = tpu.matmul %0, %1, %cst {dimension_numbers = #tpu.dot_dimension_numbers<[1], [0], [0], [1], [0, 0, 1, 1], [], []>} : vector<16x1024xbf16>, vector<1024x1024xbf16>, vector<16x1024xf32> -> vector<16x1024xf32>
    %c0_3 = arith.constant 0 : index
    %c0_4 = arith.constant 0 : index
    %3 = vector.load %arg3[%c0_3, %c0_4] : memref<1x1024xf32, #tpu.memory_space<vmem>>, vector<1x1024xf32>
    %4 = vector.broadcast %3 : vector<1x1024xf32> to vector<16x1024xf32>
    %5 = arith.addf %2, %4 : vector<16x1024xf32>
    %cst_5 = arith.constant 0.000000e+00 : f32
    %6 = vector.broadcast %cst_5 : f32 to vector<16x1024xf32>
    %7 = arith.maximumf %5, %6 : vector<16x1024xf32>
    %8 = arith.truncf %7 : vector<16x1024xf32> to vector<16x1024xbf16>
    %c0_6 = arith.constant 0 : index
    %c0_7 = arith.constant 0 : index
    %9 = vector.load %arg4[%c0_6, %c0_7] : memref<1024x512xbf16, #tpu.memory_space<vmem>>, vector<1024x512xbf16>
    %cst_8 = arith.constant dense<0.000000e+00> : vector<16x512xf32>
    %10 = tpu.matmul %8, %9, %cst_8 {dimension_numbers = #tpu.dot_dimension_numbers<[1], [0], [0], [1], [0, 0, 1, 1], [], []>} : vector<16x1024xbf16>, vector<1024x512xbf16>, vector<16x512xf32> -> vector<16x512xf32>
    %c0_9 = arith.constant 0 : index
    %c0_10 = arith.constant 0 : index
    %11 = vector.load %arg5[%c0_9, %c0_10] : memref<1x512xf32, #tpu.memory_space<vmem>>, vector<1x512xf32>
    %12 = vector.broadcast %11 : vector<1x512xf32> to vector<16x512xf32>
    %13 = arith.addf %10, %12 : vector<16x512xf32>
    %cst_11 = arith.constant 0.000000e+00 : f32
    %14 = vector.broadcast %cst_11 : f32 to vector<16x512xf32>
    %15 = arith.maximumf %13, %14 : vector<16x512xf32>
    %16 = arith.truncf %15 : vector<16x512xf32> to vector<16x512xbf16>
    %c0_12 = arith.constant 0 : index
    %c0_13 = arith.constant 0 : index
    %17 = vector.load %arg6[%c0_12, %c0_13] : memref<512x133xbf16, #tpu.memory_space<vmem>>, vector<512x133xbf16>
    %cst_14 = arith.constant dense<0.000000e+00> : vector<16x133xf32>
    %18 = tpu.matmul %16, %17, %cst_14 {dimension_numbers = #tpu.dot_dimension_numbers<[1], [0], [0], [1], [0, 0, 1, 1], [], []>} : vector<16x512xbf16>, vector<512x133xbf16>, vector<16x133xf32> -> vector<16x133xf32>
    %c0_15 = arith.constant 0 : index
    %c0_16 = arith.constant 0 : index
    %19 = vector.load %arg7[%c0_15, %c0_16] : memref<1x133xf32, #tpu.memory_space<vmem>>, vector<1x133xf32>
    %20 = vector.broadcast %19 : vector<1x133xf32> to vector<16x133xf32>
    %21 = arith.addf %18, %20 : vector<16x133xf32>
    %c0_17 = arith.constant 0 : index
    %c0_18 = arith.constant 0 : index
    %22 = vector.load %arg8[%c0_17, %c0_18] : memref<16x133xf32, #tpu.memory_space<vmem>>, vector<16x133xf32>
    tpu.vector_store %arg8[%c0_17, %c0_18], %21 {strides = array<i32>} : memref<16x133xf32, #tpu.memory_space<vmem>>, vector<16x133xf32>,
    return
  }
  func.func @transform_0(%arg0: i32) -> (i32, i32) {
    %c0_i32 = arith.constant 0 : i32
    %c0_i32_0 = arith.constant 0 : i32
    %c0_i32_1 = arith.constant 0 : i32
    return %c0_i32, %c0_i32_0 : i32, i32
  }
  func.func @transform_1(%arg0: i32) -> (i32, i32) {
    %c0_i32 = arith.constant 0 : i32
    %c0_i32_0 = arith.constant 0 : i32
    %c0_i32_1 = arith.constant 0 : i32
    return %c0_i32, %c0_i32_0 : i32, i32
  }
  func.func @transform_2(%arg0: i32) -> (i32, i32) {
    %c0_i32 = arith.constant 0 : i32
    %c0_i32_0 = arith.constant 0 : i32
    %c0_i32_1 = arith.constant 0 : i32
    return %c0_i32, %c0_i32_0 : i32, i32
  }
  func.func @transform_3(%arg0: i32) -> (i32, i32) {
    %c0_i32 = arith.constant 0 : i32
    %c0_i32_0 = arith.constant 0 : i32
    %c0_i32_1 = arith.constant 0 : i32
    return %c0_i32, %c0_i32_0 : i32, i32
  }
  func.func @transform_4(%arg0: i32) -> (i32, i32) {
    %c0_i32 = arith.constant 0 : i32
    %c0_i32_0 = arith.constant 0 : i32
    %c0_i32_1 = arith.constant 0 : i32
    return %c0_i32, %c0_i32_0 : i32, i32
  }
  func.func @transform_5(%arg0: i32) -> (i32, i32) {
    %c0_i32 = arith.constant 0 : i32
    %c0_i32_0 = arith.constant 0 : i32
    %c0_i32_1 = arith.constant 0 : i32
    return %c0_i32, %c0_i32_0 : i32, i32
  }
  func.func @transform_6(%arg0: i32) -> (i32, i32) {
    %c0_i32 = arith.constant 0 : i32
    %c0_i32_0 = arith.constant 0 : i32
    %c0_i32_1 = arith.constant 0 : i32
    return %c0_i32, %c0_i32_0 : i32, i32
  }
  func.func @transform_7(%arg0: i32) -> (i32, i32) {
    %c0_i32 = arith.constant 0 : i32
    %c0_i32_0 = arith.constant 0 : i32
    %c0_i32_1 = arith.constant 0 : i32
    return %c0_i32, %c0_i32_0 : i32, i32
  }
}

</mosaic_0001>

<llo_original>
// kernel: net_forward.5
$region0: #{net_forward.5}
  #allocation0 [shape = 'u32[]', space=smem, size = 0x4, offset = 0x4, fixed_abs, tag = 'smem constant byte address 0x4 - core index']
  #allocation1 [shape = 'u32[144,128]{1,0:T(1,128)}', space=vmem, size = 0x12000, scoped, tag = 'internal scratch']
  %s0 = inlined_call_operand.vmem [shape: bf16[2048,32], index: 0, kind: input, shape index: {}]
  %s1 = inlined_call_operand.vmem [shape: bf16[32,32], index: 1, kind: input, shape index: {}]
  %s2 = inlined_call_operand.vmem [shape: f32[1,32], index: 2, kind: input, shape index: {}]
  %s3 = inlined_call_operand.vmem [shape: bf16[512,32], index: 3, kind: output, shape index: {}]
  %s4 = sld [smem:[#allocation0]]
  $region22: #{net_forward.5} parent=0
    _
  %s6 = ssub.s32 1, %s4
  %s7 = scalar_select 0, %s6, %s4
  // Predicated region
  $region2: #{net_forward.5} parent=0 // pred_check
    _
  $region3: #{net_forward.5} parent=0 // pred_check_branch
    %9 = sbr.rel (0) target = $region5
  $region4: #{net_forward.5} parent=0 // pred_region
    _
  $region5: #{net_forward.5} parent=0 // pred_fallthru
    _
  // Predicated region
  $region6: #{net_forward.5} parent=0 // pred_check
    _
  $region7: #{net_forward.5} parent=0 // pred_check_branch
    %11 = sbr.rel (0) target = $region9
  $region8: #{net_forward.5} parent=0 // pred_region
    _
  $region9: #{net_forward.5} parent=0 // pred_fallthru
    _
  // Predicated region
  $region10: #{net_forward.5} parent=0 // pred_check
    _
  $region11: #{net_forward.5} parent=0 // pred_check_branch
    %13 = sbr.rel (0) target = $region13
  $region12: #{net_forward.5} parent=0 // pred_region
    _
  $region13: #{net_forward.5} parent=0 // pred_fallthru
    _
  %v15 = vld [vmem:[%s0] sm:$0xf]
  %v16 = vld [vmem:[%s0 + $0x4] sm:$0xf]
  %v17 = vld [vmem:[%s0 + $0x8] sm:$0xf]
  %v18 = vld [vmem:[%s0 + $0xc] sm:$0xf]
  %v19 = vld [vmem:[%s0 + $0x10] sm:$0xf]
  %v20 = vld [vmem:[%s0 + $0x14] sm:$0xf]
  %v21 = vld [vmem:[%s0 + $0x18] sm:$0xf]
  %v22 = vld [vmem:[%s0 + $0x1c] sm:$0xf]
  %v23 = vld [vmem:[%s0 + $0x20] sm:$0xf]
  %v24 = vld [vmem:[%s0 + $0x24] sm:$0xf]
  %v25 = vld [vmem:[%s0 + $0x28] sm:$0xf]
  %v26 = vld [vmem:[%s0 + $0x2c] sm:$0xf]
  %v27 = vld [vmem:[%s0 + $0x30] sm:$0xf]
  %v28 = vld [vmem:[%s0 + $0x34] sm:$0xf]
  %v29 = vld [vmem:[%s0 + $0x38] sm:$0xf]
  %v30 = vld [vmem:[%s0 + $0x3c] sm:$0xf]
  %v31 = vld [vmem:[%s0 + $0x40] sm:$0xf]
  %v32 = vld [vmem:[%s0 + $0x44] sm:$0xf]
  %v33 = vld [vmem:[%s0 + $0x48] sm:$0xf]
  %v34 = vld [vmem:[%s0 + $0x4c] sm:$0xf]
  %v35 = vld [vmem:[%s0 + $0x50] sm:$0xf]
  %v36 = vld [vmem:[%s0 + $0x54] sm:$0xf]
  %v37 = vld [vmem:[%s0 + $0x58] sm:$0xf]
  %v38 = vld [vmem:[%s0 + $0x5c] sm:$0xf]
  %v39 = vld [vmem:[%s0 + $0x60] sm:$0xf]
  %v40 = vld [vmem:[%s0 + $0x64] sm:$0xf]
  %v41 = vld [vmem:[%s0 + $0x68] sm:$0xf]
  %v42 = vld [vmem:[%s0 + $0x6c] sm:$0xf]
  %v43 = vld [vmem:[%s0 + $0x70] sm:$0xf]
  %v44 = vld [vmem:[%s0 + $0x74] sm:$0xf]
  %v45 = vld [vmem:[%s0 + $0x78] sm:$0xf]
  %v46 = vld [vmem:[%s0 + $0x7c] sm:$0xf]
  %v47 = vld [vmem:[%s0 + $0x80] sm:$0xf]
  %v48 = vld [vmem:[%s0 + $0x84] sm:$0xf]
  %v49 = vld [vmem:[%s0 + $0x88] sm:$0xf]
  %v50 = vld [vmem:[%s0 + $0x8c] sm:$0xf]
  %v51 = vld [vmem:[%s0 + $0x90] sm:$0xf]
  %v52 = vld [vmem:[%s0 + $0x94] sm:$0xf]
  %v53 = vld [vmem:[%s0 + $0x98] sm:$0xf]
  %v54 = vld [vmem:[%s0 + $0x9c] sm:$0xf]
  %v55 = vld [vmem:[%s0 + $0xa0] sm:$0xf]
  %v56 = vld [vmem:[%s0 + $0xa4] sm:$0xf]
  %v57 = vld [vmem:[%s0 + $0xa8] sm:$0xf]
  %v58 = vld [vmem:[%s0 + $0xac] sm:$0xf]
  %v59 = vld [vmem:[%s0 + $0xb0] sm:$0xf]
  %v60 = vld [vmem:[%s0 + $0xb4] sm:$0xf]
  %v61 = vld [vmem:[%s0 + $0xb8] sm:$0xf]
  %v62 = vld [vmem:[%s0 + $0xbc] sm:$0xf]
  %v63 = vld [vmem:[%s0 + $0xc0] sm:$0xf]
  %v64 = vld [vmem:[%s0 + $0xc4] sm:$0xf]
  %v65 = vld [vmem:[%s0 + $0xc8] sm:$0xf]
  %v66 = vld [vmem:[%s0 + $0xcc] sm:$0xf]
  %v67 = vld [vmem:[%s0 + $0xd0] sm:$0xf]
  %v68 = vld [vmem:[%s0 + $0xd4] sm:$0xf]
  %v69 = vld [vmem:[%s0 + $0xd8] sm:$0xf]
  %v70 = vld [vmem:[%s0 + $0xdc] sm:$0xf]
  %v71 = vld [vmem:[%s0 + $0xe0] sm:$0xf]
  %v72 = vld [vmem:[%s0 + $0xe4] sm:$0xf]
  %v73 = vld [vmem:[%s0 + $0xe8] sm:$0xf]
  %v74 = vld [vmem:[%s0 + $0xec] sm:$0xf]
  %v75 = vld [vmem:[%s0 + $0xf0] sm:$0xf]
  %v76 = vld [vmem:[%s0 + $0xf4] sm:$0xf]
  %v77 = vld [vmem:[%s0 + $0xf8] sm:$0xf]
  %v78 = vld [vmem:[%s0 + $0xfc] sm:$0xf]
  %v79 = vld [vmem:[%s0 + $0x100] sm:$0xf]
  %v80 = vld [vmem:[%s0 + $0x104] sm:$0xf]
  %v81 = vld [vmem:[%s0 + $0x108] sm:$0xf]
  %v82 = vld [vmem:[%s0 + $0x10c] sm:$0xf]
  %v83 = vld [vmem:[%s0 + $0x110] sm:$0xf]
  %v84 = vld [vmem:[%s0 + $0x114] sm:$0xf]
  %v85 = vld [vmem:[%s0 + $0x118] sm:$0xf]
  %v86 = vld [vmem:[%s0 + $0x11c] sm:$0xf]
  %v87 = vld [vmem:[%s0 + $0x120] sm:$0xf]
  %v88 = vld [vmem:[%s0 + $0x124] sm:$0xf]
  %v89 = vld [vmem:[%s0 + $0x128] sm:$0xf]
  %v90 = vld [vmem:[%s0 + $0x12c] sm:$0xf]
  %v91 = vld [vmem:[%s0 + $0x130] sm:$0xf]
  %v92 = vld [vmem:[%s0 + $0x134] sm:$0xf]
  %v93 = vld [vmem:[%s0 + $0x138] sm:$0xf]
  %v94 = vld [vmem:[%s0 + $0x13c] sm:$0xf]
  %v95 = vld [vmem:[%s0 + $0x140] sm:$0xf]
  %v96 = vld [vmem:[%s0 + $0x144] sm:$0xf]
  %v97 = vld [vmem:[%s0 + $0x148] sm:$0xf]
  %v98 = vld [vmem:[%s0 + $0x14c] sm:$0xf]
  %v99 = vld [vmem:[%s0 + $0x150] sm:$0xf]
  %v100 = vld [vmem:[%s0 + $0x154] sm:$0xf]
  %v101 = vld [vmem:[%s0 + $0x158] sm:$0xf]
  %v102 = vld [vmem:[%s0 + $0x15c] sm:$0xf]
  %v103 = vld [vmem:[%s0 + $0x160] sm:$0xf]
  %v104 = vld [vmem:[%s0 + $0x164] sm:$0xf]
  %v105 = vld [vmem:[%s0 + $0x168] sm:$0xf]
  %v106 = vld [vmem:[%s0 + $0x16c] sm:$0xf]
  %v107 = vld [vmem:[%s0 + $0x170] sm:$0xf]
  %v108 = vld [vmem:[%s0 + $0x174] sm:$0xf]
  %v109 = vld [vmem:[%s0 + $0x178] sm:$0xf]
  %v110 = vld [vmem:[%s0 + $0x17c] sm:$0xf]
  %v111 = vld [vmem:[%s0 + $0x180] sm:$0xf]
  %v112 = vld [vmem:[%s0 + $0x184] sm:$0xf]
  %v113 = vld [vmem:[%s0 + $0x188] sm:$0xf]
  %v114 = vld [vmem:[%s0 + $0x18c] sm:$0xf]
  %v115 = vld [vmem:[%s0 + $0x190] sm:$0xf]
  %v116 = vld [vmem:[%s0 + $0x194] sm:$0xf]
  %v117 = vld [vmem:[%s0 + $0x198] sm:$0xf]
  %v118 = vld [vmem:[%s0 + $0x19c] sm:$0xf]
  %v119 = vld [vmem:[%s0 + $0x1a0] sm:$0xf]
  %v120 = vld [vmem:[%s0 + $0x1a4] sm:$0xf]
  %v121 = vld [vmem:[%s0 + $0x1a8] sm:$0xf]
  %v122 = vld [vmem:[%s0 + $0x1ac] sm:$0xf]
  %v123 = vld [vmem:[%s0 + $0x1b0] sm:$0xf]
  %v124 = vld [vmem:[%s0 + $0x1b4] sm:$0xf]
  %v125 = vld [vmem:[%s0 + $0x1b8] sm:$0xf]
  %v126 = vld [vmem:[%s0 + $0x1bc] sm:$0xf]
  %v127 = vld [vmem:[%s0 + $0x1c0] sm:$0xf]
  %v128 = vld [vmem:[%s0 + $0x1c4] sm:$0xf]
  %v129 = vld [vmem:[%s0 + $0x1c8] sm:$0xf]
  %v130 = vld [vmem:[%s0 + $0x1cc] sm:$0xf]
  %v131 = vld [vmem:[%s0 + $0x1d0] sm:$0xf]
  %v132 = vld [vmem:[%s0 + $0x1d4] sm:$0xf]
  %v133 = vld [vmem:[%s0 + $0x1d8] sm:$0xf]
  %v134 = vld [vmem:[%s0 + $0x1dc] sm:$0xf]
  %v135 = vld [vmem:[%s0 + $0x1e0] sm:$0xf]
  %v136 = vld [vmem:[%s0 + $0x1e4] sm:$0xf]
  %v137 = vld [vmem:[%s0 + $0x1e8] sm:$0xf]
  %v138 = vld [vmem:[%s0 + $0x1ec] sm:$0xf]
  %v139 = vld [vmem:[%s0 + $0x1f0] sm:$0xf]
  %v140 = vld [vmem:[%s0 + $0x1f4] sm:$0xf]
  %v141 = vld [vmem:[%s0 + $0x1f8] sm:$0xf]
  %v142 = vld [vmem:[%s0 + $0x1fc] sm:$0xf]
  %v143 = vld [vmem:[%s0 + $0x200] sm:$0xf]
  %v144 = vld [vmem:[%s0 + $0x204] sm:$0xf]
  %v145 = vld [vmem:[%s0 + $0x208] sm:$0xf]
  %v146 = vld [vmem:[%s0 + $0x20c] sm:$0xf]
  %v147 = vld [vmem:[%s0 + $0x210] sm:$0xf]
  %v148 = vld [vmem:[%s0 + $0x214] sm:$0xf]
  %v149 = vld [vmem:[%s0 + $0x218] sm:$0xf]
  %v150 = vld [vmem:[%s0 + $0x21c] sm:$0xf]
  %v151 = vld [vmem:[%s0 + $0x220] sm:$0xf]
  %v152 = vld [vmem:[%s0 + $0x224] sm:$0xf]
  %v153 = vld [vmem:[%s0 + $0x228] sm:$0xf]
  %v154 = vld [vmem:[%s0 + $0x22c] sm:$0xf]
  %v155 = vld [vmem:[%s0 + $0x230] sm:$0xf]
  %v156 = vld [vmem:[%s0 + $0x234] sm:$0xf]
  %v157 = vld [vmem:[%s0 + $0x238] sm:$0xf]
  %v158 = vld [vmem:[%s0 + $0x23c] sm:$0xf]
  %v159 = vld [vmem:[%s0 + $0x240] sm:$0xf]
  %v160 = vld [vmem:[%s0 + $0x244] sm:$0xf]
  %v161 = vld [vmem:[%s0 + $0x248] sm:$0xf]
  %v162 = vld [vmem:[%s0 + $0x24c] sm:$0xf]
  %v163 = vld [vmem:[%s0 + $0x250] sm:$0xf]
  %v164 = vld [vmem:[%s0 + $0x254] sm:$0xf]
  %v165 = vld [vmem:[%s0 + $0x258] sm:$0xf]
  %v166 = vld [vmem:[%s0 + $0x25c] sm:$0xf]
  %v167 = vld [vmem:[%s0 + $0x260] sm:$0xf]
  %v168 = vld [vmem:[%s0 + $0x264] sm:$0xf]
  %v169 = vld [vmem:[%s0 + $0x268] sm:$0xf]
  %v170 = vld [vmem:[%s0 + $0x26c] sm:$0xf]
  %v171 = vld [vmem:[%s0 + $0x270] sm:$0xf]
  %v172 = vld [vmem:[%s0 + $0x274] sm:$0xf]
  %v173 = vld [vmem:[%s0 + $0x278] sm:$0xf]
  %v174 = vld [vmem:[%s0 + $0x27c] sm:$0xf]
  %v175 = vld [vmem:[%s0 + $0x280] sm:$0xf]
  %v176 = vld [vmem:[%s0 + $0x284] sm:$0xf]
  %v177 = vld [vmem:[%s0 + $0x288] sm:$0xf]
  %v178 = vld [vmem:[%s0 + $0x28c] sm:$0xf]
  %v179 = vld [vmem:[%s0 + $0x290] sm:$0xf]
  %v180 = vld [vmem:[%s0 + $0x294] sm:$0xf]
  %v181 = vld [vmem:[%s0 + $0x298] sm:$0xf]
  %v182 = vld [vmem:[%s0 + $0x29c] sm:$0xf]
  %v183 = vld [vmem:[%s0 + $0x2a0] sm:$0xf]
  %v184 = vld [vmem:[%s0 + $0x2a4] sm:$0xf]
  %v185 = vld [vmem:[%s0 + $0x2a8] sm:$0xf]
  %v186 = vld [vmem:[%s0 + $0x2ac] sm:$0xf]
  %v187 = vld [vmem:[%s0 + $0x2b0] sm:$0xf]
  %v188 = vld [vmem:[%s0 + $0x2b4] sm:$0xf]
  %v189 = vld [vmem:[%s0 + $0x2b8] sm:$0xf]
  %v190 = vld [vmem:[%s0 + $0x2bc] sm:$0xf]
  %v191 = vld [vmem:[%s0 + $0x2c0] sm:$0xf]
  %v192 = vld [vmem:[%s0 + $0x2c4] sm:$0xf]
  %v193 = vld [vmem:[%s0 + $0x2c8] sm:$0xf]
  %v194 = vld [vmem:[%s0 + $0x2cc] sm:$0xf]
  %v195 = vld [vmem:[%s0 + $0x2d0] sm:$0xf]
  %v196 = vld [vmem:[%s0 + $0x2d4] sm:$0xf]
  %v197 = vld [vmem:[%s0 + $0x2d8] sm:$0xf]
  %v198 = vld [vmem:[%s0 + $0x2dc] sm:$0xf]
  %v199 = vld [vmem:[%s0 + $0x2e0] sm:$0xf]
  %v200 = vld [vmem:[%s0 + $0x2e4] sm:$0xf]
  %v201 = vld [vmem:[%s0 + $0x2e8] sm:$0xf]
  %v202 = vld [vmem:[%s0 + $0x2ec] sm:$0xf]
  %v203 = vld [vmem:[%s0 + $0x2f0] sm:$0xf]
  %v204 = vld [vmem:[%s0 + $0x2f4] sm:$0xf]
  %v205 = vld [vmem:[%s0 + $0x2f8] sm:$0xf]
  %v206 = vld [vmem:[%s0 + $0x2fc] sm:$0xf]
  %v207 = vld [vmem:[%s0 + $0x300] sm:$0xf]
  %v208 = vld [vmem:[%s0 + $0x304] sm:$0xf]
  %v209 = vld [vmem:[%s0 + $0x308] sm:$0xf]
  %v210 = vld [vmem:[%s0 + $0x30c] sm:$0xf]
  %v211 = vld [vmem:[%s0 + $0x310] sm:$0xf]
  %v212 = vld [vmem:[%s0 + $0x314] sm:$0xf]
  %v213 = vld [vmem:[%s0 + $0x318] sm:$0xf]
  %v214 = vld [vmem:[%s0 + $0x31c] sm:$0xf]
  %v215 = vld [vmem:[%s0 + $0x320] sm:$0xf]
  %v216 = vld [vmem:[%s0 + $0x324] sm:$0xf]
  %v217 = vld [vmem:[%s0 + $0x328] sm:$0xf]
  %v218 = vld [vmem:[%s0 + $0x32c] sm:$0xf]
  %v219 = vld [vmem:[%s0 + $0x330] sm:$0xf]
  %v220 = vld [vmem:[%s0 + $0x334] sm:$0xf]
  %v221 = vld [vmem:[%s0 + $0x338] sm:$0xf]
  %v222 = vld [vmem:[%s0 + $0x33c] sm:$0xf]
  %v223 = vld [vmem:[%s0 + $0x340] sm:$0xf]
  %v224 = vld [vmem:[%s0 + $0x344] sm:$0xf]
  %v225 = vld [vmem:[%s0 + $0x348] sm:$0xf]
  %v226 = vld [vmem:[%s0 + $0x34c] sm:$0xf]
  %v227 = vld [vmem:[%s0 + $0x350] sm:$0xf]
  %v228 = vld [vmem:[%s0 + $0x354] sm:$0xf]
  %v229 = vld [vmem:[%s0 + $0x358] sm:$0xf]
  %v230 = vld [vmem:[%s0 + $0x35c] sm:$0xf]
  %v231 = vld [vmem:[%s0 + $0x360] sm:$0xf]
  %v232 = vld [vmem:[%s0 + $0x364] sm:$0xf]
  %v233 = vld [vmem:[%s0 + $0x368] sm:$0xf]
  %v234 = vld [vmem:[%s0 + $0x36c] sm:$0xf]
  %v235 = vld [vmem:[%s0 + $0x370] sm:$0xf]
  %v236 = vld [vmem:[%s0 + $0x374] sm:$0xf]
  %v237 = vld [vmem:[%s0 + $0x378] sm:$0xf]
  %v238 = vld [vmem:[%s0 + $0x37c] sm:$0xf]
  %v239 = vld [vmem:[%s0 + $0x380] sm:$0xf]
  %v240 = vld [vmem:[%s0 + $0x384] sm:$0xf]
  %v241 = vld [vmem:[%s0 + $0x388] sm:$0xf]
  %v242 = vld [vmem:[%s0 + $0x38c] sm:$0xf]
  %v243 = vld [vmem:[%s0 + $0x390] sm:$0xf]
  %v244 = vld [vmem:[%s0 + $0x394] sm:$0xf]
  %v245 = vld [vmem:[%s0 + $0x398] sm:$0xf]
  %v246 = vld [vmem:[%s0 + $0x39c] sm:$0xf]
  %v247 = vld [vmem:[%s0 + $0x3a0] sm:$0xf]
  %v248 = vld [vmem:[%s0 + $0x3a4] sm:$0xf]
  %v249 = vld [vmem:[%s0 + $0x3a8] sm:$0xf]
  %v250 = vld [vmem:[%s0 + $0x3ac] sm:$0xf]
  %v251 = vld [vmem:[%s0 + $0x3b0] sm:$0xf]
  %v252 = vld [vmem:[%s0 + $0x3b4] sm:$0xf]
  %v253 = vld [vmem:[%s0 + $0x3b8] sm:$0xf]
  %v254 = vld [vmem:[%s0 + $0x3bc] sm:$0xf]
  %v255 = vld [vmem:[%s0 + $0x3c0] sm:$0xf]
  %v256 = vld [vmem:[%s0 + $0x3c4] sm:$0xf]
  %v257 = vld [vmem:[%s0 + $0x3c8] sm:$0xf]
  %v258 = vld [vmem:[%s0 + $0x3cc] sm:$0xf]
  %v259 = vld [vmem:[%s0 + $0x3d0] sm:$0xf]
  %v260 = vld [vmem:[%s0 + $0x3d4] sm:$0xf]
  %v261 = vld [vmem:[%s0 + $0x3d8] sm:$0xf]
  %v262 = vld [vmem:[%s0 + $0x3dc] sm:$0xf]
  %v263 = vld [vmem:[%s0 + $0x3e0] sm:$0xf]
  %v264 = vld [vmem:[%s0 + $0x3e4] sm:$0xf]
  %v265 = vld [vmem:[%s0 + $0x3e8] sm:$0xf]
  %v266 = vld [vmem:[%s0 + $0x3ec] sm:$0xf]
  %v267 = vld [vmem:[%s0 + $0x3f0] sm:$0xf]
  %v268 = vld [vmem:[%s0 + $0x3f4] sm:$0xf]
  %v269 = vld [vmem:[%s0 + $0x3f8] sm:$0xf]
  %v270 = vld [vmem:[%s0 + $0x3fc] sm:$0xf]
  %v271 = vld [vmem:[%s1] sm:$0xf]
  %v272 = vld [vmem:[%s1 + $0x4] sm:$0xf]
  %v273 = vld [vmem:[%s1 + $0x8] sm:$0xf]
  %v274 = vld [vmem:[%s1 + $0xc] sm:$0xf]
  %v531 = vunpack.c.l.b16 %v15
  %v532 = vunpack.c.l.b16 %v16
  %v533 = vunpack.c.l.b16 %v17
  %v534 = vunpack.c.l.b16 %v18
  %v535 = vunpack.c.l.b16 %v19
  %v536 = vunpack.c.l.b16 %v20
  %v537 = vunpack.c.l.b16 %v21
  %v538 = vunpack.c.l.b16 %v22
  %v539 = vunpack.c.l.b16 %v23
  %v540 = vunpack.c.l.b16 %v24
  %v541 = vunpack.c.l.b16 %v25
  %v542 = vunpack.c.l.b16 %v26
  %v543 = vunpack.c.l.b16 %v27
  %v544 = vunpack.c.l.b16 %v28
  %v545 = vunpack.c.l.b16 %v29
  %v546 = vunpack.c.l.b16 %v30
  %v547 = vunpack.c.l.b16 %v31
  %v548 = vunpack.c.l.b16 %v32
  %v549 = vunpack.c.l.b16 %v33
  %v550 = vunpack.c.l.b16 %v34
  %v551 = vunpack.c.l.b16 %v35
  %v552 = vunpack.c.l.b16 %v36
  %v553 = vunpack.c.l.b16 %v37
  %v554 = vunpack.c.l.b16 %v38
  %v555 = vunpack.c.l.b16 %v39
  %v556 = vunpack.c.l.b16 %v40
  %v557 = vunpack.c.l.b16 %v41
  %v558 = vunpack.c.l.b16 %v42
  %v559 = vunpack.c.l.b16 %v43
  %v560 = vunpack.c.l.b16 %v44
  %v561 = vunpack.c.l.b16 %v45
  %v562 = vunpack.c.l.b16 %v46
  %v563 = vunpack.c.l.b16 %v47
  %v564 = vunpack.c.l.b16 %v48
  %v565 = vunpack.c.l.b16 %v49
  %v566 = vunpack.c.l.b16 %v50
  %v567 = vunpack.c.l.b16 %v51
  %v568 = vunpack.c.l.b16 %v52
  %v569 = vunpack.c.l.b16 %v53
  %v570 = vunpack.c.l.b16 %v54
  %v571 = vunpack.c.l.b16 %v55
  %v572 = vunpack.c.l.b16 %v56
  %v573 = vunpack.c.l.b16 %v57
  %v574 = vunpack.c.l.b16 %v58
  %v575 = vunpack.c.l.b16 %v59
  %v576 = vunpack.c.l.b16 %v60
  %v577 = vunpack.c.l.b16 %v61
  %v578 = vunpack.c.l.b16 %v62
  %v579 = vunpack.c.l.b16 %v63
  %v580 = vunpack.c.l.b16 %v64
  %v581 = vunpack.c.l.b16 %v65
  %v582 = vunpack.c.l.b16 %v66
  %v583 = vunpack.c.l.b16 %v67
  %v584 = vunpack.c.l.b16 %v68
  %v585 = vunpack.c.l.b16 %v69
  %v586 = vunpack.c.l.b16 %v70
  %v587 = vunpack.c.l.b16 %v71
  %v588 = vunpack.c.l.b16 %v72
  %v589 = vunpack.c.l.b16 %v73
  %v590 = vunpack.c.l.b16 %v74
  %v591 = vunpack.c.l.b16 %v75
  %v592 = vunpack.c.l.b16 %v76
  %v593 = vunpack.c.l.b16 %v77
  %v594 = vunpack.c.l.b16 %v78
  %v595 = vunpack.c.l.b16 %v79
  %v596 = vunpack.c.l.b16 %v80
  %v597 = vunpack.c.l.b16 %v81
  %v598 = vunpack.c.l.b16 %v82
  %v599 = vunpack.c.l.b16 %v83
  %v600 = vunpack.c.l.b16 %v84
  %v601 = vunpack.c.l.b16 %v85
  %v602 = vunpack.c.l.b16 %v86
  %v603 = vunpack.c.l.b16 %v87
  %v604 = vunpack.c.l.b16 %v88
  %v605 = vunpack.c.l.b16 %v89
  %v606 = vunpack.c.l.b16 %v90
  %v607 = vunpack.c.l.b16 %v91
  %v608 = vunpack.c.l.b16 %v92
  %v609 = vunpack.c.l.b16 %v93
  %v610 = vunpack.c.l.b16 %v94
  %v611 = vunpack.c.l.b16 %v95
  %v612 = vunpack.c.l.b16 %v96
  %v613 = vunpack.c.l.b16 %v97
  %v614 = vunpack.c.l.b16 %v98
  %v615 = vunpack.c.l.b16 %v99
  %v616 = vunpack.c.l.b16 %v100
  %v617 = vunpack.c.l.b16 %v101
  %v618 = vunpack.c.l.b16 %v102
  %v619 = vunpack.c.l.b16 %v103
  %v620 = vunpack.c.l.b16 %v104
  %v621 = vunpack.c.l.b16 %v105
  %v622 = vunpack.c.l.b16 %v106
  %v623 = vunpack.c.l.b16 %v107
  %v624 = vunpack.c.l.b16 %v108
  %v625 = vunpack.c.l.b16 %v109
  %v626 = vunpack.c.l.b16 %v110
  %v627 = vunpack.c.l.b16 %v111
  %v628 = vunpack.c.l.b16 %v112
  %v629 = vunpack.c.l.b16 %v113
  %v630 = vunpack.c.l.b16 %v114
  %v631 = vunpack.c.l.b16 %v115
  %v632 = vunpack.c.l.b16 %v116
  %v633 = vunpack.c.l.b16 %v117
  %v634 = vunpack.c.l.b16 %v118
  %v635 = vunpack.c.l.b16 %v119
  %v636 = vunpack.c.l.b16 %v120
  %v637 = vunpack.c.l.b16 %v121
  %v638 = vunpack.c.l.b16 %v122
  %v639 = vunpack.c.l.b16 %v123
  %v640 = vunpack.c.l.b16 %v124
  %v641 = vunpack.c.l.b16 %v125
  %v642 = vunpack.c.l.b16 %v126
  %v643 = vunpack.c.l.b16 %v127
  %v644 = vunpack.c.l.b16 %v128
  %v645 = vunpack.c.l.b16 %v129
  %v646 = vunpack.c.l.b16 %v130
  %v647 = vunpack.c.l.b16 %v131
  %v648 = vunpack.c.l.b16 %v132
  %v649 = vunpack.c.l.b16 %v133
  %v650 = vunpack.c.l.b16 %v134
  %v651 = vunpack.c.l.b16 %v135
  %v652 = vunpack.c.l.b16 %v136
  %v653 = vunpack.c.l.b16 %v137
  %v654 = vunpack.c.l.b16 %v138
  %v655 = vunpack.c.l.b16 %v139
  %v656 = vunpack.c.l.b16 %v140
  %v657 = vunpack.c.l.b16 %v141
  %v658 = vunpack.c.l.b16 %v142
  %v659 = vunpack.c.l.b16 %v143
  %v660 = vunpack.c.l.b16 %v144
  %v661 = vunpack.c.l.b16 %v145
  %v662 = vunpack.c.l.b16 %v146
  %v663 = vunpack.c.l.b16 %v147
  %v664 = vunpack.c.l.b16 %v148
  %v665 = vunpack.c.l.b16 %v149
  %v666 = vunpack.c.l.b16 %v150
  %v667 = vunpack.c.l.b16 %v151
  %v668 = vunpack.c.l.b16 %v152
  %v669 = vunpack.c.l.b16 %v153
  %v670 = vunpack.c.l.b16 %v154
  %v671 = vunpack.c.l.b16 %v155
  %v672 = vunpack.c.l.b16 %v156
  %v673 = vunpack.c.l.b16 %v157
  %v674 = vunpack.c.l.b16 %v158
  %v675 = vunpack.c.l.b16 %v159
  %v676 = vunpack.c.l.b16 %v160
  %v677 = vunpack.c.l.b16 %v161
  %v678 = vunpack.c.l.b16 %v162
  %v679 = vunpack.c.l.b16 %v163
  %v680 = vunpack.c.l.b16 %v164
  %v681 = vunpack.c.l.b16 %v165
  %v682 = vunpack.c.l.b16 %v166
  %v683 = vunpack.c.l.b16 %v167
  %v684 = vunpack.c.l.b16 %v168
  %v685 = vunpack.c.l.b16 %v169
  %v686 = vunpack.c.l.b16 %v170
  %v687 = vunpack.c.l.b16 %v171
  %v688 = vunpack.c.l.b16 %v172
  %v689 = vunpack.c.l.b16 %v173
  %v690 = vunpack.c.l.b16 %v174
  %v691 = vunpack.c.l.b16 %v175
  %v692 = vunpack.c.l.b16 %v176
  %v693 = vunpack.c.l.b16 %v177
  %v694 = vunpack.c.l.b16 %v178
  %v695 = vunpack.c.l.b16 %v179
  %v696 = vunpack.c.l.b16 %v180
  %v697 = vunpack.c.l.b16 %v181
  %v698 = vunpack.c.l.b16 %v182
  %v699 = vunpack.c.l.b16 %v183
  %v700 = vunpack.c.l.b16 %v184
  %v701 = vunpack.c.l.b16 %v185
  %v702 = vunpack.c.l.b16 %v186
  %v703 = vunpack.c.l.b16 %v187
  %v704 = vunpack.c.l.b16 %v188
  %v705 = vunpack.c.l.b16 %v189
  %v706 = vunpack.c.l.b16 %v190
  %v707 = vunpack.c.l.b16 %v191
  %v708 = vunpack.c.l.b16 %v192
  %v709 = vunpack.c.l.b16 %v193
  %v710 = vunpack.c.l.b16 %v194
  %v711 = vunpack.c.l.b16 %v195
  %v712 = vunpack.c.l.b16 %v196
  %v713 = vunpack.c.l.b16 %v197
  %v714 = vunpack.c.l.b16 %v198
  %v715 = vunpack.c.l.b16 %v199
  %v716 = vunpack.c.l.b16 %v200
  %v717 = vunpack.c.l.b16 %v201
  %v718 = vunpack.c.l.b16 %v202
  %v719 = vunpack.c.l.b16 %v203
  %v720 = vunpack.c.l.b16 %v204
  %v721 = vunpack.c.l.b16 %v205
  %v722 = vunpack.c.l.b16 %v206
  %v723 = vunpack.c.l.b16 %v207
  %v724 = vunpack.c.l.b16 %v208
  %v725 = vunpack.c.l.b16 %v209
  %v726 = vunpack.c.l.b16 %v210
  %v727 = vunpack.c.l.b16 %v211
  %v728 = vunpack.c.l.b16 %v212
  %v729 = vunpack.c.l.b16 %v213
  %v730 = vunpack.c.l.b16 %v214
  %v731 = vunpack.c.l.b16 %v215
  %v732 = vunpack.c.l.b16 %v216
  %v733 = vunpack.c.l.b16 %v217
  %v734 = vunpack.c.l.b16 %v218
  %v735 = vunpack.c.l.b16 %v219
  %v736 = vunpack.c.l.b16 %v220
  %v737 = vunpack.c.l.b16 %v221
  %v738 = vunpack.c.l.b16 %v222
  %v739 = vunpack.c.l.b16 %v223
  %v740 = vunpack.c.l.b16 %v224
  %v741 = vunpack.c.l.b16 %v225
  %v742 = vunpack.c.l.b16 %v226
  %v743 = vunpack.c.l.b16 %v227
  %v744 = vunpack.c.l.b16 %v228
  %v745 = vunpack.c.l.b16 %v229
  %v746 = vunpack.c.l.b16 %v230
  %v747 = vunpack.c.l.b16 %v231
  %v748 = vunpack.c.l.b16 %v232
  %v749 = vunpack.c.l.b16 %v233
  %v750 = vunpack.c.l.b16 %v234
  %v751 = vunpack.c.l.b16 %v235
  %v752 = vunpack.c.l.b16 %v236
  %v753 = vunpack.c.l.b16 %v237
  %v754 = vunpack.c.l.b16 %v238
  %v755 = vunpack.c.l.b16 %v239
  %v756 = vunpack.c.l.b16 %v240
  %v757 = vunpack.c.l.b16 %v241
  %v758 = vunpack.c.l.b16 %v242
  %v759 = vunpack.c.l.b16 %v243
  %v760 = vunpack.c.l.b16 %v244
  %v761 = vunpack.c.l.b16 %v245
  %v762 = vunpack.c.l.b16 %v246
  %v763 = vunpack.c.l.b16 %v247
  %v764 = vunpack.c.l.b16 %v248
  %v765 = vunpack.c.l.b16 %v249
  %v766 = vunpack.c.l.b16 %v250
  %v767 = vunpack.c.l.b16 %v251
  %v768 = vunpack.c.l.b16 %v252
  %v769 = vunpack.c.l.b16 %v253
  %v770 = vunpack.c.l.b16 %v254
  %v771 = vunpack.c.l.b16 %v255
  %v772 = vunpack.c.l.b16 %v256
  %v773 = vunpack.c.l.b16 %v257
  %v774 = vunpack.c.l.b16 %v258
  %v775 = vunpack.c.l.b16 %v259
  %v776 = vunpack.c.l.b16 %v260
  %v777 = vunpack.c.l.b16 %v261
  %v778 = vunpack.c.l.b16 %v262
  %v779 = vunpack.c.l.b16 %v263
  %v780 = vunpack.c.l.b16 %v264
  %v781 = vunpack.c.l.b16 %v265
  %v782 = vunpack.c.l.b16 %v266
  %v783 = vunpack.c.l.b16 %v267
  %v784 = vunpack.c.l.b16 %v268
  %v785 = vunpack.c.l.b16 %v269
  %v786 = vunpack.c.l.b16 %v270
  %v787 = vpack.c.b16 %v532, %v531
  %v788 = vpack.c.b16 %v534, %v533
  %v789 = vpack.c.b16 %v536, %v535
  %v790 = vpack.c.b16 %v538, %v537
  %v791 = vpack.c.b16 %v540, %v539
  %v792 = vpack.c.b16 %v542, %v541
  %v793 = vpack.c.b16 %v544, %v543
  %v794 = vpack.c.b16 %v546, %v545
  %v795 = vpack.c.b16 %v548, %v547
  %v796 = vpack.c.b16 %v550, %v549
  %v797 = vpack.c.b16 %v552, %v551
  %v798 = vpack.c.b16 %v554, %v553
  %v799 = vpack.c.b16 %v556, %v555
  %v800 = vpack.c.b16 %v558, %v557
  %v801 = vpack.c.b16 %v560, %v559
  %v802 = vpack.c.b16 %v562, %v561
  %v803 = vpack.c.b16 %v564, %v563
  %v804 = vpack.c.b16 %v566, %v565
  %v805 = vpack.c.b16 %v568, %v567
  %v806 = vpack.c.b16 %v570, %v569
  %v807 = vpack.c.b16 %v572, %v571
  %v808 = vpack.c.b16 %v574, %v573
  %v809 = vpack.c.b16 %v576, %v575
  %v810 = vpack.c.b16 %v578, %v577
  %v811 = vpack.c.b16 %v580, %v579
  %v812 = vpack.c.b16 %v582, %v581
  %v813 = vpack.c.b16 %v584, %v583
  %v814 = vpack.c.b16 %v586, %v585
  %v815 = vpack.c.b16 %v588, %v587
  %v816 = vpack.c.b16 %v590, %v589
  %v817 = vpack.c.b16 %v592, %v591
  %v818 = vpack.c.b16 %v594, %v593
  %v819 = vpack.c.b16 %v596, %v595
  %v820 = vpack.c.b16 %v598, %v597
  %v821 = vpack.c.b16 %v600, %v599
  %v822 = vpack.c.b16 %v602, %v601
  %v823 = vpack.c.b16 %v604, %v603
  %v824 = vpack.c.b16 %v606, %v605
  %v825 = vpack.c.b16 %v608, %v607
  %v826 = vpack.c.b16 %v610, %v609
  %v827 = vpack.c.b16 %v612, %v611
  %v828 = vpack.c.b16 %v614, %v613
  %v829 = vpack.c.b16 %v616, %v615
  %v830 = vpack.c.b16 %v618, %v617
  %v831 = vpack.c.b16 %v620, %v619
  %v832 = vpack.c.b16 %v622, %v621
  %v833 = vpack.c.b16 %v624, %v623
  %v834 = vpack.c.b16 %v626, %v625
  %v835 = vpack.c.b16 %v628, %v627
  %v836 = vpack.c.b16 %v630, %v629
  %v837 = vpack.c.b16 %v632, %v631
  %v838 = vpack.c.b16 %v634, %v633
  %v839 = vpack.c.b16 %v636, %v635
  %v840 = vpack.c.b16 %v638, %v637
  %v841 = vpack.c.b16 %v640, %v639
  %v842 = vpack.c.b16 %v642, %v641
  %v843 = vpack.c.b16 %v644, %v643
  %v844 = vpack.c.b16 %v646, %v645
  %v845 = vpack.c.b16 %v648, %v647
  %v846 = vpack.c.b16 %v650, %v649
  %v847 = vpack.c.b16 %v652, %v651
  %v848 = vpack.c.b16 %v654, %v653
  %v849 = vpack.c.b16 %v656, %v655
  %v850 = vpack.c.b16 %v658, %v657
  %v851 = vpack.c.b16 %v660, %v659
  %v852 = vpack.c.b16 %v662, %v661
  %v853 = vpack.c.b16 %v664, %v663
  %v854 = vpack.c.b16 %v666, %v665
  %v855 = vpack.c.b16 %v668, %v667
  %v856 = vpack.c.b16 %v670, %v669
  %v857 = vpack.c.b16 %v672, %v671
  %v858 = vpack.c.b16 %v674, %v673
  %v859 = vpack.c.b16 %v676, %v675
  %v860 = vpack.c.b16 %v678, %v677
  %v861 = vpack.c.b16 %v680, %v679
  %v862 = vpack.c.b16 %v682, %v681
  %v863 = vpack.c.b16 %v684, %v683
  %v864 = vpack.c.b16 %v686, %v685
  %v865 = vpack.c.b16 %v688, %v687
  %v866 = vpack.c.b16 %v690, %v689
  %v867 = vpack.c.b16 %v692, %v691
  %v868 = vpack.c.b16 %v694, %v693
  %v869 = vpack.c.b16 %v696, %v695
  %v870 = vpack.c.b16 %v698, %v697
  %v871 = vpack.c.b16 %v700, %v699
  %v872 = vpack.c.b16 %v702, %v701
  %v873 = vpack.c.b16 %v704, %v703
  %v874 = vpack.c.b16 %v706, %v705
  %v875 = vpack.c.b16 %v708, %v707
  %v876 = vpack.c.b16 %v710, %v709
  %v877 = vpack.c.b16 %v712, %v711
  %v878 = vpack.c.b16 %v714, %v713
  %v879 = vpack.c.b16 %v716, %v715
  %v880 = vpack.c.b16 %v718, %v717
  %v881 = vpack.c.b16 %v720, %v719
  %v882 = vpack.c.b16 %v722, %v721
  %v883 = vpack.c.b16 %v724, %v723
  %v884 = vpack.c.b16 %v726, %v725
  %v885 = vpack.c.b16 %v728, %v727
  %v886 = vpack.c.b16 %v730, %v729
  %v887 = vpack.c.b16 %v732, %v731
  %v888 = vpack.c.b16 %v734, %v733
  %v889 = vpack.c.b16 %v736, %v735
  %v890 = vpack.c.b16 %v738, %v737
  %v891 = vpack.c.b16 %v740, %v739
  %v892 = vpack.c.b16 %v742, %v741
  %v893 = vpack.c.b16 %v744, %v743
  %v894 = vpack.c.b16 %v746, %v745
  %v895 = vpack.c.b16 %v748, %v747
  %v896 = vpack.c.b16 %v750, %v749
  %v897 = vpack.c.b16 %v752, %v751
  %v898 = vpack.c.b16 %v754, %v753
  %v899 = vpack.c.b16 %v756, %v755
  %v900 = vpack.c.b16 %v758, %v757
  %v901 = vpack.c.b16 %v760, %v759
  %v902 = vpack.c.b16 %v762, %v761
  %v903 = vpack.c.b16 %v764, %v763
  %v904 = vpack.c.b16 %v766, %v765
  %v905 = vpack.c.b16 %v768, %v767
  %v906 = vpack.c.b16 %v770, %v769
  %v907 = vpack.c.b16 %v772, %v771
  %v908 = vpack.c.b16 %v774, %v773
  %v909 = vpack.c.b16 %v776, %v775
  %v910 = vpack.c.b16 %v778, %v777
  %v911 = vpack.c.b16 %v780, %v779
  %v912 = vpack.c.b16 %v782, %v781
  %v913 = vpack.c.b16 %v784, %v783
  %v914 = vpack.c.b16 %v786, %v785
  %v919 = vunpack.c.l.b16 %v271
  %v920 = vunpack.c.l.b16 %v272
  %v921 = vunpack.c.l.b16 %v273
  %v922 = vunpack.c.l.b16 %v274
  %v923 = vpack.c.b16 %v920, %v919
  %v924 = vpack.c.b16 %v922, %v921
  %vm927 = vcmask 261120
  %v929 = vsel %vm927, %v787, 0
  %v932 = vsel %vm927, %v788, 0
  %v935 = vsel %vm927, %v789, 0
  %v938 = vsel %vm927, %v790, 0
  %v941 = vsel %vm927, %v791, 0
  %v944 = vsel %vm927, %v792, 0
  %v947 = vsel %vm927, %v793, 0
  %v950 = vsel %vm927, %v794, 0
  %v953 = vsel %vm927, %v795, 0
  %v956 = vsel %vm927, %v796, 0
  %v959 = vsel %vm927, %v797, 0
  %v962 = vsel %vm927, %v798, 0
  %v965 = vsel %vm927, %v799, 0
  %v968 = vsel %vm927, %v800, 0
  %v971 = vsel %vm927, %v801, 0
  %v974 = vsel %vm927, %v802, 0
  %v977 = vsel %vm927, %v803, 0
  %v980 = vsel %vm927, %v804, 0
  %v983 = vsel %vm927, %v805, 0
  %v986 = vsel %vm927, %v806, 0
  %v989 = vsel %vm927, %v807, 0
  %v992 = vsel %vm927, %v808, 0
  %v995 = vsel %vm927, %v809, 0
  %v998 = vsel %vm927, %v810, 0
  %v1001 = vsel %vm927, %v811, 0
  %v1004 = vsel %vm927, %v812, 0
  %v1007 = vsel %vm927, %v813, 0
  %v1010 = vsel %vm927, %v814, 0
  %v1013 = vsel %vm927, %v815, 0
  %v1016 = vsel %vm927, %v816, 0
  %v1019 = vsel %vm927, %v817, 0
  %v1022 = vsel %vm927, %v818, 0
  %v1025 = vsel %vm927, %v819, 0
  %v1028 = vsel %vm927, %v820, 0
  %v1031 = vsel %vm927, %v821, 0
  %v1034 = vsel %vm927, %v822, 0
  %v1037 = vsel %vm927, %v823, 0
  %v1040 = vsel %vm927, %v824, 0
  %v1043 = vsel %vm927, %v825, 0
  %v1046 = vsel %vm927, %v826, 0
  %v1049 = vsel %vm927, %v827, 0
  %v1052 = vsel %vm927, %v828, 0
  %v1055 = vsel %vm927, %v829, 0
  %v1058 = vsel %vm927, %v830, 0
  %v1061 = vsel %vm927, %v831, 0
  %v1064 = vsel %vm927, %v832, 0
  %v1067 = vsel %vm927, %v833, 0
  %v1070 = vsel %vm927, %v834, 0
  %v1073 = vsel %vm927, %v835, 0
  %v1076 = vsel %vm927, %v836, 0
  %v1079 = vsel %vm927, %v837, 0
  %v1082 = vsel %vm927, %v838, 0
  %v1085 = vsel %vm927, %v839, 0
  %v1088 = vsel %vm927, %v840, 0
  %v1091 = vsel %vm927, %v841, 0
  %v1094 = vsel %vm927, %v842, 0
  %v1097 = vsel %vm927, %v843, 0
  %v1100 = vsel %vm927, %v844, 0
  %v1103 = vsel %vm927, %v845, 0
  %v1106 = vsel %vm927, %v846, 0
  %v1109 = vsel %vm927, %v847, 0
  %v1112 = vsel %vm927, %v848, 0
  %v1115 = vsel %vm927, %v849, 0
  %v1118 = vsel %vm927, %v850, 0
  %v1121 = vsel %vm927, %v851, 0
  %v1124 = vsel %vm927, %v852, 0
  %v1127 = vsel %vm927, %v853, 0
  %v1130 = vsel %vm927, %v854, 0
  %v1133 = vsel %vm927, %v855, 0
  %v1136 = vsel %vm927, %v856, 0
  %v1139 = vsel %vm927, %v857, 0
  %v1142 = vsel %vm927, %v858, 0
  %v1145 = vsel %vm927, %v859, 0
  %v1148 = vsel %vm927, %v860, 0
  %v1151 = vsel %vm927, %v861, 0
  %v1154 = vsel %vm927, %v862, 0
  %v1157 = vsel %vm927, %v863, 0
  %v1160 = vsel %vm927, %v864, 0
  %v1163 = vsel %vm927, %v865, 0
  %v1166 = vsel %vm927, %v866, 0
  %v1169 = vsel %vm927, %v867, 0
  %v1172 = vsel %vm927, %v868, 0
  %v1175 = vsel %vm927, %v869, 0
  %v1178 = vsel %vm927, %v870, 0
  %v1181 = vsel %vm927, %v871, 0
  %v1184 = vsel %vm927, %v872, 0
  %v1187 = vsel %vm927, %v873, 0
  %v1190 = vsel %vm927, %v874, 0
  %v1193 = vsel %vm927, %v875, 0
  %v1196 = vsel %vm927, %v876, 0
  %v1199 = vsel %vm927, %v877, 0
  %v1202 = vsel %vm927, %v878, 0
  %v1205 = vsel %vm927, %v879, 0
  %v1208 = vsel %vm927, %v880, 0
  %v1211 = vsel %vm927, %v881, 0
  %v1214 = vsel %vm927, %v882, 0
  %v1217 = vsel %vm927, %v883, 0
  %v1220 = vsel %vm927, %v884, 0
  %v1223 = vsel %vm927, %v885, 0
  %v1226 = vsel %vm927, %v886, 0
  %v1229 = vsel %vm927, %v887, 0
  %v1232 = vsel %vm927, %v888, 0
  %v1235 = vsel %vm927, %v889, 0
  %v1238 = vsel %vm927, %v890, 0
  %v1241 = vsel %vm927, %v891, 0
  %v1244 = vsel %vm927, %v892, 0
  %v1247 = vsel %vm927, %v893, 0
  %v1250 = vsel %vm927, %v894, 0
  %v1253 = vsel %vm927, %v895, 0
  %v1256 = vsel %vm927, %v896, 0
  %v1259 = vsel %vm927, %v897, 0
  %v1262 = vsel %vm927, %v898, 0
  %v1265 = vsel %vm927, %v899, 0
  %v1268 = vsel %vm927, %v900, 0
  %v1271 = vsel %vm927, %v901, 0
  %v1274 = vsel %vm927, %v902, 0
  %v1277 = vsel %vm927, %v903, 0
  %v1280 = vsel %vm927, %v904, 0
  %v1283 = vsel %vm927, %v905, 0
  %v1286 = vsel %vm927, %v906, 0
  %v1289 = vsel %vm927, %v907, 0
  %v1292 = vsel %vm927, %v908, 0
  %v1295 = vsel %vm927, %v909, 0
  %v1298 = vsel %vm927, %v910, 0
  %v1301 = vsel %vm927, %v911, 0
  %v1304 = vsel %vm927, %v912, 0
  %v1307 = vsel %vm927, %v913, 0
  %v1310 = vsel %vm927, %v914, 0
  %1312 = vmatprep.subr.bf16.mxu0 0
  %1313 = vmatpush1.bf16.msra.mxu0 0
  %1314 = vmatprep.subr.bf16.mxu0 0
  %1315 = vmatpush1.bf16.msra.mxu0 0
  %1316 = vmatprep.subr.bf16.mxu0 0
  %1317 = vmatpush1.bf16.msra.mxu0 0
  %1318 = vmatprep.subr.bf16.mxu0 0
  %1319 = vmatpush1.bf16.msra.mxu0 0
  %1320 = vmatprep.subr.bf16.mxu0 0
  %1321 = vmatpush1.bf16.msra.mxu0 0
  %1322 = vmatprep.subr.bf16.mxu0 0
  %1323 = vmatpush1.bf16.msra.mxu0 0
  %1324 = vmatprep.subr.bf16.mxu0 0
  %1325 = vmatpush1.bf16.msra.mxu0 %v924
  %1326 = vmatprep.subr.bf16.mxu0 0
  %1327 = vmatpush1.bf16.msra.mxu0 %v923
  %1328 = vmatprep.subr.bf16.mxu0 0
  %1329 = vmatpush2.bf16.msra.mxu0 0
  %1330 = vmatprep.subr.bf16.mxu0 0
  %1331 = vmatpush2.bf16.msra.mxu0 0
  %1332 = vmatprep.subr.bf16.mxu0 0
  %1333 = vmatpush2.bf16.msra.mxu0 0
  %1334 = vmatprep.subr.bf16.mxu0 0
  %1335 = vmatpush2.bf16.msra.mxu0 0
  %1336 = vmatprep.subr.bf16.mxu0 0
  %1337 = vmatpush2.bf16.msra.mxu0 0
  %1338 = vmatprep.subr.bf16.mxu0 0
  %1339 = vmatpush2.bf16.msra.mxu0 0
  %1340 = vmatprep.subr.bf16.mxu0 0
  %1341 = vmatpush2.bf16.msra.mxu0 0
  %1342 = vmatprep.subr.bf16.mxu0 0
  %1343 = vmatpush2.bf16.msra.mxu0 0
  %1344 = vmatprep.mubr.bf16.mxu0 0
  %1345 = vmatmul.mubr.bf16.gmra.mxu0 %v929
  %v1346 = vpop.f32.mrf.mxu0
  %v1347 = vadd.f32 0.0, %v1346
  %v1348 = vpop.f32.mrf.mxu0
  %v1349 = vpop.f32.mrf.mxu0
  %v1350 = vadd.f32 0.0, %v1349
  %v1351 = vpop.f32.mrf.mxu0
  %1352 = vmatprep.mubr.bf16.mxu0 0
  %1353 = vmatmul.mubr.bf16.gmra.mxu0 %v932
  %v1354 = vpop.f32.mrf.mxu0
  %v1355 = vadd.f32 0.0, %v1354
  %v1356 = vpop.f32.mrf.mxu0
  %v1357 = vpop.f32.mrf.mxu0
  %v1358 = vadd.f32 0.0, %v1357
  %v1359 = vpop.f32.mrf.mxu0
  %1360 = vmatprep.mubr.bf16.mxu0 0
  %1361 = vmatmul.mubr.bf16.gmra.mxu0 %v935
  %v1362 = vpop.f32.mrf.mxu0
  %v1363 = vadd.f32 0.0, %v1362
  %v1364 = vpop.f32.mrf.mxu0
  %v1365 = vpop.f32.mrf.mxu0
  %v1366 = vadd.f32 0.0, %v1365
  %v1367 = vpop.f32.mrf.mxu0
  %1368 = vmatprep.mubr.bf16.mxu0 0
  %1369 = vmatmul.mubr.bf16.gmra.mxu0 %v938
  %v1370 = vpop.f32.mrf.mxu0
  %v1371 = vadd.f32 0.0, %v1370
  %v1372 = vpop.f32.mrf.mxu0
  %v1373 = vpop.f32.mrf.mxu0
  %v1374 = vadd.f32 0.0, %v1373
  %v1375 = vpop.f32.mrf.mxu0
  %1376 = vmatprep.mubr.bf16.mxu0 0
  %1377 = vmatmul.mubr.bf16.gmra.mxu0 %v941
  %v1378 = vpop.f32.mrf.mxu0
  %v1379 = vadd.f32 0.0, %v1378
  %v1380 = vpop.f32.mrf.mxu0
  %v1381 = vpop.f32.mrf.mxu0
  %v1382 = vadd.f32 0.0, %v1381
  %v1383 = vpop.f32.mrf.mxu0
  %1384 = vmatprep.mubr.bf16.mxu0 0
  %1385 = vmatmul.mubr.bf16.gmra.mxu0 %v944
  %v1386 = vpop.f32.mrf.mxu0
  %v1387 = vadd.f32 0.0, %v1386
  %v1388 = vpop.f32.mrf.mxu0
  %v1389 = vpop.f32.mrf.mxu0
  %v1390 = vadd.f32 0.0, %v1389
  %v1391 = vpop.f32.mrf.mxu0
  %1392 = vmatprep.mubr.bf16.mxu0 0
  %1393 = vmatmul.mubr.bf16.gmra.mxu0 %v947
  %v1394 = vpop.f32.mrf.mxu0
  %v1395 = vadd.f32 0.0, %v1394
  %v1396 = vpop.f32.mrf.mxu0
  %v1397 = vpop.f32.mrf.mxu0
  %v1398 = vadd.f32 0.0, %v1397
  %v1399 = vpop.f32.mrf.mxu0
  %1400 = vmatprep.mubr.bf16.mxu0 0
  %1401 = vmatmul.mubr.bf16.gmra.mxu0 %v950
  %v1402 = vpop.f32.mrf.mxu0
  %v1403 = vadd.f32 0.0, %v1402
  %v1404 = vpop.f32.mrf.mxu0
  %v1405 = vpop.f32.mrf.mxu0
  %v1406 = vadd.f32 0.0, %v1405
  %v1407 = vpop.f32.mrf.mxu0
  %1408 = vmatprep.mubr.bf16.mxu0 0
  %1409 = vmatmul.mubr.bf16.gmra.mxu0 %v953
  %v1410 = vpop.f32.mrf.mxu0
  %v1411 = vadd.f32 0.0, %v1410
  %v1412 = vpop.f32.mrf.mxu0
  %v1413 = vpop.f32.mrf.mxu0
  %v1414 = vadd.f32 0.0, %v1413
  %v1415 = vpop.f32.mrf.mxu0
  %1416 = vmatprep.mubr.bf16.mxu0 0
  %1417 = vmatmul.mubr.bf16.gmra.mxu0 %v956
  %v1418 = vpop.f32.mrf.mxu0
  %v1419 = vadd.f32 0.0, %v1418
  %v1420 = vpop.f32.mrf.mxu0
  %v1421 = vpop.f32.mrf.mxu0
  %v1422 = vadd.f32 0.0, %v1421
  %v1423 = vpop.f32.mrf.mxu0
  %1424 = vmatprep.mubr.bf16.mxu0 0
  %1425 = vmatmul.mubr.bf16.gmra.mxu0 %v959
  %v1426 = vpop.f32.mrf.mxu0
  %v1427 = vadd.f32 0.0, %v1426
  %v1428 = vpop.f32.mrf.mxu0
  %v1429 = vpop.f32.mrf.mxu0
  %v1430 = vadd.f32 0.0, %v1429
  %v1431 = vpop.f32.mrf.mxu0
  %1432 = vmatprep.mubr.bf16.mxu0 0
  %1433 = vmatmul.mubr.bf16.gmra.mxu0 %v962
  %v1434 = vpop.f32.mrf.mxu0
  %v1435 = vadd.f32 0.0, %v1434
  %v1436 = vpop.f32.mrf.mxu0
  %v1437 = vpop.f32.mrf.mxu0
  %v1438 = vadd.f32 0.0, %v1437
  %v1439 = vpop.f32.mrf.mxu0
  %1440 = vmatprep.mubr.bf16.mxu0 0
  %1441 = vmatmul.mubr.bf16.gmra.mxu0 %v965
  %v1442 = vpop.f32.mrf.mxu0
  %v1443 = vadd.f32 0.0, %v1442
  %v1444 = vpop.f32.mrf.mxu0
  %v1445 = vpop.f32.mrf.mxu0
  %v1446 = vadd.f32 0.0, %v1445
  %v1447 = vpop.f32.mrf.mxu0
  %1448 = vmatprep.mubr.bf16.mxu0 0
  %1449 = vmatmul.mubr.bf16.gmra.mxu0 %v968
  %v1450 = vpop.f32.mrf.mxu0
  %v1451 = vadd.f32 0.0, %v1450
  %v1452 = vpop.f32.mrf.mxu0
  %v1453 = vpop.f32.mrf.mxu0
  %v1454 = vadd.f32 0.0, %v1453
  %v1455 = vpop.f32.mrf.mxu0
  %1456 = vmatprep.mubr.bf16.mxu0 0
  %1457 = vmatmul.mubr.bf16.gmra.mxu0 %v971
  %v1458 = vpop.f32.mrf.mxu0
  %v1459 = vadd.f32 0.0, %v1458
  %v1460 = vpop.f32.mrf.mxu0
  %v1461 = vpop.f32.mrf.mxu0
  %v1462 = vadd.f32 0.0, %v1461
  %v1463 = vpop.f32.mrf.mxu0
  %1464 = vmatprep.mubr.bf16.mxu0 0
  %1465 = vmatmul.mubr.bf16.gmra.mxu0 %v974
  %v1466 = vpop.f32.mrf.mxu0
  %v1467 = vadd.f32 0.0, %v1466
  %v1468 = vpop.f32.mrf.mxu0
  %v1469 = vpop.f32.mrf.mxu0
  %v1470 = vadd.f32 0.0, %v1469
  %v1471 = vpop.f32.mrf.mxu0
  %1472 = vmatprep.mubr.bf16.mxu0 0
  %1473 = vmatmul.mubr.bf16.gmra.mxu0 %v977
  %v1474 = vpop.f32.mrf.mxu0
  %v1475 = vadd.f32 0.0, %v1474
  %v1476 = vpop.f32.mrf.mxu0
  %v1477 = vpop.f32.mrf.mxu0
  %v1478 = vadd.f32 0.0, %v1477
  %v1479 = vpop.f32.mrf.mxu0
  %1480 = vmatprep.mubr.bf16.mxu0 0
  %1481 = vmatmul.mubr.bf16.gmra.mxu0 %v980
  %v1482 = vpop.f32.mrf.mxu0
  %v1483 = vadd.f32 0.0, %v1482
  %v1484 = vpop.f32.mrf.mxu0
  %v1485 = vpop.f32.mrf.mxu0
  %v1486 = vadd.f32 0.0, %v1485
  %v1487 = vpop.f32.mrf.mxu0
  %1488 = vmatprep.mubr.bf16.mxu0 0
  %1489 = vmatmul.mubr.bf16.gmra.mxu0 %v983
  %v1490 = vpop.f32.mrf.mxu0
  %v1491 = vadd.f32 0.0, %v1490
  %v1492 = vpop.f32.mrf.mxu0
  %v1493 = vpop.f32.mrf.mxu0
  %v1494 = vadd.f32 0.0, %v1493
  %v1495 = vpop.f32.mrf.mxu0
  %1496 = vmatprep.mubr.bf16.mxu0 0
  %1497 = vmatmul.mubr.bf16.gmra.mxu0 %v986
  %v1498 = vpop.f32.mrf.mxu0
  %v1499 = vadd.f32 0.0, %v1498
  %v1500 = vpop.f32.mrf.mxu0
  %v1501 = vpop.f32.mrf.mxu0
  %v1502 = vadd.f32 0.0, %v1501
  %v1503 = vpop.f32.mrf.mxu0
  %1504 = vmatprep.mubr.bf16.mxu0 0
  %1505 = vmatmul.mubr.bf16.gmra.mxu0 %v989
  %v1506 = vpop.f32.mrf.mxu0
  %v1507 = vadd.f32 0.0, %v1506
  %v1508 = vpop.f32.mrf.mxu0
  %v1509 = vpop.f32.mrf.mxu0
  %v1510 = vadd.f32 0.0, %v1509
  %v1511 = vpop.f32.mrf.mxu0
  %1512 = vmatprep.mubr.bf16.mxu0 0
  %1513 = vmatmul.mubr.bf16.gmra.mxu0 %v992
  %v1514 = vpop.f32.mrf.mxu0
  %v1515 = vadd.f32 0.0, %v1514
  %v1516 = vpop.f32.mrf.mxu0
  %v1517 = vpop.f32.mrf.mxu0
  %v1518 = vadd.f32 0.0, %v1517
  %v1519 = vpop.f32.mrf.mxu0
  %1520 = vmatprep.mubr.bf16.mxu0 0
  %1521 = vmatmul.mubr.bf16.gmra.mxu0 %v995
  %v1522 = vpop.f32.mrf.mxu0
  %v1523 = vadd.f32 0.0, %v1522
  %v1524 = vpop.f32.mrf.mxu0
  %v1525 = vpop.f32.mrf.mxu0
  %v1526 = vadd.f32 0.0, %v1525
  %v1527 = vpop.f32.mrf.mxu0
  %1528 = vmatprep.mubr.bf16.mxu0 0
  %1529 = vmatmul.mubr.bf16.gmra.mxu0 %v998
  %v1530 = vpop.f32.mrf.mxu0
  %v1531 = vadd.f32 0.0, %v1530
  %v1532 = vpop.f32.mrf.mxu0
  %v1533 = vpop.f32.mrf.mxu0
  %v1534 = vadd.f32 0.0, %v1533
  %v1535 = vpop.f32.mrf.mxu0
  %1536 = vmatprep.mubr.bf16.mxu0 0
  %1537 = vmatmul.mubr.bf16.gmra.mxu0 %v1001
  %v1538 = vpop.f32.mrf.mxu0
  %v1539 = vadd.f32 0.0, %v1538
  %v1540 = vpop.f32.mrf.mxu0
  %v1541 = vpop.f32.mrf.mxu0
  %v1542 = vadd.f32 0.0, %v1541
  %v1543 = vpop.f32.mrf.mxu0
  %1544 = vmatprep.mubr.bf16.mxu0 0
  %1545 = vmatmul.mubr.bf16.gmra.mxu0 %v1004
  %v1546 = vpop.f32.mrf.mxu0
  %v1547 = vadd.f32 0.0, %v1546
  %v1548 = vpop.f32.mrf.mxu0
  %v1549 = vpop.f32.mrf.mxu0
  %v1550 = vadd.f32 0.0, %v1549
  %v1551 = vpop.f32.mrf.mxu0
  %1552 = vmatprep.mubr.bf16.mxu0 0
  %1553 = vmatmul.mubr.bf16.gmra.mxu0 %v1007
  %v1554 = vpop.f32.mrf.mxu0
  %v1555 = vadd.f32 0.0, %v1554
  %v1556 = vpop.f32.mrf.mxu0
  %v1557 = vpop.f32.mrf.mxu0
  %v1558 = vadd.f32 0.0, %v1557
  %v1559 = vpop.f32.mrf.mxu0
  %1560 = vmatprep.mubr.bf16.mxu0 0
  %1561 = vmatmul.mubr.bf16.gmra.mxu0 %v1010
  %v1562 = vpop.f32.mrf.mxu0
  %v1563 = vadd.f32 0.0, %v1562
  %v1564 = vpop.f32.mrf.mxu0
  %v1565 = vpop.f32.mrf.mxu0
  %v1566 = vadd.f32 0.0, %v1565
  %v1567 = vpop.f32.mrf.mxu0
  %1568 = vmatprep.mubr.bf16.mxu0 0
  %1569 = vmatmul.mubr.bf16.gmra.mxu0 %v1013
  %v1570 = vpop.f32.mrf.mxu0
  %v1571 = vadd.f32 0.0, %v1570
  %v1572 = vpop.f32.mrf.mxu0
  %v1573 = vpop.f32.mrf.mxu0
  %v1574 = vadd.f32 0.0, %v1573
  %v1575 = vpop.f32.mrf.mxu0
  %1576 = vmatprep.mubr.bf16.mxu0 0
  %1577 = vmatmul.mubr.bf16.gmra.mxu0 %v1016
  %v1578 = vpop.f32.mrf.mxu0
  %v1579 = vadd.f32 0.0, %v1578
  %v1580 = vpop.f32.mrf.mxu0
  %v1581 = vpop.f32.mrf.mxu0
  %v1582 = vadd.f32 0.0, %v1581
  %v1583 = vpop.f32.mrf.mxu0
  %1584 = vmatprep.mubr.bf16.mxu0 0
  %1585 = vmatmul.mubr.bf16.gmra.mxu0 %v1019
  %v1586 = vpop.f32.mrf.mxu0
  %v1587 = vadd.f32 0.0, %v1586
  %v1588 = vpop.f32.mrf.mxu0
  %v1589 = vpop.f32.mrf.mxu0
  %v1590 = vadd.f32 0.0, %v1589
  %v1591 = vpop.f32.mrf.mxu0
  %1592 = vmatprep.mubr.bf16.mxu0 0
  %1593 = vmatmul.mubr.bf16.gmra.mxu0 %v1022
  %v1594 = vpop.f32.mrf.mxu0
  %v1595 = vadd.f32 0.0, %v1594
  %v1596 = vpop.f32.mrf.mxu0
  %v1597 = vpop.f32.mrf.mxu0
  %v1598 = vadd.f32 0.0, %v1597
  %v1599 = vpop.f32.mrf.mxu0
  %1600 = vmatprep.mubr.bf16.mxu0 0
  %1601 = vmatmul.mubr.bf16.gmra.mxu0 %v1025
  %v1602 = vpop.f32.mrf.mxu0
  %v1603 = vadd.f32 0.0, %v1602
  %v1604 = vpop.f32.mrf.mxu0
  %v1605 = vpop.f32.mrf.mxu0
  %v1606 = vadd.f32 0.0, %v1605
  %v1607 = vpop.f32.mrf.mxu0
  %1608 = vmatprep.mubr.bf16.mxu0 0
  %1609 = vmatmul.mubr.bf16.gmra.mxu0 %v1028
  %v1610 = vpop.f32.mrf.mxu0
  %v1611 = vadd.f32 0.0, %v1610
  %v1612 = vpop.f32.mrf.mxu0
  %v1613 = vpop.f32.mrf.mxu0
  %v1614 = vadd.f32 0.0, %v1613
  %v1615 = vpop.f32.mrf.mxu0
  %1616 = vmatprep.mubr.bf16.mxu0 0
  %1617 = vmatmul.mubr.bf16.gmra.mxu0 %v1031
  %v1618 = vpop.f32.mrf.mxu0
  %v1619 = vadd.f32 0.0, %v1618
  %v1620 = vpop.f32.mrf.mxu0
  %v1621 = vpop.f32.mrf.mxu0
  %v1622 = vadd.f32 0.0, %v1621
  %v1623 = vpop.f32.mrf.mxu0
  %1624 = vmatprep.mubr.bf16.mxu0 0
  %1625 = vmatmul.mubr.bf16.gmra.mxu0 %v1034
  %v1626 = vpop.f32.mrf.mxu0
  %v1627 = vadd.f32 0.0, %v1626
  %v1628 = vpop.f32.mrf.mxu0
  %v1629 = vpop.f32.mrf.mxu0
  %v1630 = vadd.f32 0.0, %v1629
  %v1631 = vpop.f32.mrf.mxu0
  %1632 = vmatprep.mubr.bf16.mxu0 0
  %1633 = vmatmul.mubr.bf16.gmra.mxu0 %v1037
  %v1634 = vpop.f32.mrf.mxu0
  %v1635 = vadd.f32 0.0, %v1634
  %v1636 = vpop.f32.mrf.mxu0
  %v1637 = vpop.f32.mrf.mxu0
  %v1638 = vadd.f32 0.0, %v1637
  %v1639 = vpop.f32.mrf.mxu0
  %1640 = vmatprep.mubr.bf16.mxu0 0
  %1641 = vmatmul.mubr.bf16.gmra.mxu0 %v1040
  %v1642 = vpop.f32.mrf.mxu0
  %v1643 = vadd.f32 0.0, %v1642
  %v1644 = vpop.f32.mrf.mxu0
  %v1645 = vpop.f32.mrf.mxu0
  %v1646 = vadd.f32 0.0, %v1645
  %v1647 = vpop.f32.mrf.mxu0
  %1648 = vmatprep.mubr.bf16.mxu0 0
  %1649 = vmatmul.mubr.bf16.gmra.mxu0 %v1043
  %v1650 = vpop.f32.mrf.mxu0
  %v1651 = vadd.f32 0.0, %v1650
  %v1652 = vpop.f32.mrf.mxu0
  %v1653 = vpop.f32.mrf.mxu0
  %v1654 = vadd.f32 0.0, %v1653
  %v1655 = vpop.f32.mrf.mxu0
  %1656 = vmatprep.mubr.bf16.mxu0 0
  %1657 = vmatmul.mubr.bf16.gmra.mxu0 %v1046
  %v1658 = vpop.f32.mrf.mxu0
  %v1659 = vadd.f32 0.0, %v1658
  %v1660 = vpop.f32.mrf.mxu0
  %v1661 = vpop.f32.mrf.mxu0
  %v1662 = vadd.f32 0.0, %v1661
  %v1663 = vpop.f32.mrf.mxu0
  %1664 = vmatprep.mubr.bf16.mxu0 0
  %1665 = vmatmul.mubr.bf16.gmra.mxu0 %v1049
  %v1666 = vpop.f32.mrf.mxu0
  %v1667 = vadd.f32 0.0, %v1666
  %v1668 = vpop.f32.mrf.mxu0
  %v1669 = vpop.f32.mrf.mxu0
  %v1670 = vadd.f32 0.0, %v1669
  %v1671 = vpop.f32.mrf.mxu0
  %1672 = vmatprep.mubr.bf16.mxu0 0
  %1673 = vmatmul.mubr.bf16.gmra.mxu0 %v1052
  %v1674 = vpop.f32.mrf.mxu0
  %v1675 = vadd.f32 0.0, %v1674
  %v1676 = vpop.f32.mrf.mxu0
  %v1677 = vpop.f32.mrf.mxu0
  %v1678 = vadd.f32 0.0, %v1677
  %v1679 = vpop.f32.mrf.mxu0
  %1680 = vmatprep.mubr.bf16.mxu0 0
  %1681 = vmatmul.mubr.bf16.gmra.mxu0 %v1055
  %v1682 = vpop.f32.mrf.mxu0
  %v1683 = vadd.f32 0.0, %v1682
  %v1684 = vpop.f32.mrf.mxu0
  %v1685 = vpop.f32.mrf.mxu0
  %v1686 = vadd.f32 0.0, %v1685
  %v1687 = vpop.f32.mrf.mxu0
  %1688 = vmatprep.mubr.bf16.mxu0 0
  %1689 = vmatmul.mubr.bf16.gmra.mxu0 %v1058
  %v1690 = vpop.f32.mrf.mxu0
  %v1691 = vadd.f32 0.0, %v1690
  %v1692 = vpop.f32.mrf.mxu0
  %v1693 = vpop.f32.mrf.mxu0
  %v1694 = vadd.f32 0.0, %v1693
  %v1695 = vpop.f32.mrf.mxu0
  %1696 = vmatprep.mubr.bf16.mxu0 0
  %1697 = vmatmul.mubr.bf16.gmra.mxu0 %v1061
  %v1698 = vpop.f32.mrf.mxu0
  %v1699 = vadd.f32 0.0, %v1698
  %v1700 = vpop.f32.mrf.mxu0
  %v1701 = vpop.f32.mrf.mxu0
  %v1702 = vadd.f32 0.0, %v1701
  %v1703 = vpop.f32.mrf.mxu0
  %1704 = vmatprep.mubr.bf16.mxu0 0
  %1705 = vmatmul.mubr.bf16.gmra.mxu0 %v1064
  %v1706 = vpop.f32.mrf.mxu0
  %v1707 = vadd.f32 0.0, %v1706
  %v1708 = vpop.f32.mrf.mxu0
  %v1709 = vpop.f32.mrf.mxu0
  %v1710 = vadd.f32 0.0, %v1709
  %v1711 = vpop.f32.mrf.mxu0
  %1712 = vmatprep.mubr.bf16.mxu0 0
  %1713 = vmatmul.mubr.bf16.gmra.mxu0 %v1067
  %v1714 = vpop.f32.mrf.mxu0
  %v1715 = vadd.f32 0.0, %v1714
  %v1716 = vpop.f32.mrf.mxu0
  %v1717 = vpop.f32.mrf.mxu0
  %v1718 = vadd.f32 0.0, %v1717
  %v1719 = vpop.f32.mrf.mxu0
  %1720 = vmatprep.mubr.bf16.mxu0 0
  %1721 = vmatmul.mubr.bf16.gmra.mxu0 %v1070
  %v1722 = vpop.f32.mrf.mxu0
  %v1723 = vadd.f32 0.0, %v1722
  %v1724 = vpop.f32.mrf.mxu0
  %v1725 = vpop.f32.mrf.mxu0
  %v1726 = vadd.f32 0.0, %v1725
  %v1727 = vpop.f32.mrf.mxu0
  %1728 = vmatprep.mubr.bf16.mxu0 0
  %1729 = vmatmul.mubr.bf16.gmra.mxu0 %v1073
  %v1730 = vpop.f32.mrf.mxu0
  %v1731 = vadd.f32 0.0, %v1730
  %v1732 = vpop.f32.mrf.mxu0
  %v1733 = vpop.f32.mrf.mxu0
  %v1734 = vadd.f32 0.0, %v1733
  %v1735 = vpop.f32.mrf.mxu0
  %1736 = vmatprep.mubr.bf16.mxu0 0
  %1737 = vmatmul.mubr.bf16.gmra.mxu0 %v1076
  %v1738 = vpop.f32.mrf.mxu0
  %v1739 = vadd.f32 0.0, %v1738
  %v1740 = vpop.f32.mrf.mxu0
  %v1741 = vpop.f32.mrf.mxu0
  %v1742 = vadd.f32 0.0, %v1741
  %v1743 = vpop.f32.mrf.mxu0
  %1744 = vmatprep.mubr.bf16.mxu0 0
  %1745 = vmatmul.mubr.bf16.gmra.mxu0 %v1079
  %v1746 = vpop.f32.mrf.mxu0
  %v1747 = vadd.f32 0.0, %v1746
  %v1748 = vpop.f32.mrf.mxu0
  %v1749 = vpop.f32.mrf.mxu0
  %v1750 = vadd.f32 0.0, %v1749
  %v1751 = vpop.f32.mrf.mxu0
  %1752 = vmatprep.mubr.bf16.mxu0 0
  %1753 = vmatmul.mubr.bf16.gmra.mxu0 %v1082
  %v1754 = vpop.f32.mrf.mxu0
  %v1755 = vadd.f32 0.0, %v1754
  %v1756 = vpop.f32.mrf.mxu0
  %v1757 = vpop.f32.mrf.mxu0
  %v1758 = vadd.f32 0.0, %v1757
  %v1759 = vpop.f32.mrf.mxu0
  %1760 = vmatprep.mubr.bf16.mxu0 0
  %1761 = vmatmul.mubr.bf16.gmra.mxu0 %v1085
  %v1762 = vpop.f32.mrf.mxu0
  %v1763 = vadd.f32 0.0, %v1762
  %v1764 = vpop.f32.mrf.mxu0
  %v1765 = vpop.f32.mrf.mxu0
  %v1766 = vadd.f32 0.0, %v1765
  %v1767 = vpop.f32.mrf.mxu0
  %1768 = vmatprep.mubr.bf16.mxu0 0
  %1769 = vmatmul.mubr.bf16.gmra.mxu0 %v1088
  %v1770 = vpop.f32.mrf.mxu0
  %v1771 = vadd.f32 0.0, %v1770
  %v1772 = vpop.f32.mrf.mxu0
  %v1773 = vpop.f32.mrf.mxu0
  %v1774 = vadd.f32 0.0, %v1773
  %v1775 = vpop.f32.mrf.mxu0
  %1776 = vmatprep.mubr.bf16.mxu0 0
  %1777 = vmatmul.mubr.bf16.gmra.mxu0 %v1091
  %v1778 = vpop.f32.mrf.mxu0
  %v1779 = vadd.f32 0.0, %v1778
  %v1780 = vpop.f32.mrf.mxu0
  %v1781 = vpop.f32.mrf.mxu0
  %v1782 = vadd.f32 0.0, %v1781
  %v1783 = vpop.f32.mrf.mxu0
  %1784 = vmatprep.mubr.bf16.mxu0 0
  %1785 = vmatmul.mubr.bf16.gmra.mxu0 %v1094
  %v1786 = vpop.f32.mrf.mxu0
  %v1787 = vadd.f32 0.0, %v1786
  %v1788 = vpop.f32.mrf.mxu0
  %v1789 = vpop.f32.mrf.mxu0
  %v1790 = vadd.f32 0.0, %v1789
  %v1791 = vpop.f32.mrf.mxu0
  %1792 = vmatprep.mubr.bf16.mxu0 0
  %1793 = vmatmul.mubr.bf16.gmra.mxu0 %v1097
  %v1794 = vpop.f32.mrf.mxu0
  %v1795 = vadd.f32 0.0, %v1794
  %v1796 = vpop.f32.mrf.mxu0
  %v1797 = vpop.f32.mrf.mxu0
  %v1798 = vadd.f32 0.0, %v1797
  %v1799 = vpop.f32.mrf.mxu0
  %1800 = vmatprep.mubr.bf16.mxu0 0
  %1801 = vmatmul.mubr.bf16.gmra.mxu0 %v1100
  %v1802 = vpop.f32.mrf.mxu0
  %v1803 = vadd.f32 0.0, %v1802
  %v1804 = vpop.f32.mrf.mxu0
  %v1805 = vpop.f32.mrf.mxu0
  %v1806 = vadd.f32 0.0, %v1805
  %v1807 = vpop.f32.mrf.mxu0
  %1808 = vmatprep.mubr.bf16.mxu0 0
  %1809 = vmatmul.mubr.bf16.gmra.mxu0 %v1103
  %v1810 = vpop.f32.mrf.mxu0
  %v1811 = vadd.f32 0.0, %v1810
  %v1812 = vpop.f32.mrf.mxu0
  %v1813 = vpop.f32.mrf.mxu0
  %v1814 = vadd.f32 0.0, %v1813
  %v1815 = vpop.f32.mrf.mxu0
  %1816 = vmatprep.mubr.bf16.mxu0 0
  %1817 = vmatmul.mubr.bf16.gmra.mxu0 %v1106
  %v1818 = vpop.f32.mrf.mxu0
  %v1819 = vadd.f32 0.0, %v1818
  %v1820 = vpop.f32.mrf.mxu0
  %v1821 = vpop.f32.mrf.mxu0
  %v1822 = vadd.f32 0.0, %v1821
  %v1823 = vpop.f32.mrf.mxu0
  %1824 = vmatprep.mubr.bf16.mxu0 0
  %1825 = vmatmul.mubr.bf16.gmra.mxu0 %v1109
  %v1826 = vpop.f32.mrf.mxu0
  %v1827 = vadd.f32 0.0, %v1826
  %v1828 = vpop.f32.mrf.mxu0
  %v1829 = vpop.f32.mrf.mxu0
  %v1830 = vadd.f32 0.0, %v1829
  %v1831 = vpop.f32.mrf.mxu0
  %1832 = vmatprep.mubr.bf16.mxu0 0
  %1833 = vmatmul.mubr.bf16.gmra.mxu0 %v1112
  %v1834 = vpop.f32.mrf.mxu0
  %v1835 = vadd.f32 0.0, %v1834
  %v1836 = vpop.f32.mrf.mxu0
  %v1837 = vpop.f32.mrf.mxu0
  %v1838 = vadd.f32 0.0, %v1837
  %v1839 = vpop.f32.mrf.mxu0
  %1840 = vmatprep.mubr.bf16.mxu0 0
  %1841 = vmatmul.mubr.bf16.gmra.mxu0 %v1115
  %v1842 = vpop.f32.mrf.mxu0
  %v1843 = vadd.f32 0.0, %v1842
  %v1844 = vpop.f32.mrf.mxu0
  %v1845 = vpop.f32.mrf.mxu0
  %v1846 = vadd.f32 0.0, %v1845
  %v1847 = vpop.f32.mrf.mxu0
  %1848 = vmatprep.mubr.bf16.mxu0 0
  %1849 = vmatmul.mubr.bf16.gmra.mxu0 %v1118
  %v1850 = vpop.f32.mrf.mxu0
  %v1851 = vadd.f32 0.0, %v1850
  %v1852 = vpop.f32.mrf.mxu0
  %v1853 = vpop.f32.mrf.mxu0
  %v1854 = vadd.f32 0.0, %v1853
  %v1855 = vpop.f32.mrf.mxu0
  %1856 = vmatprep.mubr.bf16.mxu0 0
  %1857 = vmatmul.mubr.bf16.gmra.mxu0 %v1121
  %v1858 = vpop.f32.mrf.mxu0
  %v1859 = vadd.f32 0.0, %v1858
  %v1860 = vpop.f32.mrf.mxu0
  %v1861 = vpop.f32.mrf.mxu0
  %v1862 = vadd.f32 0.0, %v1861
  %v1863 = vpop.f32.mrf.mxu0
  %1864 = vmatprep.mubr.bf16.mxu0 0
  %1865 = vmatmul.mubr.bf16.gmra.mxu0 %v1124
  %v1866 = vpop.f32.mrf.mxu0
  %v1867 = vadd.f32 0.0, %v1866
  %v1868 = vpop.f32.mrf.mxu0
  %v1869 = vpop.f32.mrf.mxu0
  %v1870 = vadd.f32 0.0, %v1869
  %v1871 = vpop.f32.mrf.mxu0
  %1872 = vmatprep.mubr.bf16.mxu0 0
  %1873 = vmatmul.mubr.bf16.gmra.mxu0 %v1127
  %v1874 = vpop.f32.mrf.mxu0
  %v1875 = vadd.f32 0.0, %v1874
  %v1876 = vpop.f32.mrf.mxu0
  %v1877 = vpop.f32.mrf.mxu0
  %v1878 = vadd.f32 0.0, %v1877
  %v1879 = vpop.f32.mrf.mxu0
  %1880 = vmatprep.mubr.bf16.mxu0 0
  %1881 = vmatmul.mubr.bf16.gmra.mxu0 %v1130
  %v1882 = vpop.f32.mrf.mxu0
  %v1883 = vadd.f32 0.0, %v1882
  %v1884 = vpop.f32.mrf.mxu0
  %v1885 = vpop.f32.mrf.mxu0
  %v1886 = vadd.f32 0.0, %v1885
  %v1887 = vpop.f32.mrf.mxu0
  %1888 = vmatprep.mubr.bf16.mxu0 0
  %1889 = vmatmul.mubr.bf16.gmra.mxu0 %v1133
  %v1890 = vpop.f32.mrf.mxu0
  %v1891 = vadd.f32 0.0, %v1890
  %v1892 = vpop.f32.mrf.mxu0
  %v1893 = vpop.f32.mrf.mxu0
  %v1894 = vadd.f32 0.0, %v1893
  %v1895 = vpop.f32.mrf.mxu0
  %1896 = vmatprep.mubr.bf16.mxu0 0
  %1897 = vmatmul.mubr.bf16.gmra.mxu0 %v1136
  %v1898 = vpop.f32.mrf.mxu0
  %v1899 = vadd.f32 0.0, %v1898
  %v1900 = vpop.f32.mrf.mxu0
  %v1901 = vpop.f32.mrf.mxu0
  %v1902 = vadd.f32 0.0, %v1901
  %v1903 = vpop.f32.mrf.mxu0
  %1904 = vmatprep.mubr.bf16.mxu0 0
  %1905 = vmatmul.mubr.bf16.gmra.mxu0 %v1139
  %v1906 = vpop.f32.mrf.mxu0
  %v1907 = vadd.f32 0.0, %v1906
  %v1908 = vpop.f32.mrf.mxu0
  %v1909 = vpop.f32.mrf.mxu0
  %v1910 = vadd.f32 0.0, %v1909
  %v1911 = vpop.f32.mrf.mxu0
  %1912 = vmatprep.mubr.bf16.mxu0 0
  %1913 = vmatmul.mubr.bf16.gmra.mxu0 %v1142
  %v1914 = vpop.f32.mrf.mxu0
  %v1915 = vadd.f32 0.0, %v1914
  %v1916 = vpop.f32.mrf.mxu0
  %v1917 = vpop.f32.mrf.mxu0
  %v1918 = vadd.f32 0.0, %v1917
  %v1919 = vpop.f32.mrf.mxu0
  %1920 = vmatprep.mubr.bf16.mxu0 0
  %1921 = vmatmul.mubr.bf16.gmra.mxu0 %v1145
  %v1922 = vpop.f32.mrf.mxu0
  %v1923 = vadd.f32 0.0, %v1922
  %v1924 = vpop.f32.mrf.mxu0
  %v1925 = vpop.f32.mrf.mxu0
  %v1926 = vadd.f32 0.0, %v1925
  %v1927 = vpop.f32.mrf.mxu0
  %1928 = vmatprep.mubr.bf16.mxu0 0
  %1929 = vmatmul.mubr.bf16.gmra.mxu0 %v1148
  %v1930 = vpop.f32.mrf.mxu0
  %v1931 = vadd.f32 0.0, %v1930
  %v1932 = vpop.f32.mrf.mxu0
  %v1933 = vpop.f32.mrf.mxu0
  %v1934 = vadd.f32 0.0, %v1933
  %v1935 = vpop.f32.mrf.mxu0
  %1936 = vmatprep.mubr.bf16.mxu0 0
  %1937 = vmatmul.mubr.bf16.gmra.mxu0 %v1151
  %v1938 = vpop.f32.mrf.mxu0
  %v1939 = vadd.f32 0.0, %v1938
  %v1940 = vpop.f32.mrf.mxu0
  %v1941 = vpop.f32.mrf.mxu0
  %v1942 = vadd.f32 0.0, %v1941
  %v1943 = vpop.f32.mrf.mxu0
  %1944 = vmatprep.mubr.bf16.mxu0 0
  %1945 = vmatmul.mubr.bf16.gmra.mxu0 %v1154
  %v1946 = vpop.f32.mrf.mxu0
  %v1947 = vadd.f32 0.0, %v1946
  %v1948 = vpop.f32.mrf.mxu0
  %v1949 = vpop.f32.mrf.mxu0
  %v1950 = vadd.f32 0.0, %v1949
  %v1951 = vpop.f32.mrf.mxu0
  %1952 = vmatprep.mubr.bf16.mxu0 0
  %1953 = vmatmul.mubr.bf16.gmra.mxu0 %v1157
  %v1954 = vpop.f32.mrf.mxu0
  %v1955 = vadd.f32 0.0, %v1954
  %v1956 = vpop.f32.mrf.mxu0
  %v1957 = vpop.f32.mrf.mxu0
  %v1958 = vadd.f32 0.0, %v1957
  %v1959 = vpop.f32.mrf.mxu0
  %1960 = vmatprep.mubr.bf16.mxu0 0
  %1961 = vmatmul.mubr.bf16.gmra.mxu0 %v1160
  %v1962 = vpop.f32.mrf.mxu0
  %v1963 = vadd.f32 0.0, %v1962
  %v1964 = vpop.f32.mrf.mxu0
  %v1965 = vpop.f32.mrf.mxu0
  %v1966 = vadd.f32 0.0, %v1965
  %v1967 = vpop.f32.mrf.mxu0
  %1968 = vmatprep.mubr.bf16.mxu0 0
  %1969 = vmatmul.mubr.bf16.gmra.mxu0 %v1163
  %v1970 = vpop.f32.mrf.mxu0
  %v1971 = vadd.f32 0.0, %v1970
  %v1972 = vpop.f32.mrf.mxu0
  %v1973 = vpop.f32.mrf.mxu0
  %v1974 = vadd.f32 0.0, %v1973
  %v1975 = vpop.f32.mrf.mxu0
  %1976 = vmatprep.mubr.bf16.mxu0 0
  %1977 = vmatmul.mubr.bf16.gmra.mxu0 %v1166
  %v1978 = vpop.f32.mrf.mxu0
  %v1979 = vadd.f32 0.0, %v1978
  %v1980 = vpop.f32.mrf.mxu0
  %v1981 = vpop.f32.mrf.mxu0
  %v1982 = vadd.f32 0.0, %v1981
  %v1983 = vpop.f32.mrf.mxu0
  %1984 = vmatprep.mubr.bf16.mxu0 0
  %1985 = vmatmul.mubr.bf16.gmra.mxu0 %v1169
  %v1986 = vpop.f32.mrf.mxu0
  %v1987 = vadd.f32 0.0, %v1986
  %v1988 = vpop.f32.mrf.mxu0
  %v1989 = vpop.f32.mrf.mxu0
  %v1990 = vadd.f32 0.0, %v1989
  %v1991 = vpop.f32.mrf.mxu0
  %1992 = vmatprep.mubr.bf16.mxu0 0
  %1993 = vmatmul.mubr.bf16.gmra.mxu0 %v1172
  %v1994 = vpop.f32.mrf.mxu0
  %v1995 = vadd.f32 0.0, %v1994
  %v1996 = vpop.f32.mrf.mxu0
  %v1997 = vpop.f32.mrf.mxu0
  %v1998 = vadd.f32 0.0, %v1997
  %v1999 = vpop.f32.mrf.mxu0
  %2000 = vmatprep.mubr.bf16.mxu0 0
  %2001 = vmatmul.mubr.bf16.gmra.mxu0 %v1175
  %v2002 = vpop.f32.mrf.mxu0
  %v2003 = vadd.f32 0.0, %v2002
  %v2004 = vpop.f32.mrf.mxu0
  %v2005 = vpop.f32.mrf.mxu0
  %v2006 = vadd.f32 0.0, %v2005
  %v2007 = vpop.f32.mrf.mxu0
  %2008 = vmatprep.mubr.bf16.mxu0 0
  %2009 = vmatmul.mubr.bf16.gmra.mxu0 %v1178
  %v2010 = vpop.f32.mrf.mxu0
  %v2011 = vadd.f32 0.0, %v2010
  %v2012 = vpop.f32.mrf.mxu0
  %v2013 = vpop.f32.mrf.mxu0
  %v2014 = vadd.f32 0.0, %v2013
  %v2015 = vpop.f32.mrf.mxu0
  %2016 = vmatprep.mubr.bf16.mxu0 0
  %2017 = vmatmul.mubr.bf16.gmra.mxu0 %v1181
  %v2018 = vpop.f32.mrf.mxu0
  %v2019 = vadd.f32 0.0, %v2018
  %v2020 = vpop.f32.mrf.mxu0
  %v2021 = vpop.f32.mrf.mxu0
  %v2022 = vadd.f32 0.0, %v2021
  %v2023 = vpop.f32.mrf.mxu0
  %2024 = vmatprep.mubr.bf16.mxu0 0
  %2025 = vmatmul.mubr.bf16.gmra.mxu0 %v1184
  %v2026 = vpop.f32.mrf.mxu0
  %v2027 = vadd.f32 0.0, %v2026
  %v2028 = vpop.f32.mrf.mxu0
  %v2029 = vpop.f32.mrf.mxu0
  %v2030 = vadd.f32 0.0, %v2029
  %v2031 = vpop.f32.mrf.mxu0
  %2032 = vmatprep.mubr.bf16.mxu0 0
  %2033 = vmatmul.mubr.bf16.gmra.mxu0 %v1187
  %v2034 = vpop.f32.mrf.mxu0
  %v2035 = vadd.f32 0.0, %v2034
  %v2036 = vpop.f32.mrf.mxu0
  %v2037 = vpop.f32.mrf.mxu0
  %v2038 = vadd.f32 0.0, %v2037
  %v2039 = vpop.f32.mrf.mxu0
  %2040 = vmatprep.mubr.bf16.mxu0 0
  %2041 = vmatmul.mubr.bf16.gmra.mxu0 %v1190
  %v2042 = vpop.f32.mrf.mxu0
  %v2043 = vadd.f32 0.0, %v2042
  %v2044 = vpop.f32.mrf.mxu0
  %v2045 = vpop.f32.mrf.mxu0
  %v2046 = vadd.f32 0.0, %v2045
  %v2047 = vpop.f32.mrf.mxu0
  %2048 = vmatprep.mubr.bf16.mxu0 0
  %2049 = vmatmul.mubr.bf16.gmra.mxu0 %v1193
  %v2050 = vpop.f32.mrf.mxu0
  %v2051 = vadd.f32 0.0, %v2050
  %v2052 = vpop.f32.mrf.mxu0
  %v2053 = vpop.f32.mrf.mxu0
  %v2054 = vadd.f32 0.0, %v2053
  %v2055 = vpop.f32.mrf.mxu0
  %2056 = vmatprep.mubr.bf16.mxu0 0
  %2057 = vmatmul.mubr.bf16.gmra.mxu0 %v1196
  %v2058 = vpop.f32.mrf.mxu0
  %v2059 = vadd.f32 0.0, %v2058
  %v2060 = vpop.f32.mrf.mxu0
  %v2061 = vpop.f32.mrf.mxu0
  %v2062 = vadd.f32 0.0, %v2061
  %v2063 = vpop.f32.mrf.mxu0
  %2064 = vmatprep.mubr.bf16.mxu0 0
  %2065 = vmatmul.mubr.bf16.gmra.mxu0 %v1199
  %v2066 = vpop.f32.mrf.mxu0
  %v2067 = vadd.f32 0.0, %v2066
  %v2068 = vpop.f32.mrf.mxu0
  %v2069 = vpop.f32.mrf.mxu0
  %v2070 = vadd.f32 0.0, %v2069
  %v2071 = vpop.f32.mrf.mxu0
  %2072 = vmatprep.mubr.bf16.mxu0 0
  %2073 = vmatmul.mubr.bf16.gmra.mxu0 %v1202
  %v2074 = vpop.f32.mrf.mxu0
  %v2075 = vadd.f32 0.0, %v2074
  %v2076 = vpop.f32.mrf.mxu0
  %v2077 = vpop.f32.mrf.mxu0
  %v2078 = vadd.f32 0.0, %v2077
  %v2079 = vpop.f32.mrf.mxu0
  %2080 = vmatprep.mubr.bf16.mxu0 0
  %2081 = vmatmul.mubr.bf16.gmra.mxu0 %v1205
  %v2082 = vpop.f32.mrf.mxu0
  %v2083 = vadd.f32 0.0, %v2082
  %v2084 = vpop.f32.mrf.mxu0
  %v2085 = vpop.f32.mrf.mxu0
  %v2086 = vadd.f32 0.0, %v2085
  %v2087 = vpop.f32.mrf.mxu0
  %2088 = vmatprep.mubr.bf16.mxu0 0
  %2089 = vmatmul.mubr.bf16.gmra.mxu0 %v1208
  %v2090 = vpop.f32.mrf.mxu0
  %v2091 = vadd.f32 0.0, %v2090
  %v2092 = vpop.f32.mrf.mxu0
  %v2093 = vpop.f32.mrf.mxu0
  %v2094 = vadd.f32 0.0, %v2093
  %v2095 = vpop.f32.mrf.mxu0
  %2096 = vmatprep.mubr.bf16.mxu0 0
  %2097 = vmatmul.mubr.bf16.gmra.mxu0 %v1211
  %v2098 = vpop.f32.mrf.mxu0
  %v2099 = vadd.f32 0.0, %v2098
  %v2100 = vpop.f32.mrf.mxu0
  %v2101 = vpop.f32.mrf.mxu0
  %v2102 = vadd.f32 0.0, %v2101
  %v2103 = vpop.f32.mrf.mxu0
  %2104 = vmatprep.mubr.bf16.mxu0 0
  %2105 = vmatmul.mubr.bf16.gmra.mxu0 %v1214
  %v2106 = vpop.f32.mrf.mxu0
  %v2107 = vadd.f32 0.0, %v2106
  %v2108 = vpop.f32.mrf.mxu0
  %v2109 = vpop.f32.mrf.mxu0
  %v2110 = vadd.f32 0.0, %v2109
  %v2111 = vpop.f32.mrf.mxu0
  %2112 = vmatprep.mubr.bf16.mxu0 0
  %2113 = vmatmul.mubr.bf16.gmra.mxu0 %v1217
  %v2114 = vpop.f32.mrf.mxu0
  %v2115 = vadd.f32 0.0, %v2114
  %v2116 = vpop.f32.mrf.mxu0
  %v2117 = vpop.f32.mrf.mxu0
  %v2118 = vadd.f32 0.0, %v2117
  %v2119 = vpop.f32.mrf.mxu0
  %2120 = vmatprep.mubr.bf16.mxu0 0
  %2121 = vmatmul.mubr.bf16.gmra.mxu0 %v1220
  %v2122 = vpop.f32.mrf.mxu0
  %v2123 = vadd.f32 0.0, %v2122
  %v2124 = vpop.f32.mrf.mxu0
  %v2125 = vpop.f32.mrf.mxu0
  %v2126 = vadd.f32 0.0, %v2125
  %v2127 = vpop.f32.mrf.mxu0
  %2128 = vmatprep.mubr.bf16.mxu0 0
  %2129 = vmatmul.mubr.bf16.gmra.mxu0 %v1223
  %v2130 = vpop.f32.mrf.mxu0
  %v2131 = vadd.f32 0.0, %v2130
  %v2132 = vpop.f32.mrf.mxu0
  %v2133 = vpop.f32.mrf.mxu0
  %v2134 = vadd.f32 0.0, %v2133
  %v2135 = vpop.f32.mrf.mxu0
  %2136 = vmatprep.mubr.bf16.mxu0 0
  %2137 = vmatmul.mubr.bf16.gmra.mxu0 %v1226
  %v2138 = vpop.f32.mrf.mxu0
  %v2139 = vadd.f32 0.0, %v2138
  %v2140 = vpop.f32.mrf.mxu0
  %v2141 = vpop.f32.mrf.mxu0
  %v2142 = vadd.f32 0.0, %v2141
  %v2143 = vpop.f32.mrf.mxu0
  %2144 = vmatprep.mubr.bf16.mxu0 0
  %2145 = vmatmul.mubr.bf16.gmra.mxu0 %v1229
  %v2146 = vpop.f32.mrf.mxu0
  %v2147 = vadd.f32 0.0, %v2146
  %v2148 = vpop.f32.mrf.mxu0
  %v2149 = vpop.f32.mrf.mxu0
  %v2150 = vadd.f32 0.0, %v2149
  %v2151 = vpop.f32.mrf.mxu0
  %2152 = vmatprep.mubr.bf16.mxu0 0
  %2153 = vmatmul.mubr.bf16.gmra.mxu0 %v1232
  %v2154 = vpop.f32.mrf.mxu0
  %v2155 = vadd.f32 0.0, %v2154
  %v2156 = vpop.f32.mrf.mxu0
  %v2157 = vpop.f32.mrf.mxu0
  %v2158 = vadd.f32 0.0, %v2157
  %v2159 = vpop.f32.mrf.mxu0
  %2160 = vmatprep.mubr.bf16.mxu0 0
  %2161 = vmatmul.mubr.bf16.gmra.mxu0 %v1235
  %v2162 = vpop.f32.mrf.mxu0
  %v2163 = vadd.f32 0.0, %v2162
  %v2164 = vpop.f32.mrf.mxu0
  %v2165 = vpop.f32.mrf.mxu0
  %v2166 = vadd.f32 0.0, %v2165
  %v2167 = vpop.f32.mrf.mxu0
  %2168 = vmatprep.mubr.bf16.mxu0 0
  %2169 = vmatmul.mubr.bf16.gmra.mxu0 %v1238
  %v2170 = vpop.f32.mrf.mxu0
  %v2171 = vadd.f32 0.0, %v2170
  %v2172 = vpop.f32.mrf.mxu0
  %v2173 = vpop.f32.mrf.mxu0
  %v2174 = vadd.f32 0.0, %v2173
  %v2175 = vpop.f32.mrf.mxu0
  %2176 = vmatprep.mubr.bf16.mxu0 0
  %2177 = vmatmul.mubr.bf16.gmra.mxu0 %v1241
  %v2178 = vpop.f32.mrf.mxu0
  %v2179 = vadd.f32 0.0, %v2178
  %v2180 = vpop.f32.mrf.mxu0
  %v2181 = vpop.f32.mrf.mxu0
  %v2182 = vadd.f32 0.0, %v2181
  %v2183 = vpop.f32.mrf.mxu0
  %2184 = vmatprep.mubr.bf16.mxu0 0
  %2185 = vmatmul.mubr.bf16.gmra.mxu0 %v1244
  %v2186 = vpop.f32.mrf.mxu0
  %v2187 = vadd.f32 0.0, %v2186
  %v2188 = vpop.f32.mrf.mxu0
  %v2189 = vpop.f32.mrf.mxu0
  %v2190 = vadd.f32 0.0, %v2189
  %v2191 = vpop.f32.mrf.mxu0
  %2192 = vmatprep.mubr.bf16.mxu0 0
  %2193 = vmatmul.mubr.bf16.gmra.mxu0 %v1247
  %v2194 = vpop.f32.mrf.mxu0
  %v2195 = vadd.f32 0.0, %v2194
  %v2196 = vpop.f32.mrf.mxu0
  %v2197 = vpop.f32.mrf.mxu0
  %v2198 = vadd.f32 0.0, %v2197
  %v2199 = vpop.f32.mrf.mxu0
  %2200 = vmatprep.mubr.bf16.mxu0 0
  %2201 = vmatmul.mubr.bf16.gmra.mxu0 %v1250
  %v2202 = vpop.f32.mrf.mxu0
  %v2203 = vadd.f32 0.0, %v2202
  %v2204 = vpop.f32.mrf.mxu0
  %v2205 = vpop.f32.mrf.mxu0
  %v2206 = vadd.f32 0.0, %v2205
  %v2207 = vpop.f32.mrf.mxu0
  %2208 = vmatprep.mubr.bf16.mxu0 0
  %2209 = vmatmul.mubr.bf16.gmra.mxu0 %v1253
  %v2210 = vpop.f32.mrf.mxu0
  %v2211 = vadd.f32 0.0, %v2210
  %v2212 = vpop.f32.mrf.mxu0
  %v2213 = vpop.f32.mrf.mxu0
  %v2214 = vadd.f32 0.0, %v2213
  %v2215 = vpop.f32.mrf.mxu0
  %2216 = vmatprep.mubr.bf16.mxu0 0
  %2217 = vmatmul.mubr.bf16.gmra.mxu0 %v1256
  %v2218 = vpop.f32.mrf.mxu0
  %v2219 = vadd.f32 0.0, %v2218
  %v2220 = vpop.f32.mrf.mxu0
  %v2221 = vpop.f32.mrf.mxu0
  %v2222 = vadd.f32 0.0, %v2221
  %v2223 = vpop.f32.mrf.mxu0
  %2224 = vmatprep.mubr.bf16.mxu0 0
  %2225 = vmatmul.mubr.bf16.gmra.mxu0 %v1259
  %v2226 = vpop.f32.mrf.mxu0
  %v2227 = vadd.f32 0.0, %v2226
  %v2228 = vpop.f32.mrf.mxu0
  %v2229 = vpop.f32.mrf.mxu0
  %v2230 = vadd.f32 0.0, %v2229
  %v2231 = vpop.f32.mrf.mxu0
  %2232 = vmatprep.mubr.bf16.mxu0 0
  %2233 = vmatmul.mubr.bf16.gmra.mxu0 %v1262
  %v2234 = vpop.f32.mrf.mxu0
  %v2235 = vadd.f32 0.0, %v2234
  %v2236 = vpop.f32.mrf.mxu0
  %v2237 = vpop.f32.mrf.mxu0
  %v2238 = vadd.f32 0.0, %v2237
  %v2239 = vpop.f32.mrf.mxu0
  %2240 = vmatprep.mubr.bf16.mxu0 0
  %2241 = vmatmul.mubr.bf16.gmra.mxu0 %v1265
  %v2242 = vpop.f32.mrf.mxu0
  %v2243 = vadd.f32 0.0, %v2242
  %v2244 = vpop.f32.mrf.mxu0
  %v2245 = vpop.f32.mrf.mxu0
  %v2246 = vadd.f32 0.0, %v2245
  %v2247 = vpop.f32.mrf.mxu0
  %2248 = vmatprep.mubr.bf16.mxu0 0
  %2249 = vmatmul.mubr.bf16.gmra.mxu0 %v1268
  %v2250 = vpop.f32.mrf.mxu0
  %v2251 = vadd.f32 0.0, %v2250
  %v2252 = vpop.f32.mrf.mxu0
  %v2253 = vpop.f32.mrf.mxu0
  %v2254 = vadd.f32 0.0, %v2253
  %v2255 = vpop.f32.mrf.mxu0
  %2256 = vmatprep.mubr.bf16.mxu0 0
  %2257 = vmatmul.mubr.bf16.gmra.mxu0 %v1271
  %v2258 = vpop.f32.mrf.mxu0
  %v2259 = vadd.f32 0.0, %v2258
  %v2260 = vpop.f32.mrf.mxu0
  %v2261 = vpop.f32.mrf.mxu0
  %v2262 = vadd.f32 0.0, %v2261
  %v2263 = vpop.f32.mrf.mxu0
  %2264 = vmatprep.mubr.bf16.mxu0 0
  %2265 = vmatmul.mubr.bf16.gmra.mxu0 %v1274
  %v2266 = vpop.f32.mrf.mxu0
  %v2267 = vadd.f32 0.0, %v2266
  %v2268 = vpop.f32.mrf.mxu0
  %v2269 = vpop.f32.mrf.mxu0
  %v2270 = vadd.f32 0.0, %v2269
  %v2271 = vpop.f32.mrf.mxu0
  %2272 = vmatprep.mubr.bf16.mxu0 0
  %2273 = vmatmul.mubr.bf16.gmra.mxu0 %v1277
  %v2274 = vpop.f32.mrf.mxu0
  %v2275 = vadd.f32 0.0, %v2274
  %v2276 = vpop.f32.mrf.mxu0
  %v2277 = vpop.f32.mrf.mxu0
  %v2278 = vadd.f32 0.0, %v2277
  %v2279 = vpop.f32.mrf.mxu0
  %2280 = vmatprep.mubr.bf16.mxu0 0
  %2281 = vmatmul.mubr.bf16.gmra.mxu0 %v1280
  %v2282 = vpop.f32.mrf.mxu0
  %v2283 = vadd.f32 0.0, %v2282
  %v2284 = vpop.f32.mrf.mxu0
  %v2285 = vpop.f32.mrf.mxu0
  %v2286 = vadd.f32 0.0, %v2285
  %v2287 = vpop.f32.mrf.mxu0
  %2288 = vmatprep.mubr.bf16.mxu0 0
  %2289 = vmatmul.mubr.bf16.gmra.mxu0 %v1283
  %v2290 = vpop.f32.mrf.mxu0
  %v2291 = vadd.f32 0.0, %v2290
  %v2292 = vpop.f32.mrf.mxu0
  %v2293 = vpop.f32.mrf.mxu0
  %v2294 = vadd.f32 0.0, %v2293
  %v2295 = vpop.f32.mrf.mxu0
  %2296 = vmatprep.mubr.bf16.mxu0 0
  %2297 = vmatmul.mubr.bf16.gmra.mxu0 %v1286
  %v2298 = vpop.f32.mrf.mxu0
  %v2299 = vadd.f32 0.0, %v2298
  %v2300 = vpop.f32.mrf.mxu0
  %v2301 = vpop.f32.mrf.mxu0
  %v2302 = vadd.f32 0.0, %v2301
  %v2303 = vpop.f32.mrf.mxu0
  %2304 = vmatprep.mubr.bf16.mxu0 0
  %2305 = vmatmul.mubr.bf16.gmra.mxu0 %v1289
  %v2306 = vpop.f32.mrf.mxu0
  %v2307 = vadd.f32 0.0, %v2306
  %v2308 = vpop.f32.mrf.mxu0
  %v2309 = vpop.f32.mrf.mxu0
  %v2310 = vadd.f32 0.0, %v2309
  %v2311 = vpop.f32.mrf.mxu0
  %2312 = vmatprep.mubr.bf16.mxu0 0
  %2313 = vmatmul.mubr.bf16.gmra.mxu0 %v1292
  %v2314 = vpop.f32.mrf.mxu0
  %v2315 = vadd.f32 0.0, %v2314
  %v2316 = vpop.f32.mrf.mxu0
  %v2317 = vpop.f32.mrf.mxu0
  %v2318 = vadd.f32 0.0, %v2317
  %v2319 = vpop.f32.mrf.mxu0
  %2320 = vmatprep.mubr.bf16.mxu0 0
  %2321 = vmatmul.mubr.bf16.gmra.mxu0 %v1295
  %v2322 = vpop.f32.mrf.mxu0
  %v2323 = vadd.f32 0.0, %v2322
  %v2324 = vpop.f32.mrf.mxu0
  %v2325 = vpop.f32.mrf.mxu0
  %v2326 = vadd.f32 0.0, %v2325
  %v2327 = vpop.f32.mrf.mxu0
  %2328 = vmatprep.mubr.bf16.mxu0 0
  %2329 = vmatmul.mubr.bf16.gmra.mxu0 %v1298
  %v2330 = vpop.f32.mrf.mxu0
  %v2331 = vadd.f32 0.0, %v2330
  %v2332 = vpop.f32.mrf.mxu0
  %v2333 = vpop.f32.mrf.mxu0
  %v2334 = vadd.f32 0.0, %v2333
  %v2335 = vpop.f32.mrf.mxu0
  %2336 = vmatprep.mubr.bf16.mxu0 0
  %2337 = vmatmul.mubr.bf16.gmra.mxu0 %v1301
  %v2338 = vpop.f32.mrf.mxu0
  %v2339 = vadd.f32 0.0, %v2338
  %v2340 = vpop.f32.mrf.mxu0
  %v2341 = vpop.f32.mrf.mxu0
  %v2342 = vadd.f32 0.0, %v2341
  %v2343 = vpop.f32.mrf.mxu0
  %2344 = vmatprep.mubr.bf16.mxu0 0
  %2345 = vmatmul.mubr.bf16.gmra.mxu0 %v1304
  %v2346 = vpop.f32.mrf.mxu0
  %v2347 = vadd.f32 0.0, %v2346
  %v2348 = vpop.f32.mrf.mxu0
  %v2349 = vpop.f32.mrf.mxu0
  %v2350 = vadd.f32 0.0, %v2349
  %v2351 = vpop.f32.mrf.mxu0
  %2352 = vmatprep.mubr.bf16.mxu0 0
  %2353 = vmatmul.mubr.bf16.gmra.mxu0 %v1307
  %v2354 = vpop.f32.mrf.mxu0
  %v2355 = vadd.f32 0.0, %v2354
  %v2356 = vpop.f32.mrf.mxu0
  %v2357 = vpop.f32.mrf.mxu0
  %v2358 = vadd.f32 0.0, %v2357
  %v2359 = vpop.f32.mrf.mxu0
  %2360 = vmatprep.mubr.bf16.mxu0 0
  %2361 = vmatmul.mubr.bf16.gmra.mxu0 %v1310
  %v2362 = vpop.f32.mrf.mxu0
  %v2363 = vadd.f32 0.0, %v2362
  %v2364 = vpop.f32.mrf.mxu0
  %v2365 = vpop.f32.mrf.mxu0
  %v2366 = vadd.f32 0.0, %v2365
  %v2367 = vpop.f32.mrf.mxu0
  %2368 = vdwg.mxu0
  %v2369 = vmax.f32 %v1347, %v1603
  %v2370 = vmax.f32 %v1350, %v1606
  %v2371 = vmax.f32 %v1355, %v1611
  %v2372 = vmax.f32 %v1358, %v1614
  %v2373 = vmax.f32 %v1363, %v1619
  %v2374 = vmax.f32 %v1366, %v1622
  %v2375 = vmax.f32 %v1371, %v1627
  %v2376 = vmax.f32 %v1374, %v1630
  %v2377 = vmax.f32 %v1379, %v1635
  %v2378 = vmax.f32 %v1382, %v1638
  %v2379 = vmax.f32 %v1387, %v1643
  %v2380 = vmax.f32 %v1390, %v1646
  %v2381 = vmax.f32 %v1395, %v1651
  %v2382 = vmax.f32 %v1398, %v1654
  %v2383 = vmax.f32 %v1403, %v1659
  %v2384 = vmax.f32 %v1406, %v1662
  %v2385 = vmax.f32 %v1411, %v1667
  %v2386 = vmax.f32 %v1414, %v1670
  %v2387 = vmax.f32 %v1419, %v1675
  %v2388 = vmax.f32 %v1422, %v1678
  %v2389 = vmax.f32 %v1427, %v1683
  %v2390 = vmax.f32 %v1430, %v1686
  %v2391 = vmax.f32 %v1435, %v1691
  %v2392 = vmax.f32 %v1438, %v1694
  %v2393 = vmax.f32 %v1443, %v1699
  %v2394 = vmax.f32 %v1446, %v1702
  %v2395 = vmax.f32 %v1451, %v1707
  %v2396 = vmax.f32 %v1454, %v1710
  %v2397 = vmax.f32 %v1459, %v1715
  %v2398 = vmax.f32 %v1462, %v1718
  %v2399 = vmax.f32 %v1467, %v1723
  %v2400 = vmax.f32 %v1470, %v1726
  %v2401 = vmax.f32 %v1475, %v1731
  %v2402 = vmax.f32 %v1478, %v1734
  %v2403 = vmax.f32 %v1483, %v1739
  %v2404 = vmax.f32 %v1486, %v1742
  %v2405 = vmax.f32 %v1491, %v1747
  %v2406 = vmax.f32 %v1494, %v1750
  %v2407 = vmax.f32 %v1499, %v1755
  %v2408 = vmax.f32 %v1502, %v1758
  %v2409 = vmax.f32 %v1507, %v1763
  %v2410 = vmax.f32 %v1510, %v1766
  %v2411 = vmax.f32 %v1515, %v1771
  %v2412 = vmax.f32 %v1518, %v1774
  %v2413 = vmax.f32 %v1523, %v1779
  %v2414 = vmax.f32 %v1526, %v1782
  %v2415 = vmax.f32 %v1531, %v1787
  %v2416 = vmax.f32 %v1534, %v1790
  %v2417 = vmax.f32 %v1539, %v1795
  %v2418 = vmax.f32 %v1542, %v1798
  %v2419 = vmax.f32 %v1547, %v1803
  %v2420 = vmax.f32 %v1550, %v1806
  %v2421 = vmax.f32 %v1555, %v1811
  %v2422 = vmax.f32 %v1558, %v1814
  %v2423 = vmax.f32 %v1563, %v1819
  %v2424 = vmax.f32 %v1566, %v1822
  %v2425 = vmax.f32 %v1571, %v1827
  %v2426 = vmax.f32 %v1574, %v1830
  %v2427 = vmax.f32 %v1579, %v1835
  %v2428 = vmax.f32 %v1582, %v1838
  %v2429 = vmax.f32 %v1587, %v1843
  %v2430 = vmax.f32 %v1590, %v1846
  %v2431 = vmax.f32 %v1595, %v1851
  %v2432 = vmax.f32 %v1598, %v1854
  %v2433 = vmax.f32 %v1859, %v2115
  %v2434 = vmax.f32 %v1862, %v2118
  %v2435 = vmax.f32 %v1867, %v2123
  %v2436 = vmax.f32 %v1870, %v2126
  %v2437 = vmax.f32 %v1875, %v2131
  %v2438 = vmax.f32 %v1878, %v2134
  %v2439 = vmax.f32 %v1883, %v2139
  %v2440 = vmax.f32 %v1886, %v2142
  %v2441 = vmax.f32 %v1891, %v2147
  %v2442 = vmax.f32 %v1894, %v2150
  %v2443 = vmax.f32 %v1899, %v2155
  %v2444 = vmax.f32 %v1902, %v2158
  %v2445 = vmax.f32 %v1907, %v2163
  %v2446 = vmax.f32 %v1910, %v2166
  %v2447 = vmax.f32 %v1915, %v2171
  %v2448 = vmax.f32 %v1918, %v2174
  %v2449 = vmax.f32 %v1923, %v2179
  %v2450 = vmax.f32 %v1926, %v2182
  %v2451 = vmax.f32 %v1931, %v2187
  %v2452 = vmax.f32 %v1934, %v2190
  %v2453 = vmax.f32 %v1939, %v2195
  %v2454 = vmax.f32 %v1942, %v2198
  %v2455 = vmax.f32 %v1947, %v2203
  %v2456 = vmax.f32 %v1950, %v2206
  %v2457 = vmax.f32 %v1955, %v2211
  %v2458 = vmax.f32 %v1958, %v2214
  %v2459 = vmax.f32 %v1963, %v2219
  %v2460 = vmax.f32 %v1966, %v2222
  %v2461 = vmax.f32 %v1971, %v2227
  %v2462 = vmax.f32 %v1974, %v2230
  %v2463 = vmax.f32 %v1979, %v2235
  %v2464 = vmax.f32 %v1982, %v2238
  %v2465 = vmax.f32 %v1987, %v2243
  %v2466 = vmax.f32 %v1990, %v2246
  %v2467 = vmax.f32 %v1995, %v2251
  %v2468 = vmax.f32 %v1998, %v2254
  %v2469 = vmax.f32 %v2003, %v2259
  %v2470 = vmax.f32 %v2006, %v2262
  %v2471 = vmax.f32 %v2011, %v2267
  %v2472 = vmax.f32 %v2014, %v2270
  %v2473 = vmax.f32 %v2019, %v2275
  %v2474 = vmax.f32 %v2022, %v2278
  %v2475 = vmax.f32 %v2027, %v2283
  %v2476 = vmax.f32 %v2030, %v2286
  %v2477 = vmax.f32 %v2035, %v2291
  %v2478 = vmax.f32 %v2038, %v2294
  %v2479 = vmax.f32 %v2043, %v2299
  %v2480 = vmax.f32 %v2046, %v2302
  %v2481 = vmax.f32 %v2051, %v2307
  %v2482 = vmax.f32 %v2054, %v2310
  %v2483 = vmax.f32 %v2059, %v2315
  %v2484 = vmax.f32 %v2062, %v2318
  %v2485 = vmax.f32 %v2067, %v2323
  %v2486 = vmax.f32 %v2070, %v2326
  %v2487 = vmax.f32 %v2075, %v2331
  %v2488 = vmax.f32 %v2078, %v2334
  %v2489 = vmax.f32 %v2083, %v2339
  %v2490 = vmax.f32 %v2086, %v2342
  %v2491 = vmax.f32 %v2091, %v2347
  %v2492 = vmax.f32 %v2094, %v2350
  %v2493 = vmax.f32 %v2099, %v2355
  %v2494 = vmax.f32 %v2102, %v2358
  %v2495 = vmax.f32 %v2107, %v2363
  %v2496 = vmax.f32 %v2110, %v2366
  %v2497 = vmax.f32 %v2369, %v2433
  %v2498 = vmax.f32 %v2370, %v2434
  %v2499 = vmax.f32 %v2371, %v2435
  %v2500 = vmax.f32 %v2372, %v2436
  %v2501 = vmax.f32 %v2373, %v2437
  %v2502 = vmax.f32 %v2374, %v2438
  %v2503 = vmax.f32 %v2375, %v2439
  %v2504 = vmax.f32 %v2376, %v2440
  %v2505 = vmax.f32 %v2377, %v2441
  %v2506 = vmax.f32 %v2378, %v2442
  %v2507 = vmax.f32 %v2379, %v2443
  %v2508 = vmax.f32 %v2380, %v2444
  %v2509 = vmax.f32 %v2381, %v2445
  %v2510 = vmax.f32 %v2382, %v2446
  %v2511 = vmax.f32 %v2383, %v2447
  %v2512 = vmax.f32 %v2384, %v2448
  %v2513 = vmax.f32 %v2385, %v2449
  %v2514 = vmax.f32 %v2386, %v2450
  %v2515 = vmax.f32 %v2387, %v2451
  %v2516 = vmax.f32 %v2388, %v2452
  %v2517 = vmax.f32 %v2389, %v2453
  %v2518 = vmax.f32 %v2390, %v2454
  %v2519 = vmax.f32 %v2391, %v2455
  %v2520 = vmax.f32 %v2392, %v2456
  %v2521 = vmax.f32 %v2393, %v2457
  %v2522 = vmax.f32 %v2394, %v2458
  %v2523 = vmax.f32 %v2395, %v2459
  %v2524 = vmax.f32 %v2396, %v2460
  %v2525 = vmax.f32 %v2397, %v2461
  %v2526 = vmax.f32 %v2398, %v2462
  %v2527 = vmax.f32 %v2399, %v2463
  %v2528 = vmax.f32 %v2400, %v2464
  %v2529 = vmax.f32 %v2401, %v2465
  %v2530 = vmax.f32 %v2402, %v2466
  %v2531 = vmax.f32 %v2403, %v2467
  %v2532 = vmax.f32 %v2404, %v2468
  %v2533 = vmax.f32 %v2405, %v2469
  %v2534 = vmax.f32 %v2406, %v2470
  %v2535 = vmax.f32 %v2407, %v2471
  %v2536 = vmax.f32 %v2408, %v2472
  %v2537 = vmax.f32 %v2409, %v2473
  %v2538 = vmax.f32 %v2410, %v2474
  %v2539 = vmax.f32 %v2411, %v2475
  %v2540 = vmax.f32 %v2412, %v2476
  %v2541 = vmax.f32 %v2413, %v2477
  %v2542 = vmax.f32 %v2414, %v2478
  %v2543 = vmax.f32 %v2415, %v2479
  %v2544 = vmax.f32 %v2416, %v2480
  %v2545 = vmax.f32 %v2417, %v2481
  %v2546 = vmax.f32 %v2418, %v2482
  %v2547 = vmax.f32 %v2419, %v2483
  %v2548 = vmax.f32 %v2420, %v2484
  %v2549 = vmax.f32 %v2421, %v2485
  %v2550 = vmax.f32 %v2422, %v2486
  %v2551 = vmax.f32 %v2423, %v2487
  %v2552 = vmax.f32 %v2424, %v2488
  %v2553 = vmax.f32 %v2425, %v2489
  %v2554 = vmax.f32 %v2426, %v2490
  %v2555 = vmax.f32 %v2427, %v2491
  %v2556 = vmax.f32 %v2428, %v2492
  %v2557 = vmax.f32 %v2429, %v2493
  %v2558 = vmax.f32 %v2430, %v2494
  %v2559 = vmax.f32 %v2431, %v2495
  %v2560 = vmax.f32 %v2432, %v2496
  %v2561 = vld [vmem:[%s2] sm:$0x1]
  %v2563 = vlaneseq
  %v2564 = vshrl.u32 %v2563, 7
  %v2565 = vsub.s32 0, %v2564
  %v2566 = vrot.slane %v2561, %v2565
  %v2568 = vadd.f32 %v2497, %v2566
  %v2569 = vadd.f32 %v2498, %v2566
  %v2570 = vadd.f32 %v2499, %v2566
  %v2571 = vadd.f32 %v2500, %v2566
  %v2572 = vadd.f32 %v2501, %v2566
  %v2573 = vadd.f32 %v2502, %v2566
  %v2574 = vadd.f32 %v2503, %v2566
  %v2575 = vadd.f32 %v2504, %v2566
  %v2576 = vadd.f32 %v2505, %v2566
  %v2577 = vadd.f32 %v2506, %v2566
  %v2578 = vadd.f32 %v2507, %v2566
  %v2579 = vadd.f32 %v2508, %v2566
  %v2580 = vadd.f32 %v2509, %v2566
  %v2581 = vadd.f32 %v2510, %v2566
  %v2582 = vadd.f32 %v2511, %v2566
  %v2583 = vadd.f32 %v2512, %v2566
  %v2584 = vadd.f32 %v2513, %v2566
  %v2585 = vadd.f32 %v2514, %v2566
  %v2586 = vadd.f32 %v2515, %v2566
  %v2587 = vadd.f32 %v2516, %v2566
  %v2588 = vadd.f32 %v2517, %v2566
  %v2589 = vadd.f32 %v2518, %v2566
  %v2590 = vadd.f32 %v2519, %v2566
  %v2591 = vadd.f32 %v2520, %v2566
  %v2592 = vadd.f32 %v2521, %v2566
  %v2593 = vadd.f32 %v2522, %v2566
  %v2594 = vadd.f32 %v2523, %v2566
  %v2595 = vadd.f32 %v2524, %v2566
  %v2596 = vadd.f32 %v2525, %v2566
  %v2597 = vadd.f32 %v2526, %v2566
  %v2598 = vadd.f32 %v2527, %v2566
  %v2599 = vadd.f32 %v2528, %v2566
  %v2600 = vadd.f32 %v2529, %v2566
  %v2601 = vadd.f32 %v2530, %v2566
  %v2602 = vadd.f32 %v2531, %v2566
  %v2603 = vadd.f32 %v2532, %v2566
  %v2604 = vadd.f32 %v2533, %v2566
  %v2605 = vadd.f32 %v2534, %v2566
  %v2606 = vadd.f32 %v2535, %v2566
  %v2607 = vadd.f32 %v2536, %v2566
  %v2608 = vadd.f32 %v2537, %v2566
  %v2609 = vadd.f32 %v2538, %v2566
  %v2610 = vadd.f32 %v2539, %v2566
  %v2611 = vadd.f32 %v2540, %v2566
  %v2612 = vadd.f32 %v2541, %v2566
  %v2613 = vadd.f32 %v2542, %v2566
  %v2614 = vadd.f32 %v2543, %v2566
  %v2615 = vadd.f32 %v2544, %v2566
  %v2616 = vadd.f32 %v2545, %v2566
  %v2617 = vadd.f32 %v2546, %v2566
  %v2618 = vadd.f32 %v2547, %v2566
  %v2619 = vadd.f32 %v2548, %v2566
  %v2620 = vadd.f32 %v2549, %v2566
  %v2621 = vadd.f32 %v2550, %v2566
  %v2622 = vadd.f32 %v2551, %v2566
  %v2623 = vadd.f32 %v2552, %v2566
  %v2624 = vadd.f32 %v2553, %v2566
  %v2625 = vadd.f32 %v2554, %v2566
  %v2626 = vadd.f32 %v2555, %v2566
  %v2627 = vadd.f32 %v2556, %v2566
  %v2628 = vadd.f32 %v2557, %v2566
  %v2629 = vadd.f32 %v2558, %v2566
  %v2630 = vadd.f32 %v2559, %v2566
  %v2631 = vadd.f32 %v2560, %v2566
  %v2632 = vmax.f32 %v2568, 0.0
  %v2633 = vmax.f32 %v2569, 0.0
  %v2634 = vmax.f32 %v2570, 0.0
  %v2635 = vmax.f32 %v2571, 0.0
  %v2636 = vmax.f32 %v2572, 0.0
  %v2637 = vmax.f32 %v2573, 0.0
  %v2638 = vmax.f32 %v2574, 0.0
  %v2639 = vmax.f32 %v2575, 0.0
  %v2640 = vmax.f32 %v2576, 0.0
  %v2641 = vmax.f32 %v2577, 0.0
  %v2642 = vmax.f32 %v2578, 0.0
  %v2643 = vmax.f32 %v2579, 0.0
  %v2644 = vmax.f32 %v2580, 0.0
  %v2645 = vmax.f32 %v2581, 0.0
  %v2646 = vmax.f32 %v2582, 0.0
  %v2647 = vmax.f32 %v2583, 0.0
  %v2648 = vmax.f32 %v2584, 0.0
  %v2649 = vmax.f32 %v2585, 0.0
  %v2650 = vmax.f32 %v2586, 0.0
  %v2651 = vmax.f32 %v2587, 0.0
  %v2652 = vmax.f32 %v2588, 0.0
  %v2653 = vmax.f32 %v2589, 0.0
  %v2654 = vmax.f32 %v2590, 0.0
  %v2655 = vmax.f32 %v2591, 0.0
  %v2656 = vmax.f32 %v2592, 0.0
  %v2657 = vmax.f32 %v2593, 0.0
  %v2658 = vmax.f32 %v2594, 0.0
  %v2659 = vmax.f32 %v2595, 0.0
  %v2660 = vmax.f32 %v2596, 0.0
  %v2661 = vmax.f32 %v2597, 0.0
  %v2662 = vmax.f32 %v2598, 0.0
  %v2663 = vmax.f32 %v2599, 0.0
  %v2664 = vmax.f32 %v2600, 0.0
  %v2665 = vmax.f32 %v2601, 0.0
  %v2666 = vmax.f32 %v2602, 0.0
  %v2667 = vmax.f32 %v2603, 0.0
  %v2668 = vmax.f32 %v2604, 0.0
  %v2669 = vmax.f32 %v2605, 0.0
  %v2670 = vmax.f32 %v2606, 0.0
  %v2671 = vmax.f32 %v2607, 0.0
  %v2672 = vmax.f32 %v2608, 0.0
  %v2673 = vmax.f32 %v2609, 0.0
  %v2674 = vmax.f32 %v2610, 0.0
  %v2675 = vmax.f32 %v2611, 0.0
  %v2676 = vmax.f32 %v2612, 0.0
  %v2677 = vmax.f32 %v2613, 0.0
  %v2678 = vmax.f32 %v2614, 0.0
  %v2679 = vmax.f32 %v2615, 0.0
  %v2680 = vmax.f32 %v2616, 0.0
  %v2681 = vmax.f32 %v2617, 0.0
  %v2682 = vmax.f32 %v2618, 0.0
  %v2683 = vmax.f32 %v2619, 0.0
  %v2684 = vmax.f32 %v2620, 0.0
  %v2685 = vmax.f32 %v2621, 0.0
  %v2686 = vmax.f32 %v2622, 0.0
  %v2687 = vmax.f32 %v2623, 0.0
  %v2688 = vmax.f32 %v2624, 0.0
  %v2689 = vmax.f32 %v2625, 0.0
  %v2690 = vmax.f32 %v2626, 0.0
  %v2691 = vmax.f32 %v2627, 0.0
  %v2692 = vmax.f32 %v2628, 0.0
  %v2693 = vmax.f32 %v2629, 0.0
  %v2694 = vmax.f32 %v2630, 0.0
  %v2695 = vmax.f32 %v2631, 0.0
  %v2696 = vpack.c.bf16 %v2633, %v2632
  %v2697 = vpack.c.bf16 %v2635, %v2634
  %v2698 = vpack.c.bf16 %v2637, %v2636
  %v2699 = vpack.c.bf16 %v2639, %v2638
  %v2700 = vpack.c.bf16 %v2641, %v2640
  %v2701 = vpack.c.bf16 %v2643, %v2642
  %v2702 = vpack.c.bf16 %v2645, %v2644
  %v2703 = vpack.c.bf16 %v2647, %v2646
  %v2704 = vpack.c.bf16 %v2649, %v2648
  %v2705 = vpack.c.bf16 %v2651, %v2650
  %v2706 = vpack.c.bf16 %v2653, %v2652
  %v2707 = vpack.c.bf16 %v2655, %v2654
  %v2708 = vpack.c.bf16 %v2657, %v2656
  %v2709 = vpack.c.bf16 %v2659, %v2658
  %v2710 = vpack.c.bf16 %v2661, %v2660
  %v2711 = vpack.c.bf16 %v2663, %v2662
  %v2712 = vpack.c.bf16 %v2665, %v2664
  %v2713 = vpack.c.bf16 %v2667, %v2666
  %v2714 = vpack.c.bf16 %v2669, %v2668
  %v2715 = vpack.c.bf16 %v2671, %v2670
  %v2716 = vpack.c.bf16 %v2673, %v2672
  %v2717 = vpack.c.bf16 %v2675, %v2674
  %v2718 = vpack.c.bf16 %v2677, %v2676
  %v2719 = vpack.c.bf16 %v2679, %v2678
  %v2720 = vpack.c.bf16 %v2681, %v2680
  %v2721 = vpack.c.bf16 %v2683, %v2682
  %v2722 = vpack.c.bf16 %v2685, %v2684
  %v2723 = vpack.c.bf16 %v2687, %v2686
  %v2724 = vpack.c.bf16 %v2689, %v2688
  %v2725 = vpack.c.bf16 %v2691, %v2690
  %v2726 = vpack.c.bf16 %v2693, %v2692
  %v2727 = vpack.c.bf16 %v2695, %v2694
  %v2760 = vunpack.c.l.b16 %v2696
  %v2761 = vunpack.c.h.b16 %v2696
  %v2762 = vunpack.c.l.b16 %v2697
  %v2763 = vunpack.c.h.b16 %v2697
  %v2764 = vunpack.c.l.b16 %v2698
  %v2765 = vunpack.c.h.b16 %v2698
  %v2766 = vunpack.c.l.b16 %v2699
  %v2767 = vunpack.c.h.b16 %v2699
  %v2768 = vunpack.c.l.b16 %v2700
  %v2769 = vunpack.c.h.b16 %v2700
  %v2770 = vunpack.c.l.b16 %v2701
  %v2771 = vunpack.c.h.b16 %v2701
  %v2772 = vunpack.c.l.b16 %v2702
  %v2773 = vunpack.c.h.b16 %v2702
  %v2774 = vunpack.c.l.b16 %v2703
  %v2775 = vunpack.c.h.b16 %v2703
  %v2776 = vunpack.c.l.b16 %v2704
  %v2777 = vunpack.c.h.b16 %v2704
  %v2778 = vunpack.c.l.b16 %v2705
  %v2779 = vunpack.c.h.b16 %v2705
  %v2780 = vunpack.c.l.b16 %v2706
  %v2781 = vunpack.c.h.b16 %v2706
  %v2782 = vunpack.c.l.b16 %v2707
  %v2783 = vunpack.c.h.b16 %v2707
  %v2784 = vunpack.c.l.b16 %v2708
  %v2785 = vunpack.c.h.b16 %v2708
  %v2786 = vunpack.c.l.b16 %v2709
  %v2787 = vunpack.c.h.b16 %v2709
  %v2788 = vunpack.c.l.b16 %v2710
  %v2789 = vunpack.c.h.b16 %v2710
  %v2790 = vunpack.c.l.b16 %v2711
  %v2791 = vunpack.c.h.b16 %v2711
  %v2792 = vunpack.c.l.b16 %v2712
  %v2793 = vunpack.c.h.b16 %v2712
  %v2794 = vunpack.c.l.b16 %v2713
  %v2795 = vunpack.c.h.b16 %v2713
  %v2796 = vunpack.c.l.b16 %v2714
  %v2797 = vunpack.c.h.b16 %v2714
  %v2798 = vunpack.c.l.b16 %v2715
  %v2799 = vunpack.c.h.b16 %v2715
  %v2800 = vunpack.c.l.b16 %v2716
  %v2801 = vunpack.c.h.b16 %v2716
  %v2802 = vunpack.c.l.b16 %v2717
  %v2803 = vunpack.c.h.b16 %v2717
  %v2804 = vunpack.c.l.b16 %v2718
  %v2805 = vunpack.c.h.b16 %v2718
  %v2806 = vunpack.c.l.b16 %v2719
  %v2807 = vunpack.c.h.b16 %v2719
  %v2808 = vunpack.c.l.b16 %v2720
  %v2809 = vunpack.c.h.b16 %v2720
  %v2810 = vunpack.c.l.b16 %v2721
  %v2811 = vunpack.c.h.b16 %v2721
  %v2812 = vunpack.c.l.b16 %v2722
  %v2813 = vunpack.c.h.b16 %v2722
  %v2814 = vunpack.c.l.b16 %v2723
  %v2815 = vunpack.c.h.b16 %v2723
  %v2816 = vunpack.c.l.b16 %v2724
  %v2817 = vunpack.c.h.b16 %v2724
  %v2818 = vunpack.c.l.b16 %v2725
  %v2819 = vunpack.c.h.b16 %v2725
  %v2820 = vunpack.c.l.b16 %v2726
  %v2821 = vunpack.c.h.b16 %v2726
  %v2822 = vunpack.c.l.b16 %v2727
  %v2823 = vunpack.c.h.b16 %v2727
  %v2824 = vpack.c.b16 %v2760, %v2760
  %v2825 = vpack.c.b16 %v2761, %v2761
  %v2826 = vpack.c.b16 %v2762, %v2762
  %v2827 = vpack.c.b16 %v2763, %v2763
  %v2828 = vpack.c.b16 %v2764, %v2764
  %v2829 = vpack.c.b16 %v2765, %v2765
  %v2830 = vpack.c.b16 %v2766, %v2766
  %v2831 = vpack.c.b16 %v2767, %v2767
  %v2832 = vpack.c.b16 %v2768, %v2768
  %v2833 = vpack.c.b16 %v2769, %v2769
  %v2834 = vpack.c.b16 %v2770, %v2770
  %v2835 = vpack.c.b16 %v2771, %v2771
  %v2836 = vpack.c.b16 %v2772, %v2772
  %v2837 = vpack.c.b16 %v2773, %v2773
  %v2838 = vpack.c.b16 %v2774, %v2774
  %v2839 = vpack.c.b16 %v2775, %v2775
  %v2840 = vpack.c.b16 %v2776, %v2776
  %v2841 = vpack.c.b16 %v2777, %v2777
  %v2842 = vpack.c.b16 %v2778, %v2778
  %v2843 = vpack.c.b16 %v2779, %v2779
  %v2844 = vpack.c.b16 %v2780, %v2780
  %v2845 = vpack.c.b16 %v2781, %v2781
  %v2846 = vpack.c.b16 %v2782, %v2782
  %v2847 = vpack.c.b16 %v2783, %v2783
  %v2848 = vpack.c.b16 %v2784, %v2784
  %v2849 = vpack.c.b16 %v2785, %v2785
  %v2850 = vpack.c.b16 %v2786, %v2786
  %v2851 = vpack.c.b16 %v2787, %v2787
  %v2852 = vpack.c.b16 %v2788, %v2788
  %v2853 = vpack.c.b16 %v2789, %v2789
  %v2854 = vpack.c.b16 %v2790, %v2790
  %v2855 = vpack.c.b16 %v2791, %v2791
  %v2856 = vpack.c.b16 %v2792, %v2792
  %v2857 = vpack.c.b16 %v2793, %v2793
  %v2858 = vpack.c.b16 %v2794, %v2794
  %v2859 = vpack.c.b16 %v2795, %v2795
  %v2860 = vpack.c.b16 %v2796, %v2796
  %v2861 = vpack.c.b16 %v2797, %v2797
  %v2862 = vpack.c.b16 %v2798, %v2798
  %v2863 = vpack.c.b16 %v2799, %v2799
  %v2864 = vpack.c.b16 %v2800, %v2800
  %v2865 = vpack.c.b16 %v2801, %v2801
  %v2866 = vpack.c.b16 %v2802, %v2802
  %v2867 = vpack.c.b16 %v2803, %v2803
  %v2868 = vpack.c.b16 %v2804, %v2804
  %v2869 = vpack.c.b16 %v2805, %v2805
  %v2870 = vpack.c.b16 %v2806, %v2806
  %v2871 = vpack.c.b16 %v2807, %v2807
  %v2872 = vpack.c.b16 %v2808, %v2808
  %v2873 = vpack.c.b16 %v2809, %v2809
  %v2874 = vpack.c.b16 %v2810, %v2810
  %v2875 = vpack.c.b16 %v2811, %v2811
  %v2876 = vpack.c.b16 %v2812, %v2812
  %v2877 = vpack.c.b16 %v2813, %v2813
  %v2878 = vpack.c.b16 %v2814, %v2814
  %v2879 = vpack.c.b16 %v2815, %v2815
  %v2880 = vpack.c.b16 %v2816, %v2816
  %v2881 = vpack.c.b16 %v2817, %v2817
  %v2882 = vpack.c.b16 %v2818, %v2818
  %v2883 = vpack.c.b16 %v2819, %v2819
  %v2884 = vpack.c.b16 %v2820, %v2820
  %v2885 = vpack.c.b16 %v2821, %v2821
  %v2886 = vpack.c.b16 %v2822, %v2822
  %v2887 = vpack.c.b16 %v2823, %v2823
  %vm2952 = vcmask 257024
  %2953 = vst.msk [vmem:[%s3] sm:$0xf] %vm2952, %v2824
  %2954 = vst.msk [vmem:[%s3 + $0x4] sm:$0xf] %vm2952, %v2825
  %2955 = vst.msk [vmem:[%s3 + $0x8] sm:$0xf] %vm2952, %v2826
  %2956 = vst.msk [vmem:[%s3 + $0xc] sm:$0xf] %vm2952, %v2827
  %2957 = vst.msk [vmem:[%s3 + $0x10] sm:$0xf] %vm2952, %v2828
  %2958 = vst.msk [vmem:[%s3 + $0x14] sm:$0xf] %vm2952, %v2829
  %2959 = vst.msk [vmem:[%s3 + $0x18] sm:$0xf] %vm2952, %v2830
  %2960 = vst.msk [vmem:[%s3 + $0x1c] sm:$0xf] %vm2952, %v2831
  %2961 = vst.msk [vmem:[%s3 + $0x20] sm:$0xf] %vm2952, %v2832
  %2962 = vst.msk [vmem:[%s3 + $0x24] sm:$0xf] %vm2952, %v2833
  %2963 = vst.msk [vmem:[%s3 + $0x28] sm:$0xf] %vm2952, %v2834
  %2964 = vst.msk [vmem:[%s3 + $0x2c] sm:$0xf] %vm2952, %v2835
  %2965 = vst.msk [vmem:[%s3 + $0x30] sm:$0xf] %vm2952, %v2836
  %2966 = vst.msk [vmem:[%s3 + $0x34] sm:$0xf] %vm2952, %v2837
  %2967 = vst.msk [vmem:[%s3 + $0x38] sm:$0xf] %vm2952, %v2838
  %2968 = vst.msk [vmem:[%s3 + $0x3c] sm:$0xf] %vm2952, %v2839
  %2969 = vst.msk [vmem:[%s3 + $0x40] sm:$0xf] %vm2952, %v2840
  %2970 = vst.msk [vmem:[%s3 + $0x44] sm:$0xf] %vm2952, %v2841
  %2971 = vst.msk [vmem:[%s3 + $0x48] sm:$0xf] %vm2952, %v2842
  %2972 = vst.msk [vmem:[%s3 + $0x4c] sm:$0xf] %vm2952, %v2843
  %2973 = vst.msk [vmem:[%s3 + $0x50] sm:$0xf] %vm2952, %v2844
  %2974 = vst.msk [vmem:[%s3 + $0x54] sm:$0xf] %vm2952, %v2845
  %2975 = vst.msk [vmem:[%s3 + $0x58] sm:$0xf] %vm2952, %v2846
  %2976 = vst.msk [vmem:[%s3 + $0x5c] sm:$0xf] %vm2952, %v2847
  %2977 = vst.msk [vmem:[%s3 + $0x60] sm:$0xf] %vm2952, %v2848
  %2978 = vst.msk [vmem:[%s3 + $0x64] sm:$0xf] %vm2952, %v2849
  %2979 = vst.msk [vmem:[%s3 + $0x68] sm:$0xf] %vm2952, %v2850
  %2980 = vst.msk [vmem:[%s3 + $0x6c] sm:$0xf] %vm2952, %v2851
  %2981 = vst.msk [vmem:[%s3 + $0x70] sm:$0xf] %vm2952, %v2852
  %2982 = vst.msk [vmem:[%s3 + $0x74] sm:$0xf] %vm2952, %v2853
  %2983 = vst.msk [vmem:[%s3 + $0x78] sm:$0xf] %vm2952, %v2854
  %2984 = vst.msk [vmem:[%s3 + $0x7c] sm:$0xf] %vm2952, %v2855
  %2985 = vst.msk [vmem:[%s3 + $0x80] sm:$0xf] %vm2952, %v2856
  %2986 = vst.msk [vmem:[%s3 + $0x84] sm:$0xf] %vm2952, %v2857
  %2987 = vst.msk [vmem:[%s3 + $0x88] sm:$0xf] %vm2952, %v2858
  %2988 = vst.msk [vmem:[%s3 + $0x8c] sm:$0xf] %vm2952, %v2859
  %2989 = vst.msk [vmem:[%s3 + $0x90] sm:$0xf] %vm2952, %v2860
  %2990 = vst.msk [vmem:[%s3 + $0x94] sm:$0xf] %vm2952, %v2861
  %2991 = vst.msk [vmem:[%s3 + $0x98] sm:$0xf] %vm2952, %v2862
  %2992 = vst.msk [vmem:[%s3 + $0x9c] sm:$0xf] %vm2952, %v2863
  %2993 = vst.msk [vmem:[%s3 + $0xa0] sm:$0xf] %vm2952, %v2864
  %2994 = vst.msk [vmem:[%s3 + $0xa4] sm:$0xf] %vm2952, %v2865
  %2995 = vst.msk [vmem:[%s3 + $0xa8] sm:$0xf] %vm2952, %v2866
  %2996 = vst.msk [vmem:[%s3 + $0xac] sm:$0xf] %vm2952, %v2867
  %2997 = vst.msk [vmem:[%s3 + $0xb0] sm:$0xf] %vm2952, %v2868
  %2998 = vst.msk [vmem:[%s3 + $0xb4] sm:$0xf] %vm2952, %v2869
  %2999 = vst.msk [vmem:[%s3 + $0xb8] sm:$0xf] %vm2952, %v2870
  %3000 = vst.msk [vmem:[%s3 + $0xbc] sm:$0xf] %vm2952, %v2871
  %3001 = vst.msk [vmem:[%s3 + $0xc0] sm:$0xf] %vm2952, %v2872
  %3002 = vst.msk [vmem:[%s3 + $0xc4] sm:$0xf] %vm2952, %v2873
  %3003 = vst.msk [vmem:[%s3 + $0xc8] sm:$0xf] %vm2952, %v2874
  %3004 = vst.msk [vmem:[%s3 + $0xcc] sm:$0xf] %vm2952, %v2875
  %3005 = vst.msk [vmem:[%s3 + $0xd0] sm:$0xf] %vm2952, %v2876
  %3006 = vst.msk [vmem:[%s3 + $0xd4] sm:$0xf] %vm2952, %v2877
  %3007 = vst.msk [vmem:[%s3 + $0xd8] sm:$0xf] %vm2952, %v2878
  %3008 = vst.msk [vmem:[%s3 + $0xdc] sm:$0xf] %vm2952, %v2879
  %3009 = vst.msk [vmem:[%s3 + $0xe0] sm:$0xf] %vm2952, %v2880
  %3010 = vst.msk [vmem:[%s3 + $0xe4] sm:$0xf] %vm2952, %v2881
  %3011 = vst.msk [vmem:[%s3 + $0xe8] sm:$0xf] %vm2952, %v2882
  %3012 = vst.msk [vmem:[%s3 + $0xec] sm:$0xf] %vm2952, %v2883
  %3013 = vst.msk [vmem:[%s3 + $0xf0] sm:$0xf] %vm2952, %v2884
  %3014 = vst.msk [vmem:[%s3 + $0xf4] sm:$0xf] %vm2952, %v2885
  %3015 = vst.msk [vmem:[%s3 + $0xf8] sm:$0xf] %vm2952, %v2886
  %3016 = vst.msk [vmem:[%s3 + $0xfc] sm:$0xf] %vm2952, %v2887
  // Predicated region
  $region14: #{net_forward.5} parent=0 // pred_check
    _
  $region15: #{net_forward.5} parent=0 // pred_check_branch
    %3018 = sbr.rel (0) target = $region17
  $region16: #{net_forward.5} parent=0 // pred_region
    _
  $region17: #{net_forward.5} parent=0 // pred_fallthru
    _
  // Predicated region
  $region18: #{net_forward.5} parent=0 // pred_check
    _
  $region19: #{net_forward.5} parent=0 // pred_check_branch
    %3020 = sbr.rel (0) target = $region21
  $region20: #{net_forward.5} parent=0 // pred_region
    _
  $region21: #{net_forward.5} parent=0 // pred_fallthru
    _

// kernel: net_forward.6
$region0: #{net_forward.6}
  #allocation0 [shape = 'u32[]', space=smem, size = 0x4, offset = 0x4, fixed_abs, tag = 'smem constant byte address 0x4 - core index']
  #allocation1 [shape = 'u32[144,128]{1,0:T(1,128)}', space=vmem, size = 0x12000, scoped, tag = 'internal scratch']
  %s0 = inlined_call_operand.vmem [shape: bf16[512,288], index: 0, kind: input, shape index: {}]
  %s1 = inlined_call_operand.vmem [shape: bf16[288,64], index: 1, kind: input, shape index: {}]
  %s2 = inlined_call_operand.vmem [shape: f32[1,64], index: 2, kind: input, shape index: {}]
  %s3 = inlined_call_operand.vmem [shape: bf16[128,64], index: 3, kind: output, shape index: {}]
  %s4 = sld [smem:[#allocation0]]
  $region22: #{net_forward.6} parent=0
    _
  %s6 = ssub.s32 1, %s4
  %s7 = scalar_select 0, %s6, %s4
  // Predicated region
  $region2: #{net_forward.6} parent=0 // pred_check
    _
  $region3: #{net_forward.6} parent=0 // pred_check_branch
    %9 = sbr.rel (0) target = $region5
  $region4: #{net_forward.6} parent=0 // pred_region
    _
  $region5: #{net_forward.6} parent=0 // pred_fallthru
    _
  // Predicated region
  $region6: #{net_forward.6} parent=0 // pred_check
    _
  $region7: #{net_forward.6} parent=0 // pred_check_branch
    %11 = sbr.rel (0) target = $region9
  $region8: #{net_forward.6} parent=0 // pred_region
    _
  $region9: #{net_forward.6} parent=0 // pred_fallthru
    _
  // Predicated region
  $region10: #{net_forward.6} parent=0 // pred_check
    _
  $region11: #{net_forward.6} parent=0 // pred_check_branch
    %13 = sbr.rel (0) target = $region13
  $region12: #{net_forward.6} parent=0 // pred_region
    _
  $region13: #{net_forward.6} parent=0 // pred_fallthru
    _
  %v15 = vld [vmem:[%s0] sm:$0xff]
  %v16 = vld [vmem:[%s0 + $0x8] sm:$0xf]
  %v17 = vld [vmem:[%s0 + $0xc] sm:$0xff]
  %v18 = vld [vmem:[%s0 + $0x14] sm:$0xf]
  %v19 = vld [vmem:[%s0 + $0x18] sm:$0xff]
  %v20 = vld [vmem:[%s0 + $0x20] sm:$0xf]
  %v21 = vld [vmem:[%s0 + $0x24] sm:$0xff]
  %v22 = vld [vmem:[%s0 + $0x2c] sm:$0xf]
  %v23 = vld [vmem:[%s0 + $0x30] sm:$0xff]
  %v24 = vld [vmem:[%s0 + $0x38] sm:$0xf]
  %v25 = vld [vmem:[%s0 + $0x3c] sm:$0xff]
  %v26 = vld [vmem:[%s0 + $0x44] sm:$0xf]
  %v27 = vld [vmem:[%s0 + $0x48] sm:$0xff]
  %v28 = vld [vmem:[%s0 + $0x50] sm:$0xf]
  %v29 = vld [vmem:[%s0 + $0x54] sm:$0xff]
  %v30 = vld [vmem:[%s0 + $0x5c] sm:$0xf]
  %v31 = vld [vmem:[%s0 + $0x60] sm:$0xff]
  %v32 = vld [vmem:[%s0 + $0x68] sm:$0xf]
  %v33 = vld [vmem:[%s0 + $0x6c] sm:$0xff]
  %v34 = vld [vmem:[%s0 + $0x74] sm:$0xf]
  %v35 = vld [vmem:[%s0 + $0x78] sm:$0xff]
  %v36 = vld [vmem:[%s0 + $0x80] sm:$0xf]
  %v37 = vld [vmem:[%s0 + $0x84] sm:$0xff]
  %v38 = vld [vmem:[%s0 + $0x8c] sm:$0xf]
  %v39 = vld [vmem:[%s0 + $0x90] sm:$0xff]
  %v40 = vld [vmem:[%s0 + $0x98] sm:$0xf]
  %v41 = vld [vmem:[%s0 + $0x9c] sm:$0xff]
  %v42 = vld [vmem:[%s0 + $0xa4] sm:$0xf]
  %v43 = vld [vmem:[%s0 + $0xa8] sm:$0xff]
  %v44 = vld [vmem:[%s0 + $0xb0] sm:$0xf]
  %v45 = vld [vmem:[%s0 + $0xb4] sm:$0xff]
  %v46 = vld [vmem:[%s0 + $0xbc] sm:$0xf]
  %v47 = vld [vmem:[%s0 + $0xc0] sm:$0xff]
  %v48 = vld [vmem:[%s0 + $0xc8] sm:$0xf]
  %v49 = vld [vmem:[%s0 + $0xcc] sm:$0xff]
  %v50 = vld [vmem:[%s0 + $0xd4] sm:$0xf]
  %v51 = vld [vmem:[%s0 + $0xd8] sm:$0xff]
  %v52 = vld [vmem:[%s0 + $0xe0] sm:$0xf]
  %v53 = vld [vmem:[%s0 + $0xe4] sm:$0xff]
  %v54 = vld [vmem:[%s0 + $0xec] sm:$0xf]
  %v55 = vld [vmem:[%s0 + $0xf0] sm:$0xff]
  %v56 = vld [vmem:[%s0 + $0xf8] sm:$0xf]
  %v57 = vld [vmem:[%s0 + $0xfc] sm:$0xff]
  %v58 = vld [vmem:[%s0 + $0x104] sm:$0xf]
  %v59 = vld [vmem:[%s0 + $0x108] sm:$0xff]
  %v60 = vld [vmem:[%s0 + $0x110] sm:$0xf]
  %v61 = vld [vmem:[%s0 + $0x114] sm:$0xff]
  %v62 = vld [vmem:[%s0 + $0x11c] sm:$0xf]
  %v63 = vld [vmem:[%s0 + $0x120] sm:$0xff]
  %v64 = vld [vmem:[%s0 + $0x128] sm:$0xf]
  %v65 = vld [vmem:[%s0 + $0x12c] sm:$0xff]
  %v66 = vld [vmem:[%s0 + $0x134] sm:$0xf]
  %v67 = vld [vmem:[%s0 + $0x138] sm:$0xff]
  %v68 = vld [vmem:[%s0 + $0x140] sm:$0xf]
  %v69 = vld [vmem:[%s0 + $0x144] sm:$0xff]
  %v70 = vld [vmem:[%s0 + $0x14c] sm:$0xf]
  %v71 = vld [vmem:[%s0 + $0x150] sm:$0xff]
  %v72 = vld [vmem:[%s0 + $0x158] sm:$0xf]
  %v73 = vld [vmem:[%s0 + $0x15c] sm:$0xff]
  %v74 = vld [vmem:[%s0 + $0x164] sm:$0xf]
  %v75 = vld [vmem:[%s0 + $0x168] sm:$0xff]
  %v76 = vld [vmem:[%s0 + $0x170] sm:$0xf]
  %v77 = vld [vmem:[%s0 + $0x174] sm:$0xff]
  %v78 = vld [vmem:[%s0 + $0x17c] sm:$0xf]
  %v79 = vld [vmem:[%s0 + $0x180] sm:$0xff]
  %v80 = vld [vmem:[%s0 + $0x188] sm:$0xf]
  %v81 = vld [vmem:[%s0 + $0x18c] sm:$0xff]
  %v82 = vld [vmem:[%s0 + $0x194] sm:$0xf]
  %v83 = vld [vmem:[%s0 + $0x198] sm:$0xff]
  %v84 = vld [vmem:[%s0 + $0x1a0] sm:$0xf]
  %v85 = vld [vmem:[%s0 + $0x1a4] sm:$0xff]
  %v86 = vld [vmem:[%s0 + $0x1ac] sm:$0xf]
  %v87 = vld [vmem:[%s0 + $0x1b0] sm:$0xff]
  %v88 = vld [vmem:[%s0 + $0x1b8] sm:$0xf]
  %v89 = vld [vmem:[%s0 + $0x1bc] sm:$0xff]
  %v90 = vld [vmem:[%s0 + $0x1c4] sm:$0xf]
  %v91 = vld [vmem:[%s0 + $0x1c8] sm:$0xff]
  %v92 = vld [vmem:[%s0 + $0x1d0] sm:$0xf]
  %v93 = vld [vmem:[%s0 + $0x1d4] sm:$0xff]
  %v94 = vld [vmem:[%s0 + $0x1dc] sm:$0xf]
  %v95 = vld [vmem:[%s0 + $0x1e0] sm:$0xff]
  %v96 = vld [vmem:[%s0 + $0x1e8] sm:$0xf]
  %v97 = vld [vmem:[%s0 + $0x1ec] sm:$0xff]
  %v98 = vld [vmem:[%s0 + $0x1f4] sm:$0xf]
  %v99 = vld [vmem:[%s0 + $0x1f8] sm:$0xff]
  %v100 = vld [vmem:[%s0 + $0x200] sm:$0xf]
  %v101 = vld [vmem:[%s0 + $0x204] sm:$0xff]
  %v102 = vld [vmem:[%s0 + $0x20c] sm:$0xf]
  %v103 = vld [vmem:[%s0 + $0x210] sm:$0xff]
  %v104 = vld [vmem:[%s0 + $0x218] sm:$0xf]
  %v105 = vld [vmem:[%s0 + $0x21c] sm:$0xff]
  %v106 = vld [vmem:[%s0 + $0x224] sm:$0xf]
  %v107 = vld [vmem:[%s0 + $0x228] sm:$0xff]
  %v108 = vld [vmem:[%s0 + $0x230] sm:$0xf]
  %v109 = vld [vmem:[%s0 + $0x234] sm:$0xff]
  %v110 = vld [vmem:[%s0 + $0x23c] sm:$0xf]
  %v111 = vld [vmem:[%s0 + $0x240] sm:$0xff]
  %v112 = vld [vmem:[%s0 + $0x248] sm:$0xf]
  %v113 = vld [vmem:[%s0 + $0x24c] sm:$0xff]
  %v114 = vld [vmem:[%s0 + $0x254] sm:$0xf]
  %v115 = vld [vmem:[%s0 + $0x258] sm:$0xff]
  %v116 = vld [vmem:[%s0 + $0x260] sm:$0xf]
  %v117 = vld [vmem:[%s0 + $0x264] sm:$0xff]
  %v118 = vld [vmem:[%s0 + $0x26c] sm:$0xf]
  %v119 = vld [vmem:[%s0 + $0x270] sm:$0xff]
  %v120 = vld [vmem:[%s0 + $0x278] sm:$0xf]
  %v121 = vld [vmem:[%s0 + $0x27c] sm:$0xff]
  %v122 = vld [vmem:[%s0 + $0x284] sm:$0xf]
  %v123 = vld [vmem:[%s0 + $0x288] sm:$0xff]
  %v124 = vld [vmem:[%s0 + $0x290] sm:$0xf]
  %v125 = vld [vmem:[%s0 + $0x294] sm:$0xff]
  %v126 = vld [vmem:[%s0 + $0x29c] sm:$0xf]
  %v127 = vld [vmem:[%s0 + $0x2a0] sm:$0xff]
  %v128 = vld [vmem:[%s0 + $0x2a8] sm:$0xf]
  %v129 = vld [vmem:[%s0 + $0x2ac] sm:$0xff]
  %v130 = vld [vmem:[%s0 + $0x2b4] sm:$0xf]
  %v131 = vld [vmem:[%s0 + $0x2b8] sm:$0xff]
  %v132 = vld [vmem:[%s0 + $0x2c0] sm:$0xf]
  %v133 = vld [vmem:[%s0 + $0x2c4] sm:$0xff]
  %v134 = vld [vmem:[%s0 + $0x2cc] sm:$0xf]
  %v135 = vld [vmem:[%s0 + $0x2d0] sm:$0xff]
  %v136 = vld [vmem:[%s0 + $0x2d8] sm:$0xf]
  %v137 = vld [vmem:[%s0 + $0x2dc] sm:$0xff]
  %v138 = vld [vmem:[%s0 + $0x2e4] sm:$0xf]
  %v139 = vld [vmem:[%s0 + $0x2e8] sm:$0xff]
  %v140 = vld [vmem:[%s0 + $0x2f0] sm:$0xf]
  %v141 = vld [vmem:[%s0 + $0x2f4] sm:$0xff]
  %v142 = vld [vmem:[%s0 + $0x2fc] sm:$0xf]
  %v143 = vld [vmem:[%s1] sm:$0xf]
  %v144 = vld [vmem:[%s1 + $0x4] sm:$0xf]
  %v145 = vld [vmem:[%s1 + $0x8] sm:$0xf]
  %v146 = vld [vmem:[%s1 + $0xc] sm:$0xf]
  %v147 = vld [vmem:[%s1 + $0x10] sm:$0xf]
  %v148 = vld [vmem:[%s1 + $0x14] sm:$0xf]
  %v149 = vld [vmem:[%s1 + $0x18] sm:$0xf]
  %v150 = vld [vmem:[%s1 + $0x1c] sm:$0xf]
  %v151 = vld [vmem:[%s1 + $0x20] sm:$0xf]
  %v152 = vld [vmem:[%s1 + $0x24] sm:$0xf]
  %v153 = vld [vmem:[%s1 + $0x28] sm:$0xf]
  %v154 = vld [vmem:[%s1 + $0x2c] sm:$0xf]
  %v155 = vld [vmem:[%s1 + $0x30] sm:$0xf]
  %v156 = vld [vmem:[%s1 + $0x34] sm:$0xf]
  %v157 = vld [vmem:[%s1 + $0x38] sm:$0xf]
  %v158 = vld [vmem:[%s1 + $0x3c] sm:$0xf]
  %v159 = vld [vmem:[%s1 + $0x40] sm:$0xf]
  %v160 = vld [vmem:[%s1 + $0x44] sm:$0xf]
  %v161 = vld [vmem:[%s1 + $0x48] sm:$0xf]
  %v162 = vld [vmem:[%s1 + $0x4c] sm:$0xf]
  %v163 = vld [vmem:[%s1 + $0x50] sm:$0xf]
  %v164 = vld [vmem:[%s1 + $0x54] sm:$0xf]
  %v165 = vld [vmem:[%s1 + $0x58] sm:$0xf]
  %v166 = vld [vmem:[%s1 + $0x5c] sm:$0xf]
  %v167 = vld [vmem:[%s1 + $0x60] sm:$0xf]
  %v168 = vld [vmem:[%s1 + $0x64] sm:$0xf]
  %v169 = vld [vmem:[%s1 + $0x68] sm:$0xf]
  %v170 = vld [vmem:[%s1 + $0x6c] sm:$0xf]
  %v171 = vld [vmem:[%s1 + $0x70] sm:$0xf]
  %v172 = vld [vmem:[%s1 + $0x74] sm:$0xf]
  %v173 = vld [vmem:[%s1 + $0x78] sm:$0xf]
  %v174 = vld [vmem:[%s1 + $0x7c] sm:$0xf]
  %v175 = vld [vmem:[%s1 + $0x80] sm:$0xf]
  %v176 = vld [vmem:[%s1 + $0x84] sm:$0xf]
  %v177 = vld [vmem:[%s1 + $0x88] sm:$0xf]
  %v178 = vld [vmem:[%s1 + $0x8c] sm:$0xf]
  %v307 = vunpack.c.l.b16 %v15
  %v308 = vunpack.c.h.b16 %v15
  %v309 = vunpack.c.l.b16 %v16
  %v310 = vunpack.c.l.b16 %v17
  %v311 = vunpack.c.h.b16 %v17
  %v312 = vunpack.c.l.b16 %v18
  %v313 = vunpack.c.l.b16 %v19
  %v314 = vunpack.c.h.b16 %v19
  %v315 = vunpack.c.l.b16 %v20
  %v316 = vunpack.c.l.b16 %v21
  %v317 = vunpack.c.h.b16 %v21
  %v318 = vunpack.c.l.b16 %v22
  %v319 = vunpack.c.l.b16 %v23
  %v320 = vunpack.c.h.b16 %v23
  %v321 = vunpack.c.l.b16 %v24
  %v322 = vunpack.c.l.b16 %v25
  %v323 = vunpack.c.h.b16 %v25
  %v324 = vunpack.c.l.b16 %v26
  %v325 = vunpack.c.l.b16 %v27
  %v326 = vunpack.c.h.b16 %v27
  %v327 = vunpack.c.l.b16 %v28
  %v328 = vunpack.c.l.b16 %v29
  %v329 = vunpack.c.h.b16 %v29
  %v330 = vunpack.c.l.b16 %v30
  %v331 = vunpack.c.l.b16 %v31
  %v332 = vunpack.c.h.b16 %v31
  %v333 = vunpack.c.l.b16 %v32
  %v334 = vunpack.c.l.b16 %v33
  %v335 = vunpack.c.h.b16 %v33
  %v336 = vunpack.c.l.b16 %v34
  %v337 = vunpack.c.l.b16 %v35
  %v338 = vunpack.c.h.b16 %v35
  %v339 = vunpack.c.l.b16 %v36
  %v340 = vunpack.c.l.b16 %v37
  %v341 = vunpack.c.h.b16 %v37
  %v342 = vunpack.c.l.b16 %v38
  %v343 = vunpack.c.l.b16 %v39
  %v344 = vunpack.c.h.b16 %v39
  %v345 = vunpack.c.l.b16 %v40
  %v346 = vunpack.c.l.b16 %v41
  %v347 = vunpack.c.h.b16 %v41
  %v348 = vunpack.c.l.b16 %v42
  %v349 = vunpack.c.l.b16 %v43
  %v350 = vunpack.c.h.b16 %v43
  %v351 = vunpack.c.l.b16 %v44
  %v352 = vunpack.c.l.b16 %v45
  %v353 = vunpack.c.h.b16 %v45
  %v354 = vunpack.c.l.b16 %v46
  %v355 = vunpack.c.l.b16 %v47
  %v356 = vunpack.c.h.b16 %v47
  %v357 = vunpack.c.l.b16 %v48
  %v358 = vunpack.c.l.b16 %v49
  %v359 = vunpack.c.h.b16 %v49
  %v360 = vunpack.c.l.b16 %v50
  %v361 = vunpack.c.l.b16 %v51
  %v362 = vunpack.c.h.b16 %v51
  %v363 = vunpack.c.l.b16 %v52
  %v364 = vunpack.c.l.b16 %v53
  %v365 = vunpack.c.h.b16 %v53
  %v366 = vunpack.c.l.b16 %v54
  %v367 = vunpack.c.l.b16 %v55
  %v368 = vunpack.c.h.b16 %v55
  %v369 = vunpack.c.l.b16 %v56
  %v370 = vunpack.c.l.b16 %v57
  %v371 = vunpack.c.h.b16 %v57
  %v372 = vunpack.c.l.b16 %v58
  %v373 = vunpack.c.l.b16 %v59
  %v374 = vunpack.c.h.b16 %v59
  %v375 = vunpack.c.l.b16 %v60
  %v376 = vunpack.c.l.b16 %v61
  %v377 = vunpack.c.h.b16 %v61
  %v378 = vunpack.c.l.b16 %v62
  %v379 = vunpack.c.l.b16 %v63
  %v380 = vunpack.c.h.b16 %v63
  %v381 = vunpack.c.l.b16 %v64
  %v382 = vunpack.c.l.b16 %v65
  %v383 = vunpack.c.h.b16 %v65
  %v384 = vunpack.c.l.b16 %v66
  %v385 = vunpack.c.l.b16 %v67
  %v386 = vunpack.c.h.b16 %v67
  %v387 = vunpack.c.l.b16 %v68
  %v388 = vunpack.c.l.b16 %v69
  %v389 = vunpack.c.h.b16 %v69
  %v390 = vunpack.c.l.b16 %v70
  %v391 = vunpack.c.l.b16 %v71
  %v392 = vunpack.c.h.b16 %v71
  %v393 = vunpack.c.l.b16 %v72
  %v394 = vunpack.c.l.b16 %v73
  %v395 = vunpack.c.h.b16 %v73
  %v396 = vunpack.c.l.b16 %v74
  %v397 = vunpack.c.l.b16 %v75
  %v398 = vunpack.c.h.b16 %v75
  %v399 = vunpack.c.l.b16 %v76
  %v400 = vunpack.c.l.b16 %v77
  %v401 = vunpack.c.h.b16 %v77
  %v402 = vunpack.c.l.b16 %v78
  %v403 = vunpack.c.l.b16 %v79
  %v404 = vunpack.c.h.b16 %v79
  %v405 = vunpack.c.l.b16 %v80
  %v406 = vunpack.c.l.b16 %v81
  %v407 = vunpack.c.h.b16 %v81
  %v408 = vunpack.c.l.b16 %v82
  %v409 = vunpack.c.l.b16 %v83
  %v410 = vunpack.c.h.b16 %v83
  %v411 = vunpack.c.l.b16 %v84
  %v412 = vunpack.c.l.b16 %v85
  %v413 = vunpack.c.h.b16 %v85
  %v414 = vunpack.c.l.b16 %v86
  %v415 = vunpack.c.l.b16 %v87
  %v416 = vunpack.c.h.b16 %v87
  %v417 = vunpack.c.l.b16 %v88
  %v418 = vunpack.c.l.b16 %v89
  %v419 = vunpack.c.h.b16 %v89
  %v420 = vunpack.c.l.b16 %v90
  %v421 = vunpack.c.l.b16 %v91
  %v422 = vunpack.c.h.b16 %v91
  %v423 = vunpack.c.l.b16 %v92
  %v424 = vunpack.c.l.b16 %v93
  %v425 = vunpack.c.h.b16 %v93
  %v426 = vunpack.c.l.b16 %v94
  %v427 = vunpack.c.l.b16 %v95
  %v428 = vunpack.c.h.b16 %v95
  %v429 = vunpack.c.l.b16 %v96
  %v430 = vunpack.c.l.b16 %v97
  %v431 = vunpack.c.h.b16 %v97
  %v432 = vunpack.c.l.b16 %v98
  %v433 = vunpack.c.l.b16 %v99
  %v434 = vunpack.c.h.b16 %v99
  %v435 = vunpack.c.l.b16 %v100
  %v436 = vunpack.c.l.b16 %v101
  %v437 = vunpack.c.h.b16 %v101
  %v438 = vunpack.c.l.b16 %v102
  %v439 = vunpack.c.l.b16 %v103
  %v440 = vunpack.c.h.b16 %v103
  %v441 = vunpack.c.l.b16 %v104
  %v442 = vunpack.c.l.b16 %v105
  %v443 = vunpack.c.h.b16 %v105
  %v444 = vunpack.c.l.b16 %v106
  %v445 = vunpack.c.l.b16 %v107
  %v446 = vunpack.c.h.b16 %v107
  %v447 = vunpack.c.l.b16 %v108
  %v448 = vunpack.c.l.b16 %v109
  %v449 = vunpack.c.h.b16 %v109
  %v450 = vunpack.c.l.b16 %v110
  %v451 = vunpack.c.l.b16 %v111
  %v452 = vunpack.c.h.b16 %v111
  %v453 = vunpack.c.l.b16 %v112
  %v454 = vunpack.c.l.b16 %v113
  %v455 = vunpack.c.h.b16 %v113
  %v456 = vunpack.c.l.b16 %v114
  %v457 = vunpack.c.l.b16 %v115
  %v458 = vunpack.c.h.b16 %v115
  %v459 = vunpack.c.l.b16 %v116
  %v460 = vunpack.c.l.b16 %v117
  %v461 = vunpack.c.h.b16 %v117
  %v462 = vunpack.c.l.b16 %v118
  %v463 = vunpack.c.l.b16 %v119
  %v464 = vunpack.c.h.b16 %v119
  %v465 = vunpack.c.l.b16 %v120
  %v466 = vunpack.c.l.b16 %v121
  %v467 = vunpack.c.h.b16 %v121
  %v468 = vunpack.c.l.b16 %v122
  %v469 = vunpack.c.l.b16 %v123
  %v470 = vunpack.c.h.b16 %v123
  %v471 = vunpack.c.l.b16 %v124
  %v472 = vunpack.c.l.b16 %v125
  %v473 = vunpack.c.h.b16 %v125
  %v474 = vunpack.c.l.b16 %v126
  %v475 = vunpack.c.l.b16 %v127
  %v476 = vunpack.c.h.b16 %v127
  %v477 = vunpack.c.l.b16 %v128
  %v478 = vunpack.c.l.b16 %v129
  %v479 = vunpack.c.h.b16 %v129
  %v480 = vunpack.c.l.b16 %v130
  %v481 = vunpack.c.l.b16 %v131
  %v482 = vunpack.c.h.b16 %v131
  %v483 = vunpack.c.l.b16 %v132
  %v484 = vunpack.c.l.b16 %v133
  %v485 = vunpack.c.h.b16 %v133
  %v486 = vunpack.c.l.b16 %v134
  %v487 = vunpack.c.l.b16 %v135
  %v488 = vunpack.c.h.b16 %v135
  %v489 = vunpack.c.l.b16 %v136
  %v490 = vunpack.c.l.b16 %v137
  %v491 = vunpack.c.h.b16 %v137
  %v492 = vunpack.c.l.b16 %v138
  %v493 = vunpack.c.l.b16 %v139
  %v494 = vunpack.c.h.b16 %v139
  %v495 = vunpack.c.l.b16 %v140
  %v496 = vunpack.c.l.b16 %v141
  %v497 = vunpack.c.h.b16 %v141
  %v498 = vunpack.c.l.b16 %v142
  %v499 = vpack.c.b16 %v310, %v307
  %v500 = vpack.c.b16 %v311, %v308
  %v501 = vpack.c.b16 %v312, %v309
  %v502 = vpack.c.b16 %v316, %v313
  %v503 = vpack.c.b16 %v317, %v314
  %v504 = vpack.c.b16 %v318, %v315
  %v505 = vpack.c.b16 %v322, %v319
  %v506 = vpack.c.b16 %v323, %v320
  %v507 = vpack.c.b16 %v324, %v321
  %v508 = vpack.c.b16 %v328, %v325
  %v509 = vpack.c.b16 %v329, %v326
  %v510 = vpack.c.b16 %v330, %v327
  %v511 = vpack.c.b16 %v334, %v331
  %v512 = vpack.c.b16 %v335, %v332
  %v513 = vpack.c.b16 %v336, %v333
  %v514 = vpack.c.b16 %v340, %v337
  %v515 = vpack.c.b16 %v341, %v338
  %v516 = vpack.c.b16 %v342, %v339
  %v517 = vpack.c.b16 %v346, %v343
  %v518 = vpack.c.b16 %v347, %v344
  %v519 = vpack.c.b16 %v348, %v345
  %v520 = vpack.c.b16 %v352, %v349
  %v521 = vpack.c.b16 %v353, %v350
  %v522 = vpack.c.b16 %v354, %v351
  %v523 = vpack.c.b16 %v358, %v355
  %v524 = vpack.c.b16 %v359, %v356
  %v525 = vpack.c.b16 %v360, %v357
  %v526 = vpack.c.b16 %v364, %v361
  %v527 = vpack.c.b16 %v365, %v362
  %v528 = vpack.c.b16 %v366, %v363
  %v529 = vpack.c.b16 %v370, %v367
  %v530 = vpack.c.b16 %v371, %v368
  %v531 = vpack.c.b16 %v372, %v369
  %v532 = vpack.c.b16 %v376, %v373
  %v533 = vpack.c.b16 %v377, %v374
  %v534 = vpack.c.b16 %v378, %v375
  %v535 = vpack.c.b16 %v382, %v379
  %v536 = vpack.c.b16 %v383, %v380
  %v537 = vpack.c.b16 %v384, %v381
  %v538 = vpack.c.b16 %v388, %v385
  %v539 = vpack.c.b16 %v389, %v386
  %v540 = vpack.c.b16 %v390, %v387
  %v541 = vpack.c.b16 %v394, %v391
  %v542 = vpack.c.b16 %v395, %v392
  %v543 = vpack.c.b16 %v396, %v393
  %v544 = vpack.c.b16 %v400, %v397
  %v545 = vpack.c.b16 %v401, %v398
  %v546 = vpack.c.b16 %v402, %v399
  %v547 = vpack.c.b16 %v406, %v403
  %v548 = vpack.c.b16 %v407, %v404
  %v549 = vpack.c.b16 %v408, %v405
  %v550 = vpack.c.b16 %v412, %v409
  %v551 = vpack.c.b16 %v413, %v410
  %v552 = vpack.c.b16 %v414, %v411
  %v553 = vpack.c.b16 %v418, %v415
  %v554 = vpack.c.b16 %v419, %v416
  %v555 = vpack.c.b16 %v420, %v417
  %v556 = vpack.c.b16 %v424, %v421
  %v557 = vpack.c.b16 %v425, %v422
  %v558 = vpack.c.b16 %v426, %v423
  %v559 = vpack.c.b16 %v430, %v427
  %v560 = vpack.c.b16 %v431, %v428
  %v561 = vpack.c.b16 %v432, %v429
  %v562 = vpack.c.b16 %v436, %v433
  %v563 = vpack.c.b16 %v437, %v434
  %v564 = vpack.c.b16 %v438, %v435
  %v565 = vpack.c.b16 %v442, %v439
  %v566 = vpack.c.b16 %v443, %v440
  %v567 = vpack.c.b16 %v444, %v441
  %v568 = vpack.c.b16 %v448, %v445
  %v569 = vpack.c.b16 %v449, %v446
  %v570 = vpack.c.b16 %v450, %v447
  %v571 = vpack.c.b16 %v454, %v451
  %v572 = vpack.c.b16 %v455, %v452
  %v573 = vpack.c.b16 %v456, %v453
  %v574 = vpack.c.b16 %v460, %v457
  %v575 = vpack.c.b16 %v461, %v458
  %v576 = vpack.c.b16 %v462, %v459
  %v577 = vpack.c.b16 %v466, %v463
  %v578 = vpack.c.b16 %v467, %v464
  %v579 = vpack.c.b16 %v468, %v465
  %v580 = vpack.c.b16 %v472, %v469
  %v581 = vpack.c.b16 %v473, %v470
  %v582 = vpack.c.b16 %v474, %v471
  %v583 = vpack.c.b16 %v478, %v475
  %v584 = vpack.c.b16 %v479, %v476
  %v585 = vpack.c.b16 %v480, %v477
  %v586 = vpack.c.b16 %v484, %v481
  %v587 = vpack.c.b16 %v485, %v482
  %v588 = vpack.c.b16 %v486, %v483
  %v589 = vpack.c.b16 %v490, %v487
  %v590 = vpack.c.b16 %v491, %v488
  %v591 = vpack.c.b16 %v492, %v489
  %v592 = vpack.c.b16 %v496, %v493
  %v593 = vpack.c.b16 %v497, %v494
  %v594 = vpack.c.b16 %v498, %v495
  %v695 = vunpack.c.l.b16 %v143
  %v696 = vunpack.c.l.b16 %v144
  %v697 = vunpack.c.l.b16 %v145
  %v698 = vunpack.c.l.b16 %v146
  %v699 = vunpack.c.l.b16 %v147
  %v700 = vunpack.c.l.b16 %v148
  %v701 = vunpack.c.l.b16 %v149
  %v702 = vunpack.c.l.b16 %v150
  %v703 = vunpack.c.l.b16 %v151
  %v704 = vunpack.c.l.b16 %v152
  %v705 = vunpack.c.l.b16 %v153
  %v706 = vunpack.c.l.b16 %v154
  %v707 = vunpack.c.l.b16 %v155
  %v708 = vunpack.c.l.b16 %v156
  %v709 = vunpack.c.l.b16 %v157
  %v710 = vunpack.c.l.b16 %v158
  %v711 = vunpack.c.l.b16 %v159
  %v712 = vunpack.c.l.b16 %v160
  %v713 = vunpack.c.l.b16 %v161
  %v714 = vunpack.c.l.b16 %v162
  %v715 = vunpack.c.l.b16 %v163
  %v716 = vunpack.c.l.b16 %v164
  %v717 = vunpack.c.l.b16 %v165
  %v718 = vunpack.c.l.b16 %v166
  %v719 = vunpack.c.l.b16 %v167
  %v720 = vunpack.c.l.b16 %v168
  %v721 = vunpack.c.l.b16 %v169
  %v722 = vunpack.c.l.b16 %v170
  %v723 = vunpack.c.l.b16 %v171
  %v724 = vunpack.c.l.b16 %v172
  %v725 = vunpack.c.l.b16 %v173
  %v726 = vunpack.c.l.b16 %v174
  %v727 = vunpack.c.l.b16 %v175
  %v728 = vunpack.c.l.b16 %v176
  %v729 = vunpack.c.l.b16 %v177
  %v730 = vunpack.c.l.b16 %v178
  %v731 = vpack.c.b16 %v696, %v695
  %v732 = vpack.c.b16 %v698, %v697
  %v733 = vpack.c.b16 %v700, %v699
  %v734 = vpack.c.b16 %v702, %v701
  %v735 = vpack.c.b16 %v704, %v703
  %v736 = vpack.c.b16 %v706, %v705
  %v737 = vpack.c.b16 %v708, %v707
  %v738 = vpack.c.b16 %v710, %v709
  %v739 = vpack.c.b16 %v712, %v711
  %v740 = vpack.c.b16 %v714, %v713
  %v741 = vpack.c.b16 %v716, %v715
  %v742 = vpack.c.b16 %v718, %v717
  %v743 = vpack.c.b16 %v720, %v719
  %v744 = vpack.c.b16 %v722, %v721
  %v745 = vpack.c.b16 %v724, %v723
  %v746 = vpack.c.b16 %v726, %v725
  %v747 = vpack.c.b16 %v728, %v727
  %v748 = vpack.c.b16 %v730, %v729
  %vm767 = vcmask 261120
  %v769 = vsel %vm767, %v501, 0
  %v772 = vsel %vm767, %v504, 0
  %v775 = vsel %vm767, %v507, 0
  %v778 = vsel %vm767, %v510, 0
  %v781 = vsel %vm767, %v513, 0
  %v784 = vsel %vm767, %v516, 0
  %v787 = vsel %vm767, %v519, 0
  %v790 = vsel %vm767, %v522, 0
  %v793 = vsel %vm767, %v525, 0
  %v796 = vsel %vm767, %v528, 0
  %v799 = vsel %vm767, %v531, 0
  %v802 = vsel %vm767, %v534, 0
  %v805 = vsel %vm767, %v537, 0
  %v808 = vsel %vm767, %v540, 0
  %v811 = vsel %vm767, %v543, 0
  %v814 = vsel %vm767, %v546, 0
  %v817 = vsel %vm767, %v549, 0
  %v820 = vsel %vm767, %v552, 0
  %v823 = vsel %vm767, %v555, 0
  %v826 = vsel %vm767, %v558, 0
  %v829 = vsel %vm767, %v561, 0
  %v832 = vsel %vm767, %v564, 0
  %v835 = vsel %vm767, %v567, 0
  %v838 = vsel %vm767, %v570, 0
  %v841 = vsel %vm767, %v573, 0
  %v844 = vsel %vm767, %v576, 0
  %v847 = vsel %vm767, %v579, 0
  %v850 = vsel %vm767, %v582, 0
  %v853 = vsel %vm767, %v585, 0
  %v856 = vsel %vm767, %v588, 0
  %v859 = vsel %vm767, %v591, 0
  %v862 = vsel %vm767, %v594, 0
  %864 = vmatprep.subr.bf16.mxu0 0
  %865 = vmatpush1.bf16.msra.mxu0 %v738
  %866 = vmatprep.subr.bf16.mxu0 0
  %867 = vmatpush1.bf16.msra.mxu0 %v737
  %868 = vmatprep.subr.bf16.mxu0 0
  %869 = vmatpush1.bf16.msra.mxu0 %v736
  %870 = vmatprep.subr.bf16.mxu0 0
  %871 = vmatpush1.bf16.msra.mxu0 %v735
  %872 = vmatprep.subr.bf16.mxu0 0
  %873 = vmatpush1.bf16.msra.mxu0 %v734
  %874 = vmatprep.subr.bf16.mxu0 0
  %875 = vmatpush1.bf16.msra.mxu0 %v733
  %876 = vmatprep.subr.bf16.mxu0 0
  %877 = vmatpush1.bf16.msra.mxu0 %v732
  %878 = vmatprep.subr.bf16.mxu0 0
  %879 = vmatpush1.bf16.msra.mxu0 %v731
  %880 = vmatprep.subr.bf16.mxu0 0
  %881 = vmatpush2.bf16.msra.mxu0 %v746
  %882 = vmatprep.subr.bf16.mxu0 0
  %883 = vmatpush2.bf16.msra.mxu0 %v745
  %884 = vmatprep.subr.bf16.mxu0 0
  %885 = vmatpush2.bf16.msra.mxu0 %v744
  %886 = vmatprep.subr.bf16.mxu0 0
  %887 = vmatpush2.bf16.msra.mxu0 %v743
  %888 = vmatprep.subr.bf16.mxu0 0
  %889 = vmatpush2.bf16.msra.mxu0 %v742
  %890 = vmatprep.subr.bf16.mxu0 0
  %891 = vmatpush2.bf16.msra.mxu0 %v741
  %892 = vmatprep.subr.bf16.mxu0 0
  %893 = vmatpush2.bf16.msra.mxu0 %v740
  %894 = vmatprep.subr.bf16.mxu0 0
  %895 = vmatpush2.bf16.msra.mxu0 %v739
  %896 = vmatprep.mubr.bf16.mxu0 %v500
  %897 = vmatmul.mubr.bf16.gmra.mxu0 %v499
  %v898 = vpop.f32.mrf.mxu0
  %v899 = vadd.f32 0.0, %v898
  %v900 = vpop.f32.mrf.mxu0
  %v901 = vpop.f32.mrf.mxu0
  %v902 = vadd.f32 0.0, %v901
  %v903 = vpop.f32.mrf.mxu0
  %904 = vmatprep.mubr.bf16.mxu0 %v503
  %905 = vmatmul.mubr.bf16.gmra.mxu0 %v502
  %v906 = vpop.f32.mrf.mxu0
  %v907 = vadd.f32 0.0, %v906
  %v908 = vpop.f32.mrf.mxu0
  %v909 = vpop.f32.mrf.mxu0
  %v910 = vadd.f32 0.0, %v909
  %v911 = vpop.f32.mrf.mxu0
  %912 = vmatprep.mubr.bf16.mxu0 %v506
  %913 = vmatmul.mubr.bf16.gmra.mxu0 %v505
  %v914 = vpop.f32.mrf.mxu0
  %v915 = vadd.f32 0.0, %v914
  %v916 = vpop.f32.mrf.mxu0
  %v917 = vpop.f32.mrf.mxu0
  %v918 = vadd.f32 0.0, %v917
  %v919 = vpop.f32.mrf.mxu0
  %920 = vmatprep.mubr.bf16.mxu0 %v509
  %921 = vmatmul.mubr.bf16.gmra.mxu0 %v508
  %v922 = vpop.f32.mrf.mxu0
  %v923 = vadd.f32 0.0, %v922
  %v924 = vpop.f32.mrf.mxu0
  %v925 = vpop.f32.mrf.mxu0
  %v926 = vadd.f32 0.0, %v925
  %v927 = vpop.f32.mrf.mxu0
  %928 = vmatprep.mubr.bf16.mxu0 %v512
  %929 = vmatmul.mubr.bf16.gmra.mxu0 %v511
  %v930 = vpop.f32.mrf.mxu0
  %v931 = vadd.f32 0.0, %v930
  %v932 = vpop.f32.mrf.mxu0
  %v933 = vpop.f32.mrf.mxu0
  %v934 = vadd.f32 0.0, %v933
  %v935 = vpop.f32.mrf.mxu0
  %936 = vmatprep.mubr.bf16.mxu0 %v515
  %937 = vmatmul.mubr.bf16.gmra.mxu0 %v514
  %v938 = vpop.f32.mrf.mxu0
  %v939 = vadd.f32 0.0, %v938
  %v940 = vpop.f32.mrf.mxu0
  %v941 = vpop.f32.mrf.mxu0
  %v942 = vadd.f32 0.0, %v941
  %v943 = vpop.f32.mrf.mxu0
  %944 = vmatprep.mubr.bf16.mxu0 %v518
  %945 = vmatmul.mubr.bf16.gmra.mxu0 %v517
  %v946 = vpop.f32.mrf.mxu0
  %v947 = vadd.f32 0.0, %v946
  %v948 = vpop.f32.mrf.mxu0
  %v949 = vpop.f32.mrf.mxu0
  %v950 = vadd.f32 0.0, %v949
  %v951 = vpop.f32.mrf.mxu0
  %952 = vmatprep.mubr.bf16.mxu0 %v521
  %953 = vmatmul.mubr.bf16.gmra.mxu0 %v520
  %v954 = vpop.f32.mrf.mxu0
  %v955 = vadd.f32 0.0, %v954
  %v956 = vpop.f32.mrf.mxu0
  %v957 = vpop.f32.mrf.mxu0
  %v958 = vadd.f32 0.0, %v957
  %v959 = vpop.f32.mrf.mxu0
  %960 = vmatprep.mubr.bf16.mxu0 %v524
  %961 = vmatmul.mubr.bf16.gmra.mxu0 %v523
  %v962 = vpop.f32.mrf.mxu0
  %v963 = vadd.f32 0.0, %v962
  %v964 = vpop.f32.mrf.mxu0
  %v965 = vpop.f32.mrf.mxu0
  %v966 = vadd.f32 0.0, %v965
  %v967 = vpop.f32.mrf.mxu0
  %968 = vmatprep.mubr.bf16.mxu0 %v527
  %969 = vmatmul.mubr.bf16.gmra.mxu0 %v526
  %v970 = vpop.f32.mrf.mxu0
  %v971 = vadd.f32 0.0, %v970
  %v972 = vpop.f32.mrf.mxu0
  %v973 = vpop.f32.mrf.mxu0
  %v974 = vadd.f32 0.0, %v973
  %v975 = vpop.f32.mrf.mxu0
  %976 = vmatprep.mubr.bf16.mxu0 %v530
  %977 = vmatmul.mubr.bf16.gmra.mxu0 %v529
  %v978 = vpop.f32.mrf.mxu0
  %v979 = vadd.f32 0.0, %v978
  %v980 = vpop.f32.mrf.mxu0
  %v981 = vpop.f32.mrf.mxu0
  %v982 = vadd.f32 0.0, %v981
  %v983 = vpop.f32.mrf.mxu0
  %984 = vmatprep.mubr.bf16.mxu0 %v533
  %985 = vmatmul.mubr.bf16.gmra.mxu0 %v532
  %v986 = vpop.f32.mrf.mxu0
  %v987 = vadd.f32 0.0, %v986
  %v988 = vpop.f32.mrf.mxu0
  %v989 = vpop.f32.mrf.mxu0
  %v990 = vadd.f32 0.0, %v989
  %v991 = vpop.f32.mrf.mxu0
  %992 = vmatprep.mubr.bf16.mxu0 %v536
  %993 = vmatmul.mubr.bf16.gmra.mxu0 %v535
  %v994 = vpop.f32.mrf.mxu0
  %v995 = vadd.f32 0.0, %v994
  %v996 = vpop.f32.mrf.mxu0
  %v997 = vpop.f32.mrf.mxu0
  %v998 = vadd.f32 0.0, %v997
  %v999 = vpop.f32.mrf.mxu0
  %1000 = vmatprep.mubr.bf16.mxu0 %v539
  %1001 = vmatmul.mubr.bf16.gmra.mxu0 %v538
  %v1002 = vpop.f32.mrf.mxu0
  %v1003 = vadd.f32 0.0, %v1002
  %v1004 = vpop.f32.mrf.mxu0
  %v1005 = vpop.f32.mrf.mxu0
  %v1006 = vadd.f32 0.0, %v1005
  %v1007 = vpop.f32.mrf.mxu0
  %1008 = vmatprep.mubr.bf16.mxu0 %v542
  %1009 = vmatmul.mubr.bf16.gmra.mxu0 %v541
  %v1010 = vpop.f32.mrf.mxu0
  %v1011 = vadd.f32 0.0, %v1010
  %v1012 = vpop.f32.mrf.mxu0
  %v1013 = vpop.f32.mrf.mxu0
  %v1014 = vadd.f32 0.0, %v1013
  %v1015 = vpop.f32.mrf.mxu0
  %1016 = vmatprep.mubr.bf16.mxu0 %v545
  %1017 = vmatmul.mubr.bf16.gmra.mxu0 %v544
  %v1018 = vpop.f32.mrf.mxu0
  %v1019 = vadd.f32 0.0, %v1018
  %v1020 = vpop.f32.mrf.mxu0
  %v1021 = vpop.f32.mrf.mxu0
  %v1022 = vadd.f32 0.0, %v1021
  %v1023 = vpop.f32.mrf.mxu0
  %1024 = vmatprep.mubr.bf16.mxu0 %v548
  %1025 = vmatmul.mubr.bf16.gmra.mxu0 %v547
  %v1026 = vpop.f32.mrf.mxu0
  %v1027 = vadd.f32 0.0, %v1026
  %v1028 = vpop.f32.mrf.mxu0
  %v1029 = vpop.f32.mrf.mxu0
  %v1030 = vadd.f32 0.0, %v1029
  %v1031 = vpop.f32.mrf.mxu0
  %1032 = vmatprep.mubr.bf16.mxu0 %v551
  %1033 = vmatmul.mubr.bf16.gmra.mxu0 %v550
  %v1034 = vpop.f32.mrf.mxu0
  %v1035 = vadd.f32 0.0, %v1034
  %v1036 = vpop.f32.mrf.mxu0
  %v1037 = vpop.f32.mrf.mxu0
  %v1038 = vadd.f32 0.0, %v1037
  %v1039 = vpop.f32.mrf.mxu0
  %1040 = vmatprep.mubr.bf16.mxu0 %v554
  %1041 = vmatmul.mubr.bf16.gmra.mxu0 %v553
  %v1042 = vpop.f32.mrf.mxu0
  %v1043 = vadd.f32 0.0, %v1042
  %v1044 = vpop.f32.mrf.mxu0
  %v1045 = vpop.f32.mrf.mxu0
  %v1046 = vadd.f32 0.0, %v1045
  %v1047 = vpop.f32.mrf.mxu0
  %1048 = vmatprep.mubr.bf16.mxu0 %v557
  %1049 = vmatmul.mubr.bf16.gmra.mxu0 %v556
  %v1050 = vpop.f32.mrf.mxu0
  %v1051 = vadd.f32 0.0, %v1050
  %v1052 = vpop.f32.mrf.mxu0
  %v1053 = vpop.f32.mrf.mxu0
  %v1054 = vadd.f32 0.0, %v1053
  %v1055 = vpop.f32.mrf.mxu0
  %1056 = vmatprep.mubr.bf16.mxu0 %v560
  %1057 = vmatmul.mubr.bf16.gmra.mxu0 %v559
  %v1058 = vpop.f32.mrf.mxu0
  %v1059 = vadd.f32 0.0, %v1058
  %v1060 = vpop.f32.mrf.mxu0
  %v1061 = vpop.f32.mrf.mxu0
  %v1062 = vadd.f32 0.0, %v1061
  %v1063 = vpop.f32.mrf.mxu0
  %1064 = vmatprep.mubr.bf16.mxu0 %v563
  %1065 = vmatmul.mubr.bf16.gmra.mxu0 %v562
  %v1066 = vpop.f32.mrf.mxu0
  %v1067 = vadd.f32 0.0, %v1066
  %v1068 = vpop.f32.mrf.mxu0
  %v1069 = vpop.f32.mrf.mxu0
  %v1070 = vadd.f32 0.0, %v1069
  %v1071 = vpop.f32.mrf.mxu0
  %1072 = vmatprep.mubr.bf16.mxu0 %v566
  %1073 = vmatmul.mubr.bf16.gmra.mxu0 %v565
  %v1074 = vpop.f32.mrf.mxu0
  %v1075 = vadd.f32 0.0, %v1074
  %v1076 = vpop.f32.mrf.mxu0
  %v1077 = vpop.f32.mrf.mxu0
  %v1078 = vadd.f32 0.0, %v1077
  %v1079 = vpop.f32.mrf.mxu0
  %1080 = vmatprep.mubr.bf16.mxu0 %v569
  %1081 = vmatmul.mubr.bf16.gmra.mxu0 %v568
  %v1082 = vpop.f32.mrf.mxu0
  %v1083 = vadd.f32 0.0, %v1082
  %v1084 = vpop.f32.mrf.mxu0
  %v1085 = vpop.f32.mrf.mxu0
  %v1086 = vadd.f32 0.0, %v1085
  %v1087 = vpop.f32.mrf.mxu0
  %1088 = vmatprep.mubr.bf16.mxu0 %v572
  %1089 = vmatmul.mubr.bf16.gmra.mxu0 %v571
  %v1090 = vpop.f32.mrf.mxu0
  %v1091 = vadd.f32 0.0, %v1090
  %v1092 = vpop.f32.mrf.mxu0
  %v1093 = vpop.f32.mrf.mxu0
  %v1094 = vadd.f32 0.0, %v1093
  %v1095 = vpop.f32.mrf.mxu0
  %1096 = vmatprep.mubr.bf16.mxu0 %v575
  %1097 = vmatmul.mubr.bf16.gmra.mxu0 %v574
  %v1098 = vpop.f32.mrf.mxu0
  %v1099 = vadd.f32 0.0, %v1098
  %v1100 = vpop.f32.mrf.mxu0
  %v1101 = vpop.f32.mrf.mxu0
  %v1102 = vadd.f32 0.0, %v1101
  %v1103 = vpop.f32.mrf.mxu0
  %1104 = vmatprep.mubr.bf16.mxu0 %v578
  %1105 = vmatmul.mubr.bf16.gmra.mxu0 %v577
  %v1106 = vpop.f32.mrf.mxu0
  %v1107 = vadd.f32 0.0, %v1106
  %v1108 = vpop.f32.mrf.mxu0
  %v1109 = vpop.f32.mrf.mxu0
  %v1110 = vadd.f32 0.0, %v1109
  %v1111 = vpop.f32.mrf.mxu0
  %1112 = vmatprep.mubr.bf16.mxu0 %v581
  %1113 = vmatmul.mubr.bf16.gmra.mxu0 %v580
  %v1114 = vpop.f32.mrf.mxu0
  %v1115 = vadd.f32 0.0, %v1114
  %v1116 = vpop.f32.mrf.mxu0
  %v1117 = vpop.f32.mrf.mxu0
  %v1118 = vadd.f32 0.0, %v1117
  %v1119 = vpop.f32.mrf.mxu0
  %1120 = vmatprep.mubr.bf16.mxu0 %v584
  %1121 = vmatmul.mubr.bf16.gmra.mxu0 %v583
  %v1122 = vpop.f32.mrf.mxu0
  %v1123 = vadd.f32 0.0, %v1122
  %v1124 = vpop.f32.mrf.mxu0
  %v1125 = vpop.f32.mrf.mxu0
  %v1126 = vadd.f32 0.0, %v1125
  %v1127 = vpop.f32.mrf.mxu0
  %1128 = vmatprep.mubr.bf16.mxu0 %v587
  %1129 = vmatmul.mubr.bf16.gmra.mxu0 %v586
  %v1130 = vpop.f32.mrf.mxu0
  %v1131 = vadd.f32 0.0, %v1130
  %v1132 = vpop.f32.mrf.mxu0
  %v1133 = vpop.f32.mrf.mxu0
  %v1134 = vadd.f32 0.0, %v1133
  %v1135 = vpop.f32.mrf.mxu0
  %1136 = vmatprep.mubr.bf16.mxu0 %v590
  %1137 = vmatmul.mubr.bf16.gmra.mxu0 %v589
  %v1138 = vpop.f32.mrf.mxu0
  %v1139 = vadd.f32 0.0, %v1138
  %v1140 = vpop.f32.mrf.mxu0
  %v1141 = vpop.f32.mrf.mxu0
  %v1142 = vadd.f32 0.0, %v1141
  %v1143 = vpop.f32.mrf.mxu0
  %1144 = vmatprep.mubr.bf16.mxu0 %v593
  %1145 = vmatmul.mubr.bf16.gmra.mxu0 %v592
  %v1146 = vpop.f32.mrf.mxu0
  %v1147 = vadd.f32 0.0, %v1146
  %v1148 = vpop.f32.mrf.mxu0
  %v1149 = vpop.f32.mrf.mxu0
  %v1150 = vadd.f32 0.0, %v1149
  %v1151 = vpop.f32.mrf.mxu0
  %1152 = vdwg.mxu0
  %1153 = vmatprep.subr.bf16.mxu0 0
  %1154 = vmatpush1.bf16.msra.mxu0 0
  %1155 = vmatprep.subr.bf16.mxu0 0
  %1156 = vmatpush1.bf16.msra.mxu0 0
  %1157 = vmatprep.subr.bf16.mxu0 0
  %1158 = vmatpush1.bf16.msra.mxu0 0
  %1159 = vmatprep.subr.bf16.mxu0 0
  %1160 = vmatpush1.bf16.msra.mxu0 0
  %1161 = vmatprep.subr.bf16.mxu0 0
  %1162 = vmatpush1.bf16.msra.mxu0 0
  %1163 = vmatprep.subr.bf16.mxu0 0
  %1164 = vmatpush1.bf16.msra.mxu0 0
  %1165 = vmatprep.subr.bf16.mxu0 0
  %1166 = vmatpush1.bf16.msra.mxu0 %v748
  %1167 = vmatprep.subr.bf16.mxu0 0
  %1168 = vmatpush1.bf16.msra.mxu0 %v747
  %1169 = vmatprep.subr.bf16.mxu0 0
  %1170 = vmatpush2.bf16.msra.mxu0 0
  %1171 = vmatprep.subr.bf16.mxu0 0
  %1172 = vmatpush2.bf16.msra.mxu0 0
  %1173 = vmatprep.subr.bf16.mxu0 0
  %1174 = vmatpush2.bf16.msra.mxu0 0
  %1175 = vmatprep.subr.bf16.mxu0 0
  %1176 = vmatpush2.bf16.msra.mxu0 0
  %1177 = vmatprep.subr.bf16.mxu0 0
  %1178 = vmatpush2.bf16.msra.mxu0 0
  %1179 = vmatprep.subr.bf16.mxu0 0
  %1180 = vmatpush2.bf16.msra.mxu0 0
  %1181 = vmatprep.subr.bf16.mxu0 0
  %1182 = vmatpush2.bf16.msra.mxu0 0
  %1183 = vmatprep.subr.bf16.mxu0 0
  %1184 = vmatpush2.bf16.msra.mxu0 0
  %1185 = vmatprep.mubr.bf16.mxu0 0
  %1186 = vmatmul.mubr.bf16.gmra.mxu0 %v769
  %v1187 = vpop.f32.mrf.mxu0
  %v1188 = vadd.f32 %v899, %v1187
  %v1189 = vpop.f32.mrf.mxu0
  %v1190 = vpop.f32.mrf.mxu0
  %v1191 = vadd.f32 %v902, %v1190
  %v1192 = vpop.f32.mrf.mxu0
  %1193 = vmatprep.mubr.bf16.mxu0 0
  %1194 = vmatmul.mubr.bf16.gmra.mxu0 %v772
  %v1195 = vpop.f32.mrf.mxu0
  %v1196 = vadd.f32 %v907, %v1195
  %v1197 = vpop.f32.mrf.mxu0
  %v1198 = vpop.f32.mrf.mxu0
  %v1199 = vadd.f32 %v910, %v1198
  %v1200 = vpop.f32.mrf.mxu0
  %1201 = vmatprep.mubr.bf16.mxu0 0
  %1202 = vmatmul.mubr.bf16.gmra.mxu0 %v775
  %v1203 = vpop.f32.mrf.mxu0
  %v1204 = vadd.f32 %v915, %v1203
  %v1205 = vpop.f32.mrf.mxu0
  %v1206 = vpop.f32.mrf.mxu0
  %v1207 = vadd.f32 %v918, %v1206
  %v1208 = vpop.f32.mrf.mxu0
  %1209 = vmatprep.mubr.bf16.mxu0 0
  %1210 = vmatmul.mubr.bf16.gmra.mxu0 %v778
  %v1211 = vpop.f32.mrf.mxu0
  %v1212 = vadd.f32 %v923, %v1211
  %v1213 = vpop.f32.mrf.mxu0
  %v1214 = vpop.f32.mrf.mxu0
  %v1215 = vadd.f32 %v926, %v1214
  %v1216 = vpop.f32.mrf.mxu0
  %1217 = vmatprep.mubr.bf16.mxu0 0
  %1218 = vmatmul.mubr.bf16.gmra.mxu0 %v781
  %v1219 = vpop.f32.mrf.mxu0
  %v1220 = vadd.f32 %v931, %v1219
  %v1221 = vpop.f32.mrf.mxu0
  %v1222 = vpop.f32.mrf.mxu0
  %v1223 = vadd.f32 %v934, %v1222
  %v1224 = vpop.f32.mrf.mxu0
  %1225 = vmatprep.mubr.bf16.mxu0 0
  %1226 = vmatmul.mubr.bf16.gmra.mxu0 %v784
  %v1227 = vpop.f32.mrf.mxu0
  %v1228 = vadd.f32 %v939, %v1227
  %v1229 = vpop.f32.mrf.mxu0
  %v1230 = vpop.f32.mrf.mxu0
  %v1231 = vadd.f32 %v942, %v1230
  %v1232 = vpop.f32.mrf.mxu0
  %1233 = vmatprep.mubr.bf16.mxu0 0
  %1234 = vmatmul.mubr.bf16.gmra.mxu0 %v787
  %v1235 = vpop.f32.mrf.mxu0
  %v1236 = vadd.f32 %v947, %v1235
  %v1237 = vpop.f32.mrf.mxu0
  %v1238 = vpop.f32.mrf.mxu0
  %v1239 = vadd.f32 %v950, %v1238
  %v1240 = vpop.f32.mrf.mxu0
  %1241 = vmatprep.mubr.bf16.mxu0 0
  %1242 = vmatmul.mubr.bf16.gmra.mxu0 %v790
  %v1243 = vpop.f32.mrf.mxu0
  %v1244 = vadd.f32 %v955, %v1243
  %v1245 = vpop.f32.mrf.mxu0
  %v1246 = vpop.f32.mrf.mxu0
  %v1247 = vadd.f32 %v958, %v1246
  %v1248 = vpop.f32.mrf.mxu0
  %1249 = vmatprep.mubr.bf16.mxu0 0
  %1250 = vmatmul.mubr.bf16.gmra.mxu0 %v793
  %v1251 = vpop.f32.mrf.mxu0
  %v1252 = vadd.f32 %v963, %v1251
  %v1253 = vpop.f32.mrf.mxu0
  %v1254 = vpop.f32.mrf.mxu0
  %v1255 = vadd.f32 %v966, %v1254
  %v1256 = vpop.f32.mrf.mxu0
  %1257 = vmatprep.mubr.bf16.mxu0 0
  %1258 = vmatmul.mubr.bf16.gmra.mxu0 %v796
  %v1259 = vpop.f32.mrf.mxu0
  %v1260 = vadd.f32 %v971, %v1259
  %v1261 = vpop.f32.mrf.mxu0
  %v1262 = vpop.f32.mrf.mxu0
  %v1263 = vadd.f32 %v974, %v1262
  %v1264 = vpop.f32.mrf.mxu0
  %1265 = vmatprep.mubr.bf16.mxu0 0
  %1266 = vmatmul.mubr.bf16.gmra.mxu0 %v799
  %v1267 = vpop.f32.mrf.mxu0
  %v1268 = vadd.f32 %v979, %v1267
  %v1269 = vpop.f32.mrf.mxu0
  %v1270 = vpop.f32.mrf.mxu0
  %v1271 = vadd.f32 %v982, %v1270
  %v1272 = vpop.f32.mrf.mxu0
  %1273 = vmatprep.mubr.bf16.mxu0 0
  %1274 = vmatmul.mubr.bf16.gmra.mxu0 %v802
  %v1275 = vpop.f32.mrf.mxu0
  %v1276 = vadd.f32 %v987, %v1275
  %v1277 = vpop.f32.mrf.mxu0
  %v1278 = vpop.f32.mrf.mxu0
  %v1279 = vadd.f32 %v990, %v1278
  %v1280 = vpop.f32.mrf.mxu0
  %1281 = vmatprep.mubr.bf16.mxu0 0
  %1282 = vmatmul.mubr.bf16.gmra.mxu0 %v805
  %v1283 = vpop.f32.mrf.mxu0
  %v1284 = vadd.f32 %v995, %v1283
  %v1285 = vpop.f32.mrf.mxu0
  %v1286 = vpop.f32.mrf.mxu0
  %v1287 = vadd.f32 %v998, %v1286
  %v1288 = vpop.f32.mrf.mxu0
  %1289 = vmatprep.mubr.bf16.mxu0 0
  %1290 = vmatmul.mubr.bf16.gmra.mxu0 %v808
  %v1291 = vpop.f32.mrf.mxu0
  %v1292 = vadd.f32 %v1003, %v1291
  %v1293 = vpop.f32.mrf.mxu0
  %v1294 = vpop.f32.mrf.mxu0
  %v1295 = vadd.f32 %v1006, %v1294
  %v1296 = vpop.f32.mrf.mxu0
  %1297 = vmatprep.mubr.bf16.mxu0 0
  %1298 = vmatmul.mubr.bf16.gmra.mxu0 %v811
  %v1299 = vpop.f32.mrf.mxu0
  %v1300 = vadd.f32 %v1011, %v1299
  %v1301 = vpop.f32.mrf.mxu0
  %v1302 = vpop.f32.mrf.mxu0
  %v1303 = vadd.f32 %v1014, %v1302
  %v1304 = vpop.f32.mrf.mxu0
  %1305 = vmatprep.mubr.bf16.mxu0 0
  %1306 = vmatmul.mubr.bf16.gmra.mxu0 %v814
  %v1307 = vpop.f32.mrf.mxu0
  %v1308 = vadd.f32 %v1019, %v1307
  %v1309 = vpop.f32.mrf.mxu0
  %v1310 = vpop.f32.mrf.mxu0
  %v1311 = vadd.f32 %v1022, %v1310
  %v1312 = vpop.f32.mrf.mxu0
  %1313 = vmatprep.mubr.bf16.mxu0 0
  %1314 = vmatmul.mubr.bf16.gmra.mxu0 %v817
  %v1315 = vpop.f32.mrf.mxu0
  %v1316 = vadd.f32 %v1027, %v1315
  %v1317 = vpop.f32.mrf.mxu0
  %v1318 = vpop.f32.mrf.mxu0
  %v1319 = vadd.f32 %v1030, %v1318
  %v1320 = vpop.f32.mrf.mxu0
  %1321 = vmatprep.mubr.bf16.mxu0 0
  %1322 = vmatmul.mubr.bf16.gmra.mxu0 %v820
  %v1323 = vpop.f32.mrf.mxu0
  %v1324 = vadd.f32 %v1035, %v1323
  %v1325 = vpop.f32.mrf.mxu0
  %v1326 = vpop.f32.mrf.mxu0
  %v1327 = vadd.f32 %v1038, %v1326
  %v1328 = vpop.f32.mrf.mxu0
  %1329 = vmatprep.mubr.bf16.mxu0 0
  %1330 = vmatmul.mubr.bf16.gmra.mxu0 %v823
  %v1331 = vpop.f32.mrf.mxu0
  %v1332 = vadd.f32 %v1043, %v1331
  %v1333 = vpop.f32.mrf.mxu0
  %v1334 = vpop.f32.mrf.mxu0
  %v1335 = vadd.f32 %v1046, %v1334
  %v1336 = vpop.f32.mrf.mxu0
  %1337 = vmatprep.mubr.bf16.mxu0 0
  %1338 = vmatmul.mubr.bf16.gmra.mxu0 %v826
  %v1339 = vpop.f32.mrf.mxu0
  %v1340 = vadd.f32 %v1051, %v1339
  %v1341 = vpop.f32.mrf.mxu0
  %v1342 = vpop.f32.mrf.mxu0
  %v1343 = vadd.f32 %v1054, %v1342
  %v1344 = vpop.f32.mrf.mxu0
  %1345 = vmatprep.mubr.bf16.mxu0 0
  %1346 = vmatmul.mubr.bf16.gmra.mxu0 %v829
  %v1347 = vpop.f32.mrf.mxu0
  %v1348 = vadd.f32 %v1059, %v1347
  %v1349 = vpop.f32.mrf.mxu0
  %v1350 = vpop.f32.mrf.mxu0
  %v1351 = vadd.f32 %v1062, %v1350
  %v1352 = vpop.f32.mrf.mxu0
  %1353 = vmatprep.mubr.bf16.mxu0 0
  %1354 = vmatmul.mubr.bf16.gmra.mxu0 %v832
  %v1355 = vpop.f32.mrf.mxu0
  %v1356 = vadd.f32 %v1067, %v1355
  %v1357 = vpop.f32.mrf.mxu0
  %v1358 = vpop.f32.mrf.mxu0
  %v1359 = vadd.f32 %v1070, %v1358
  %v1360 = vpop.f32.mrf.mxu0
  %1361 = vmatprep.mubr.bf16.mxu0 0
  %1362 = vmatmul.mubr.bf16.gmra.mxu0 %v835
  %v1363 = vpop.f32.mrf.mxu0
  %v1364 = vadd.f32 %v1075, %v1363
  %v1365 = vpop.f32.mrf.mxu0
  %v1366 = vpop.f32.mrf.mxu0
  %v1367 = vadd.f32 %v1078, %v1366
  %v1368 = vpop.f32.mrf.mxu0
  %1369 = vmatprep.mubr.bf16.mxu0 0
  %1370 = vmatmul.mubr.bf16.gmra.mxu0 %v838
  %v1371 = vpop.f32.mrf.mxu0
  %v1372 = vadd.f32 %v1083, %v1371
  %v1373 = vpop.f32.mrf.mxu0
  %v1374 = vpop.f32.mrf.mxu0
  %v1375 = vadd.f32 %v1086, %v1374
  %v1376 = vpop.f32.mrf.mxu0
  %1377 = vmatprep.mubr.bf16.mxu0 0
  %1378 = vmatmul.mubr.bf16.gmra.mxu0 %v841
  %v1379 = vpop.f32.mrf.mxu0
  %v1380 = vadd.f32 %v1091, %v1379
  %v1381 = vpop.f32.mrf.mxu0
  %v1382 = vpop.f32.mrf.mxu0
  %v1383 = vadd.f32 %v1094, %v1382
  %v1384 = vpop.f32.mrf.mxu0
  %1385 = vmatprep.mubr.bf16.mxu0 0
  %1386 = vmatmul.mubr.bf16.gmra.mxu0 %v844
  %v1387 = vpop.f32.mrf.mxu0
  %v1388 = vadd.f32 %v1099, %v1387
  %v1389 = vpop.f32.mrf.mxu0
  %v1390 = vpop.f32.mrf.mxu0
  %v1391 = vadd.f32 %v1102, %v1390
  %v1392 = vpop.f32.mrf.mxu0
  %1393 = vmatprep.mubr.bf16.mxu0 0
  %1394 = vmatmul.mubr.bf16.gmra.mxu0 %v847
  %v1395 = vpop.f32.mrf.mxu0
  %v1396 = vadd.f32 %v1107, %v1395
  %v1397 = vpop.f32.mrf.mxu0
  %v1398 = vpop.f32.mrf.mxu0
  %v1399 = vadd.f32 %v1110, %v1398
  %v1400 = vpop.f32.mrf.mxu0
  %1401 = vmatprep.mubr.bf16.mxu0 0
  %1402 = vmatmul.mubr.bf16.gmra.mxu0 %v850
  %v1403 = vpop.f32.mrf.mxu0
  %v1404 = vadd.f32 %v1115, %v1403
  %v1405 = vpop.f32.mrf.mxu0
  %v1406 = vpop.f32.mrf.mxu0
  %v1407 = vadd.f32 %v1118, %v1406
  %v1408 = vpop.f32.mrf.mxu0
  %1409 = vmatprep.mubr.bf16.mxu0 0
  %1410 = vmatmul.mubr.bf16.gmra.mxu0 %v853
  %v1411 = vpop.f32.mrf.mxu0
  %v1412 = vadd.f32 %v1123, %v1411
  %v1413 = vpop.f32.mrf.mxu0
  %v1414 = vpop.f32.mrf.mxu0
  %v1415 = vadd.f32 %v1126, %v1414
  %v1416 = vpop.f32.mrf.mxu0
  %1417 = vmatprep.mubr.bf16.mxu0 0
  %1418 = vmatmul.mubr.bf16.gmra.mxu0 %v856
  %v1419 = vpop.f32.mrf.mxu0
  %v1420 = vadd.f32 %v1131, %v1419
  %v1421 = vpop.f32.mrf.mxu0
  %v1422 = vpop.f32.mrf.mxu0
  %v1423 = vadd.f32 %v1134, %v1422
  %v1424 = vpop.f32.mrf.mxu0
  %1425 = vmatprep.mubr.bf16.mxu0 0
  %1426 = vmatmul.mubr.bf16.gmra.mxu0 %v859
  %v1427 = vpop.f32.mrf.mxu0
  %v1428 = vadd.f32 %v1139, %v1427
  %v1429 = vpop.f32.mrf.mxu0
  %v1430 = vpop.f32.mrf.mxu0
  %v1431 = vadd.f32 %v1142, %v1430
  %v1432 = vpop.f32.mrf.mxu0
  %1433 = vmatprep.mubr.bf16.mxu0 0
  %1434 = vmatmul.mubr.bf16.gmra.mxu0 %v862
  %v1435 = vpop.f32.mrf.mxu0
  %v1436 = vadd.f32 %v1147, %v1435
  %v1437 = vpop.f32.mrf.mxu0
  %v1438 = vpop.f32.mrf.mxu0
  %v1439 = vadd.f32 %v1150, %v1438
  %v1440 = vpop.f32.mrf.mxu0
  %1441 = vdwg.mxu0
  %v1442 = vmax.f32 %v1188, %v1252
  %v1443 = vmax.f32 %v1191, %v1255
  %v1444 = vmax.f32 %v1196, %v1260
  %v1445 = vmax.f32 %v1199, %v1263
  %v1446 = vmax.f32 %v1204, %v1268
  %v1447 = vmax.f32 %v1207, %v1271
  %v1448 = vmax.f32 %v1212, %v1276
  %v1449 = vmax.f32 %v1215, %v1279
  %v1450 = vmax.f32 %v1220, %v1284
  %v1451 = vmax.f32 %v1223, %v1287
  %v1452 = vmax.f32 %v1228, %v1292
  %v1453 = vmax.f32 %v1231, %v1295
  %v1454 = vmax.f32 %v1236, %v1300
  %v1455 = vmax.f32 %v1239, %v1303
  %v1456 = vmax.f32 %v1244, %v1308
  %v1457 = vmax.f32 %v1247, %v1311
  %v1458 = vmax.f32 %v1316, %v1380
  %v1459 = vmax.f32 %v1319, %v1383
  %v1460 = vmax.f32 %v1324, %v1388
  %v1461 = vmax.f32 %v1327, %v1391
  %v1462 = vmax.f32 %v1332, %v1396
  %v1463 = vmax.f32 %v1335, %v1399
  %v1464 = vmax.f32 %v1340, %v1404
  %v1465 = vmax.f32 %v1343, %v1407
  %v1466 = vmax.f32 %v1348, %v1412
  %v1467 = vmax.f32 %v1351, %v1415
  %v1468 = vmax.f32 %v1356, %v1420
  %v1469 = vmax.f32 %v1359, %v1423
  %v1470 = vmax.f32 %v1364, %v1428
  %v1471 = vmax.f32 %v1367, %v1431
  %v1472 = vmax.f32 %v1372, %v1436
  %v1473 = vmax.f32 %v1375, %v1439
  %v1474 = vmax.f32 %v1442, %v1458
  %v1475 = vmax.f32 %v1443, %v1459
  %v1476 = vmax.f32 %v1444, %v1460
  %v1477 = vmax.f32 %v1445, %v1461
  %v1478 = vmax.f32 %v1446, %v1462
  %v1479 = vmax.f32 %v1447, %v1463
  %v1480 = vmax.f32 %v1448, %v1464
  %v1481 = vmax.f32 %v1449, %v1465
  %v1482 = vmax.f32 %v1450, %v1466
  %v1483 = vmax.f32 %v1451, %v1467
  %v1484 = vmax.f32 %v1452, %v1468
  %v1485 = vmax.f32 %v1453, %v1469
  %v1486 = vmax.f32 %v1454, %v1470
  %v1487 = vmax.f32 %v1455, %v1471
  %v1488 = vmax.f32 %v1456, %v1472
  %v1489 = vmax.f32 %v1457, %v1473
  %v1490 = vld [vmem:[%s2] sm:$0x1]
  %v1492 = vlaneseq
  %v1493 = vshrl.u32 %v1492, 7
  %v1494 = vsub.s32 0, %v1493
  %v1495 = vrot.slane %v1490, %v1494
  %v1497 = vadd.f32 %v1474, %v1495
  %v1498 = vadd.f32 %v1475, %v1495
  %v1499 = vadd.f32 %v1476, %v1495
  %v1500 = vadd.f32 %v1477, %v1495
  %v1501 = vadd.f32 %v1478, %v1495
  %v1502 = vadd.f32 %v1479, %v1495
  %v1503 = vadd.f32 %v1480, %v1495
  %v1504 = vadd.f32 %v1481, %v1495
  %v1505 = vadd.f32 %v1482, %v1495
  %v1506 = vadd.f32 %v1483, %v1495
  %v1507 = vadd.f32 %v1484, %v1495
  %v1508 = vadd.f32 %v1485, %v1495
  %v1509 = vadd.f32 %v1486, %v1495
  %v1510 = vadd.f32 %v1487, %v1495
  %v1511 = vadd.f32 %v1488, %v1495
  %v1512 = vadd.f32 %v1489, %v1495
  %v1513 = vmax.f32 %v1497, 0.0
  %v1514 = vmax.f32 %v1498, 0.0
  %v1515 = vmax.f32 %v1499, 0.0
  %v1516 = vmax.f32 %v1500, 0.0
  %v1517 = vmax.f32 %v1501, 0.0
  %v1518 = vmax.f32 %v1502, 0.0
  %v1519 = vmax.f32 %v1503, 0.0
  %v1520 = vmax.f32 %v1504, 0.0
  %v1521 = vmax.f32 %v1505, 0.0
  %v1522 = vmax.f32 %v1506, 0.0
  %v1523 = vmax.f32 %v1507, 0.0
  %v1524 = vmax.f32 %v1508, 0.0
  %v1525 = vmax.f32 %v1509, 0.0
  %v1526 = vmax.f32 %v1510, 0.0
  %v1527 = vmax.f32 %v1511, 0.0
  %v1528 = vmax.f32 %v1512, 0.0
  %v1529 = vpack.c.bf16 %v1514, %v1513
  %v1530 = vpack.c.bf16 %v1516, %v1515
  %v1531 = vpack.c.bf16 %v1518, %v1517
  %v1532 = vpack.c.bf16 %v1520, %v1519
  %v1533 = vpack.c.bf16 %v1522, %v1521
  %v1534 = vpack.c.bf16 %v1524, %v1523
  %v1535 = vpack.c.bf16 %v1526, %v1525
  %v1536 = vpack.c.bf16 %v1528, %v1527
  %v1545 = vunpack.c.l.b16 %v1529
  %v1546 = vunpack.c.h.b16 %v1529
  %v1547 = vunpack.c.l.b16 %v1530
  %v1548 = vunpack.c.h.b16 %v1530
  %v1549 = vunpack.c.l.b16 %v1531
  %v1550 = vunpack.c.h.b16 %v1531
  %v1551 = vunpack.c.l.b16 %v1532
  %v1552 = vunpack.c.h.b16 %v1532
  %v1553 = vunpack.c.l.b16 %v1533
  %v1554 = vunpack.c.h.b16 %v1533
  %v1555 = vunpack.c.l.b16 %v1534
  %v1556 = vunpack.c.h.b16 %v1534
  %v1557 = vunpack.c.l.b16 %v1535
  %v1558 = vunpack.c.h.b16 %v1535
  %v1559 = vunpack.c.l.b16 %v1536
  %v1560 = vunpack.c.h.b16 %v1536
  %v1561 = vpack.c.b16 %v1545, %v1545
  %v1562 = vpack.c.b16 %v1546, %v1546
  %v1563 = vpack.c.b16 %v1547, %v1547
  %v1564 = vpack.c.b16 %v1548, %v1548
  %v1565 = vpack.c.b16 %v1549, %v1549
  %v1566 = vpack.c.b16 %v1550, %v1550
  %v1567 = vpack.c.b16 %v1551, %v1551
  %v1568 = vpack.c.b16 %v1552, %v1552
  %v1569 = vpack.c.b16 %v1553, %v1553
  %v1570 = vpack.c.b16 %v1554, %v1554
  %v1571 = vpack.c.b16 %v1555, %v1555
  %v1572 = vpack.c.b16 %v1556, %v1556
  %v1573 = vpack.c.b16 %v1557, %v1557
  %v1574 = vpack.c.b16 %v1558, %v1558
  %v1575 = vpack.c.b16 %v1559, %v1559
  %v1576 = vpack.c.b16 %v1560, %v1560
  %vm1593 = vcmask 519168
  %1594 = vst.msk [vmem:[%s3] sm:$0xf] %vm1593, %v1561
  %1595 = vst.msk [vmem:[%s3 + $0x4] sm:$0xf] %vm1593, %v1562
  %1596 = vst.msk [vmem:[%s3 + $0x8] sm:$0xf] %vm1593, %v1563
  %1597 = vst.msk [vmem:[%s3 + $0xc] sm:$0xf] %vm1593, %v1564
  %1598 = vst.msk [vmem:[%s3 + $0x10] sm:$0xf] %vm1593, %v1565
  %1599 = vst.msk [vmem:[%s3 + $0x14] sm:$0xf] %vm1593, %v1566
  %1600 = vst.msk [vmem:[%s3 + $0x18] sm:$0xf] %vm1593, %v1567
  %1601 = vst.msk [vmem:[%s3 + $0x1c] sm:$0xf] %vm1593, %v1568
  %1602 = vst.msk [vmem:[%s3 + $0x20] sm:$0xf] %vm1593, %v1569
  %1603 = vst.msk [vmem:[%s3 + $0x24] sm:$0xf] %vm1593, %v1570
  %1604 = vst.msk [vmem:[%s3 + $0x28] sm:$0xf] %vm1593, %v1571
  %1605 = vst.msk [vmem:[%s3 + $0x2c] sm:$0xf] %vm1593, %v1572
  %1606 = vst.msk [vmem:[%s3 + $0x30] sm:$0xf] %vm1593, %v1573
  %1607 = vst.msk [vmem:[%s3 + $0x34] sm:$0xf] %vm1593, %v1574
  %1608 = vst.msk [vmem:[%s3 + $0x38] sm:$0xf] %vm1593, %v1575
  %1609 = vst.msk [vmem:[%s3 + $0x3c] sm:$0xf] %vm1593, %v1576
  // Predicated region
  $region14: #{net_forward.6} parent=0 // pred_check
    _
  $region15: #{net_forward.6} parent=0 // pred_check_branch
    %1611 = sbr.rel (0) target = $region17
  $region16: #{net_forward.6} parent=0 // pred_region
    _
  $region17: #{net_forward.6} parent=0 // pred_fallthru
    _
  // Predicated region
  $region18: #{net_forward.6} parent=0 // pred_check
    _
  $region19: #{net_forward.6} parent=0 // pred_check_branch
    %1613 = sbr.rel (0) target = $region21
  $region20: #{net_forward.6} parent=0 // pred_region
    _
  $region21: #{net_forward.6} parent=0 // pred_fallthru
    _

// kernel: net_forward.7
$region0: #{net_forward.7}
  #allocation0 [shape = 'u32[]', space=smem, size = 0x4, offset = 0x4, fixed_abs, tag = 'smem constant byte address 0x4 - core index']
  #allocation1 [shape = 'u32[144,128]{1,0:T(1,128)}', space=vmem, size = 0x12000, scoped, tag = 'internal scratch']
  %s0 = inlined_call_operand.vmem [shape: bf16[128,576], index: 0, kind: input, shape index: {}]
  %s1 = inlined_call_operand.vmem [shape: bf16[576,128], index: 1, kind: input, shape index: {}]
  %s2 = inlined_call_operand.vmem [shape: f32[1,128], index: 2, kind: input, shape index: {}]
  %s3 = inlined_call_operand.vmem [shape: bf16[32,128], index: 3, kind: output, shape index: {}]
  %s4 = sld [smem:[#allocation0]]
  $region22: #{net_forward.7} parent=0
    _
  %s6 = ssub.s32 1, %s4
  %s7 = scalar_select 0, %s6, %s4
  // Predicated region
  $region2: #{net_forward.7} parent=0 // pred_check
    _
  $region3: #{net_forward.7} parent=0 // pred_check_branch
    %9 = sbr.rel (0) target = $region5
  $region4: #{net_forward.7} parent=0 // pred_region
    _
  $region5: #{net_forward.7} parent=0 // pred_fallthru
    _
  // Predicated region
  $region6: #{net_forward.7} parent=0 // pred_check
    _
  $region7: #{net_forward.7} parent=0 // pred_check_branch
    %11 = sbr.rel (0) target = $region9
  $region8: #{net_forward.7} parent=0 // pred_region
    _
  $region9: #{net_forward.7} parent=0 // pred_fallthru
    _
  // Predicated region
  $region10: #{net_forward.7} parent=0 // pred_check
    _
  $region11: #{net_forward.7} parent=0 // pred_check_branch
    %13 = sbr.rel (0) target = $region13
  $region12: #{net_forward.7} parent=0 // pred_region
    _
  $region13: #{net_forward.7} parent=0 // pred_fallthru
    _
  %v15 = vld [vmem:[%s0] sm:$0xff]
  %v16 = vld [vmem:[%s0 + $0x8] sm:$0xff]
  %v17 = vld [vmem:[%s0 + $0x10] sm:$0xf]
  %v18 = vld [vmem:[%s0 + $0x14] sm:$0xff]
  %v19 = vld [vmem:[%s0 + $0x1c] sm:$0xff]
  %v20 = vld [vmem:[%s0 + $0x24] sm:$0xf]
  %v21 = vld [vmem:[%s0 + $0x28] sm:$0xff]
  %v22 = vld [vmem:[%s0 + $0x30] sm:$0xff]
  %v23 = vld [vmem:[%s0 + $0x38] sm:$0xf]
  %v24 = vld [vmem:[%s0 + $0x3c] sm:$0xff]
  %v25 = vld [vmem:[%s0 + $0x44] sm:$0xff]
  %v26 = vld [vmem:[%s0 + $0x4c] sm:$0xf]
  %v27 = vld [vmem:[%s0 + $0x50] sm:$0xff]
  %v28 = vld [vmem:[%s0 + $0x58] sm:$0xff]
  %v29 = vld [vmem:[%s0 + $0x60] sm:$0xf]
  %v30 = vld [vmem:[%s0 + $0x64] sm:$0xff]
  %v31 = vld [vmem:[%s0 + $0x6c] sm:$0xff]
  %v32 = vld [vmem:[%s0 + $0x74] sm:$0xf]
  %v33 = vld [vmem:[%s0 + $0x78] sm:$0xff]
  %v34 = vld [vmem:[%s0 + $0x80] sm:$0xff]
  %v35 = vld [vmem:[%s0 + $0x88] sm:$0xf]
  %v36 = vld [vmem:[%s0 + $0x8c] sm:$0xff]
  %v37 = vld [vmem:[%s0 + $0x94] sm:$0xff]
  %v38 = vld [vmem:[%s0 + $0x9c] sm:$0xf]
  %v39 = vld [vmem:[%s0 + $0xa0] sm:$0xff]
  %v40 = vld [vmem:[%s0 + $0xa8] sm:$0xff]
  %v41 = vld [vmem:[%s0 + $0xb0] sm:$0xf]
  %v42 = vld [vmem:[%s0 + $0xb4] sm:$0xff]
  %v43 = vld [vmem:[%s0 + $0xbc] sm:$0xff]
  %v44 = vld [vmem:[%s0 + $0xc4] sm:$0xf]
  %v45 = vld [vmem:[%s0 + $0xc8] sm:$0xff]
  %v46 = vld [vmem:[%s0 + $0xd0] sm:$0xff]
  %v47 = vld [vmem:[%s0 + $0xd8] sm:$0xf]
  %v48 = vld [vmem:[%s0 + $0xdc] sm:$0xff]
  %v49 = vld [vmem:[%s0 + $0xe4] sm:$0xff]
  %v50 = vld [vmem:[%s0 + $0xec] sm:$0xf]
  %v51 = vld [vmem:[%s0 + $0xf0] sm:$0xff]
  %v52 = vld [vmem:[%s0 + $0xf8] sm:$0xff]
  %v53 = vld [vmem:[%s0 + $0x100] sm:$0xf]
  %v54 = vld [vmem:[%s0 + $0x104] sm:$0xff]
  %v55 = vld [vmem:[%s0 + $0x10c] sm:$0xff]
  %v56 = vld [vmem:[%s0 + $0x114] sm:$0xf]
  %v57 = vld [vmem:[%s0 + $0x118] sm:$0xff]
  %v58 = vld [vmem:[%s0 + $0x120] sm:$0xff]
  %v59 = vld [vmem:[%s0 + $0x128] sm:$0xf]
  %v60 = vld [vmem:[%s0 + $0x12c] sm:$0xff]
  %v61 = vld [vmem:[%s0 + $0x134] sm:$0xff]
  %v62 = vld [vmem:[%s0 + $0x13c] sm:$0xf]
  %v63 = vld [vmem:[%s1] sm:$0xf]
  %v64 = vld [vmem:[%s1 + $0x4] sm:$0xf]
  %v65 = vld [vmem:[%s1 + $0x8] sm:$0xf]
  %v66 = vld [vmem:[%s1 + $0xc] sm:$0xf]
  %v67 = vld [vmem:[%s1 + $0x10] sm:$0xf]
  %v68 = vld [vmem:[%s1 + $0x14] sm:$0xf]
  %v69 = vld [vmem:[%s1 + $0x18] sm:$0xf]
  %v70 = vld [vmem:[%s1 + $0x1c] sm:$0xf]
  %v71 = vld [vmem:[%s1 + $0x20] sm:$0xf]
  %v72 = vld [vmem:[%s1 + $0x24] sm:$0xf]
  %v73 = vld [vmem:[%s1 + $0x28] sm:$0xf]
  %v74 = vld [vmem:[%s1 + $0x2c] sm:$0xf]
  %v75 = vld [vmem:[%s1 + $0x30] sm:$0xf]
  %v76 = vld [vmem:[%s1 + $0x34] sm:$0xf]
  %v77 = vld [vmem:[%s1 + $0x38] sm:$0xf]
  %v78 = vld [vmem:[%s1 + $0x3c] sm:$0xf]
  %v79 = vld [vmem:[%s1 + $0x40] sm:$0xf]
  %v80 = vld [vmem:[%s1 + $0x44] sm:$0xf]
  %v81 = vld [vmem:[%s1 + $0x48] sm:$0xf]
  %v82 = vld [vmem:[%s1 + $0x4c] sm:$0xf]
  %v83 = vld [vmem:[%s1 + $0x50] sm:$0xf]
  %v84 = vld [vmem:[%s1 + $0x54] sm:$0xf]
  %v85 = vld [vmem:[%s1 + $0x58] sm:$0xf]
  %v86 = vld [vmem:[%s1 + $0x5c] sm:$0xf]
  %v87 = vld [vmem:[%s1 + $0x60] sm:$0xf]
  %v88 = vld [vmem:[%s1 + $0x64] sm:$0xf]
  %v89 = vld [vmem:[%s1 + $0x68] sm:$0xf]
  %v90 = vld [vmem:[%s1 + $0x6c] sm:$0xf]
  %v91 = vld [vmem:[%s1 + $0x70] sm:$0xf]
  %v92 = vld [vmem:[%s1 + $0x74] sm:$0xf]
  %v93 = vld [vmem:[%s1 + $0x78] sm:$0xf]
  %v94 = vld [vmem:[%s1 + $0x7c] sm:$0xf]
  %v95 = vld [vmem:[%s1 + $0x80] sm:$0xf]
  %v96 = vld [vmem:[%s1 + $0x84] sm:$0xf]
  %v97 = vld [vmem:[%s1 + $0x88] sm:$0xf]
  %v98 = vld [vmem:[%s1 + $0x8c] sm:$0xf]
  %v99 = vld [vmem:[%s1 + $0x90] sm:$0xf]
  %v100 = vld [vmem:[%s1 + $0x94] sm:$0xf]
  %v101 = vld [vmem:[%s1 + $0x98] sm:$0xf]
  %v102 = vld [vmem:[%s1 + $0x9c] sm:$0xf]
  %v103 = vld [vmem:[%s1 + $0xa0] sm:$0xf]
  %v104 = vld [vmem:[%s1 + $0xa4] sm:$0xf]
  %v105 = vld [vmem:[%s1 + $0xa8] sm:$0xf]
  %v106 = vld [vmem:[%s1 + $0xac] sm:$0xf]
  %v107 = vld [vmem:[%s1 + $0xb0] sm:$0xf]
  %v108 = vld [vmem:[%s1 + $0xb4] sm:$0xf]
  %v109 = vld [vmem:[%s1 + $0xb8] sm:$0xf]
  %v110 = vld [vmem:[%s1 + $0xbc] sm:$0xf]
  %v111 = vld [vmem:[%s1 + $0xc0] sm:$0xf]
  %v112 = vld [vmem:[%s1 + $0xc4] sm:$0xf]
  %v113 = vld [vmem:[%s1 + $0xc8] sm:$0xf]
  %v114 = vld [vmem:[%s1 + $0xcc] sm:$0xf]
  %v115 = vld [vmem:[%s1 + $0xd0] sm:$0xf]
  %v116 = vld [vmem:[%s1 + $0xd4] sm:$0xf]
  %v117 = vld [vmem:[%s1 + $0xd8] sm:$0xf]
  %v118 = vld [vmem:[%s1 + $0xdc] sm:$0xf]
  %v119 = vld [vmem:[%s1 + $0xe0] sm:$0xf]
  %v120 = vld [vmem:[%s1 + $0xe4] sm:$0xf]
  %v121 = vld [vmem:[%s1 + $0xe8] sm:$0xf]
  %v122 = vld [vmem:[%s1 + $0xec] sm:$0xf]
  %v123 = vld [vmem:[%s1 + $0xf0] sm:$0xf]
  %v124 = vld [vmem:[%s1 + $0xf4] sm:$0xf]
  %v125 = vld [vmem:[%s1 + $0xf8] sm:$0xf]
  %v126 = vld [vmem:[%s1 + $0xfc] sm:$0xf]
  %v127 = vld [vmem:[%s1 + $0x100] sm:$0xf]
  %v128 = vld [vmem:[%s1 + $0x104] sm:$0xf]
  %v129 = vld [vmem:[%s1 + $0x108] sm:$0xf]
  %v130 = vld [vmem:[%s1 + $0x10c] sm:$0xf]
  %v131 = vld [vmem:[%s1 + $0x110] sm:$0xf]
  %v132 = vld [vmem:[%s1 + $0x114] sm:$0xf]
  %v133 = vld [vmem:[%s1 + $0x118] sm:$0xf]
  %v134 = vld [vmem:[%s1 + $0x11c] sm:$0xf]
  %v183 = vunpack.c.l.b16 %v15
  %v184 = vunpack.c.h.b16 %v15
  %v185 = vunpack.c.l.b16 %v16
  %v186 = vunpack.c.h.b16 %v16
  %v187 = vunpack.c.l.b16 %v17
  %v188 = vunpack.c.l.b16 %v18
  %v189 = vunpack.c.h.b16 %v18
  %v190 = vunpack.c.l.b16 %v19
  %v191 = vunpack.c.h.b16 %v19
  %v192 = vunpack.c.l.b16 %v20
  %v193 = vunpack.c.l.b16 %v21
  %v194 = vunpack.c.h.b16 %v21
  %v195 = vunpack.c.l.b16 %v22
  %v196 = vunpack.c.h.b16 %v22
  %v197 = vunpack.c.l.b16 %v23
  %v198 = vunpack.c.l.b16 %v24
  %v199 = vunpack.c.h.b16 %v24
  %v200 = vunpack.c.l.b16 %v25
  %v201 = vunpack.c.h.b16 %v25
  %v202 = vunpack.c.l.b16 %v26
  %v203 = vunpack.c.l.b16 %v27
  %v204 = vunpack.c.h.b16 %v27
  %v205 = vunpack.c.l.b16 %v28
  %v206 = vunpack.c.h.b16 %v28
  %v207 = vunpack.c.l.b16 %v29
  %v208 = vunpack.c.l.b16 %v30
  %v209 = vunpack.c.h.b16 %v30
  %v210 = vunpack.c.l.b16 %v31
  %v211 = vunpack.c.h.b16 %v31
  %v212 = vunpack.c.l.b16 %v32
  %v213 = vunpack.c.l.b16 %v33
  %v214 = vunpack.c.h.b16 %v33
  %v215 = vunpack.c.l.b16 %v34
  %v216 = vunpack.c.h.b16 %v34
  %v217 = vunpack.c.l.b16 %v35
  %v218 = vunpack.c.l.b16 %v36
  %v219 = vunpack.c.h.b16 %v36
  %v220 = vunpack.c.l.b16 %v37
  %v221 = vunpack.c.h.b16 %v37
  %v222 = vunpack.c.l.b16 %v38
  %v223 = vunpack.c.l.b16 %v39
  %v224 = vunpack.c.h.b16 %v39
  %v225 = vunpack.c.l.b16 %v40
  %v226 = vunpack.c.h.b16 %v40
  %v227 = vunpack.c.l.b16 %v41
  %v228 = vunpack.c.l.b16 %v42
  %v229 = vunpack.c.h.b16 %v42
  %v230 = vunpack.c.l.b16 %v43
  %v231 = vunpack.c.h.b16 %v43
  %v232 = vunpack.c.l.b16 %v44
  %v233 = vunpack.c.l.b16 %v45
  %v234 = vunpack.c.h.b16 %v45
  %v235 = vunpack.c.l.b16 %v46
  %v236 = vunpack.c.h.b16 %v46
  %v237 = vunpack.c.l.b16 %v47
  %v238 = vunpack.c.l.b16 %v48
  %v239 = vunpack.c.h.b16 %v48
  %v240 = vunpack.c.l.b16 %v49
  %v241 = vunpack.c.h.b16 %v49
  %v242 = vunpack.c.l.b16 %v50
  %v243 = vunpack.c.l.b16 %v51
  %v244 = vunpack.c.h.b16 %v51
  %v245 = vunpack.c.l.b16 %v52
  %v246 = vunpack.c.h.b16 %v52
  %v247 = vunpack.c.l.b16 %v53
  %v248 = vunpack.c.l.b16 %v54
  %v249 = vunpack.c.h.b16 %v54
  %v250 = vunpack.c.l.b16 %v55
  %v251 = vunpack.c.h.b16 %v55
  %v252 = vunpack.c.l.b16 %v56
  %v253 = vunpack.c.l.b16 %v57
  %v254 = vunpack.c.h.b16 %v57
  %v255 = vunpack.c.l.b16 %v58
  %v256 = vunpack.c.h.b16 %v58
  %v257 = vunpack.c.l.b16 %v59
  %v258 = vunpack.c.l.b16 %v60
  %v259 = vunpack.c.h.b16 %v60
  %v260 = vunpack.c.l.b16 %v61
  %v261 = vunpack.c.h.b16 %v61
  %v262 = vunpack.c.l.b16 %v62
  %v263 = vpack.c.b16 %v188, %v183
  %v264 = vpack.c.b16 %v189, %v184
  %v265 = vpack.c.b16 %v190, %v185
  %v266 = vpack.c.b16 %v191, %v186
  %v267 = vpack.c.b16 %v192, %v187
  %v268 = vpack.c.b16 %v198, %v193
  %v269 = vpack.c.b16 %v199, %v194
  %v270 = vpack.c.b16 %v200, %v195
  %v271 = vpack.c.b16 %v201, %v196
  %v272 = vpack.c.b16 %v202, %v197
  %v273 = vpack.c.b16 %v208, %v203
  %v274 = vpack.c.b16 %v209, %v204
  %v275 = vpack.c.b16 %v210, %v205
  %v276 = vpack.c.b16 %v211, %v206
  %v277 = vpack.c.b16 %v212, %v207
  %v278 = vpack.c.b16 %v218, %v213
  %v279 = vpack.c.b16 %v219, %v214
  %v280 = vpack.c.b16 %v220, %v215
  %v281 = vpack.c.b16 %v221, %v216
  %v282 = vpack.c.b16 %v222, %v217
  %v283 = vpack.c.b16 %v228, %v223
  %v284 = vpack.c.b16 %v229, %v224
  %v285 = vpack.c.b16 %v230, %v225
  %v286 = vpack.c.b16 %v231, %v226
  %v287 = vpack.c.b16 %v232, %v227
  %v288 = vpack.c.b16 %v238, %v233
  %v289 = vpack.c.b16 %v239, %v234
  %v290 = vpack.c.b16 %v240, %v235
  %v291 = vpack.c.b16 %v241, %v236
  %v292 = vpack.c.b16 %v242, %v237
  %v293 = vpack.c.b16 %v248, %v243
  %v294 = vpack.c.b16 %v249, %v244
  %v295 = vpack.c.b16 %v250, %v245
  %v296 = vpack.c.b16 %v251, %v246
  %v297 = vpack.c.b16 %v252, %v247
  %v298 = vpack.c.b16 %v258, %v253
  %v299 = vpack.c.b16 %v259, %v254
  %v300 = vpack.c.b16 %v260, %v255
  %v301 = vpack.c.b16 %v261, %v256
  %v302 = vpack.c.b16 %v262, %v257
  %v407 = vunpack.c.l.b16 %v63
  %v408 = vunpack.c.l.b16 %v64
  %v409 = vunpack.c.l.b16 %v65
  %v410 = vunpack.c.l.b16 %v66
  %v411 = vunpack.c.l.b16 %v67
  %v412 = vunpack.c.l.b16 %v68
  %v413 = vunpack.c.l.b16 %v69
  %v414 = vunpack.c.l.b16 %v70
  %v415 = vunpack.c.l.b16 %v71
  %v416 = vunpack.c.l.b16 %v72
  %v417 = vunpack.c.l.b16 %v73
  %v418 = vunpack.c.l.b16 %v74
  %v419 = vunpack.c.l.b16 %v75
  %v420 = vunpack.c.l.b16 %v76
  %v421 = vunpack.c.l.b16 %v77
  %v422 = vunpack.c.l.b16 %v78
  %v423 = vunpack.c.l.b16 %v79
  %v424 = vunpack.c.l.b16 %v80
  %v425 = vunpack.c.l.b16 %v81
  %v426 = vunpack.c.l.b16 %v82
  %v427 = vunpack.c.l.b16 %v83
  %v428 = vunpack.c.l.b16 %v84
  %v429 = vunpack.c.l.b16 %v85
  %v430 = vunpack.c.l.b16 %v86
  %v431 = vunpack.c.l.b16 %v87
  %v432 = vunpack.c.l.b16 %v88
  %v433 = vunpack.c.l.b16 %v89
  %v434 = vunpack.c.l.b16 %v90
  %v435 = vunpack.c.l.b16 %v91
  %v436 = vunpack.c.l.b16 %v92
  %v437 = vunpack.c.l.b16 %v93
  %v438 = vunpack.c.l.b16 %v94
  %v439 = vunpack.c.l.b16 %v95
  %v440 = vunpack.c.l.b16 %v96
  %v441 = vunpack.c.l.b16 %v97
  %v442 = vunpack.c.l.b16 %v98
  %v443 = vunpack.c.l.b16 %v99
  %v444 = vunpack.c.l.b16 %v100
  %v445 = vunpack.c.l.b16 %v101
  %v446 = vunpack.c.l.b16 %v102
  %v447 = vunpack.c.l.b16 %v103
  %v448 = vunpack.c.l.b16 %v104
  %v449 = vunpack.c.l.b16 %v105
  %v450 = vunpack.c.l.b16 %v106
  %v451 = vunpack.c.l.b16 %v107
  %v452 = vunpack.c.l.b16 %v108
  %v453 = vunpack.c.l.b16 %v109
  %v454 = vunpack.c.l.b16 %v110
  %v455 = vunpack.c.l.b16 %v111
  %v456 = vunpack.c.l.b16 %v112
  %v457 = vunpack.c.l.b16 %v113
  %v458 = vunpack.c.l.b16 %v114
  %v459 = vunpack.c.l.b16 %v115
  %v460 = vunpack.c.l.b16 %v116
  %v461 = vunpack.c.l.b16 %v117
  %v462 = vunpack.c.l.b16 %v118
  %v463 = vunpack.c.l.b16 %v119
  %v464 = vunpack.c.l.b16 %v120
  %v465 = vunpack.c.l.b16 %v121
  %v466 = vunpack.c.l.b16 %v122
  %v467 = vunpack.c.l.b16 %v123
  %v468 = vunpack.c.l.b16 %v124
  %v469 = vunpack.c.l.b16 %v125
  %v470 = vunpack.c.l.b16 %v126
  %v471 = vunpack.c.l.b16 %v127
  %v472 = vunpack.c.l.b16 %v128
  %v473 = vunpack.c.l.b16 %v129
  %v474 = vunpack.c.l.b16 %v130
  %v475 = vunpack.c.l.b16 %v131
  %v476 = vunpack.c.l.b16 %v132
  %v477 = vunpack.c.l.b16 %v133
  %v478 = vunpack.c.l.b16 %v134
  %v479 = vpack.c.b16 %v408, %v407
  %v480 = vpack.c.b16 %v410, %v409
  %v481 = vpack.c.b16 %v412, %v411
  %v482 = vpack.c.b16 %v414, %v413
  %v483 = vpack.c.b16 %v416, %v415
  %v484 = vpack.c.b16 %v418, %v417
  %v485 = vpack.c.b16 %v420, %v419
  %v486 = vpack.c.b16 %v422, %v421
  %v487 = vpack.c.b16 %v424, %v423
  %v488 = vpack.c.b16 %v426, %v425
  %v489 = vpack.c.b16 %v428, %v427
  %v490 = vpack.c.b16 %v430, %v429
  %v491 = vpack.c.b16 %v432, %v431
  %v492 = vpack.c.b16 %v434, %v433
  %v493 = vpack.c.b16 %v436, %v435
  %v494 = vpack.c.b16 %v438, %v437
  %v495 = vpack.c.b16 %v440, %v439
  %v496 = vpack.c.b16 %v442, %v441
  %v497 = vpack.c.b16 %v444, %v443
  %v498 = vpack.c.b16 %v446, %v445
  %v499 = vpack.c.b16 %v448, %v447
  %v500 = vpack.c.b16 %v450, %v449
  %v501 = vpack.c.b16 %v452, %v451
  %v502 = vpack.c.b16 %v454, %v453
  %v503 = vpack.c.b16 %v456, %v455
  %v504 = vpack.c.b16 %v458, %v457
  %v505 = vpack.c.b16 %v460, %v459
  %v506 = vpack.c.b16 %v462, %v461
  %v507 = vpack.c.b16 %v464, %v463
  %v508 = vpack.c.b16 %v466, %v465
  %v509 = vpack.c.b16 %v468, %v467
  %v510 = vpack.c.b16 %v470, %v469
  %v511 = vpack.c.b16 %v472, %v471
  %v512 = vpack.c.b16 %v474, %v473
  %v513 = vpack.c.b16 %v476, %v475
  %v514 = vpack.c.b16 %v478, %v477
  %vm551 = vcmask 523264
  %v553 = vsel %vm551, %v267, 0
  %v556 = vsel %vm551, %v272, 0
  %v559 = vsel %vm551, %v277, 0
  %v562 = vsel %vm551, %v282, 0
  %v565 = vsel %vm551, %v287, 0
  %v568 = vsel %vm551, %v292, 0
  %v571 = vsel %vm551, %v297, 0
  %v574 = vsel %vm551, %v302, 0
  %576 = vmatprep.subr.bf16.mxu0 0
  %577 = vmatpush1.bf16.msra.mxu0 %v486
  %578 = vmatprep.subr.bf16.mxu0 0
  %579 = vmatpush1.bf16.msra.mxu0 %v485
  %580 = vmatprep.subr.bf16.mxu0 0
  %581 = vmatpush1.bf16.msra.mxu0 %v484
  %582 = vmatprep.subr.bf16.mxu0 0
  %583 = vmatpush1.bf16.msra.mxu0 %v483
  %584 = vmatprep.subr.bf16.mxu0 0
  %585 = vmatpush1.bf16.msra.mxu0 %v482
  %586 = vmatprep.subr.bf16.mxu0 0
  %587 = vmatpush1.bf16.msra.mxu0 %v481
  %588 = vmatprep.subr.bf16.mxu0 0
  %589 = vmatpush1.bf16.msra.mxu0 %v480
  %590 = vmatprep.subr.bf16.mxu0 0
  %591 = vmatpush1.bf16.msra.mxu0 %v479
  %592 = vmatprep.subr.bf16.mxu0 0
  %593 = vmatpush2.bf16.msra.mxu0 %v494
  %594 = vmatprep.subr.bf16.mxu0 0
  %595 = vmatpush2.bf16.msra.mxu0 %v493
  %596 = vmatprep.subr.bf16.mxu0 0
  %597 = vmatpush2.bf16.msra.mxu0 %v492
  %598 = vmatprep.subr.bf16.mxu0 0
  %599 = vmatpush2.bf16.msra.mxu0 %v491
  %600 = vmatprep.subr.bf16.mxu0 0
  %601 = vmatpush2.bf16.msra.mxu0 %v490
  %602 = vmatprep.subr.bf16.mxu0 0
  %603 = vmatpush2.bf16.msra.mxu0 %v489
  %604 = vmatprep.subr.bf16.mxu0 0
  %605 = vmatpush2.bf16.msra.mxu0 %v488
  %606 = vmatprep.subr.bf16.mxu0 0
  %607 = vmatpush2.bf16.msra.mxu0 %v487
  %608 = vmatprep.mubr.bf16.mxu0 %v264
  %609 = vmatmul.mubr.bf16.gmra.mxu0 %v263
  %v610 = vpop.f32.mrf.mxu0
  %v611 = vadd.f32 0.0, %v610
  %v612 = vpop.f32.mrf.mxu0
  %v613 = vpop.f32.mrf.mxu0
  %v614 = vadd.f32 0.0, %v613
  %v615 = vpop.f32.mrf.mxu0
  %616 = vmatprep.mubr.bf16.mxu0 %v269
  %617 = vmatmul.mubr.bf16.gmra.mxu0 %v268
  %v618 = vpop.f32.mrf.mxu0
  %v619 = vadd.f32 0.0, %v618
  %v620 = vpop.f32.mrf.mxu0
  %v621 = vpop.f32.mrf.mxu0
  %v622 = vadd.f32 0.0, %v621
  %v623 = vpop.f32.mrf.mxu0
  %624 = vmatprep.mubr.bf16.mxu0 %v274
  %625 = vmatmul.mubr.bf16.gmra.mxu0 %v273
  %v626 = vpop.f32.mrf.mxu0
  %v627 = vadd.f32 0.0, %v626
  %v628 = vpop.f32.mrf.mxu0
  %v629 = vpop.f32.mrf.mxu0
  %v630 = vadd.f32 0.0, %v629
  %v631 = vpop.f32.mrf.mxu0
  %632 = vmatprep.mubr.bf16.mxu0 %v279
  %633 = vmatmul.mubr.bf16.gmra.mxu0 %v278
  %v634 = vpop.f32.mrf.mxu0
  %v635 = vadd.f32 0.0, %v634
  %v636 = vpop.f32.mrf.mxu0
  %v637 = vpop.f32.mrf.mxu0
  %v638 = vadd.f32 0.0, %v637
  %v639 = vpop.f32.mrf.mxu0
  %640 = vmatprep.mubr.bf16.mxu0 %v284
  %641 = vmatmul.mubr.bf16.gmra.mxu0 %v283
  %v642 = vpop.f32.mrf.mxu0
  %v643 = vadd.f32 0.0, %v642
  %v644 = vpop.f32.mrf.mxu0
  %v645 = vpop.f32.mrf.mxu0
  %v646 = vadd.f32 0.0, %v645
  %v647 = vpop.f32.mrf.mxu0
  %648 = vmatprep.mubr.bf16.mxu0 %v289
  %649 = vmatmul.mubr.bf16.gmra.mxu0 %v288
  %v650 = vpop.f32.mrf.mxu0
  %v651 = vadd.f32 0.0, %v650
  %v652 = vpop.f32.mrf.mxu0
  %v653 = vpop.f32.mrf.mxu0
  %v654 = vadd.f32 0.0, %v653
  %v655 = vpop.f32.mrf.mxu0
  %656 = vmatprep.mubr.bf16.mxu0 %v294
  %657 = vmatmul.mubr.bf16.gmra.mxu0 %v293
  %v658 = vpop.f32.mrf.mxu0
  %v659 = vadd.f32 0.0, %v658
  %v660 = vpop.f32.mrf.mxu0
  %v661 = vpop.f32.mrf.mxu0
  %v662 = vadd.f32 0.0, %v661
  %v663 = vpop.f32.mrf.mxu0
  %664 = vmatprep.mubr.bf16.mxu0 %v299
  %665 = vmatmul.mubr.bf16.gmra.mxu0 %v298
  %v666 = vpop.f32.mrf.mxu0
  %v667 = vadd.f32 0.0, %v666
  %v668 = vpop.f32.mrf.mxu0
  %v669 = vpop.f32.mrf.mxu0
  %v670 = vadd.f32 0.0, %v669
  %v671 = vpop.f32.mrf.mxu0
  %672 = vdwg.mxu0
  %673 = vmatprep.subr.bf16.mxu0 0
  %674 = vmatpush1.bf16.msra.mxu0 %v502
  %675 = vmatprep.subr.bf16.mxu0 0
  %676 = vmatpush1.bf16.msra.mxu0 %v501
  %677 = vmatprep.subr.bf16.mxu0 0
  %678 = vmatpush1.bf16.msra.mxu0 %v500
  %679 = vmatprep.subr.bf16.mxu0 0
  %680 = vmatpush1.bf16.msra.mxu0 %v499
  %681 = vmatprep.subr.bf16.mxu0 0
  %682 = vmatpush1.bf16.msra.mxu0 %v498
  %683 = vmatprep.subr.bf16.mxu0 0
  %684 = vmatpush1.bf16.msra.mxu0 %v497
  %685 = vmatprep.subr.bf16.mxu0 0
  %686 = vmatpush1.bf16.msra.mxu0 %v496
  %687 = vmatprep.subr.bf16.mxu0 0
  %688 = vmatpush1.bf16.msra.mxu0 %v495
  %689 = vmatprep.subr.bf16.mxu0 0
  %690 = vmatpush2.bf16.msra.mxu0 %v510
  %691 = vmatprep.subr.bf16.mxu0 0
  %692 = vmatpush2.bf16.msra.mxu0 %v509
  %693 = vmatprep.subr.bf16.mxu0 0
  %694 = vmatpush2.bf16.msra.mxu0 %v508
  %695 = vmatprep.subr.bf16.mxu0 0
  %696 = vmatpush2.bf16.msra.mxu0 %v507
  %697 = vmatprep.subr.bf16.mxu0 0
  %698 = vmatpush2.bf16.msra.mxu0 %v506
  %699 = vmatprep.subr.bf16.mxu0 0
  %700 = vmatpush2.bf16.msra.mxu0 %v505
  %701 = vmatprep.subr.bf16.mxu0 0
  %702 = vmatpush2.bf16.msra.mxu0 %v504
  %703 = vmatprep.subr.bf16.mxu0 0
  %704 = vmatpush2.bf16.msra.mxu0 %v503
  %705 = vmatprep.mubr.bf16.mxu0 %v266
  %706 = vmatmul.mubr.bf16.gmra.mxu0 %v265
  %v707 = vpop.f32.mrf.mxu0
  %v708 = vadd.f32 %v611, %v707
  %v709 = vpop.f32.mrf.mxu0
  %v710 = vpop.f32.mrf.mxu0
  %v711 = vadd.f32 %v614, %v710
  %v712 = vpop.f32.mrf.mxu0
  %713 = vmatprep.mubr.bf16.mxu0 %v271
  %714 = vmatmul.mubr.bf16.gmra.mxu0 %v270
  %v715 = vpop.f32.mrf.mxu0
  %v716 = vadd.f32 %v619, %v715
  %v717 = vpop.f32.mrf.mxu0
  %v718 = vpop.f32.mrf.mxu0
  %v719 = vadd.f32 %v622, %v718
  %v720 = vpop.f32.mrf.mxu0
  %721 = vmatprep.mubr.bf16.mxu0 %v276
  %722 = vmatmul.mubr.bf16.gmra.mxu0 %v275
  %v723 = vpop.f32.mrf.mxu0
  %v724 = vadd.f32 %v627, %v723
  %v725 = vpop.f32.mrf.mxu0
  %v726 = vpop.f32.mrf.mxu0
  %v727 = vadd.f32 %v630, %v726
  %v728 = vpop.f32.mrf.mxu0
  %729 = vmatprep.mubr.bf16.mxu0 %v281
  %730 = vmatmul.mubr.bf16.gmra.mxu0 %v280
  %v731 = vpop.f32.mrf.mxu0
  %v732 = vadd.f32 %v635, %v731
  %v733 = vpop.f32.mrf.mxu0
  %v734 = vpop.f32.mrf.mxu0
  %v735 = vadd.f32 %v638, %v734
  %v736 = vpop.f32.mrf.mxu0
  %737 = vmatprep.mubr.bf16.mxu0 %v286
  %738 = vmatmul.mubr.bf16.gmra.mxu0 %v285
  %v739 = vpop.f32.mrf.mxu0
  %v740 = vadd.f32 %v643, %v739
  %v741 = vpop.f32.mrf.mxu0
  %v742 = vpop.f32.mrf.mxu0
  %v743 = vadd.f32 %v646, %v742
  %v744 = vpop.f32.mrf.mxu0
  %745 = vmatprep.mubr.bf16.mxu0 %v291
  %746 = vmatmul.mubr.bf16.gmra.mxu0 %v290
  %v747 = vpop.f32.mrf.mxu0
  %v748 = vadd.f32 %v651, %v747
  %v749 = vpop.f32.mrf.mxu0
  %v750 = vpop.f32.mrf.mxu0
  %v751 = vadd.f32 %v654, %v750
  %v752 = vpop.f32.mrf.mxu0
  %753 = vmatprep.mubr.bf16.mxu0 %v296
  %754 = vmatmul.mubr.bf16.gmra.mxu0 %v295
  %v755 = vpop.f32.mrf.mxu0
  %v756 = vadd.f32 %v659, %v755
  %v757 = vpop.f32.mrf.mxu0
  %v758 = vpop.f32.mrf.mxu0
  %v759 = vadd.f32 %v662, %v758
  %v760 = vpop.f32.mrf.mxu0
  %761 = vmatprep.mubr.bf16.mxu0 %v301
  %762 = vmatmul.mubr.bf16.gmra.mxu0 %v300
  %v763 = vpop.f32.mrf.mxu0
  %v764 = vadd.f32 %v667, %v763
  %v765 = vpop.f32.mrf.mxu0
  %v766 = vpop.f32.mrf.mxu0
  %v767 = vadd.f32 %v670, %v766
  %v768 = vpop.f32.mrf.mxu0
  %769 = vdwg.mxu0
  %770 = vmatprep.subr.bf16.mxu0 0
  %771 = vmatpush1.bf16.msra.mxu0 0
  %772 = vmatprep.subr.bf16.mxu0 0
  %773 = vmatpush1.bf16.msra.mxu0 0
  %774 = vmatprep.subr.bf16.mxu0 0
  %775 = vmatpush1.bf16.msra.mxu0 0
  %776 = vmatprep.subr.bf16.mxu0 0
  %777 = vmatpush1.bf16.msra.mxu0 0
  %778 = vmatprep.subr.bf16.mxu0 0
  %779 = vmatpush1.bf16.msra.mxu0 %v514
  %780 = vmatprep.subr.bf16.mxu0 0
  %781 = vmatpush1.bf16.msra.mxu0 %v513
  %782 = vmatprep.subr.bf16.mxu0 0
  %783 = vmatpush1.bf16.msra.mxu0 %v512
  %784 = vmatprep.subr.bf16.mxu0 0
  %785 = vmatpush1.bf16.msra.mxu0 %v511
  %786 = vmatprep.subr.bf16.mxu0 0
  %787 = vmatpush2.bf16.msra.mxu0 0
  %788 = vmatprep.subr.bf16.mxu0 0
  %789 = vmatpush2.bf16.msra.mxu0 0
  %790 = vmatprep.subr.bf16.mxu0 0
  %791 = vmatpush2.bf16.msra.mxu0 0
  %792 = vmatprep.subr.bf16.mxu0 0
  %793 = vmatpush2.bf16.msra.mxu0 0
  %794 = vmatprep.subr.bf16.mxu0 0
  %795 = vmatpush2.bf16.msra.mxu0 0
  %796 = vmatprep.subr.bf16.mxu0 0
  %797 = vmatpush2.bf16.msra.mxu0 0
  %798 = vmatprep.subr.bf16.mxu0 0
  %799 = vmatpush2.bf16.msra.mxu0 0
  %800 = vmatprep.subr.bf16.mxu0 0
  %801 = vmatpush2.bf16.msra.mxu0 0
  %802 = vmatprep.mubr.bf16.mxu0 0
  %803 = vmatmul.mubr.bf16.gmra.mxu0 %v553
  %v804 = vpop.f32.mrf.mxu0
  %v805 = vadd.f32 %v708, %v804
  %v806 = vpop.f32.mrf.mxu0
  %v807 = vpop.f32.mrf.mxu0
  %v808 = vadd.f32 %v711, %v807
  %v809 = vpop.f32.mrf.mxu0
  %810 = vmatprep.mubr.bf16.mxu0 0
  %811 = vmatmul.mubr.bf16.gmra.mxu0 %v556
  %v812 = vpop.f32.mrf.mxu0
  %v813 = vadd.f32 %v716, %v812
  %v814 = vpop.f32.mrf.mxu0
  %v815 = vpop.f32.mrf.mxu0
  %v816 = vadd.f32 %v719, %v815
  %v817 = vpop.f32.mrf.mxu0
  %818 = vmatprep.mubr.bf16.mxu0 0
  %819 = vmatmul.mubr.bf16.gmra.mxu0 %v559
  %v820 = vpop.f32.mrf.mxu0
  %v821 = vadd.f32 %v724, %v820
  %v822 = vpop.f32.mrf.mxu0
  %v823 = vpop.f32.mrf.mxu0
  %v824 = vadd.f32 %v727, %v823
  %v825 = vpop.f32.mrf.mxu0
  %826 = vmatprep.mubr.bf16.mxu0 0
  %827 = vmatmul.mubr.bf16.gmra.mxu0 %v562
  %v828 = vpop.f32.mrf.mxu0
  %v829 = vadd.f32 %v732, %v828
  %v830 = vpop.f32.mrf.mxu0
  %v831 = vpop.f32.mrf.mxu0
  %v832 = vadd.f32 %v735, %v831
  %v833 = vpop.f32.mrf.mxu0
  %834 = vmatprep.mubr.bf16.mxu0 0
  %835 = vmatmul.mubr.bf16.gmra.mxu0 %v565
  %v836 = vpop.f32.mrf.mxu0
  %v837 = vadd.f32 %v740, %v836
  %v838 = vpop.f32.mrf.mxu0
  %v839 = vpop.f32.mrf.mxu0
  %v840 = vadd.f32 %v743, %v839
  %v841 = vpop.f32.mrf.mxu0
  %842 = vmatprep.mubr.bf16.mxu0 0
  %843 = vmatmul.mubr.bf16.gmra.mxu0 %v568
  %v844 = vpop.f32.mrf.mxu0
  %v845 = vadd.f32 %v748, %v844
  %v846 = vpop.f32.mrf.mxu0
  %v847 = vpop.f32.mrf.mxu0
  %v848 = vadd.f32 %v751, %v847
  %v849 = vpop.f32.mrf.mxu0
  %850 = vmatprep.mubr.bf16.mxu0 0
  %851 = vmatmul.mubr.bf16.gmra.mxu0 %v571
  %v852 = vpop.f32.mrf.mxu0
  %v853 = vadd.f32 %v756, %v852
  %v854 = vpop.f32.mrf.mxu0
  %v855 = vpop.f32.mrf.mxu0
  %v856 = vadd.f32 %v759, %v855
  %v857 = vpop.f32.mrf.mxu0
  %858 = vmatprep.mubr.bf16.mxu0 0
  %859 = vmatmul.mubr.bf16.gmra.mxu0 %v574
  %v860 = vpop.f32.mrf.mxu0
  %v861 = vadd.f32 %v764, %v860
  %v862 = vpop.f32.mrf.mxu0
  %v863 = vpop.f32.mrf.mxu0
  %v864 = vadd.f32 %v767, %v863
  %v865 = vpop.f32.mrf.mxu0
  %866 = vdwg.mxu0
  %v867 = vmax.f32 %v805, %v821
  %v868 = vmax.f32 %v808, %v824
  %v869 = vmax.f32 %v813, %v829
  %v870 = vmax.f32 %v816, %v832
  %v871 = vmax.f32 %v837, %v853
  %v872 = vmax.f32 %v840, %v856
  %v873 = vmax.f32 %v845, %v861
  %v874 = vmax.f32 %v848, %v864
  %v875 = vmax.f32 %v867, %v871
  %v876 = vmax.f32 %v868, %v872
  %v877 = vmax.f32 %v869, %v873
  %v878 = vmax.f32 %v870, %v874
  %v879 = vld [vmem:[%s2] sm:$0x1]
  %v881 = vlaneseq
  %v882 = vshrl.u32 %v881, 7
  %v883 = vsub.s32 0, %v882
  %v884 = vrot.slane %v879, %v883
  %v886 = vadd.f32 %v875, %v884
  %v887 = vadd.f32 %v876, %v884
  %v888 = vadd.f32 %v877, %v884
  %v889 = vadd.f32 %v878, %v884
  %v890 = vmax.f32 %v886, 0.0
  %v891 = vmax.f32 %v887, 0.0
  %v892 = vmax.f32 %v888, 0.0
  %v893 = vmax.f32 %v889, 0.0
  %v894 = vpack.c.bf16 %v891, %v890
  %v895 = vpack.c.bf16 %v893, %v892
  %v898 = vunpack.c.l.b16 %v894
  %v899 = vunpack.c.h.b16 %v894
  %v900 = vunpack.c.l.b16 %v895
  %v901 = vunpack.c.h.b16 %v895
  %v902 = vpack.c.b16 %v898, %v898
  %v903 = vpack.c.b16 %v899, %v899
  %v904 = vpack.c.b16 %v900, %v900
  %v905 = vpack.c.b16 %v901, %v901
  %910 = vst [vmem:[%s3] sm:$0xf] %v902
  %911 = vst [vmem:[%s3 + $0x4] sm:$0xf] %v903
  %912 = vst [vmem:[%s3 + $0x8] sm:$0xf] %v904
  %913 = vst [vmem:[%s3 + $0xc] sm:$0xf] %v905
  // Predicated region
  $region14: #{net_forward.7} parent=0 // pred_check
    _
  $region15: #{net_forward.7} parent=0 // pred_check_branch
    %915 = sbr.rel (0) target = $region17
  $region16: #{net_forward.7} parent=0 // pred_region
    _
  $region17: #{net_forward.7} parent=0 // pred_fallthru
    _
  // Predicated region
  $region18: #{net_forward.7} parent=0 // pred_check
    _
  $region19: #{net_forward.7} parent=0 // pred_check_branch
    %917 = sbr.rel (0) target = $region21
  $region20: #{net_forward.7} parent=0 // pred_region
    _
  $region21: #{net_forward.7} parent=0 // pred_fallthru
    _

// kernel: net_forward.8
$region0: #{net_forward.8}
  #allocation0 [shape = 'u32[]', space=smem, size = 0x4, offset = 0x4, fixed_abs, tag = 'smem constant byte address 0x4 - core index']
  #allocation1 [shape = 'u32[144,128]{1,0:T(1,128)}', space=vmem, size = 0x12000, scoped, tag = 'internal scratch']
  %s0 = inlined_call_operand.vmem [shape: bf16[32,1152], index: 0, kind: input, shape index: {}]
  %s1 = inlined_call_operand.vmem [shape: bf16[1152,256], index: 1, kind: input, shape index: {}]
  %s2 = inlined_call_operand.vmem [shape: f32[1,256], index: 2, kind: input, shape index: {}]
  %s3 = inlined_call_operand.vmem [shape: bf16[8,256], index: 3, kind: output, shape index: {}]
  %s4 = sld [smem:[#allocation0]]
  $region22: #{net_forward.8} parent=0
    _
  %s6 = ssub.s32 1, %s4
  %s7 = scalar_select 0, %s6, %s4
  // Predicated region
  $region2: #{net_forward.8} parent=0 // pred_check
    _
  $region3: #{net_forward.8} parent=0 // pred_check_branch
    %9 = sbr.rel (0) target = $region5
  $region4: #{net_forward.8} parent=0 // pred_region
    _
  $region5: #{net_forward.8} parent=0 // pred_fallthru
    _
  // Predicated region
  $region6: #{net_forward.8} parent=0 // pred_check
    _
  $region7: #{net_forward.8} parent=0 // pred_check_branch
    %11 = sbr.rel (0) target = $region9
  $region8: #{net_forward.8} parent=0 // pred_region
    _
  $region9: #{net_forward.8} parent=0 // pred_fallthru
    _
  // Predicated region
  $region10: #{net_forward.8} parent=0 // pred_check
    _
  $region11: #{net_forward.8} parent=0 // pred_check_branch
    %13 = sbr.rel (0) target = $region13
  $region12: #{net_forward.8} parent=0 // pred_region
    _
  $region13: #{net_forward.8} parent=0 // pred_fallthru
    _
  %v15 = vld [vmem:[%s0] sm:$0xff]
  %v16 = vld [vmem:[%s0 + $0x8] sm:$0xff]
  %v17 = vld [vmem:[%s0 + $0x10] sm:$0xff]
  %v18 = vld [vmem:[%s0 + $0x18] sm:$0xff]
  %v19 = vld [vmem:[%s0 + $0x20] sm:$0xf]
  %v20 = vld [vmem:[%s0 + $0x24] sm:$0xff]
  %v21 = vld [vmem:[%s0 + $0x2c] sm:$0xff]
  %v22 = vld [vmem:[%s0 + $0x34] sm:$0xff]
  %v23 = vld [vmem:[%s0 + $0x3c] sm:$0xff]
  %v24 = vld [vmem:[%s0 + $0x44] sm:$0xf]
  %v25 = vld [vmem:[%s0 + $0x48] sm:$0xff]
  %v26 = vld [vmem:[%s0 + $0x50] sm:$0xff]
  %v27 = vld [vmem:[%s0 + $0x58] sm:$0xff]
  %v28 = vld [vmem:[%s0 + $0x60] sm:$0xff]
  %v29 = vld [vmem:[%s0 + $0x68] sm:$0xf]
  %v30 = vld [vmem:[%s0 + $0x6c] sm:$0xff]
  %v31 = vld [vmem:[%s0 + $0x74] sm:$0xff]
  %v32 = vld [vmem:[%s0 + $0x7c] sm:$0xff]
  %v33 = vld [vmem:[%s0 + $0x84] sm:$0xff]
  %v34 = vld [vmem:[%s0 + $0x8c] sm:$0xf]
  %v35 = vld [vmem:[%s1] sm:$0xff]
  %v36 = vld [vmem:[%s1 + $0x8] sm:$0xff]
  %v37 = vld [vmem:[%s1 + $0x10] sm:$0xff]
  %v38 = vld [vmem:[%s1 + $0x18] sm:$0xff]
  %v39 = vld [vmem:[%s1 + $0x20] sm:$0xff]
  %v40 = vld [vmem:[%s1 + $0x28] sm:$0xff]
  %v41 = vld [vmem:[%s1 + $0x30] sm:$0xff]
  %v42 = vld [vmem:[%s1 + $0x38] sm:$0xff]
  %v43 = vld [vmem:[%s1 + $0x40] sm:$0xff]
  %v44 = vld [vmem:[%s1 + $0x48] sm:$0xff]
  %v45 = vld [vmem:[%s1 + $0x50] sm:$0xff]
  %v46 = vld [vmem:[%s1 + $0x58] sm:$0xff]
  %v47 = vld [vmem:[%s1 + $0x60] sm:$0xff]
  %v48 = vld [vmem:[%s1 + $0x68] sm:$0xff]
  %v49 = vld [vmem:[%s1 + $0x70] sm:$0xff]
  %v50 = vld [vmem:[%s1 + $0x78] sm:$0xff]
  %v51 = vld [vmem:[%s1 + $0x80] sm:$0xff]
  %v52 = vld [vmem:[%s1 + $0x88] sm:$0xff]
  %v53 = vld [vmem:[%s1 + $0x90] sm:$0xff]
  %v54 = vld [vmem:[%s1 + $0x98] sm:$0xff]
  %v55 = vld [vmem:[%s1 + $0xa0] sm:$0xff]
  %v56 = vld [vmem:[%s1 + $0xa8] sm:$0xff]
  %v57 = vld [vmem:[%s1 + $0xb0] sm:$0xff]
  %v58 = vld [vmem:[%s1 + $0xb8] sm:$0xff]
  %v59 = vld [vmem:[%s1 + $0xc0] sm:$0xff]
  %v60 = vld [vmem:[%s1 + $0xc8] sm:$0xff]
  %v61 = vld [vmem:[%s1 + $0xd0] sm:$0xff]
  %v62 = vld [vmem:[%s1 + $0xd8] sm:$0xff]
  %v63 = vld [vmem:[%s1 + $0xe0] sm:$0xff]
  %v64 = vld [vmem:[%s1 + $0xe8] sm:$0xff]
  %v65 = vld [vmem:[%s1 + $0xf0] sm:$0xff]
  %v66 = vld [vmem:[%s1 + $0xf8] sm:$0xff]
  %v67 = vld [vmem:[%s1 + $0x100] sm:$0xff]
  %v68 = vld [vmem:[%s1 + $0x108] sm:$0xff]
  %v69 = vld [vmem:[%s1 + $0x110] sm:$0xff]
  %v70 = vld [vmem:[%s1 + $0x118] sm:$0xff]
  %v71 = vld [vmem:[%s1 + $0x120] sm:$0xff]
  %v72 = vld [vmem:[%s1 + $0x128] sm:$0xff]
  %v73 = vld [vmem:[%s1 + $0x130] sm:$0xff]
  %v74 = vld [vmem:[%s1 + $0x138] sm:$0xff]
  %v75 = vld [vmem:[%s1 + $0x140] sm:$0xff]
  %v76 = vld [vmem:[%s1 + $0x148] sm:$0xff]
  %v77 = vld [vmem:[%s1 + $0x150] sm:$0xff]
  %v78 = vld [vmem:[%s1 + $0x158] sm:$0xff]
  %v79 = vld [vmem:[%s1 + $0x160] sm:$0xff]
  %v80 = vld [vmem:[%s1 + $0x168] sm:$0xff]
  %v81 = vld [vmem:[%s1 + $0x170] sm:$0xff]
  %v82 = vld [vmem:[%s1 + $0x178] sm:$0xff]
  %v83 = vld [vmem:[%s1 + $0x180] sm:$0xff]
  %v84 = vld [vmem:[%s1 + $0x188] sm:$0xff]
  %v85 = vld [vmem:[%s1 + $0x190] sm:$0xff]
  %v86 = vld [vmem:[%s1 + $0x198] sm:$0xff]
  %v87 = vld [vmem:[%s1 + $0x1a0] sm:$0xff]
  %v88 = vld [vmem:[%s1 + $0x1a8] sm:$0xff]
  %v89 = vld [vmem:[%s1 + $0x1b0] sm:$0xff]
  %v90 = vld [vmem:[%s1 + $0x1b8] sm:$0xff]
  %v91 = vld [vmem:[%s1 + $0x1c0] sm:$0xff]
  %v92 = vld [vmem:[%s1 + $0x1c8] sm:$0xff]
  %v93 = vld [vmem:[%s1 + $0x1d0] sm:$0xff]
  %v94 = vld [vmem:[%s1 + $0x1d8] sm:$0xff]
  %v95 = vld [vmem:[%s1 + $0x1e0] sm:$0xff]
  %v96 = vld [vmem:[%s1 + $0x1e8] sm:$0xff]
  %v97 = vld [vmem:[%s1 + $0x1f0] sm:$0xff]
  %v98 = vld [vmem:[%s1 + $0x1f8] sm:$0xff]
  %v99 = vld [vmem:[%s1 + $0x200] sm:$0xff]
  %v100 = vld [vmem:[%s1 + $0x208] sm:$0xff]
  %v101 = vld [vmem:[%s1 + $0x210] sm:$0xff]
  %v102 = vld [vmem:[%s1 + $0x218] sm:$0xff]
  %v103 = vld [vmem:[%s1 + $0x220] sm:$0xff]
  %v104 = vld [vmem:[%s1 + $0x228] sm:$0xff]
  %v105 = vld [vmem:[%s1 + $0x230] sm:$0xff]
  %v106 = vld [vmem:[%s1 + $0x238] sm:$0xff]
  %v107 = vld [vmem:[%s1 + $0x240] sm:$0xff]
  %v108 = vld [vmem:[%s1 + $0x248] sm:$0xff]
  %v109 = vld [vmem:[%s1 + $0x250] sm:$0xff]
  %v110 = vld [vmem:[%s1 + $0x258] sm:$0xff]
  %v111 = vld [vmem:[%s1 + $0x260] sm:$0xff]
  %v112 = vld [vmem:[%s1 + $0x268] sm:$0xff]
  %v113 = vld [vmem:[%s1 + $0x270] sm:$0xff]
  %v114 = vld [vmem:[%s1 + $0x278] sm:$0xff]
  %v115 = vld [vmem:[%s1 + $0x280] sm:$0xff]
  %v116 = vld [vmem:[%s1 + $0x288] sm:$0xff]
  %v117 = vld [vmem:[%s1 + $0x290] sm:$0xff]
  %v118 = vld [vmem:[%s1 + $0x298] sm:$0xff]
  %v119 = vld [vmem:[%s1 + $0x2a0] sm:$0xff]
  %v120 = vld [vmem:[%s1 + $0x2a8] sm:$0xff]
  %v121 = vld [vmem:[%s1 + $0x2b0] sm:$0xff]
  %v122 = vld [vmem:[%s1 + $0x2b8] sm:$0xff]
  %v123 = vld [vmem:[%s1 + $0x2c0] sm:$0xff]
  %v124 = vld [vmem:[%s1 + $0x2c8] sm:$0xff]
  %v125 = vld [vmem:[%s1 + $0x2d0] sm:$0xff]
  %v126 = vld [vmem:[%s1 + $0x2d8] sm:$0xff]
  %v127 = vld [vmem:[%s1 + $0x2e0] sm:$0xff]
  %v128 = vld [vmem:[%s1 + $0x2e8] sm:$0xff]
  %v129 = vld [vmem:[%s1 + $0x2f0] sm:$0xff]
  %v130 = vld [vmem:[%s1 + $0x2f8] sm:$0xff]
  %v131 = vld [vmem:[%s1 + $0x300] sm:$0xff]
  %v132 = vld [vmem:[%s1 + $0x308] sm:$0xff]
  %v133 = vld [vmem:[%s1 + $0x310] sm:$0xff]
  %v134 = vld [vmem:[%s1 + $0x318] sm:$0xff]
  %v135 = vld [vmem:[%s1 + $0x320] sm:$0xff]
  %v136 = vld [vmem:[%s1 + $0x328] sm:$0xff]
  %v137 = vld [vmem:[%s1 + $0x330] sm:$0xff]
  %v138 = vld [vmem:[%s1 + $0x338] sm:$0xff]
  %v139 = vld [vmem:[%s1 + $0x340] sm:$0xff]
  %v140 = vld [vmem:[%s1 + $0x348] sm:$0xff]
  %v141 = vld [vmem:[%s1 + $0x350] sm:$0xff]
  %v142 = vld [vmem:[%s1 + $0x358] sm:$0xff]
  %v143 = vld [vmem:[%s1 + $0x360] sm:$0xff]
  %v144 = vld [vmem:[%s1 + $0x368] sm:$0xff]
  %v145 = vld [vmem:[%s1 + $0x370] sm:$0xff]
  %v146 = vld [vmem:[%s1 + $0x378] sm:$0xff]
  %v147 = vld [vmem:[%s1 + $0x380] sm:$0xff]
  %v148 = vld [vmem:[%s1 + $0x388] sm:$0xff]
  %v149 = vld [vmem:[%s1 + $0x390] sm:$0xff]
  %v150 = vld [vmem:[%s1 + $0x398] sm:$0xff]
  %v151 = vld [vmem:[%s1 + $0x3a0] sm:$0xff]
  %v152 = vld [vmem:[%s1 + $0x3a8] sm:$0xff]
  %v153 = vld [vmem:[%s1 + $0x3b0] sm:$0xff]
  %v154 = vld [vmem:[%s1 + $0x3b8] sm:$0xff]
  %v155 = vld [vmem:[%s1 + $0x3c0] sm:$0xff]
  %v156 = vld [vmem:[%s1 + $0x3c8] sm:$0xff]
  %v157 = vld [vmem:[%s1 + $0x3d0] sm:$0xff]
  %v158 = vld [vmem:[%s1 + $0x3d8] sm:$0xff]
  %v159 = vld [vmem:[%s1 + $0x3e0] sm:$0xff]
  %v160 = vld [vmem:[%s1 + $0x3e8] sm:$0xff]
  %v161 = vld [vmem:[%s1 + $0x3f0] sm:$0xff]
  %v162 = vld [vmem:[%s1 + $0x3f8] sm:$0xff]
  %v163 = vld [vmem:[%s1 + $0x400] sm:$0xff]
  %v164 = vld [vmem:[%s1 + $0x408] sm:$0xff]
  %v165 = vld [vmem:[%s1 + $0x410] sm:$0xff]
  %v166 = vld [vmem:[%s1 + $0x418] sm:$0xff]
  %v167 = vld [vmem:[%s1 + $0x420] sm:$0xff]
  %v168 = vld [vmem:[%s1 + $0x428] sm:$0xff]
  %v169 = vld [vmem:[%s1 + $0x430] sm:$0xff]
  %v170 = vld [vmem:[%s1 + $0x438] sm:$0xff]
  %v171 = vld [vmem:[%s1 + $0x440] sm:$0xff]
  %v172 = vld [vmem:[%s1 + $0x448] sm:$0xff]
  %v173 = vld [vmem:[%s1 + $0x450] sm:$0xff]
  %v174 = vld [vmem:[%s1 + $0x458] sm:$0xff]
  %v175 = vld [vmem:[%s1 + $0x460] sm:$0xff]
  %v176 = vld [vmem:[%s1 + $0x468] sm:$0xff]
  %v177 = vld [vmem:[%s1 + $0x470] sm:$0xff]
  %v178 = vld [vmem:[%s1 + $0x478] sm:$0xff]
  %v199 = vunpack.c.l.b16 %v15
  %v200 = vunpack.c.h.b16 %v15
  %v201 = vunpack.c.l.b16 %v16
  %v202 = vunpack.c.h.b16 %v16
  %v203 = vunpack.c.l.b16 %v17
  %v204 = vunpack.c.h.b16 %v17
  %v205 = vunpack.c.l.b16 %v18
  %v206 = vunpack.c.h.b16 %v18
  %v207 = vunpack.c.l.b16 %v19
  %v208 = vunpack.c.l.b16 %v20
  %v209 = vunpack.c.h.b16 %v20
  %v210 = vunpack.c.l.b16 %v21
  %v211 = vunpack.c.h.b16 %v21
  %v212 = vunpack.c.l.b16 %v22
  %v213 = vunpack.c.h.b16 %v22
  %v214 = vunpack.c.l.b16 %v23
  %v215 = vunpack.c.h.b16 %v23
  %v216 = vunpack.c.l.b16 %v24
  %v217 = vunpack.c.l.b16 %v25
  %v218 = vunpack.c.h.b16 %v25
  %v219 = vunpack.c.l.b16 %v26
  %v220 = vunpack.c.h.b16 %v26
  %v221 = vunpack.c.l.b16 %v27
  %v222 = vunpack.c.h.b16 %v27
  %v223 = vunpack.c.l.b16 %v28
  %v224 = vunpack.c.h.b16 %v28
  %v225 = vunpack.c.l.b16 %v29
  %v226 = vunpack.c.l.b16 %v30
  %v227 = vunpack.c.h.b16 %v30
  %v228 = vunpack.c.l.b16 %v31
  %v229 = vunpack.c.h.b16 %v31
  %v230 = vunpack.c.l.b16 %v32
  %v231 = vunpack.c.h.b16 %v32
  %v232 = vunpack.c.l.b16 %v33
  %v233 = vunpack.c.h.b16 %v33
  %v234 = vunpack.c.l.b16 %v34
  %v235 = vpack.c.b16 %v208, %v199
  %v236 = vpack.c.b16 %v209, %v200
  %v237 = vpack.c.b16 %v210, %v201
  %v238 = vpack.c.b16 %v211, %v202
  %v239 = vpack.c.b16 %v212, %v203
  %v240 = vpack.c.b16 %v213, %v204
  %v241 = vpack.c.b16 %v214, %v205
  %v242 = vpack.c.b16 %v215, %v206
  %v243 = vpack.c.b16 %v216, %v207
  %v244 = vpack.c.b16 %v226, %v217
  %v245 = vpack.c.b16 %v227, %v218
  %v246 = vpack.c.b16 %v228, %v219
  %v247 = vpack.c.b16 %v229, %v220
  %v248 = vpack.c.b16 %v230, %v221
  %v249 = vpack.c.b16 %v231, %v222
  %v250 = vpack.c.b16 %v232, %v223
  %v251 = vpack.c.b16 %v233, %v224
  %v252 = vpack.c.b16 %v234, %v225
  %v415 = vunpack.c.l.b16 %v35
  %v416 = vunpack.c.h.b16 %v35
  %v417 = vunpack.c.l.b16 %v36
  %v418 = vunpack.c.h.b16 %v36
  %v419 = vunpack.c.l.b16 %v37
  %v420 = vunpack.c.h.b16 %v37
  %v421 = vunpack.c.l.b16 %v38
  %v422 = vunpack.c.h.b16 %v38
  %v423 = vunpack.c.l.b16 %v39
  %v424 = vunpack.c.h.b16 %v39
  %v425 = vunpack.c.l.b16 %v40
  %v426 = vunpack.c.h.b16 %v40
  %v427 = vunpack.c.l.b16 %v41
  %v428 = vunpack.c.h.b16 %v41
  %v429 = vunpack.c.l.b16 %v42
  %v430 = vunpack.c.h.b16 %v42
  %v431 = vunpack.c.l.b16 %v43
  %v432 = vunpack.c.h.b16 %v43
  %v433 = vunpack.c.l.b16 %v44
  %v434 = vunpack.c.h.b16 %v44
  %v435 = vunpack.c.l.b16 %v45
  %v436 = vunpack.c.h.b16 %v45
  %v437 = vunpack.c.l.b16 %v46
  %v438 = vunpack.c.h.b16 %v46
  %v439 = vunpack.c.l.b16 %v47
  %v440 = vunpack.c.h.b16 %v47
  %v441 = vunpack.c.l.b16 %v48
  %v442 = vunpack.c.h.b16 %v48
  %v443 = vunpack.c.l.b16 %v49
  %v444 = vunpack.c.h.b16 %v49
  %v445 = vunpack.c.l.b16 %v50
  %v446 = vunpack.c.h.b16 %v50
  %v447 = vunpack.c.l.b16 %v51
  %v448 = vunpack.c.h.b16 %v51
  %v449 = vunpack.c.l.b16 %v52
  %v450 = vunpack.c.h.b16 %v52
  %v451 = vunpack.c.l.b16 %v53
  %v452 = vunpack.c.h.b16 %v53
  %v453 = vunpack.c.l.b16 %v54
  %v454 = vunpack.c.h.b16 %v54
  %v455 = vunpack.c.l.b16 %v55
  %v456 = vunpack.c.h.b16 %v55
  %v457 = vunpack.c.l.b16 %v56
  %v458 = vunpack.c.h.b16 %v56
  %v459 = vunpack.c.l.b16 %v57
  %v460 = vunpack.c.h.b16 %v57
  %v461 = vunpack.c.l.b16 %v58
  %v462 = vunpack.c.h.b16 %v58
  %v463 = vunpack.c.l.b16 %v59
  %v464 = vunpack.c.h.b16 %v59
  %v465 = vunpack.c.l.b16 %v60
  %v466 = vunpack.c.h.b16 %v60
  %v467 = vunpack.c.l.b16 %v61
  %v468 = vunpack.c.h.b16 %v61
  %v469 = vunpack.c.l.b16 %v62
  %v470 = vunpack.c.h.b16 %v62
  %v471 = vunpack.c.l.b16 %v63
  %v472 = vunpack.c.h.b16 %v63
  %v473 = vunpack.c.l.b16 %v64
  %v474 = vunpack.c.h.b16 %v64
  %v475 = vunpack.c.l.b16 %v65
  %v476 = vunpack.c.h.b16 %v65
  %v477 = vunpack.c.l.b16 %v66
  %v478 = vunpack.c.h.b16 %v66
  %v479 = vunpack.c.l.b16 %v67
  %v480 = vunpack.c.h.b16 %v67
  %v481 = vunpack.c.l.b16 %v68
  %v482 = vunpack.c.h.b16 %v68
  %v483 = vunpack.c.l.b16 %v69
  %v484 = vunpack.c.h.b16 %v69
  %v485 = vunpack.c.l.b16 %v70
  %v486 = vunpack.c.h.b16 %v70
  %v487 = vunpack.c.l.b16 %v71
  %v488 = vunpack.c.h.b16 %v71
  %v489 = vunpack.c.l.b16 %v72
  %v490 = vunpack.c.h.b16 %v72
  %v491 = vunpack.c.l.b16 %v73
  %v492 = vunpack.c.h.b16 %v73
  %v493 = vunpack.c.l.b16 %v74
  %v494 = vunpack.c.h.b16 %v74
  %v495 = vunpack.c.l.b16 %v75
  %v496 = vunpack.c.h.b16 %v75
  %v497 = vunpack.c.l.b16 %v76
  %v498 = vunpack.c.h.b16 %v76
  %v499 = vunpack.c.l.b16 %v77
  %v500 = vunpack.c.h.b16 %v77
  %v501 = vunpack.c.l.b16 %v78
  %v502 = vunpack.c.h.b16 %v78
  %v503 = vunpack.c.l.b16 %v79
  %v504 = vunpack.c.h.b16 %v79
  %v505 = vunpack.c.l.b16 %v80
  %v506 = vunpack.c.h.b16 %v80
  %v507 = vunpack.c.l.b16 %v81
  %v508 = vunpack.c.h.b16 %v81
  %v509 = vunpack.c.l.b16 %v82
  %v510 = vunpack.c.h.b16 %v82
  %v511 = vunpack.c.l.b16 %v83
  %v512 = vunpack.c.h.b16 %v83
  %v513 = vunpack.c.l.b16 %v84
  %v514 = vunpack.c.h.b16 %v84
  %v515 = vunpack.c.l.b16 %v85
  %v516 = vunpack.c.h.b16 %v85
  %v517 = vunpack.c.l.b16 %v86
  %v518 = vunpack.c.h.b16 %v86
  %v519 = vunpack.c.l.b16 %v87
  %v520 = vunpack.c.h.b16 %v87
  %v521 = vunpack.c.l.b16 %v88
  %v522 = vunpack.c.h.b16 %v88
  %v523 = vunpack.c.l.b16 %v89
  %v524 = vunpack.c.h.b16 %v89
  %v525 = vunpack.c.l.b16 %v90
  %v526 = vunpack.c.h.b16 %v90
  %v527 = vunpack.c.l.b16 %v91
  %v528 = vunpack.c.h.b16 %v91
  %v529 = vunpack.c.l.b16 %v92
  %v530 = vunpack.c.h.b16 %v92
  %v531 = vunpack.c.l.b16 %v93
  %v532 = vunpack.c.h.b16 %v93
  %v533 = vunpack.c.l.b16 %v94
  %v534 = vunpack.c.h.b16 %v94
  %v535 = vunpack.c.l.b16 %v95
  %v536 = vunpack.c.h.b16 %v95
  %v537 = vunpack.c.l.b16 %v96
  %v538 = vunpack.c.h.b16 %v96
  %v539 = vunpack.c.l.b16 %v97
  %v540 = vunpack.c.h.b16 %v97
  %v541 = vunpack.c.l.b16 %v98
  %v542 = vunpack.c.h.b16 %v98
  %v543 = vunpack.c.l.b16 %v99
  %v544 = vunpack.c.h.b16 %v99
  %v545 = vunpack.c.l.b16 %v100
  %v546 = vunpack.c.h.b16 %v100
  %v547 = vunpack.c.l.b16 %v101
  %v548 = vunpack.c.h.b16 %v101
  %v549 = vunpack.c.l.b16 %v102
  %v550 = vunpack.c.h.b16 %v102
  %v551 = vunpack.c.l.b16 %v103
  %v552 = vunpack.c.h.b16 %v103
  %v553 = vunpack.c.l.b16 %v104
  %v554 = vunpack.c.h.b16 %v104
  %v555 = vunpack.c.l.b16 %v105
  %v556 = vunpack.c.h.b16 %v105
  %v557 = vunpack.c.l.b16 %v106
  %v558 = vunpack.c.h.b16 %v106
  %v559 = vunpack.c.l.b16 %v107
  %v560 = vunpack.c.h.b16 %v107
  %v561 = vunpack.c.l.b16 %v108
  %v562 = vunpack.c.h.b16 %v108
  %v563 = vunpack.c.l.b16 %v109
  %v564 = vunpack.c.h.b16 %v109
  %v565 = vunpack.c.l.b16 %v110
  %v566 = vunpack.c.h.b16 %v110
  %v567 = vunpack.c.l.b16 %v111
  %v568 = vunpack.c.h.b16 %v111
  %v569 = vunpack.c.l.b16 %v112
  %v570 = vunpack.c.h.b16 %v112
  %v571 = vunpack.c.l.b16 %v113
  %v572 = vunpack.c.h.b16 %v113
  %v573 = vunpack.c.l.b16 %v114
  %v574 = vunpack.c.h.b16 %v114
  %v575 = vunpack.c.l.b16 %v115
  %v576 = vunpack.c.h.b16 %v115
  %v577 = vunpack.c.l.b16 %v116
  %v578 = vunpack.c.h.b16 %v116
  %v579 = vunpack.c.l.b16 %v117
  %v580 = vunpack.c.h.b16 %v117
  %v581 = vunpack.c.l.b16 %v118
  %v582 = vunpack.c.h.b16 %v118
  %v583 = vunpack.c.l.b16 %v119
  %v584 = vunpack.c.h.b16 %v119
  %v585 = vunpack.c.l.b16 %v120
  %v586 = vunpack.c.h.b16 %v120
  %v587 = vunpack.c.l.b16 %v121
  %v588 = vunpack.c.h.b16 %v121
  %v589 = vunpack.c.l.b16 %v122
  %v590 = vunpack.c.h.b16 %v122
  %v591 = vunpack.c.l.b16 %v123
  %v592 = vunpack.c.h.b16 %v123
  %v593 = vunpack.c.l.b16 %v124
  %v594 = vunpack.c.h.b16 %v124
  %v595 = vunpack.c.l.b16 %v125
  %v596 = vunpack.c.h.b16 %v125
  %v597 = vunpack.c.l.b16 %v126
  %v598 = vunpack.c.h.b16 %v126
  %v599 = vunpack.c.l.b16 %v127
  %v600 = vunpack.c.h.b16 %v127
  %v601 = vunpack.c.l.b16 %v128
  %v602 = vunpack.c.h.b16 %v128
  %v603 = vunpack.c.l.b16 %v129
  %v604 = vunpack.c.h.b16 %v129
  %v605 = vunpack.c.l.b16 %v130
  %v606 = vunpack.c.h.b16 %v130
  %v607 = vunpack.c.l.b16 %v131
  %v608 = vunpack.c.h.b16 %v131
  %v609 = vunpack.c.l.b16 %v132
  %v610 = vunpack.c.h.b16 %v132
  %v611 = vunpack.c.l.b16 %v133
  %v612 = vunpack.c.h.b16 %v133
  %v613 = vunpack.c.l.b16 %v134
  %v614 = vunpack.c.h.b16 %v134
  %v615 = vunpack.c.l.b16 %v135
  %v616 = vunpack.c.h.b16 %v135
  %v617 = vunpack.c.l.b16 %v136
  %v618 = vunpack.c.h.b16 %v136
  %v619 = vunpack.c.l.b16 %v137
  %v620 = vunpack.c.h.b16 %v137
  %v621 = vunpack.c.l.b16 %v138
  %v622 = vunpack.c.h.b16 %v138
  %v623 = vunpack.c.l.b16 %v139
  %v624 = vunpack.c.h.b16 %v139
  %v625 = vunpack.c.l.b16 %v140
  %v626 = vunpack.c.h.b16 %v140
  %v627 = vunpack.c.l.b16 %v141
  %v628 = vunpack.c.h.b16 %v141
  %v629 = vunpack.c.l.b16 %v142
  %v630 = vunpack.c.h.b16 %v142
  %v631 = vunpack.c.l.b16 %v143
  %v632 = vunpack.c.h.b16 %v143
  %v633 = vunpack.c.l.b16 %v144
  %v634 = vunpack.c.h.b16 %v144
  %v635 = vunpack.c.l.b16 %v145
  %v636 = vunpack.c.h.b16 %v145
  %v637 = vunpack.c.l.b16 %v146
  %v638 = vunpack.c.h.b16 %v146
  %v639 = vunpack.c.l.b16 %v147
  %v640 = vunpack.c.h.b16 %v147
  %v641 = vunpack.c.l.b16 %v148
  %v642 = vunpack.c.h.b16 %v148
  %v643 = vunpack.c.l.b16 %v149
  %v644 = vunpack.c.h.b16 %v149
  %v645 = vunpack.c.l.b16 %v150
  %v646 = vunpack.c.h.b16 %v150
  %v647 = vunpack.c.l.b16 %v151
  %v648 = vunpack.c.h.b16 %v151
  %v649 = vunpack.c.l.b16 %v152
  %v650 = vunpack.c.h.b16 %v152
  %v651 = vunpack.c.l.b16 %v153
  %v652 = vunpack.c.h.b16 %v153
  %v653 = vunpack.c.l.b16 %v154
  %v654 = vunpack.c.h.b16 %v154
  %v655 = vunpack.c.l.b16 %v155
  %v656 = vunpack.c.h.b16 %v155
  %v657 = vunpack.c.l.b16 %v156
  %v658 = vunpack.c.h.b16 %v156
  %v659 = vunpack.c.l.b16 %v157
  %v660 = vunpack.c.h.b16 %v157
  %v661 = vunpack.c.l.b16 %v158
  %v662 = vunpack.c.h.b16 %v158
  %v663 = vunpack.c.l.b16 %v159
  %v664 = vunpack.c.h.b16 %v159
  %v665 = vunpack.c.l.b16 %v160
  %v666 = vunpack.c.h.b16 %v160
  %v667 = vunpack.c.l.b16 %v161
  %v668 = vunpack.c.h.b16 %v161
  %v669 = vunpack.c.l.b16 %v162
  %v670 = vunpack.c.h.b16 %v162
  %v671 = vunpack.c.l.b16 %v163
  %v672 = vunpack.c.h.b16 %v163
  %v673 = vunpack.c.l.b16 %v164
  %v674 = vunpack.c.h.b16 %v164
  %v675 = vunpack.c.l.b16 %v165
  %v676 = vunpack.c.h.b16 %v165
  %v677 = vunpack.c.l.b16 %v166
  %v678 = vunpack.c.h.b16 %v166
  %v679 = vunpack.c.l.b16 %v167
  %v680 = vunpack.c.h.b16 %v167
  %v681 = vunpack.c.l.b16 %v168
  %v682 = vunpack.c.h.b16 %v168
  %v683 = vunpack.c.l.b16 %v169
  %v684 = vunpack.c.h.b16 %v169
  %v685 = vunpack.c.l.b16 %v170
  %v686 = vunpack.c.h.b16 %v170
  %v687 = vunpack.c.l.b16 %v171
  %v688 = vunpack.c.h.b16 %v171
  %v689 = vunpack.c.l.b16 %v172
  %v690 = vunpack.c.h.b16 %v172
  %v691 = vunpack.c.l.b16 %v173
  %v692 = vunpack.c.h.b16 %v173
  %v693 = vunpack.c.l.b16 %v174
  %v694 = vunpack.c.h.b16 %v174
  %v695 = vunpack.c.l.b16 %v175
  %v696 = vunpack.c.h.b16 %v175
  %v697 = vunpack.c.l.b16 %v176
  %v698 = vunpack.c.h.b16 %v176
  %v699 = vunpack.c.l.b16 %v177
  %v700 = vunpack.c.h.b16 %v177
  %v701 = vunpack.c.l.b16 %v178
  %v702 = vunpack.c.h.b16 %v178
  %v703 = vpack.c.b16 %v417, %v415
  %v704 = vpack.c.b16 %v418, %v416
  %v705 = vpack.c.b16 %v421, %v419
  %v706 = vpack.c.b16 %v422, %v420
  %v707 = vpack.c.b16 %v425, %v423
  %v708 = vpack.c.b16 %v426, %v424
  %v709 = vpack.c.b16 %v429, %v427
  %v710 = vpack.c.b16 %v430, %v428
  %v711 = vpack.c.b16 %v433, %v431
  %v712 = vpack.c.b16 %v434, %v432
  %v713 = vpack.c.b16 %v437, %v435
  %v714 = vpack.c.b16 %v438, %v436
  %v715 = vpack.c.b16 %v441, %v439
  %v716 = vpack.c.b16 %v442, %v440
  %v717 = vpack.c.b16 %v445, %v443
  %v718 = vpack.c.b16 %v446, %v444
  %v719 = vpack.c.b16 %v449, %v447
  %v720 = vpack.c.b16 %v450, %v448
  %v721 = vpack.c.b16 %v453, %v451
  %v722 = vpack.c.b16 %v454, %v452
  %v723 = vpack.c.b16 %v457, %v455
  %v724 = vpack.c.b16 %v458, %v456
  %v725 = vpack.c.b16 %v461, %v459
  %v726 = vpack.c.b16 %v462, %v460
  %v727 = vpack.c.b16 %v465, %v463
  %v728 = vpack.c.b16 %v466, %v464
  %v729 = vpack.c.b16 %v469, %v467
  %v730 = vpack.c.b16 %v470, %v468
  %v731 = vpack.c.b16 %v473, %v471
  %v732 = vpack.c.b16 %v474, %v472
  %v733 = vpack.c.b16 %v477, %v475
  %v734 = vpack.c.b16 %v478, %v476
  %v735 = vpack.c.b16 %v481, %v479
  %v736 = vpack.c.b16 %v482, %v480
  %v737 = vpack.c.b16 %v485, %v483
  %v738 = vpack.c.b16 %v486, %v484
  %v739 = vpack.c.b16 %v489, %v487
  %v740 = vpack.c.b16 %v490, %v488
  %v741 = vpack.c.b16 %v493, %v491
  %v742 = vpack.c.b16 %v494, %v492
  %v743 = vpack.c.b16 %v497, %v495
  %v744 = vpack.c.b16 %v498, %v496
  %v745 = vpack.c.b16 %v501, %v499
  %v746 = vpack.c.b16 %v502, %v500
  %v747 = vpack.c.b16 %v505, %v503
  %v748 = vpack.c.b16 %v506, %v504
  %v749 = vpack.c.b16 %v509, %v507
  %v750 = vpack.c.b16 %v510, %v508
  %v751 = vpack.c.b16 %v513, %v511
  %v752 = vpack.c.b16 %v514, %v512
  %v753 = vpack.c.b16 %v517, %v515
  %v754 = vpack.c.b16 %v518, %v516
  %v755 = vpack.c.b16 %v521, %v519
  %v756 = vpack.c.b16 %v522, %v520
  %v757 = vpack.c.b16 %v525, %v523
  %v758 = vpack.c.b16 %v526, %v524
  %v759 = vpack.c.b16 %v529, %v527
  %v760 = vpack.c.b16 %v530, %v528
  %v761 = vpack.c.b16 %v533, %v531
  %v762 = vpack.c.b16 %v534, %v532
  %v763 = vpack.c.b16 %v537, %v535
  %v764 = vpack.c.b16 %v538, %v536
  %v765 = vpack.c.b16 %v541, %v539
  %v766 = vpack.c.b16 %v542, %v540
  %v767 = vpack.c.b16 %v545, %v543
  %v768 = vpack.c.b16 %v546, %v544
  %v769 = vpack.c.b16 %v549, %v547
  %v770 = vpack.c.b16 %v550, %v548
  %v771 = vpack.c.b16 %v553, %v551
  %v772 = vpack.c.b16 %v554, %v552
  %v773 = vpack.c.b16 %v557, %v555
  %v774 = vpack.c.b16 %v558, %v556
  %v775 = vpack.c.b16 %v561, %v559
  %v776 = vpack.c.b16 %v562, %v560
  %v777 = vpack.c.b16 %v565, %v563
  %v778 = vpack.c.b16 %v566, %v564
  %v779 = vpack.c.b16 %v569, %v567
  %v780 = vpack.c.b16 %v570, %v568
  %v781 = vpack.c.b16 %v573, %v571
  %v782 = vpack.c.b16 %v574, %v572
  %v783 = vpack.c.b16 %v577, %v575
  %v784 = vpack.c.b16 %v578, %v576
  %v785 = vpack.c.b16 %v581, %v579
  %v786 = vpack.c.b16 %v582, %v580
  %v787 = vpack.c.b16 %v585, %v583
  %v788 = vpack.c.b16 %v586, %v584
  %v789 = vpack.c.b16 %v589, %v587
  %v790 = vpack.c.b16 %v590, %v588
  %v791 = vpack.c.b16 %v593, %v591
  %v792 = vpack.c.b16 %v594, %v592
  %v793 = vpack.c.b16 %v597, %v595
  %v794 = vpack.c.b16 %v598, %v596
  %v795 = vpack.c.b16 %v601, %v599
  %v796 = vpack.c.b16 %v602, %v600
  %v797 = vpack.c.b16 %v605, %v603
  %v798 = vpack.c.b16 %v606, %v604
  %v799 = vpack.c.b16 %v609, %v607
  %v800 = vpack.c.b16 %v610, %v608
  %v801 = vpack.c.b16 %v613, %v611
  %v802 = vpack.c.b16 %v614, %v612
  %v803 = vpack.c.b16 %v617, %v615
  %v804 = vpack.c.b16 %v618, %v616
  %v805 = vpack.c.b16 %v621, %v619
  %v806 = vpack.c.b16 %v622, %v620
  %v807 = vpack.c.b16 %v625, %v623
  %v808 = vpack.c.b16 %v626, %v624
  %v809 = vpack.c.b16 %v629, %v627
  %v810 = vpack.c.b16 %v630, %v628
  %v811 = vpack.c.b16 %v633, %v631
  %v812 = vpack.c.b16 %v634, %v632
  %v813 = vpack.c.b16 %v637, %v635
  %v814 = vpack.c.b16 %v638, %v636
  %v815 = vpack.c.b16 %v641, %v639
  %v816 = vpack.c.b16 %v642, %v640
  %v817 = vpack.c.b16 %v645, %v643
  %v818 = vpack.c.b16 %v646, %v644
  %v819 = vpack.c.b16 %v649, %v647
  %v820 = vpack.c.b16 %v650, %v648
  %v821 = vpack.c.b16 %v653, %v651
  %v822 = vpack.c.b16 %v654, %v652
  %v823 = vpack.c.b16 %v657, %v655
  %v824 = vpack.c.b16 %v658, %v656
  %v825 = vpack.c.b16 %v661, %v659
  %v826 = vpack.c.b16 %v662, %v660
  %v827 = vpack.c.b16 %v665, %v663
  %v828 = vpack.c.b16 %v666, %v664
  %v829 = vpack.c.b16 %v669, %v667
  %v830 = vpack.c.b16 %v670, %v668
  %v831 = vpack.c.b16 %v673, %v671
  %v832 = vpack.c.b16 %v674, %v672
  %v833 = vpack.c.b16 %v677, %v675
  %v834 = vpack.c.b16 %v678, %v676
  %v835 = vpack.c.b16 %v681, %v679
  %v836 = vpack.c.b16 %v682, %v680
  %v837 = vpack.c.b16 %v685, %v683
  %v838 = vpack.c.b16 %v686, %v684
  %v839 = vpack.c.b16 %v689, %v687
  %v840 = vpack.c.b16 %v690, %v688
  %v841 = vpack.c.b16 %v693, %v691
  %v842 = vpack.c.b16 %v694, %v692
  %v843 = vpack.c.b16 %v697, %v695
  %v844 = vpack.c.b16 %v698, %v696
  %v845 = vpack.c.b16 %v701, %v699
  %v846 = vpack.c.b16 %v702, %v700
  %991 = vmatprep.subr.bf16.mxu0 %v718
  %992 = vmatpush1.bf16.msra.mxu0 %v717
  %993 = vmatprep.subr.bf16.mxu0 %v716
  %994 = vmatpush1.bf16.msra.mxu0 %v715
  %995 = vmatprep.subr.bf16.mxu0 %v714
  %996 = vmatpush1.bf16.msra.mxu0 %v713
  %997 = vmatprep.subr.bf16.mxu0 %v712
  %998 = vmatpush1.bf16.msra.mxu0 %v711
  %999 = vmatprep.subr.bf16.mxu0 %v710
  %1000 = vmatpush1.bf16.msra.mxu0 %v709
  %1001 = vmatprep.subr.bf16.mxu0 %v708
  %1002 = vmatpush1.bf16.msra.mxu0 %v707
  %1003 = vmatprep.subr.bf16.mxu0 %v706
  %1004 = vmatpush1.bf16.msra.mxu0 %v705
  %1005 = vmatprep.subr.bf16.mxu0 %v704
  %1006 = vmatpush1.bf16.msra.mxu0 %v703
  %1007 = vmatprep.subr.bf16.mxu0 %v734
  %1008 = vmatpush2.bf16.msra.mxu0 %v733
  %1009 = vmatprep.subr.bf16.mxu0 %v732
  %1010 = vmatpush2.bf16.msra.mxu0 %v731
  %1011 = vmatprep.subr.bf16.mxu0 %v730
  %1012 = vmatpush2.bf16.msra.mxu0 %v729
  %1013 = vmatprep.subr.bf16.mxu0 %v728
  %1014 = vmatpush2.bf16.msra.mxu0 %v727
  %1015 = vmatprep.subr.bf16.mxu0 %v726
  %1016 = vmatpush2.bf16.msra.mxu0 %v725
  %1017 = vmatprep.subr.bf16.mxu0 %v724
  %1018 = vmatpush2.bf16.msra.mxu0 %v723
  %1019 = vmatprep.subr.bf16.mxu0 %v722
  %1020 = vmatpush2.bf16.msra.mxu0 %v721
  %1021 = vmatprep.subr.bf16.mxu0 %v720
  %1022 = vmatpush2.bf16.msra.mxu0 %v719
  %1023 = vmatprep.mubr.bf16.mxu0 %v236
  %1024 = vmatmul.mubr.bf16.gmra.mxu0 %v235
  %v1025 = vpop.f32.mrf.mxu0
  %v1026 = vadd.f32 0.0, %v1025
  %v1027 = vpop.f32.mrf.mxu0
  %v1028 = vadd.f32 0.0, %v1027
  %v1029 = vpop.f32.mrf.mxu0
  %v1030 = vadd.f32 0.0, %v1029
  %v1031 = vpop.f32.mrf.mxu0
  %v1032 = vadd.f32 0.0, %v1031
  %1033 = vmatprep.mubr.bf16.mxu0 %v245
  %1034 = vmatmul.mubr.bf16.gmra.mxu0 %v244
  %v1035 = vpop.f32.mrf.mxu0
  %v1036 = vadd.f32 0.0, %v1035
  %v1037 = vpop.f32.mrf.mxu0
  %v1038 = vadd.f32 0.0, %v1037
  %v1039 = vpop.f32.mrf.mxu0
  %v1040 = vadd.f32 0.0, %v1039
  %v1041 = vpop.f32.mrf.mxu0
  %v1042 = vadd.f32 0.0, %v1041
  %1043 = vdwg.mxu0
  %1044 = vmatprep.subr.bf16.mxu0 %v750
  %1045 = vmatpush1.bf16.msra.mxu0 %v749
  %1046 = vmatprep.subr.bf16.mxu0 %v748
  %1047 = vmatpush1.bf16.msra.mxu0 %v747
  %1048 = vmatprep.subr.bf16.mxu0 %v746
  %1049 = vmatpush1.bf16.msra.mxu0 %v745
  %1050 = vmatprep.subr.bf16.mxu0 %v744
  %1051 = vmatpush1.bf16.msra.mxu0 %v743
  %1052 = vmatprep.subr.bf16.mxu0 %v742
  %1053 = vmatpush1.bf16.msra.mxu0 %v741
  %1054 = vmatprep.subr.bf16.mxu0 %v740
  %1055 = vmatpush1.bf16.msra.mxu0 %v739
  %1056 = vmatprep.subr.bf16.mxu0 %v738
  %1057 = vmatpush1.bf16.msra.mxu0 %v737
  %1058 = vmatprep.subr.bf16.mxu0 %v736
  %1059 = vmatpush1.bf16.msra.mxu0 %v735
  %1060 = vmatprep.subr.bf16.mxu0 %v766
  %1061 = vmatpush2.bf16.msra.mxu0 %v765
  %1062 = vmatprep.subr.bf16.mxu0 %v764
  %1063 = vmatpush2.bf16.msra.mxu0 %v763
  %1064 = vmatprep.subr.bf16.mxu0 %v762
  %1065 = vmatpush2.bf16.msra.mxu0 %v761
  %1066 = vmatprep.subr.bf16.mxu0 %v760
  %1067 = vmatpush2.bf16.msra.mxu0 %v759
  %1068 = vmatprep.subr.bf16.mxu0 %v758
  %1069 = vmatpush2.bf16.msra.mxu0 %v757
  %1070 = vmatprep.subr.bf16.mxu0 %v756
  %1071 = vmatpush2.bf16.msra.mxu0 %v755
  %1072 = vmatprep.subr.bf16.mxu0 %v754
  %1073 = vmatpush2.bf16.msra.mxu0 %v753
  %1074 = vmatprep.subr.bf16.mxu0 %v752
  %1075 = vmatpush2.bf16.msra.mxu0 %v751
  %1076 = vmatprep.mubr.bf16.mxu0 %v238
  %1077 = vmatmul.mubr.bf16.gmra.mxu0 %v237
  %v1078 = vpop.f32.mrf.mxu0
  %v1079 = vadd.f32 %v1026, %v1078
  %v1080 = vpop.f32.mrf.mxu0
  %v1081 = vadd.f32 %v1028, %v1080
  %v1082 = vpop.f32.mrf.mxu0
  %v1083 = vadd.f32 %v1030, %v1082
  %v1084 = vpop.f32.mrf.mxu0
  %v1085 = vadd.f32 %v1032, %v1084
  %1086 = vmatprep.mubr.bf16.mxu0 %v247
  %1087 = vmatmul.mubr.bf16.gmra.mxu0 %v246
  %v1088 = vpop.f32.mrf.mxu0
  %v1089 = vadd.f32 %v1036, %v1088
  %v1090 = vpop.f32.mrf.mxu0
  %v1091 = vadd.f32 %v1038, %v1090
  %v1092 = vpop.f32.mrf.mxu0
  %v1093 = vadd.f32 %v1040, %v1092
  %v1094 = vpop.f32.mrf.mxu0
  %v1095 = vadd.f32 %v1042, %v1094
  %1096 = vdwg.mxu0
  %1097 = vmatprep.subr.bf16.mxu0 %v782
  %1098 = vmatpush1.bf16.msra.mxu0 %v781
  %1099 = vmatprep.subr.bf16.mxu0 %v780
  %1100 = vmatpush1.bf16.msra.mxu0 %v779
  %1101 = vmatprep.subr.bf16.mxu0 %v778
  %1102 = vmatpush1.bf16.msra.mxu0 %v777
  %1103 = vmatprep.subr.bf16.mxu0 %v776
  %1104 = vmatpush1.bf16.msra.mxu0 %v775
  %1105 = vmatprep.subr.bf16.mxu0 %v774
  %1106 = vmatpush1.bf16.msra.mxu0 %v773
  %1107 = vmatprep.subr.bf16.mxu0 %v772
  %1108 = vmatpush1.bf16.msra.mxu0 %v771
  %1109 = vmatprep.subr.bf16.mxu0 %v770
  %1110 = vmatpush1.bf16.msra.mxu0 %v769
  %1111 = vmatprep.subr.bf16.mxu0 %v768
  %1112 = vmatpush1.bf16.msra.mxu0 %v767
  %1113 = vmatprep.subr.bf16.mxu0 %v798
  %1114 = vmatpush2.bf16.msra.mxu0 %v797
  %1115 = vmatprep.subr.bf16.mxu0 %v796
  %1116 = vmatpush2.bf16.msra.mxu0 %v795
  %1117 = vmatprep.subr.bf16.mxu0 %v794
  %1118 = vmatpush2.bf16.msra.mxu0 %v793
  %1119 = vmatprep.subr.bf16.mxu0 %v792
  %1120 = vmatpush2.bf16.msra.mxu0 %v791
  %1121 = vmatprep.subr.bf16.mxu0 %v790
  %1122 = vmatpush2.bf16.msra.mxu0 %v789
  %1123 = vmatprep.subr.bf16.mxu0 %v788
  %1124 = vmatpush2.bf16.msra.mxu0 %v787
  %1125 = vmatprep.subr.bf16.mxu0 %v786
  %1126 = vmatpush2.bf16.msra.mxu0 %v785
  %1127 = vmatprep.subr.bf16.mxu0 %v784
  %1128 = vmatpush2.bf16.msra.mxu0 %v783
  %1129 = vmatprep.mubr.bf16.mxu0 %v240
  %1130 = vmatmul.mubr.bf16.gmra.mxu0 %v239
  %v1131 = vpop.f32.mrf.mxu0
  %v1132 = vadd.f32 %v1079, %v1131
  %v1133 = vpop.f32.mrf.mxu0
  %v1134 = vadd.f32 %v1081, %v1133
  %v1135 = vpop.f32.mrf.mxu0
  %v1136 = vadd.f32 %v1083, %v1135
  %v1137 = vpop.f32.mrf.mxu0
  %v1138 = vadd.f32 %v1085, %v1137
  %1139 = vmatprep.mubr.bf16.mxu0 %v249
  %1140 = vmatmul.mubr.bf16.gmra.mxu0 %v248
  %v1141 = vpop.f32.mrf.mxu0
  %v1142 = vadd.f32 %v1089, %v1141
  %v1143 = vpop.f32.mrf.mxu0
  %v1144 = vadd.f32 %v1091, %v1143
  %v1145 = vpop.f32.mrf.mxu0
  %v1146 = vadd.f32 %v1093, %v1145
  %v1147 = vpop.f32.mrf.mxu0
  %v1148 = vadd.f32 %v1095, %v1147
  %1149 = vdwg.mxu0
  %1150 = vmatprep.subr.bf16.mxu0 %v814
  %1151 = vmatpush1.bf16.msra.mxu0 %v813
  %1152 = vmatprep.subr.bf16.mxu0 %v812
  %1153 = vmatpush1.bf16.msra.mxu0 %v811
  %1154 = vmatprep.subr.bf16.mxu0 %v810
  %1155 = vmatpush1.bf16.msra.mxu0 %v809
  %1156 = vmatprep.subr.bf16.mxu0 %v808
  %1157 = vmatpush1.bf16.msra.mxu0 %v807
  %1158 = vmatprep.subr.bf16.mxu0 %v806
  %1159 = vmatpush1.bf16.msra.mxu0 %v805
  %1160 = vmatprep.subr.bf16.mxu0 %v804
  %1161 = vmatpush1.bf16.msra.mxu0 %v803
  %1162 = vmatprep.subr.bf16.mxu0 %v802
  %1163 = vmatpush1.bf16.msra.mxu0 %v801
  %1164 = vmatprep.subr.bf16.mxu0 %v800
  %1165 = vmatpush1.bf16.msra.mxu0 %v799
  %1166 = vmatprep.subr.bf16.mxu0 %v830
  %1167 = vmatpush2.bf16.msra.mxu0 %v829
  %1168 = vmatprep.subr.bf16.mxu0 %v828
  %1169 = vmatpush2.bf16.msra.mxu0 %v827
  %1170 = vmatprep.subr.bf16.mxu0 %v826
  %1171 = vmatpush2.bf16.msra.mxu0 %v825
  %1172 = vmatprep.subr.bf16.mxu0 %v824
  %1173 = vmatpush2.bf16.msra.mxu0 %v823
  %1174 = vmatprep.subr.bf16.mxu0 %v822
  %1175 = vmatpush2.bf16.msra.mxu0 %v821
  %1176 = vmatprep.subr.bf16.mxu0 %v820
  %1177 = vmatpush2.bf16.msra.mxu0 %v819
  %1178 = vmatprep.subr.bf16.mxu0 %v818
  %1179 = vmatpush2.bf16.msra.mxu0 %v817
  %1180 = vmatprep.subr.bf16.mxu0 %v816
  %1181 = vmatpush2.bf16.msra.mxu0 %v815
  %1182 = vmatprep.mubr.bf16.mxu0 %v242
  %1183 = vmatmul.mubr.bf16.gmra.mxu0 %v241
  %v1184 = vpop.f32.mrf.mxu0
  %v1185 = vadd.f32 %v1132, %v1184
  %v1186 = vpop.f32.mrf.mxu0
  %v1187 = vadd.f32 %v1134, %v1186
  %v1188 = vpop.f32.mrf.mxu0
  %v1189 = vadd.f32 %v1136, %v1188
  %v1190 = vpop.f32.mrf.mxu0
  %v1191 = vadd.f32 %v1138, %v1190
  %1192 = vmatprep.mubr.bf16.mxu0 %v251
  %1193 = vmatmul.mubr.bf16.gmra.mxu0 %v250
  %v1194 = vpop.f32.mrf.mxu0
  %v1195 = vadd.f32 %v1142, %v1194
  %v1196 = vpop.f32.mrf.mxu0
  %v1197 = vadd.f32 %v1144, %v1196
  %v1198 = vpop.f32.mrf.mxu0
  %v1199 = vadd.f32 %v1146, %v1198
  %v1200 = vpop.f32.mrf.mxu0
  %v1201 = vadd.f32 %v1148, %v1200
  %1202 = vdwg.mxu0
  %1203 = vmatprep.subr.bf16.mxu0 %v846
  %1204 = vmatpush1.bf16.msra.mxu0 %v845
  %1205 = vmatprep.subr.bf16.mxu0 %v844
  %1206 = vmatpush1.bf16.msra.mxu0 %v843
  %1207 = vmatprep.subr.bf16.mxu0 %v842
  %1208 = vmatpush1.bf16.msra.mxu0 %v841
  %1209 = vmatprep.subr.bf16.mxu0 %v840
  %1210 = vmatpush1.bf16.msra.mxu0 %v839
  %1211 = vmatprep.subr.bf16.mxu0 %v838
  %1212 = vmatpush1.bf16.msra.mxu0 %v837
  %1213 = vmatprep.subr.bf16.mxu0 %v836
  %1214 = vmatpush1.bf16.msra.mxu0 %v835
  %1215 = vmatprep.subr.bf16.mxu0 %v834
  %1216 = vmatpush1.bf16.msra.mxu0 %v833
  %1217 = vmatprep.subr.bf16.mxu0 %v832
  %1218 = vmatpush1.bf16.msra.mxu0 %v831
  %1219 = vmatprep.subr.bf16.mxu0 0
  %1220 = vmatpush2.bf16.msra.mxu0 0
  %1221 = vmatprep.subr.bf16.mxu0 0
  %1222 = vmatpush2.bf16.msra.mxu0 0
  %1223 = vmatprep.subr.bf16.mxu0 0
  %1224 = vmatpush2.bf16.msra.mxu0 0
  %1225 = vmatprep.subr.bf16.mxu0 0
  %1226 = vmatpush2.bf16.msra.mxu0 0
  %1227 = vmatprep.subr.bf16.mxu0 0
  %1228 = vmatpush2.bf16.msra.mxu0 0
  %1229 = vmatprep.subr.bf16.mxu0 0
  %1230 = vmatpush2.bf16.msra.mxu0 0
  %1231 = vmatprep.subr.bf16.mxu0 0
  %1232 = vmatpush2.bf16.msra.mxu0 0
  %1233 = vmatprep.subr.bf16.mxu0 0
  %1234 = vmatpush2.bf16.msra.mxu0 0
  %1235 = vmatprep.mubr.bf16.mxu0 0
  %1236 = vmatmul.mubr.bf16.gmra.mxu0 %v243
  %v1237 = vpop.f32.mrf.mxu0
  %v1238 = vadd.f32 %v1185, %v1237
  %v1239 = vpop.f32.mrf.mxu0
  %v1240 = vadd.f32 %v1187, %v1239
  %v1241 = vpop.f32.mrf.mxu0
  %v1242 = vadd.f32 %v1189, %v1241
  %v1243 = vpop.f32.mrf.mxu0
  %v1244 = vadd.f32 %v1191, %v1243
  %1245 = vmatprep.mubr.bf16.mxu0 0
  %1246 = vmatmul.mubr.bf16.gmra.mxu0 %v252
  %v1247 = vpop.f32.mrf.mxu0
  %v1248 = vadd.f32 %v1195, %v1247
  %v1249 = vpop.f32.mrf.mxu0
  %v1250 = vadd.f32 %v1197, %v1249
  %v1251 = vpop.f32.mrf.mxu0
  %v1252 = vadd.f32 %v1199, %v1251
  %v1253 = vpop.f32.mrf.mxu0
  %v1254 = vadd.f32 %v1201, %v1253
  %1255 = vdwg.mxu0
  %v1256 = vmax.f32 %v1238, %v1242
  %v1257 = vmax.f32 %v1240, %v1244
  %v1258 = vmax.f32 %v1248, %v1252
  %v1259 = vmax.f32 %v1250, %v1254
  %v1260 = vmax.f32 %v1256, %v1258
  %v1261 = vmax.f32 %v1257, %v1259
  %v1262 = vld [vmem:[%s2] sm:$0x3]
  %v1264 = vlaneseq
  %v1265 = vshrl.u32 %v1264, 7
  %v1266 = vsub.s32 0, %v1265
  %v1267 = vrot.slane %v1262, %v1266
  %v1268 = vlaneseq
  %v1269 = vshrl.u32 %v1268, 7
  %v1270 = vsub.s32 1, %v1269
  %v1271 = vrot.slane %v1262, %v1270
  %v1274 = vadd.f32 %v1260, %v1267
  %v1275 = vadd.f32 %v1261, %v1271
  %v1276 = vmax.f32 %v1274, 0.0
  %v1277 = vmax.f32 %v1275, 0.0
  %v1278 = vpack.c.bf16 %v1276, %v1276
  %v1279 = vpack.c.bf16 %v1277, %v1277
  %v1282 = vunpack.c.l.b16 %v1278
  %v1283 = vunpack.c.l.b16 %v1279
  %v1284 = vpack.c.b16 %v1283, %v1282
  %1286 = vst [vmem:[%s3] sm:$0xff] %v1284
  // Predicated region
  $region14: #{net_forward.8} parent=0 // pred_check
    _
  $region15: #{net_forward.8} parent=0 // pred_check_branch
    %1288 = sbr.rel (0) target = $region17
  $region16: #{net_forward.8} parent=0 // pred_region
    _
  $region17: #{net_forward.8} parent=0 // pred_fallthru
    _
  // Predicated region
  $region18: #{net_forward.8} parent=0 // pred_check
    _
  $region19: #{net_forward.8} parent=0 // pred_check_branch
    %1290 = sbr.rel (0) target = $region21
  $region20: #{net_forward.8} parent=0 // pred_region
    _
  $region21: #{net_forward.8} parent=0 // pred_fallthru
    _

// kernel: net_forward.9
$region0: #{net_forward.9}
  #allocation0 [shape = 'u32[]', space=smem, size = 0x4, offset = 0x4, fixed_abs, tag = 'smem constant byte address 0x4 - core index']
  #allocation1 [shape = 'u32[144,128]{1,0:T(1,128)}', space=vmem, size = 0x12000, scoped, tag = 'internal scratch']
  %s0 = inlined_call_operand.vmem [shape: bf16[16,1024], index: 0, kind: input, shape index: {}]
  %s1 = inlined_call_operand.vmem [shape: bf16[1024,1024], index: 1, kind: input, shape index: {}]
  %s2 = inlined_call_operand.vmem [shape: f32[1,1024], index: 2, kind: input, shape index: {}]
  %s3 = inlined_call_operand.vmem [shape: bf16[1024,512], index: 3, kind: input, shape index: {}]
  %s4 = inlined_call_operand.vmem [shape: f32[1,512], index: 4, kind: input, shape index: {}]
  %s5 = inlined_call_operand.vmem [shape: bf16[512,133], index: 5, kind: input, shape index: {}]
  %s6 = inlined_call_operand.vmem [shape: f32[1,133], index: 6, kind: input, shape index: {}]
  %s7 = inlined_call_operand.vmem [shape: f32[16,133], index: 7, kind: output, shape index: {}]
  %s8 = sld [smem:[#allocation0]]
  $region38: #{net_forward.9} parent=0
    _
  %s10 = ssub.s32 1, %s8
  %s11 = scalar_select 0, %s10, %s8
  // Predicated region
  $region2: #{net_forward.9} parent=0 // pred_check
    _
  $region3: #{net_forward.9} parent=0 // pred_check_branch
    %13 = sbr.rel (0) target = $region5
  $region4: #{net_forward.9} parent=0 // pred_region
    _
  $region5: #{net_forward.9} parent=0 // pred_fallthru
    _
  // Predicated region
  $region6: #{net_forward.9} parent=0 // pred_check
    _
  $region7: #{net_forward.9} parent=0 // pred_check_branch
    %15 = sbr.rel (0) target = $region9
  $region8: #{net_forward.9} parent=0 // pred_region
    _
  $region9: #{net_forward.9} parent=0 // pred_fallthru
    _
  // Predicated region
  $region10: #{net_forward.9} parent=0 // pred_check
    _
  $region11: #{net_forward.9} parent=0 // pred_check_branch
    %17 = sbr.rel (0) target = $region13
  $region12: #{net_forward.9} parent=0 // pred_region
    _
  $region13: #{net_forward.9} parent=0 // pred_fallthru
    _
  // Predicated region
  $region14: #{net_forward.9} parent=0 // pred_check
    _
  $region15: #{net_forward.9} parent=0 // pred_check_branch
    %19 = sbr.rel (0) target = $region17
  $region16: #{net_forward.9} parent=0 // pred_region
    _
  $region17: #{net_forward.9} parent=0 // pred_fallthru
    _
  // Predicated region
  $region18: #{net_forward.9} parent=0 // pred_check
    _
  $region19: #{net_forward.9} parent=0 // pred_check_branch
    %21 = sbr.rel (0) target = $region21
  $region20: #{net_forward.9} parent=0 // pred_region
    _
  $region21: #{net_forward.9} parent=0 // pred_fallthru
    _
  // Predicated region
  $region22: #{net_forward.9} parent=0 // pred_check
    _
  $region23: #{net_forward.9} parent=0 // pred_check_branch
    %23 = sbr.rel (0) target = $region25
  $region24: #{net_forward.9} parent=0 // pred_region
    _
  $region25: #{net_forward.9} parent=0 // pred_fallthru
    _
  // Predicated region
  $region26: #{net_forward.9} parent=0 // pred_check
    _
  $region27: #{net_forward.9} parent=0 // pred_check_branch
    %25 = sbr.rel (0) target = $region29
  $region28: #{net_forward.9} parent=0 // pred_region
    _
  $region29: #{net_forward.9} parent=0 // pred_fallthru
    _
  %v26 = vld [vmem:[%s0] sm:$0xff]
  %v27 = vld [vmem:[%s0 + $0x8] sm:$0xff]
  %v28 = vld [vmem:[%s0 + $0x10] sm:$0xff]
  %v29 = vld [vmem:[%s0 + $0x18] sm:$0xff]
  %v30 = vld [vmem:[%s0 + $0x20] sm:$0xff]
  %v31 = vld [vmem:[%s0 + $0x28] sm:$0xff]
  %v32 = vld [vmem:[%s0 + $0x30] sm:$0xff]
  %v33 = vld [vmem:[%s0 + $0x38] sm:$0xff]
  %v34 = vld [vmem:[%s1] sm:$0xff]
  %v35 = vld [vmem:[%s1 + $0x8] sm:$0xff]
  %v36 = vld [vmem:[%s1 + $0x10] sm:$0xff]
  %v37 = vld [vmem:[%s1 + $0x18] sm:$0xff]
  %v38 = vld [vmem:[%s1 + $0x20] sm:$0xff]
  %v39 = vld [vmem:[%s1 + $0x28] sm:$0xff]
  %v40 = vld [vmem:[%s1 + $0x30] sm:$0xff]
  %v41 = vld [vmem:[%s1 + $0x38] sm:$0xff]
  %v42 = vld [vmem:[%s1 + $0x40] sm:$0xff]
  %v43 = vld [vmem:[%s1 + $0x48] sm:$0xff]
  %v44 = vld [vmem:[%s1 + $0x50] sm:$0xff]
  %v45 = vld [vmem:[%s1 + $0x58] sm:$0xff]
  %v46 = vld [vmem:[%s1 + $0x60] sm:$0xff]
  %v47 = vld [vmem:[%s1 + $0x68] sm:$0xff]
  %v48 = vld [vmem:[%s1 + $0x70] sm:$0xff]
  %v49 = vld [vmem:[%s1 + $0x78] sm:$0xff]
  %v50 = vld [vmem:[%s1 + $0x80] sm:$0xff]
  %v51 = vld [vmem:[%s1 + $0x88] sm:$0xff]
  %v52 = vld [vmem:[%s1 + $0x90] sm:$0xff]
  %v53 = vld [vmem:[%s1 + $0x98] sm:$0xff]
  %v54 = vld [vmem:[%s1 + $0xa0] sm:$0xff]
  %v55 = vld [vmem:[%s1 + $0xa8] sm:$0xff]
  %v56 = vld [vmem:[%s1 + $0xb0] sm:$0xff]
  %v57 = vld [vmem:[%s1 + $0xb8] sm:$0xff]
  %v58 = vld [vmem:[%s1 + $0xc0] sm:$0xff]
  %v59 = vld [vmem:[%s1 + $0xc8] sm:$0xff]
  %v60 = vld [vmem:[%s1 + $0xd0] sm:$0xff]
  %v61 = vld [vmem:[%s1 + $0xd8] sm:$0xff]
  %v62 = vld [vmem:[%s1 + $0xe0] sm:$0xff]
  %v63 = vld [vmem:[%s1 + $0xe8] sm:$0xff]
  %v64 = vld [vmem:[%s1 + $0xf0] sm:$0xff]
  %v65 = vld [vmem:[%s1 + $0xf8] sm:$0xff]
  %v66 = vld [vmem:[%s1 + $0x100] sm:$0xff]
  %v67 = vld [vmem:[%s1 + $0x108] sm:$0xff]
  %v68 = vld [vmem:[%s1 + $0x110] sm:$0xff]
  %v69 = vld [vmem:[%s1 + $0x118] sm:$0xff]
  %v70 = vld [vmem:[%s1 + $0x120] sm:$0xff]
  %v71 = vld [vmem:[%s1 + $0x128] sm:$0xff]
  %v72 = vld [vmem:[%s1 + $0x130] sm:$0xff]
  %v73 = vld [vmem:[%s1 + $0x138] sm:$0xff]
  %v74 = vld [vmem:[%s1 + $0x140] sm:$0xff]
  %v75 = vld [vmem:[%s1 + $0x148] sm:$0xff]
  %v76 = vld [vmem:[%s1 + $0x150] sm:$0xff]
  %v77 = vld [vmem:[%s1 + $0x158] sm:$0xff]
  %v78 = vld [vmem:[%s1 + $0x160] sm:$0xff]
  %v79 = vld [vmem:[%s1 + $0x168] sm:$0xff]
  %v80 = vld [vmem:[%s1 + $0x170] sm:$0xff]
  %v81 = vld [vmem:[%s1 + $0x178] sm:$0xff]
  %v82 = vld [vmem:[%s1 + $0x180] sm:$0xff]
  %v83 = vld [vmem:[%s1 + $0x188] sm:$0xff]
  %v84 = vld [vmem:[%s1 + $0x190] sm:$0xff]
  %v85 = vld [vmem:[%s1 + $0x198] sm:$0xff]
  %v86 = vld [vmem:[%s1 + $0x1a0] sm:$0xff]
  %v87 = vld [vmem:[%s1 + $0x1a8] sm:$0xff]
  %v88 = vld [vmem:[%s1 + $0x1b0] sm:$0xff]
  %v89 = vld [vmem:[%s1 + $0x1b8] sm:$0xff]
  %v90 = vld [vmem:[%s1 + $0x1c0] sm:$0xff]
  %v91 = vld [vmem:[%s1 + $0x1c8] sm:$0xff]
  %v92 = vld [vmem:[%s1 + $0x1d0] sm:$0xff]
  %v93 = vld [vmem:[%s1 + $0x1d8] sm:$0xff]
  %v94 = vld [vmem:[%s1 + $0x1e0] sm:$0xff]
  %v95 = vld [vmem:[%s1 + $0x1e8] sm:$0xff]
  %v96 = vld [vmem:[%s1 + $0x1f0] sm:$0xff]
  %v97 = vld [vmem:[%s1 + $0x1f8] sm:$0xff]
  %v98 = vld [vmem:[%s1 + $0x200] sm:$0xff]
  %v99 = vld [vmem:[%s1 + $0x208] sm:$0xff]
  %v100 = vld [vmem:[%s1 + $0x210] sm:$0xff]
  %v101 = vld [vmem:[%s1 + $0x218] sm:$0xff]
  %v102 = vld [vmem:[%s1 + $0x220] sm:$0xff]
  %v103 = vld [vmem:[%s1 + $0x228] sm:$0xff]
  %v104 = vld [vmem:[%s1 + $0x230] sm:$0xff]
  %v105 = vld [vmem:[%s1 + $0x238] sm:$0xff]
  %v106 = vld [vmem:[%s1 + $0x240] sm:$0xff]
  %v107 = vld [vmem:[%s1 + $0x248] sm:$0xff]
  %v108 = vld [vmem:[%s1 + $0x250] sm:$0xff]
  %v109 = vld [vmem:[%s1 + $0x258] sm:$0xff]
  %v110 = vld [vmem:[%s1 + $0x260] sm:$0xff]
  %v111 = vld [vmem:[%s1 + $0x268] sm:$0xff]
  %v112 = vld [vmem:[%s1 + $0x270] sm:$0xff]
  %v113 = vld [vmem:[%s1 + $0x278] sm:$0xff]
  %v114 = vld [vmem:[%s1 + $0x280] sm:$0xff]
  %v115 = vld [vmem:[%s1 + $0x288] sm:$0xff]
  %v116 = vld [vmem:[%s1 + $0x290] sm:$0xff]
  %v117 = vld [vmem:[%s1 + $0x298] sm:$0xff]
  %v118 = vld [vmem:[%s1 + $0x2a0] sm:$0xff]
  %v119 = vld [vmem:[%s1 + $0x2a8] sm:$0xff]
  %v120 = vld [vmem:[%s1 + $0x2b0] sm:$0xff]
  %v121 = vld [vmem:[%s1 + $0x2b8] sm:$0xff]
  %v122 = vld [vmem:[%s1 + $0x2c0] sm:$0xff]
  %v123 = vld [vmem:[%s1 + $0x2c8] sm:$0xff]
  %v124 = vld [vmem:[%s1 + $0x2d0] sm:$0xff]
  %v125 = vld [vmem:[%s1 + $0x2d8] sm:$0xff]
  %v126 = vld [vmem:[%s1 + $0x2e0] sm:$0xff]
  %v127 = vld [vmem:[%s1 + $0x2e8] sm:$0xff]
  %v128 = vld [vmem:[%s1 + $0x2f0] sm:$0xff]
  %v129 = vld [vmem:[%s1 + $0x2f8] sm:$0xff]
  %v130 = vld [vmem:[%s1 + $0x300] sm:$0xff]
  %v131 = vld [vmem:[%s1 + $0x308] sm:$0xff]
  %v132 = vld [vmem:[%s1 + $0x310] sm:$0xff]
  %v133 = vld [vmem:[%s1 + $0x318] sm:$0xff]
  %v134 = vld [vmem:[%s1 + $0x320] sm:$0xff]
  %v135 = vld [vmem:[%s1 + $0x328] sm:$0xff]
  %v136 = vld [vmem:[%s1 + $0x330] sm:$0xff]
  %v137 = vld [vmem:[%s1 + $0x338] sm:$0xff]
  %v138 = vld [vmem:[%s1 + $0x340] sm:$0xff]
  %v139 = vld [vmem:[%s1 + $0x348] sm:$0xff]
  %v140 = vld [vmem:[%s1 + $0x350] sm:$0xff]
  %v141 = vld [vmem:[%s1 + $0x358] sm:$0xff]
  %v142 = vld [vmem:[%s1 + $0x360] sm:$0xff]
  %v143 = vld [vmem:[%s1 + $0x368] sm:$0xff]
  %v144 = vld [vmem:[%s1 + $0x370] sm:$0xff]
  %v145 = vld [vmem:[%s1 + $0x378] sm:$0xff]
  %v146 = vld [vmem:[%s1 + $0x380] sm:$0xff]
  %v147 = vld [vmem:[%s1 + $0x388] sm:$0xff]
  %v148 = vld [vmem:[%s1 + $0x390] sm:$0xff]
  %v149 = vld [vmem:[%s1 + $0x398] sm:$0xff]
  %v150 = vld [vmem:[%s1 + $0x3a0] sm:$0xff]
  %v151 = vld [vmem:[%s1 + $0x3a8] sm:$0xff]
  %v152 = vld [vmem:[%s1 + $0x3b0] sm:$0xff]
  %v153 = vld [vmem:[%s1 + $0x3b8] sm:$0xff]
  %v154 = vld [vmem:[%s1 + $0x3c0] sm:$0xff]
  %v155 = vld [vmem:[%s1 + $0x3c8] sm:$0xff]
  %v156 = vld [vmem:[%s1 + $0x3d0] sm:$0xff]
  %v157 = vld [vmem:[%s1 + $0x3d8] sm:$0xff]
  %v158 = vld [vmem:[%s1 + $0x3e0] sm:$0xff]
  %v159 = vld [vmem:[%s1 + $0x3e8] sm:$0xff]
  %v160 = vld [vmem:[%s1 + $0x3f0] sm:$0xff]
  %v161 = vld [vmem:[%s1 + $0x3f8] sm:$0xff]
  %v162 = vld [vmem:[%s1 + $0x400] sm:$0xff]
  %v163 = vld [vmem:[%s1 + $0x408] sm:$0xff]
  %v164 = vld [vmem:[%s1 + $0x410] sm:$0xff]
  %v165 = vld [vmem:[%s1 + $0x418] sm:$0xff]
  %v166 = vld [vmem:[%s1 + $0x420] sm:$0xff]
  %v167 = vld [vmem:[%s1 + $0x428] sm:$0xff]
  %v168 = vld [vmem:[%s1 + $0x430] sm:$0xff]
  %v169 = vld [vmem:[%s1 + $0x438] sm:$0xff]
  %v170 = vld [vmem:[%s1 + $0x440] sm:$0xff]
  %v171 = vld [vmem:[%s1 + $0x448] sm:$0xff]
  %v172 = vld [vmem:[%s1 + $0x450] sm:$0xff]
  %v173 = vld [vmem:[%s1 + $0x458] sm:$0xff]
  %v174 = vld [vmem:[%s1 + $0x460] sm:$0xff]
  %v175 = vld [vmem:[%s1 + $0x468] sm:$0xff]
  %v176 = vld [vmem:[%s1 + $0x470] sm:$0xff]
  %v177 = vld [vmem:[%s1 + $0x478] sm:$0xff]
  %v178 = vld [vmem:[%s1 + $0x480] sm:$0xff]
  %v179 = vld [vmem:[%s1 + $0x488] sm:$0xff]
  %v180 = vld [vmem:[%s1 + $0x490] sm:$0xff]
  %v181 = vld [vmem:[%s1 + $0x498] sm:$0xff]
  %v182 = vld [vmem:[%s1 + $0x4a0] sm:$0xff]
  %v183 = vld [vmem:[%s1 + $0x4a8] sm:$0xff]
  %v184 = vld [vmem:[%s1 + $0x4b0] sm:$0xff]
  %v185 = vld [vmem:[%s1 + $0x4b8] sm:$0xff]
  %v186 = vld [vmem:[%s1 + $0x4c0] sm:$0xff]
  %v187 = vld [vmem:[%s1 + $0x4c8] sm:$0xff]
  %v188 = vld [vmem:[%s1 + $0x4d0] sm:$0xff]
  %v189 = vld [vmem:[%s1 + $0x4d8] sm:$0xff]
  %v190 = vld [vmem:[%s1 + $0x4e0] sm:$0xff]
  %v191 = vld [vmem:[%s1 + $0x4e8] sm:$0xff]
  %v192 = vld [vmem:[%s1 + $0x4f0] sm:$0xff]
  %v193 = vld [vmem:[%s1 + $0x4f8] sm:$0xff]
  %v194 = vld [vmem:[%s1 + $0x500] sm:$0xff]
  %v195 = vld [vmem:[%s1 + $0x508] sm:$0xff]
  %v196 = vld [vmem:[%s1 + $0x510] sm:$0xff]
  %v197 = vld [vmem:[%s1 + $0x518] sm:$0xff]
  %v198 = vld [vmem:[%s1 + $0x520] sm:$0xff]
  %v199 = vld [vmem:[%s1 + $0x528] sm:$0xff]
  %v200 = vld [vmem:[%s1 + $0x530] sm:$0xff]
  %v201 = vld [vmem:[%s1 + $0x538] sm:$0xff]
  %v202 = vld [vmem:[%s1 + $0x540] sm:$0xff]
  %v203 = vld [vmem:[%s1 + $0x548] sm:$0xff]
  %v204 = vld [vmem:[%s1 + $0x550] sm:$0xff]
  %v205 = vld [vmem:[%s1 + $0x558] sm:$0xff]
  %v206 = vld [vmem:[%s1 + $0x560] sm:$0xff]
  %v207 = vld [vmem:[%s1 + $0x568] sm:$0xff]
  %v208 = vld [vmem:[%s1 + $0x570] sm:$0xff]
  %v209 = vld [vmem:[%s1 + $0x578] sm:$0xff]
  %v210 = vld [vmem:[%s1 + $0x580] sm:$0xff]
  %v211 = vld [vmem:[%s1 + $0x588] sm:$0xff]
  %v212 = vld [vmem:[%s1 + $0x590] sm:$0xff]
  %v213 = vld [vmem:[%s1 + $0x598] sm:$0xff]
  %v214 = vld [vmem:[%s1 + $0x5a0] sm:$0xff]
  %v215 = vld [vmem:[%s1 + $0x5a8] sm:$0xff]
  %v216 = vld [vmem:[%s1 + $0x5b0] sm:$0xff]
  %v217 = vld [vmem:[%s1 + $0x5b8] sm:$0xff]
  %v218 = vld [vmem:[%s1 + $0x5c0] sm:$0xff]
  %v219 = vld [vmem:[%s1 + $0x5c8] sm:$0xff]
  %v220 = vld [vmem:[%s1 + $0x5d0] sm:$0xff]
  %v221 = vld [vmem:[%s1 + $0x5d8] sm:$0xff]
  %v222 = vld [vmem:[%s1 + $0x5e0] sm:$0xff]
  %v223 = vld [vmem:[%s1 + $0x5e8] sm:$0xff]
  %v224 = vld [vmem:[%s1 + $0x5f0] sm:$0xff]
  %v225 = vld [vmem:[%s1 + $0x5f8] sm:$0xff]
  %v226 = vld [vmem:[%s1 + $0x600] sm:$0xff]
  %v227 = vld [vmem:[%s1 + $0x608] sm:$0xff]
  %v228 = vld [vmem:[%s1 + $0x610] sm:$0xff]
  %v229 = vld [vmem:[%s1 + $0x618] sm:$0xff]
  %v230 = vld [vmem:[%s1 + $0x620] sm:$0xff]
  %v231 = vld [vmem:[%s1 + $0x628] sm:$0xff]
  %v232 = vld [vmem:[%s1 + $0x630] sm:$0xff]
  %v233 = vld [vmem:[%s1 + $0x638] sm:$0xff]
  %v234 = vld [vmem:[%s1 + $0x640] sm:$0xff]
  %v235 = vld [vmem:[%s1 + $0x648] sm:$0xff]
  %v236 = vld [vmem:[%s1 + $0x650] sm:$0xff]
  %v237 = vld [vmem:[%s1 + $0x658] sm:$0xff]
  %v238 = vld [vmem:[%s1 + $0x660] sm:$0xff]
  %v239 = vld [vmem:[%s1 + $0x668] sm:$0xff]
  %v240 = vld [vmem:[%s1 + $0x670] sm:$0xff]
  %v241 = vld [vmem:[%s1 + $0x678] sm:$0xff]
  %v242 = vld [vmem:[%s1 + $0x680] sm:$0xff]
  %v243 = vld [vmem:[%s1 + $0x688] sm:$0xff]
  %v244 = vld [vmem:[%s1 + $0x690] sm:$0xff]
  %v245 = vld [vmem:[%s1 + $0x698] sm:$0xff]
  %v246 = vld [vmem:[%s1 + $0x6a0] sm:$0xff]
  %v247 = vld [vmem:[%s1 + $0x6a8] sm:$0xff]
  %v248 = vld [vmem:[%s1 + $0x6b0] sm:$0xff]
  %v249 = vld [vmem:[%s1 + $0x6b8] sm:$0xff]
  %v250 = vld [vmem:[%s1 + $0x6c0] sm:$0xff]
  %v251 = vld [vmem:[%s1 + $0x6c8] sm:$0xff]
  %v252 = vld [vmem:[%s1 + $0x6d0] sm:$0xff]
  %v253 = vld [vmem:[%s1 + $0x6d8] sm:$0xff]
  %v254 = vld [vmem:[%s1 + $0x6e0] sm:$0xff]
  %v255 = vld [vmem:[%s1 + $0x6e8] sm:$0xff]
  %v256 = vld [vmem:[%s1 + $0x6f0] sm:$0xff]
  %v257 = vld [vmem:[%s1 + $0x6f8] sm:$0xff]
  %v258 = vld [vmem:[%s1 + $0x700] sm:$0xff]
  %v259 = vld [vmem:[%s1 + $0x708] sm:$0xff]
  %v260 = vld [vmem:[%s1 + $0x710] sm:$0xff]
  %v261 = vld [vmem:[%s1 + $0x718] sm:$0xff]
  %v262 = vld [vmem:[%s1 + $0x720] sm:$0xff]
  %v263 = vld [vmem:[%s1 + $0x728] sm:$0xff]
  %v264 = vld [vmem:[%s1 + $0x730] sm:$0xff]
  %v265 = vld [vmem:[%s1 + $0x738] sm:$0xff]
  %v266 = vld [vmem:[%s1 + $0x740] sm:$0xff]
  %v267 = vld [vmem:[%s1 + $0x748] sm:$0xff]
  %v268 = vld [vmem:[%s1 + $0x750] sm:$0xff]
  %v269 = vld [vmem:[%s1 + $0x758] sm:$0xff]
  %v270 = vld [vmem:[%s1 + $0x760] sm:$0xff]
  %v271 = vld [vmem:[%s1 + $0x768] sm:$0xff]
  %v272 = vld [vmem:[%s1 + $0x770] sm:$0xff]
  %v273 = vld [vmem:[%s1 + $0x778] sm:$0xff]
  %v274 = vld [vmem:[%s1 + $0x780] sm:$0xff]
  %v275 = vld [vmem:[%s1 + $0x788] sm:$0xff]
  %v276 = vld [vmem:[%s1 + $0x790] sm:$0xff]
  %v277 = vld [vmem:[%s1 + $0x798] sm:$0xff]
  %v278 = vld [vmem:[%s1 + $0x7a0] sm:$0xff]
  %v279 = vld [vmem:[%s1 + $0x7a8] sm:$0xff]
  %v280 = vld [vmem:[%s1 + $0x7b0] sm:$0xff]
  %v281 = vld [vmem:[%s1 + $0x7b8] sm:$0xff]
  %v282 = vld [vmem:[%s1 + $0x7c0] sm:$0xff]
  %v283 = vld [vmem:[%s1 + $0x7c8] sm:$0xff]
  %v284 = vld [vmem:[%s1 + $0x7d0] sm:$0xff]
  %v285 = vld [vmem:[%s1 + $0x7d8] sm:$0xff]
  %v286 = vld [vmem:[%s1 + $0x7e0] sm:$0xff]
  %v287 = vld [vmem:[%s1 + $0x7e8] sm:$0xff]
  %v288 = vld [vmem:[%s1 + $0x7f0] sm:$0xff]
  %v289 = vld [vmem:[%s1 + $0x7f8] sm:$0xff]
  %v290 = vld [vmem:[%s1 + $0x800] sm:$0xff]
  %v291 = vld [vmem:[%s1 + $0x808] sm:$0xff]
  %v292 = vld [vmem:[%s1 + $0x810] sm:$0xff]
  %v293 = vld [vmem:[%s1 + $0x818] sm:$0xff]
  %v294 = vld [vmem:[%s1 + $0x820] sm:$0xff]
  %v295 = vld [vmem:[%s1 + $0x828] sm:$0xff]
  %v296 = vld [vmem:[%s1 + $0x830] sm:$0xff]
  %v297 = vld [vmem:[%s1 + $0x838] sm:$0xff]
  %v298 = vld [vmem:[%s1 + $0x840] sm:$0xff]
  %v299 = vld [vmem:[%s1 + $0x848] sm:$0xff]
  %v300 = vld [vmem:[%s1 + $0x850] sm:$0xff]
  %v301 = vld [vmem:[%s1 + $0x858] sm:$0xff]
  %v302 = vld [vmem:[%s1 + $0x860] sm:$0xff]
  %v303 = vld [vmem:[%s1 + $0x868] sm:$0xff]
  %v304 = vld [vmem:[%s1 + $0x870] sm:$0xff]
  %v305 = vld [vmem:[%s1 + $0x878] sm:$0xff]
  %v306 = vld [vmem:[%s1 + $0x880] sm:$0xff]
  %v307 = vld [vmem:[%s1 + $0x888] sm:$0xff]
  %v308 = vld [vmem:[%s1 + $0x890] sm:$0xff]
  %v309 = vld [vmem:[%s1 + $0x898] sm:$0xff]
  %v310 = vld [vmem:[%s1 + $0x8a0] sm:$0xff]
  %v311 = vld [vmem:[%s1 + $0x8a8] sm:$0xff]
  %v312 = vld [vmem:[%s1 + $0x8b0] sm:$0xff]
  %v313 = vld [vmem:[%s1 + $0x8b8] sm:$0xff]
  %v314 = vld [vmem:[%s1 + $0x8c0] sm:$0xff]
  %v315 = vld [vmem:[%s1 + $0x8c8] sm:$0xff]
  %v316 = vld [vmem:[%s1 + $0x8d0] sm:$0xff]
  %v317 = vld [vmem:[%s1 + $0x8d8] sm:$0xff]
  %v318 = vld [vmem:[%s1 + $0x8e0] sm:$0xff]
  %v319 = vld [vmem:[%s1 + $0x8e8] sm:$0xff]
  %v320 = vld [vmem:[%s1 + $0x8f0] sm:$0xff]
  %v321 = vld [vmem:[%s1 + $0x8f8] sm:$0xff]
  %v322 = vld [vmem:[%s1 + $0x900] sm:$0xff]
  %v323 = vld [vmem:[%s1 + $0x908] sm:$0xff]
  %v324 = vld [vmem:[%s1 + $0x910] sm:$0xff]
  %v325 = vld [vmem:[%s1 + $0x918] sm:$0xff]
  %v326 = vld [vmem:[%s1 + $0x920] sm:$0xff]
  %v327 = vld [vmem:[%s1 + $0x928] sm:$0xff]
  %v328 = vld [vmem:[%s1 + $0x930] sm:$0xff]
  %v329 = vld [vmem:[%s1 + $0x938] sm:$0xff]
  %v330 = vld [vmem:[%s1 + $0x940] sm:$0xff]
  %v331 = vld [vmem:[%s1 + $0x948] sm:$0xff]
  %v332 = vld [vmem:[%s1 + $0x950] sm:$0xff]
  %v333 = vld [vmem:[%s1 + $0x958] sm:$0xff]
  %v334 = vld [vmem:[%s1 + $0x960] sm:$0xff]
  %v335 = vld [vmem:[%s1 + $0x968] sm:$0xff]
  %v336 = vld [vmem:[%s1 + $0x970] sm:$0xff]
  %v337 = vld [vmem:[%s1 + $0x978] sm:$0xff]
  %v338 = vld [vmem:[%s1 + $0x980] sm:$0xff]
  %v339 = vld [vmem:[%s1 + $0x988] sm:$0xff]
  %v340 = vld [vmem:[%s1 + $0x990] sm:$0xff]
  %v341 = vld [vmem:[%s1 + $0x998] sm:$0xff]
  %v342 = vld [vmem:[%s1 + $0x9a0] sm:$0xff]
  %v343 = vld [vmem:[%s1 + $0x9a8] sm:$0xff]
  %v344 = vld [vmem:[%s1 + $0x9b0] sm:$0xff]
  %v345 = vld [vmem:[%s1 + $0x9b8] sm:$0xff]
  %v346 = vld [vmem:[%s1 + $0x9c0] sm:$0xff]
  %v347 = vld [vmem:[%s1 + $0x9c8] sm:$0xff]
  %v348 = vld [vmem:[%s1 + $0x9d0] sm:$0xff]
  %v349 = vld [vmem:[%s1 + $0x9d8] sm:$0xff]
  %v350 = vld [vmem:[%s1 + $0x9e0] sm:$0xff]
  %v351 = vld [vmem:[%s1 + $0x9e8] sm:$0xff]
  %v352 = vld [vmem:[%s1 + $0x9f0] sm:$0xff]
  %v353 = vld [vmem:[%s1 + $0x9f8] sm:$0xff]
  %v354 = vld [vmem:[%s1 + $0xa00] sm:$0xff]
  %v355 = vld [vmem:[%s1 + $0xa08] sm:$0xff]
  %v356 = vld [vmem:[%s1 + $0xa10] sm:$0xff]
  %v357 = vld [vmem:[%s1 + $0xa18] sm:$0xff]
  %v358 = vld [vmem:[%s1 + $0xa20] sm:$0xff]
  %v359 = vld [vmem:[%s1 + $0xa28] sm:$0xff]
  %v360 = vld [vmem:[%s1 + $0xa30] sm:$0xff]
  %v361 = vld [vmem:[%s1 + $0xa38] sm:$0xff]
  %v362 = vld [vmem:[%s1 + $0xa40] sm:$0xff]
  %v363 = vld [vmem:[%s1 + $0xa48] sm:$0xff]
  %v364 = vld [vmem:[%s1 + $0xa50] sm:$0xff]
  %v365 = vld [vmem:[%s1 + $0xa58] sm:$0xff]
  %v366 = vld [vmem:[%s1 + $0xa60] sm:$0xff]
  %v367 = vld [vmem:[%s1 + $0xa68] sm:$0xff]
  %v368 = vld [vmem:[%s1 + $0xa70] sm:$0xff]
  %v369 = vld [vmem:[%s1 + $0xa78] sm:$0xff]
  %v370 = vld [vmem:[%s1 + $0xa80] sm:$0xff]
  %v371 = vld [vmem:[%s1 + $0xa88] sm:$0xff]
  %v372 = vld [vmem:[%s1 + $0xa90] sm:$0xff]
  %v373 = vld [vmem:[%s1 + $0xa98] sm:$0xff]
  %v374 = vld [vmem:[%s1 + $0xaa0] sm:$0xff]
  %v375 = vld [vmem:[%s1 + $0xaa8] sm:$0xff]
  %v376 = vld [vmem:[%s1 + $0xab0] sm:$0xff]
  %v377 = vld [vmem:[%s1 + $0xab8] sm:$0xff]
  %v378 = vld [vmem:[%s1 + $0xac0] sm:$0xff]
  %v379 = vld [vmem:[%s1 + $0xac8] sm:$0xff]
  %v380 = vld [vmem:[%s1 + $0xad0] sm:$0xff]
  %v381 = vld [vmem:[%s1 + $0xad8] sm:$0xff]
  %v382 = vld [vmem:[%s1 + $0xae0] sm:$0xff]
  %v383 = vld [vmem:[%s1 + $0xae8] sm:$0xff]
  %v384 = vld [vmem:[%s1 + $0xaf0] sm:$0xff]
  %v385 = vld [vmem:[%s1 + $0xaf8] sm:$0xff]
  %v386 = vld [vmem:[%s1 + $0xb00] sm:$0xff]
  %v387 = vld [vmem:[%s1 + $0xb08] sm:$0xff]
  %v388 = vld [vmem:[%s1 + $0xb10] sm:$0xff]
  %v389 = vld [vmem:[%s1 + $0xb18] sm:$0xff]
  %v390 = vld [vmem:[%s1 + $0xb20] sm:$0xff]
  %v391 = vld [vmem:[%s1 + $0xb28] sm:$0xff]
  %v392 = vld [vmem:[%s1 + $0xb30] sm:$0xff]
  %v393 = vld [vmem:[%s1 + $0xb38] sm:$0xff]
  %v394 = vld [vmem:[%s1 + $0xb40] sm:$0xff]
  %v395 = vld [vmem:[%s1 + $0xb48] sm:$0xff]
  %v396 = vld [vmem:[%s1 + $0xb50] sm:$0xff]
  %v397 = vld [vmem:[%s1 + $0xb58] sm:$0xff]
  %v398 = vld [vmem:[%s1 + $0xb60] sm:$0xff]
  %v399 = vld [vmem:[%s1 + $0xb68] sm:$0xff]
  %v400 = vld [vmem:[%s1 + $0xb70] sm:$0xff]
  %v401 = vld [vmem:[%s1 + $0xb78] sm:$0xff]
  %v402 = vld [vmem:[%s1 + $0xb80] sm:$0xff]
  %v403 = vld [vmem:[%s1 + $0xb88] sm:$0xff]
  %v404 = vld [vmem:[%s1 + $0xb90] sm:$0xff]
  %v405 = vld [vmem:[%s1 + $0xb98] sm:$0xff]
  %v406 = vld [vmem:[%s1 + $0xba0] sm:$0xff]
  %v407 = vld [vmem:[%s1 + $0xba8] sm:$0xff]
  %v408 = vld [vmem:[%s1 + $0xbb0] sm:$0xff]
  %v409 = vld [vmem:[%s1 + $0xbb8] sm:$0xff]
  %v410 = vld [vmem:[%s1 + $0xbc0] sm:$0xff]
  %v411 = vld [vmem:[%s1 + $0xbc8] sm:$0xff]
  %v412 = vld [vmem:[%s1 + $0xbd0] sm:$0xff]
  %v413 = vld [vmem:[%s1 + $0xbd8] sm:$0xff]
  %v414 = vld [vmem:[%s1 + $0xbe0] sm:$0xff]
  %v415 = vld [vmem:[%s1 + $0xbe8] sm:$0xff]
  %v416 = vld [vmem:[%s1 + $0xbf0] sm:$0xff]
  %v417 = vld [vmem:[%s1 + $0xbf8] sm:$0xff]
  %v418 = vld [vmem:[%s1 + $0xc00] sm:$0xff]
  %v419 = vld [vmem:[%s1 + $0xc08] sm:$0xff]
  %v420 = vld [vmem:[%s1 + $0xc10] sm:$0xff]
  %v421 = vld [vmem:[%s1 + $0xc18] sm:$0xff]
  %v422 = vld [vmem:[%s1 + $0xc20] sm:$0xff]
  %v423 = vld [vmem:[%s1 + $0xc28] sm:$0xff]
  %v424 = vld [vmem:[%s1 + $0xc30] sm:$0xff]
  %v425 = vld [vmem:[%s1 + $0xc38] sm:$0xff]
  %v426 = vld [vmem:[%s1 + $0xc40] sm:$0xff]
  %v427 = vld [vmem:[%s1 + $0xc48] sm:$0xff]
  %v428 = vld [vmem:[%s1 + $0xc50] sm:$0xff]
  %v429 = vld [vmem:[%s1 + $0xc58] sm:$0xff]
  %v430 = vld [vmem:[%s1 + $0xc60] sm:$0xff]
  %v431 = vld [vmem:[%s1 + $0xc68] sm:$0xff]
  %v432 = vld [vmem:[%s1 + $0xc70] sm:$0xff]
  %v433 = vld [vmem:[%s1 + $0xc78] sm:$0xff]
  %v434 = vld [vmem:[%s1 + $0xc80] sm:$0xff]
  %v435 = vld [vmem:[%s1 + $0xc88] sm:$0xff]
  %v436 = vld [vmem:[%s1 + $0xc90] sm:$0xff]
  %v437 = vld [vmem:[%s1 + $0xc98] sm:$0xff]
  %v438 = vld [vmem:[%s1 + $0xca0] sm:$0xff]
  %v439 = vld [vmem:[%s1 + $0xca8] sm:$0xff]
  %v440 = vld [vmem:[%s1 + $0xcb0] sm:$0xff]
  %v441 = vld [vmem:[%s1 + $0xcb8] sm:$0xff]
  %v442 = vld [vmem:[%s1 + $0xcc0] sm:$0xff]
  %v443 = vld [vmem:[%s1 + $0xcc8] sm:$0xff]
  %v444 = vld [vmem:[%s1 + $0xcd0] sm:$0xff]
  %v445 = vld [vmem:[%s1 + $0xcd8] sm:$0xff]
  %v446 = vld [vmem:[%s1 + $0xce0] sm:$0xff]
  %v447 = vld [vmem:[%s1 + $0xce8] sm:$0xff]
  %v448 = vld [vmem:[%s1 + $0xcf0] sm:$0xff]
  %v449 = vld [vmem:[%s1 + $0xcf8] sm:$0xff]
  %v450 = vld [vmem:[%s1 + $0xd00] sm:$0xff]
  %v451 = vld [vmem:[%s1 + $0xd08] sm:$0xff]
  %v452 = vld [vmem:[%s1 + $0xd10] sm:$0xff]
  %v453 = vld [vmem:[%s1 + $0xd18] sm:$0xff]
  %v454 = vld [vmem:[%s1 + $0xd20] sm:$0xff]
  %v455 = vld [vmem:[%s1 + $0xd28] sm:$0xff]
  %v456 = vld [vmem:[%s1 + $0xd30] sm:$0xff]
  %v457 = vld [vmem:[%s1 + $0xd38] sm:$0xff]
  %v458 = vld [vmem:[%s1 + $0xd40] sm:$0xff]
  %v459 = vld [vmem:[%s1 + $0xd48] sm:$0xff]
  %v460 = vld [vmem:[%s1 + $0xd50] sm:$0xff]
  %v461 = vld [vmem:[%s1 + $0xd58] sm:$0xff]
  %v462 = vld [vmem:[%s1 + $0xd60] sm:$0xff]
  %v463 = vld [vmem:[%s1 + $0xd68] sm:$0xff]
  %v464 = vld [vmem:[%s1 + $0xd70] sm:$0xff]
  %v465 = vld [vmem:[%s1 + $0xd78] sm:$0xff]
  %v466 = vld [vmem:[%s1 + $0xd80] sm:$0xff]
  %v467 = vld [vmem:[%s1 + $0xd88] sm:$0xff]
  %v468 = vld [vmem:[%s1 + $0xd90] sm:$0xff]
  %v469 = vld [vmem:[%s1 + $0xd98] sm:$0xff]
  %v470 = vld [vmem:[%s1 + $0xda0] sm:$0xff]
  %v471 = vld [vmem:[%s1 + $0xda8] sm:$0xff]
  %v472 = vld [vmem:[%s1 + $0xdb0] sm:$0xff]
  %v473 = vld [vmem:[%s1 + $0xdb8] sm:$0xff]
  %v474 = vld [vmem:[%s1 + $0xdc0] sm:$0xff]
  %v475 = vld [vmem:[%s1 + $0xdc8] sm:$0xff]
  %v476 = vld [vmem:[%s1 + $0xdd0] sm:$0xff]
  %v477 = vld [vmem:[%s1 + $0xdd8] sm:$0xff]
  %v478 = vld [vmem:[%s1 + $0xde0] sm:$0xff]
  %v479 = vld [vmem:[%s1 + $0xde8] sm:$0xff]
  %v480 = vld [vmem:[%s1 + $0xdf0] sm:$0xff]
  %v481 = vld [vmem:[%s1 + $0xdf8] sm:$0xff]
  %v482 = vld [vmem:[%s1 + $0xe00] sm:$0xff]
  %v483 = vld [vmem:[%s1 + $0xe08] sm:$0xff]
  %v484 = vld [vmem:[%s1 + $0xe10] sm:$0xff]
  %v485 = vld [vmem:[%s1 + $0xe18] sm:$0xff]
  %v486 = vld [vmem:[%s1 + $0xe20] sm:$0xff]
  %v487 = vld [vmem:[%s1 + $0xe28] sm:$0xff]
  %v488 = vld [vmem:[%s1 + $0xe30] sm:$0xff]
  %v489 = vld [vmem:[%s1 + $0xe38] sm:$0xff]
  %v490 = vld [vmem:[%s1 + $0xe40] sm:$0xff]
  %v491 = vld [vmem:[%s1 + $0xe48] sm:$0xff]
  %v492 = vld [vmem:[%s1 + $0xe50] sm:$0xff]
  %v493 = vld [vmem:[%s1 + $0xe58] sm:$0xff]
  %v494 = vld [vmem:[%s1 + $0xe60] sm:$0xff]
  %v495 = vld [vmem:[%s1 + $0xe68] sm:$0xff]
  %v496 = vld [vmem:[%s1 + $0xe70] sm:$0xff]
  %v497 = vld [vmem:[%s1 + $0xe78] sm:$0xff]
  %v498 = vld [vmem:[%s1 + $0xe80] sm:$0xff]
  %v499 = vld [vmem:[%s1 + $0xe88] sm:$0xff]
  %v500 = vld [vmem:[%s1 + $0xe90] sm:$0xff]
  %v501 = vld [vmem:[%s1 + $0xe98] sm:$0xff]
  %v502 = vld [vmem:[%s1 + $0xea0] sm:$0xff]
  %v503 = vld [vmem:[%s1 + $0xea8] sm:$0xff]
  %v504 = vld [vmem:[%s1 + $0xeb0] sm:$0xff]
  %v505 = vld [vmem:[%s1 + $0xeb8] sm:$0xff]
  %v506 = vld [vmem:[%s1 + $0xec0] sm:$0xff]
  %v507 = vld [vmem:[%s1 + $0xec8] sm:$0xff]
  %v508 = vld [vmem:[%s1 + $0xed0] sm:$0xff]
  %v509 = vld [vmem:[%s1 + $0xed8] sm:$0xff]
  %v510 = vld [vmem:[%s1 + $0xee0] sm:$0xff]
  %v511 = vld [vmem:[%s1 + $0xee8] sm:$0xff]
  %v512 = vld [vmem:[%s1 + $0xef0] sm:$0xff]
  %v513 = vld [vmem:[%s1 + $0xef8] sm:$0xff]
  %v514 = vld [vmem:[%s1 + $0xf00] sm:$0xff]
  %v515 = vld [vmem:[%s1 + $0xf08] sm:$0xff]
  %v516 = vld [vmem:[%s1 + $0xf10] sm:$0xff]
  %v517 = vld [vmem:[%s1 + $0xf18] sm:$0xff]
  %v518 = vld [vmem:[%s1 + $0xf20] sm:$0xff]
  %v519 = vld [vmem:[%s1 + $0xf28] sm:$0xff]
  %v520 = vld [vmem:[%s1 + $0xf30] sm:$0xff]
  %v521 = vld [vmem:[%s1 + $0xf38] sm:$0xff]
  %v522 = vld [vmem:[%s1 + $0xf40] sm:$0xff]
  %v523 = vld [vmem:[%s1 + $0xf48] sm:$0xff]
  %v524 = vld [vmem:[%s1 + $0xf50] sm:$0xff]
  %v525 = vld [vmem:[%s1 + $0xf58] sm:$0xff]
  %v526 = vld [vmem:[%s1 + $0xf60] sm:$0xff]
  %v527 = vld [vmem:[%s1 + $0xf68] sm:$0xff]
  %v528 = vld [vmem:[%s1 + $0xf70] sm:$0xff]
  %v529 = vld [vmem:[%s1 + $0xf78] sm:$0xff]
  %v530 = vld [vmem:[%s1 + $0xf80] sm:$0xff]
  %v531 = vld [vmem:[%s1 + $0xf88] sm:$0xff]
  %v532 = vld [vmem:[%s1 + $0xf90] sm:$0xff]
  %v533 = vld [vmem:[%s1 + $0xf98] sm:$0xff]
  %v534 = vld [vmem:[%s1 + $0xfa0] sm:$0xff]
  %v535 = vld [vmem:[%s1 + $0xfa8] sm:$0xff]
  %v536 = vld [vmem:[%s1 + $0xfb0] sm:$0xff]
  %v537 = vld [vmem:[%s1 + $0xfb8] sm:$0xff]
  %v538 = vld [vmem:[%s1 + $0xfc0] sm:$0xff]
  %v539 = vld [vmem:[%s1 + $0xfc8] sm:$0xff]
  %v540 = vld [vmem:[%s1 + $0xfd0] sm:$0xff]
  %v541 = vld [vmem:[%s1 + $0xfd8] sm:$0xff]
  %v542 = vld [vmem:[%s1 + $0xfe0] sm:$0xff]
  %v543 = vld [vmem:[%s1 + $0xfe8] sm:$0xff]
  %v544 = vld [vmem:[%s1 + $0xff0] sm:$0xff]
  %v545 = vld [vmem:[%s1 + $0xff8] sm:$0xff]
  %v546 = vld [vmem:[%s2] sm:$0xff]
  %v548 = vlaneseq
  %v549 = vshrl.u32 %v548, 7
  %v550 = vsub.s32 0, %v549
  %v551 = vrot.slane %v546, %v550
  %v552 = vlaneseq
  %v553 = vshrl.u32 %v552, 7
  %v554 = vsub.s32 1, %v553
  %v555 = vrot.slane %v546, %v554
  %v556 = vlaneseq
  %v557 = vshrl.u32 %v556, 7
  %v558 = vsub.s32 2, %v557
  %v559 = vrot.slane %v546, %v558
  %v560 = vlaneseq
  %v561 = vshrl.u32 %v560, 7
  %v562 = vsub.s32 3, %v561
  %v563 = vrot.slane %v546, %v562
  %v564 = vlaneseq
  %v565 = vshrl.u32 %v564, 7
  %v566 = vsub.s32 4, %v565
  %v567 = vrot.slane %v546, %v566
  %v568 = vlaneseq
  %v569 = vshrl.u32 %v568, 7
  %v570 = vsub.s32 5, %v569
  %v571 = vrot.slane %v546, %v570
  %v572 = vlaneseq
  %v573 = vshrl.u32 %v572, 7
  %v574 = vsub.s32 6, %v573
  %v575 = vrot.slane %v546, %v574
  %v576 = vlaneseq
  %v577 = vshrl.u32 %v576, 7
  %v578 = vsub.s32 7, %v577
  %v579 = vrot.slane %v546, %v578
  %v596 = vunpack.c.l.b16 %v26
  %v597 = vunpack.c.h.b16 %v26
  %v598 = vunpack.c.l.b16 %v27
  %v599 = vunpack.c.h.b16 %v27
  %v600 = vunpack.c.l.b16 %v28
  %v601 = vunpack.c.h.b16 %v28
  %v602 = vunpack.c.l.b16 %v29
  %v603 = vunpack.c.h.b16 %v29
  %v604 = vunpack.c.l.b16 %v30
  %v605 = vunpack.c.h.b16 %v30
  %v606 = vunpack.c.l.b16 %v31
  %v607 = vunpack.c.h.b16 %v31
  %v608 = vunpack.c.l.b16 %v32
  %v609 = vunpack.c.h.b16 %v32
  %v610 = vunpack.c.l.b16 %v33
  %v611 = vunpack.c.h.b16 %v33
  %v612 = vpack.c.b16 %v604, %v596
  %v613 = vpack.c.b16 %v605, %v597
  %v614 = vpack.c.b16 %v606, %v598
  %v615 = vpack.c.b16 %v607, %v599
  %v616 = vpack.c.b16 %v608, %v600
  %v617 = vpack.c.b16 %v609, %v601
  %v618 = vpack.c.b16 %v610, %v602
  %v619 = vpack.c.b16 %v611, %v603
  %v1140 = vunpack.c.l.b16 %v34
  %v1141 = vunpack.c.h.b16 %v34
  %v1142 = vunpack.c.l.b16 %v35
  %v1143 = vunpack.c.h.b16 %v35
  %v1144 = vunpack.c.l.b16 %v36
  %v1145 = vunpack.c.h.b16 %v36
  %v1146 = vunpack.c.l.b16 %v37
  %v1147 = vunpack.c.h.b16 %v37
  %v1148 = vunpack.c.l.b16 %v38
  %v1149 = vunpack.c.h.b16 %v38
  %v1150 = vunpack.c.l.b16 %v39
  %v1151 = vunpack.c.h.b16 %v39
  %v1152 = vunpack.c.l.b16 %v40
  %v1153 = vunpack.c.h.b16 %v40
  %v1154 = vunpack.c.l.b16 %v41
  %v1155 = vunpack.c.h.b16 %v41
  %v1156 = vunpack.c.l.b16 %v42
  %v1157 = vunpack.c.h.b16 %v42
  %v1158 = vunpack.c.l.b16 %v43
  %v1159 = vunpack.c.h.b16 %v43
  %v1160 = vunpack.c.l.b16 %v44
  %v1161 = vunpack.c.h.b16 %v44
  %v1162 = vunpack.c.l.b16 %v45
  %v1163 = vunpack.c.h.b16 %v45
  %v1164 = vunpack.c.l.b16 %v46
  %v1165 = vunpack.c.h.b16 %v46
  %v1166 = vunpack.c.l.b16 %v47
  %v1167 = vunpack.c.h.b16 %v47
  %v1168 = vunpack.c.l.b16 %v48
  %v1169 = vunpack.c.h.b16 %v48
  %v1170 = vunpack.c.l.b16 %v49
  %v1171 = vunpack.c.h.b16 %v49
  %v1172 = vunpack.c.l.b16 %v50
  %v1173 = vunpack.c.h.b16 %v50
  %v1174 = vunpack.c.l.b16 %v51
  %v1175 = vunpack.c.h.b16 %v51
  %v1176 = vunpack.c.l.b16 %v52
  %v1177 = vunpack.c.h.b16 %v52
  %v1178 = vunpack.c.l.b16 %v53
  %v1179 = vunpack.c.h.b16 %v53
  %v1180 = vunpack.c.l.b16 %v54
  %v1181 = vunpack.c.h.b16 %v54
  %v1182 = vunpack.c.l.b16 %v55
  %v1183 = vunpack.c.h.b16 %v55
  %v1184 = vunpack.c.l.b16 %v56
  %v1185 = vunpack.c.h.b16 %v56
  %v1186 = vunpack.c.l.b16 %v57
  %v1187 = vunpack.c.h.b16 %v57
  %v1188 = vunpack.c.l.b16 %v58
  %v1189 = vunpack.c.h.b16 %v58
  %v1190 = vunpack.c.l.b16 %v59
  %v1191 = vunpack.c.h.b16 %v59
  %v1192 = vunpack.c.l.b16 %v60
  %v1193 = vunpack.c.h.b16 %v60
  %v1194 = vunpack.c.l.b16 %v61
  %v1195 = vunpack.c.h.b16 %v61
  %v1196 = vunpack.c.l.b16 %v62
  %v1197 = vunpack.c.h.b16 %v62
  %v1198 = vunpack.c.l.b16 %v63
  %v1199 = vunpack.c.h.b16 %v63
  %v1200 = vunpack.c.l.b16 %v64
  %v1201 = vunpack.c.h.b16 %v64
  %v1202 = vunpack.c.l.b16 %v65
  %v1203 = vunpack.c.h.b16 %v65
  %v1204 = vunpack.c.l.b16 %v66
  %v1205 = vunpack.c.h.b16 %v66
  %v1206 = vunpack.c.l.b16 %v67
  %v1207 = vunpack.c.h.b16 %v67
  %v1208 = vunpack.c.l.b16 %v68
  %v1209 = vunpack.c.h.b16 %v68
  %v1210 = vunpack.c.l.b16 %v69
  %v1211 = vunpack.c.h.b16 %v69
  %v1212 = vunpack.c.l.b16 %v70
  %v1213 = vunpack.c.h.b16 %v70
  %v1214 = vunpack.c.l.b16 %v71
  %v1215 = vunpack.c.h.b16 %v71
  %v1216 = vunpack.c.l.b16 %v72
  %v1217 = vunpack.c.h.b16 %v72
  %v1218 = vunpack.c.l.b16 %v73
  %v1219 = vunpack.c.h.b16 %v73
  %v1220 = vunpack.c.l.b16 %v74
  %v1221 = vunpack.c.h.b16 %v74
  %v1222 = vunpack.c.l.b16 %v75
  %v1223 = vunpack.c.h.b16 %v75
  %v1224 = vunpack.c.l.b16 %v76
  %v1225 = vunpack.c.h.b16 %v76
  %v1226 = vunpack.c.l.b16 %v77
  %v1227 = vunpack.c.h.b16 %v77
  %v1228 = vunpack.c.l.b16 %v78
  %v1229 = vunpack.c.h.b16 %v78
  %v1230 = vunpack.c.l.b16 %v79
  %v1231 = vunpack.c.h.b16 %v79
  %v1232 = vunpack.c.l.b16 %v80
  %v1233 = vunpack.c.h.b16 %v80
  %v1234 = vunpack.c.l.b16 %v81
  %v1235 = vunpack.c.h.b16 %v81
  %v1236 = vunpack.c.l.b16 %v82
  %v1237 = vunpack.c.h.b16 %v82
  %v1238 = vunpack.c.l.b16 %v83
  %v1239 = vunpack.c.h.b16 %v83
  %v1240 = vunpack.c.l.b16 %v84
  %v1241 = vunpack.c.h.b16 %v84
  %v1242 = vunpack.c.l.b16 %v85
  %v1243 = vunpack.c.h.b16 %v85
  %v1244 = vunpack.c.l.b16 %v86
  %v1245 = vunpack.c.h.b16 %v86
  %v1246 = vunpack.c.l.b16 %v87
  %v1247 = vunpack.c.h.b16 %v87
  %v1248 = vunpack.c.l.b16 %v88
  %v1249 = vunpack.c.h.b16 %v88
  %v1250 = vunpack.c.l.b16 %v89
  %v1251 = vunpack.c.h.b16 %v89
  %v1252 = vunpack.c.l.b16 %v90
  %v1253 = vunpack.c.h.b16 %v90
  %v1254 = vunpack.c.l.b16 %v91
  %v1255 = vunpack.c.h.b16 %v91
  %v1256 = vunpack.c.l.b16 %v92
  %v1257 = vunpack.c.h.b16 %v92
  %v1258 = vunpack.c.l.b16 %v93
  %v1259 = vunpack.c.h.b16 %v93
  %v1260 = vunpack.c.l.b16 %v94
  %v1261 = vunpack.c.h.b16 %v94
  %v1262 = vunpack.c.l.b16 %v95
  %v1263 = vunpack.c.h.b16 %v95
  %v1264 = vunpack.c.l.b16 %v96
  %v1265 = vunpack.c.h.b16 %v96
  %v1266 = vunpack.c.l.b16 %v97
  %v1267 = vunpack.c.h.b16 %v97
  %v1268 = vunpack.c.l.b16 %v98
  %v1269 = vunpack.c.h.b16 %v98
  %v1270 = vunpack.c.l.b16 %v99
  %v1271 = vunpack.c.h.b16 %v99
  %v1272 = vunpack.c.l.b16 %v100
  %v1273 = vunpack.c.h.b16 %v100
  %v1274 = vunpack.c.l.b16 %v101
  %v1275 = vunpack.c.h.b16 %v101
  %v1276 = vunpack.c.l.b16 %v102
  %v1277 = vunpack.c.h.b16 %v102
  %v1278 = vunpack.c.l.b16 %v103
  %v1279 = vunpack.c.h.b16 %v103
  %v1280 = vunpack.c.l.b16 %v104
  %v1281 = vunpack.c.h.b16 %v104
  %v1282 = vunpack.c.l.b16 %v105
  %v1283 = vunpack.c.h.b16 %v105
  %v1284 = vunpack.c.l.b16 %v106
  %v1285 = vunpack.c.h.b16 %v106
  %v1286 = vunpack.c.l.b16 %v107
  %v1287 = vunpack.c.h.b16 %v107
  %v1288 = vunpack.c.l.b16 %v108
  %v1289 = vunpack.c.h.b16 %v108
  %v1290 = vunpack.c.l.b16 %v109
  %v1291 = vunpack.c.h.b16 %v109
  %v1292 = vunpack.c.l.b16 %v110
  %v1293 = vunpack.c.h.b16 %v110
  %v1294 = vunpack.c.l.b16 %v111
  %v1295 = vunpack.c.h.b16 %v111
  %v1296 = vunpack.c.l.b16 %v112
  %v1297 = vunpack.c.h.b16 %v112
  %v1298 = vunpack.c.l.b16 %v113
  %v1299 = vunpack.c.h.b16 %v113
  %v1300 = vunpack.c.l.b16 %v114
  %v1301 = vunpack.c.h.b16 %v114
  %v1302 = vunpack.c.l.b16 %v115
  %v1303 = vunpack.c.h.b16 %v115
  %v1304 = vunpack.c.l.b16 %v116
  %v1305 = vunpack.c.h.b16 %v116
  %v1306 = vunpack.c.l.b16 %v117
  %v1307 = vunpack.c.h.b16 %v117
  %v1308 = vunpack.c.l.b16 %v118
  %v1309 = vunpack.c.h.b16 %v118
  %v1310 = vunpack.c.l.b16 %v119
  %v1311 = vunpack.c.h.b16 %v119
  %v1312 = vunpack.c.l.b16 %v120
  %v1313 = vunpack.c.h.b16 %v120
  %v1314 = vunpack.c.l.b16 %v121
  %v1315 = vunpack.c.h.b16 %v121
  %v1316 = vunpack.c.l.b16 %v122
  %v1317 = vunpack.c.h.b16 %v122
  %v1318 = vunpack.c.l.b16 %v123
  %v1319 = vunpack.c.h.b16 %v123
  %v1320 = vunpack.c.l.b16 %v124
  %v1321 = vunpack.c.h.b16 %v124
  %v1322 = vunpack.c.l.b16 %v125
  %v1323 = vunpack.c.h.b16 %v125
  %v1324 = vunpack.c.l.b16 %v126
  %v1325 = vunpack.c.h.b16 %v126
  %v1326 = vunpack.c.l.b16 %v127
  %v1327 = vunpack.c.h.b16 %v127
  %v1328 = vunpack.c.l.b16 %v128
  %v1329 = vunpack.c.h.b16 %v128
  %v1330 = vunpack.c.l.b16 %v129
  %v1331 = vunpack.c.h.b16 %v129
  %v1332 = vunpack.c.l.b16 %v130
  %v1333 = vunpack.c.h.b16 %v130
  %v1334 = vunpack.c.l.b16 %v131
  %v1335 = vunpack.c.h.b16 %v131
  %v1336 = vunpack.c.l.b16 %v132
  %v1337 = vunpack.c.h.b16 %v132
  %v1338 = vunpack.c.l.b16 %v133
  %v1339 = vunpack.c.h.b16 %v133
  %v1340 = vunpack.c.l.b16 %v134
  %v1341 = vunpack.c.h.b16 %v134
  %v1342 = vunpack.c.l.b16 %v135
  %v1343 = vunpack.c.h.b16 %v135
  %v1344 = vunpack.c.l.b16 %v136
  %v1345 = vunpack.c.h.b16 %v136
  %v1346 = vunpack.c.l.b16 %v137
  %v1347 = vunpack.c.h.b16 %v137
  %v1348 = vunpack.c.l.b16 %v138
  %v1349 = vunpack.c.h.b16 %v138
  %v1350 = vunpack.c.l.b16 %v139
  %v1351 = vunpack.c.h.b16 %v139
  %v1352 = vunpack.c.l.b16 %v140
  %v1353 = vunpack.c.h.b16 %v140
  %v1354 = vunpack.c.l.b16 %v141
  %v1355 = vunpack.c.h.b16 %v141
  %v1356 = vunpack.c.l.b16 %v142
  %v1357 = vunpack.c.h.b16 %v142
  %v1358 = vunpack.c.l.b16 %v143
  %v1359 = vunpack.c.h.b16 %v143
  %v1360 = vunpack.c.l.b16 %v144
  %v1361 = vunpack.c.h.b16 %v144
  %v1362 = vunpack.c.l.b16 %v145
  %v1363 = vunpack.c.h.b16 %v145
  %v1364 = vunpack.c.l.b16 %v146
  %v1365 = vunpack.c.h.b16 %v146
  %v1366 = vunpack.c.l.b16 %v147
  %v1367 = vunpack.c.h.b16 %v147
  %v1368 = vunpack.c.l.b16 %v148
  %v1369 = vunpack.c.h.b16 %v148
  %v1370 = vunpack.c.l.b16 %v149
  %v1371 = vunpack.c.h.b16 %v149
  %v1372 = vunpack.c.l.b16 %v150
  %v1373 = vunpack.c.h.b16 %v150
  %v1374 = vunpack.c.l.b16 %v151
  %v1375 = vunpack.c.h.b16 %v151
  %v1376 = vunpack.c.l.b16 %v152
  %v1377 = vunpack.c.h.b16 %v152
  %v1378 = vunpack.c.l.b16 %v153
  %v1379 = vunpack.c.h.b16 %v153
  %v1380 = vunpack.c.l.b16 %v154
  %v1381 = vunpack.c.h.b16 %v154
  %v1382 = vunpack.c.l.b16 %v155
  %v1383 = vunpack.c.h.b16 %v155
  %v1384 = vunpack.c.l.b16 %v156
  %v1385 = vunpack.c.h.b16 %v156
  %v1386 = vunpack.c.l.b16 %v157
  %v1387 = vunpack.c.h.b16 %v157
  %v1388 = vunpack.c.l.b16 %v158
  %v1389 = vunpack.c.h.b16 %v158
  %v1390 = vunpack.c.l.b16 %v159
  %v1391 = vunpack.c.h.b16 %v159
  %v1392 = vunpack.c.l.b16 %v160
  %v1393 = vunpack.c.h.b16 %v160
  %v1394 = vunpack.c.l.b16 %v161
  %v1395 = vunpack.c.h.b16 %v161
  %v1396 = vunpack.c.l.b16 %v162
  %v1397 = vunpack.c.h.b16 %v162
  %v1398 = vunpack.c.l.b16 %v163
  %v1399 = vunpack.c.h.b16 %v163
  %v1400 = vunpack.c.l.b16 %v164
  %v1401 = vunpack.c.h.b16 %v164
  %v1402 = vunpack.c.l.b16 %v165
  %v1403 = vunpack.c.h.b16 %v165
  %v1404 = vunpack.c.l.b16 %v166
  %v1405 = vunpack.c.h.b16 %v166
  %v1406 = vunpack.c.l.b16 %v167
  %v1407 = vunpack.c.h.b16 %v167
  %v1408 = vunpack.c.l.b16 %v168
  %v1409 = vunpack.c.h.b16 %v168
  %v1410 = vunpack.c.l.b16 %v169
  %v1411 = vunpack.c.h.b16 %v169
  %v1412 = vunpack.c.l.b16 %v170
  %v1413 = vunpack.c.h.b16 %v170
  %v1414 = vunpack.c.l.b16 %v171
  %v1415 = vunpack.c.h.b16 %v171
  %v1416 = vunpack.c.l.b16 %v172
  %v1417 = vunpack.c.h.b16 %v172
  %v1418 = vunpack.c.l.b16 %v173
  %v1419 = vunpack.c.h.b16 %v173
  %v1420 = vunpack.c.l.b16 %v174
  %v1421 = vunpack.c.h.b16 %v174
  %v1422 = vunpack.c.l.b16 %v175
  %v1423 = vunpack.c.h.b16 %v175
  %v1424 = vunpack.c.l.b16 %v176
  %v1425 = vunpack.c.h.b16 %v176
  %v1426 = vunpack.c.l.b16 %v177
  %v1427 = vunpack.c.h.b16 %v177
  %v1428 = vunpack.c.l.b16 %v178
  %v1429 = vunpack.c.h.b16 %v178
  %v1430 = vunpack.c.l.b16 %v179
  %v1431 = vunpack.c.h.b16 %v179
  %v1432 = vunpack.c.l.b16 %v180
  %v1433 = vunpack.c.h.b16 %v180
  %v1434 = vunpack.c.l.b16 %v181
  %v1435 = vunpack.c.h.b16 %v181
  %v1436 = vunpack.c.l.b16 %v182
  %v1437 = vunpack.c.h.b16 %v182
  %v1438 = vunpack.c.l.b16 %v183
  %v1439 = vunpack.c.h.b16 %v183
  %v1440 = vunpack.c.l.b16 %v184
  %v1441 = vunpack.c.h.b16 %v184
  %v1442 = vunpack.c.l.b16 %v185
  %v1443 = vunpack.c.h.b16 %v185
  %v1444 = vunpack.c.l.b16 %v186
  %v1445 = vunpack.c.h.b16 %v186
  %v1446 = vunpack.c.l.b16 %v187
  %v1447 = vunpack.c.h.b16 %v187
  %v1448 = vunpack.c.l.b16 %v188
  %v1449 = vunpack.c.h.b16 %v188
  %v1450 = vunpack.c.l.b16 %v189
  %v1451 = vunpack.c.h.b16 %v189
  %v1452 = vunpack.c.l.b16 %v190
  %v1453 = vunpack.c.h.b16 %v190
  %v1454 = vunpack.c.l.b16 %v191
  %v1455 = vunpack.c.h.b16 %v191
  %v1456 = vunpack.c.l.b16 %v192
  %v1457 = vunpack.c.h.b16 %v192
  %v1458 = vunpack.c.l.b16 %v193
  %v1459 = vunpack.c.h.b16 %v193
  %v1460 = vunpack.c.l.b16 %v194
  %v1461 = vunpack.c.h.b16 %v194
  %v1462 = vunpack.c.l.b16 %v195
  %v1463 = vunpack.c.h.b16 %v195
  %v1464 = vunpack.c.l.b16 %v196
  %v1465 = vunpack.c.h.b16 %v196
  %v1466 = vunpack.c.l.b16 %v197
  %v1467 = vunpack.c.h.b16 %v197
  %v1468 = vunpack.c.l.b16 %v198
  %v1469 = vunpack.c.h.b16 %v198
  %v1470 = vunpack.c.l.b16 %v199
  %v1471 = vunpack.c.h.b16 %v199
  %v1472 = vunpack.c.l.b16 %v200
  %v1473 = vunpack.c.h.b16 %v200
  %v1474 = vunpack.c.l.b16 %v201
  %v1475 = vunpack.c.h.b16 %v201
  %v1476 = vunpack.c.l.b16 %v202
  %v1477 = vunpack.c.h.b16 %v202
  %v1478 = vunpack.c.l.b16 %v203
  %v1479 = vunpack.c.h.b16 %v203
  %v1480 = vunpack.c.l.b16 %v204
  %v1481 = vunpack.c.h.b16 %v204
  %v1482 = vunpack.c.l.b16 %v205
  %v1483 = vunpack.c.h.b16 %v205
  %v1484 = vunpack.c.l.b16 %v206
  %v1485 = vunpack.c.h.b16 %v206
  %v1486 = vunpack.c.l.b16 %v207
  %v1487 = vunpack.c.h.b16 %v207
  %v1488 = vunpack.c.l.b16 %v208
  %v1489 = vunpack.c.h.b16 %v208
  %v1490 = vunpack.c.l.b16 %v209
  %v1491 = vunpack.c.h.b16 %v209
  %v1492 = vunpack.c.l.b16 %v210
  %v1493 = vunpack.c.h.b16 %v210
  %v1494 = vunpack.c.l.b16 %v211
  %v1495 = vunpack.c.h.b16 %v211
  %v1496 = vunpack.c.l.b16 %v212
  %v1497 = vunpack.c.h.b16 %v212
  %v1498 = vunpack.c.l.b16 %v213
  %v1499 = vunpack.c.h.b16 %v213
  %v1500 = vunpack.c.l.b16 %v214
  %v1501 = vunpack.c.h.b16 %v214
  %v1502 = vunpack.c.l.b16 %v215
  %v1503 = vunpack.c.h.b16 %v215
  %v1504 = vunpack.c.l.b16 %v216
  %v1505 = vunpack.c.h.b16 %v216
  %v1506 = vunpack.c.l.b16 %v217
  %v1507 = vunpack.c.h.b16 %v217
  %v1508 = vunpack.c.l.b16 %v218
  %v1509 = vunpack.c.h.b16 %v218
  %v1510 = vunpack.c.l.b16 %v219
  %v1511 = vunpack.c.h.b16 %v219
  %v1512 = vunpack.c.l.b16 %v220
  %v1513 = vunpack.c.h.b16 %v220
  %v1514 = vunpack.c.l.b16 %v221
  %v1515 = vunpack.c.h.b16 %v221
  %v1516 = vunpack.c.l.b16 %v222
  %v1517 = vunpack.c.h.b16 %v222
  %v1518 = vunpack.c.l.b16 %v223
  %v1519 = vunpack.c.h.b16 %v223
  %v1520 = vunpack.c.l.b16 %v224
  %v1521 = vunpack.c.h.b16 %v224
  %v1522 = vunpack.c.l.b16 %v225
  %v1523 = vunpack.c.h.b16 %v225
  %v1524 = vunpack.c.l.b16 %v226
  %v1525 = vunpack.c.h.b16 %v226
  %v1526 = vunpack.c.l.b16 %v227
  %v1527 = vunpack.c.h.b16 %v227
  %v1528 = vunpack.c.l.b16 %v228
  %v1529 = vunpack.c.h.b16 %v228
  %v1530 = vunpack.c.l.b16 %v229
  %v1531 = vunpack.c.h.b16 %v229
  %v1532 = vunpack.c.l.b16 %v230
  %v1533 = vunpack.c.h.b16 %v230
  %v1534 = vunpack.c.l.b16 %v231
  %v1535 = vunpack.c.h.b16 %v231
  %v1536 = vunpack.c.l.b16 %v232
  %v1537 = vunpack.c.h.b16 %v232
  %v1538 = vunpack.c.l.b16 %v233
  %v1539 = vunpack.c.h.b16 %v233
  %v1540 = vunpack.c.l.b16 %v234
  %v1541 = vunpack.c.h.b16 %v234
  %v1542 = vunpack.c.l.b16 %v235
  %v1543 = vunpack.c.h.b16 %v235
  %v1544 = vunpack.c.l.b16 %v236
  %v1545 = vunpack.c.h.b16 %v236
  %v1546 = vunpack.c.l.b16 %v237
  %v1547 = vunpack.c.h.b16 %v237
  %v1548 = vunpack.c.l.b16 %v238
  %v1549 = vunpack.c.h.b16 %v238
  %v1550 = vunpack.c.l.b16 %v239
  %v1551 = vunpack.c.h.b16 %v239
  %v1552 = vunpack.c.l.b16 %v240
  %v1553 = vunpack.c.h.b16 %v240
  %v1554 = vunpack.c.l.b16 %v241
  %v1555 = vunpack.c.h.b16 %v241
  %v1556 = vunpack.c.l.b16 %v242
  %v1557 = vunpack.c.h.b16 %v242
  %v1558 = vunpack.c.l.b16 %v243
  %v1559 = vunpack.c.h.b16 %v243
  %v1560 = vunpack.c.l.b16 %v244
  %v1561 = vunpack.c.h.b16 %v244
  %v1562 = vunpack.c.l.b16 %v245
  %v1563 = vunpack.c.h.b16 %v245
  %v1564 = vunpack.c.l.b16 %v246
  %v1565 = vunpack.c.h.b16 %v246
  %v1566 = vunpack.c.l.b16 %v247
  %v1567 = vunpack.c.h.b16 %v247
  %v1568 = vunpack.c.l.b16 %v248
  %v1569 = vunpack.c.h.b16 %v248
  %v1570 = vunpack.c.l.b16 %v249
  %v1571 = vunpack.c.h.b16 %v249
  %v1572 = vunpack.c.l.b16 %v250
  %v1573 = vunpack.c.h.b16 %v250
  %v1574 = vunpack.c.l.b16 %v251
  %v1575 = vunpack.c.h.b16 %v251
  %v1576 = vunpack.c.l.b16 %v252
  %v1577 = vunpack.c.h.b16 %v252
  %v1578 = vunpack.c.l.b16 %v253
  %v1579 = vunpack.c.h.b16 %v253
  %v1580 = vunpack.c.l.b16 %v254
  %v1581 = vunpack.c.h.b16 %v254
  %v1582 = vunpack.c.l.b16 %v255
  %v1583 = vunpack.c.h.b16 %v255
  %v1584 = vunpack.c.l.b16 %v256
  %v1585 = vunpack.c.h.b16 %v256
  %v1586 = vunpack.c.l.b16 %v257
  %v1587 = vunpack.c.h.b16 %v257
  %v1588 = vunpack.c.l.b16 %v258
  %v1589 = vunpack.c.h.b16 %v258
  %v1590 = vunpack.c.l.b16 %v259
  %v1591 = vunpack.c.h.b16 %v259
  %v1592 = vunpack.c.l.b16 %v260
  %v1593 = vunpack.c.h.b16 %v260
  %v1594 = vunpack.c.l.b16 %v261
  %v1595 = vunpack.c.h.b16 %v261
  %v1596 = vunpack.c.l.b16 %v262
  %v1597 = vunpack.c.h.b16 %v262
  %v1598 = vunpack.c.l.b16 %v263
  %v1599 = vunpack.c.h.b16 %v263
  %v1600 = vunpack.c.l.b16 %v264
  %v1601 = vunpack.c.h.b16 %v264
  %v1602 = vunpack.c.l.b16 %v265
  %v1603 = vunpack.c.h.b16 %v265
  %v1604 = vunpack.c.l.b16 %v266
  %v1605 = vunpack.c.h.b16 %v266
  %v1606 = vunpack.c.l.b16 %v267
  %v1607 = vunpack.c.h.b16 %v267
  %v1608 = vunpack.c.l.b16 %v268
  %v1609 = vunpack.c.h.b16 %v268
  %v1610 = vunpack.c.l.b16 %v269
  %v1611 = vunpack.c.h.b16 %v269
  %v1612 = vunpack.c.l.b16 %v270
  %v1613 = vunpack.c.h.b16 %v270
  %v1614 = vunpack.c.l.b16 %v271
  %v1615 = vunpack.c.h.b16 %v271
  %v1616 = vunpack.c.l.b16 %v272
  %v1617 = vunpack.c.h.b16 %v272
  %v1618 = vunpack.c.l.b16 %v273
  %v1619 = vunpack.c.h.b16 %v273
  %v1620 = vunpack.c.l.b16 %v274
  %v1621 = vunpack.c.h.b16 %v274
  %v1622 = vunpack.c.l.b16 %v275
  %v1623 = vunpack.c.h.b16 %v275
  %v1624 = vunpack.c.l.b16 %v276
  %v1625 = vunpack.c.h.b16 %v276
  %v1626 = vunpack.c.l.b16 %v277
  %v1627 = vunpack.c.h.b16 %v277
  %v1628 = vunpack.c.l.b16 %v278
  %v1629 = vunpack.c.h.b16 %v278
  %v1630 = vunpack.c.l.b16 %v279
  %v1631 = vunpack.c.h.b16 %v279
  %v1632 = vunpack.c.l.b16 %v280
  %v1633 = vunpack.c.h.b16 %v280
  %v1634 = vunpack.c.l.b16 %v281
  %v1635 = vunpack.c.h.b16 %v281
  %v1636 = vunpack.c.l.b16 %v282
  %v1637 = vunpack.c.h.b16 %v282
  %v1638 = vunpack.c.l.b16 %v283
  %v1639 = vunpack.c.h.b16 %v283
  %v1640 = vunpack.c.l.b16 %v284
  %v1641 = vunpack.c.h.b16 %v284
  %v1642 = vunpack.c.l.b16 %v285
  %v1643 = vunpack.c.h.b16 %v285
  %v1644 = vunpack.c.l.b16 %v286
  %v1645 = vunpack.c.h.b16 %v286
  %v1646 = vunpack.c.l.b16 %v287
  %v1647 = vunpack.c.h.b16 %v287
  %v1648 = vunpack.c.l.b16 %v288
  %v1649 = vunpack.c.h.b16 %v288
  %v1650 = vunpack.c.l.b16 %v289
  %v1651 = vunpack.c.h.b16 %v289
  %v1652 = vunpack.c.l.b16 %v290
  %v1653 = vunpack.c.h.b16 %v290
  %v1654 = vunpack.c.l.b16 %v291
  %v1655 = vunpack.c.h.b16 %v291
  %v1656 = vunpack.c.l.b16 %v292
  %v1657 = vunpack.c.h.b16 %v292
  %v1658 = vunpack.c.l.b16 %v293
  %v1659 = vunpack.c.h.b16 %v293
  %v1660 = vunpack.c.l.b16 %v294
  %v1661 = vunpack.c.h.b16 %v294
  %v1662 = vunpack.c.l.b16 %v295
  %v1663 = vunpack.c.h.b16 %v295
  %v1664 = vunpack.c.l.b16 %v296
  %v1665 = vunpack.c.h.b16 %v296
  %v1666 = vunpack.c.l.b16 %v297
  %v1667 = vunpack.c.h.b16 %v297
  %v1668 = vunpack.c.l.b16 %v298
  %v1669 = vunpack.c.h.b16 %v298
  %v1670 = vunpack.c.l.b16 %v299
  %v1671 = vunpack.c.h.b16 %v299
  %v1672 = vunpack.c.l.b16 %v300
  %v1673 = vunpack.c.h.b16 %v300
  %v1674 = vunpack.c.l.b16 %v301
  %v1675 = vunpack.c.h.b16 %v301
  %v1676 = vunpack.c.l.b16 %v302
  %v1677 = vunpack.c.h.b16 %v302
  %v1678 = vunpack.c.l.b16 %v303
  %v1679 = vunpack.c.h.b16 %v303
  %v1680 = vunpack.c.l.b16 %v304
  %v1681 = vunpack.c.h.b16 %v304
  %v1682 = vunpack.c.l.b16 %v305
  %v1683 = vunpack.c.h.b16 %v305
  %v1684 = vunpack.c.l.b16 %v306
  %v1685 = vunpack.c.h.b16 %v306
  %v1686 = vunpack.c.l.b16 %v307
  %v1687 = vunpack.c.h.b16 %v307
  %v1688 = vunpack.c.l.b16 %v308
  %v1689 = vunpack.c.h.b16 %v308
  %v1690 = vunpack.c.l.b16 %v309
  %v1691 = vunpack.c.h.b16 %v309
  %v1692 = vunpack.c.l.b16 %v310
  %v1693 = vunpack.c.h.b16 %v310
  %v1694 = vunpack.c.l.b16 %v311
  %v1695 = vunpack.c.h.b16 %v311
  %v1696 = vunpack.c.l.b16 %v312
  %v1697 = vunpack.c.h.b16 %v312
  %v1698 = vunpack.c.l.b16 %v313
  %v1699 = vunpack.c.h.b16 %v313
  %v1700 = vunpack.c.l.b16 %v314
  %v1701 = vunpack.c.h.b16 %v314
  %v1702 = vunpack.c.l.b16 %v315
  %v1703 = vunpack.c.h.b16 %v315
  %v1704 = vunpack.c.l.b16 %v316
  %v1705 = vunpack.c.h.b16 %v316
  %v1706 = vunpack.c.l.b16 %v317
  %v1707 = vunpack.c.h.b16 %v317
  %v1708 = vunpack.c.l.b16 %v318
  %v1709 = vunpack.c.h.b16 %v318
  %v1710 = vunpack.c.l.b16 %v319
  %v1711 = vunpack.c.h.b16 %v319
  %v1712 = vunpack.c.l.b16 %v320
  %v1713 = vunpack.c.h.b16 %v320
  %v1714 = vunpack.c.l.b16 %v321
  %v1715 = vunpack.c.h.b16 %v321
  %v1716 = vunpack.c.l.b16 %v322
  %v1717 = vunpack.c.h.b16 %v322
  %v1718 = vunpack.c.l.b16 %v323
  %v1719 = vunpack.c.h.b16 %v323
  %v1720 = vunpack.c.l.b16 %v324
  %v1721 = vunpack.c.h.b16 %v324
  %v1722 = vunpack.c.l.b16 %v325
  %v1723 = vunpack.c.h.b16 %v325
  %v1724 = vunpack.c.l.b16 %v326
  %v1725 = vunpack.c.h.b16 %v326
  %v1726 = vunpack.c.l.b16 %v327
  %v1727 = vunpack.c.h.b16 %v327
  %v1728 = vunpack.c.l.b16 %v328
  %v1729 = vunpack.c.h.b16 %v328
  %v1730 = vunpack.c.l.b16 %v329
  %v1731 = vunpack.c.h.b16 %v329
  %v1732 = vunpack.c.l.b16 %v330
  %v1733 = vunpack.c.h.b16 %v330
  %v1734 = vunpack.c.l.b16 %v331
  %v1735 = vunpack.c.h.b16 %v331
  %v1736 = vunpack.c.l.b16 %v332
  %v1737 = vunpack.c.h.b16 %v332
  %v1738 = vunpack.c.l.b16 %v333
  %v1739 = vunpack.c.h.b16 %v333
  %v1740 = vunpack.c.l.b16 %v334
  %v1741 = vunpack.c.h.b16 %v334
  %v1742 = vunpack.c.l.b16 %v335
  %v1743 = vunpack.c.h.b16 %v335
  %v1744 = vunpack.c.l.b16 %v336
  %v1745 = vunpack.c.h.b16 %v336
  %v1746 = vunpack.c.l.b16 %v337
  %v1747 = vunpack.c.h.b16 %v337
  %v1748 = vunpack.c.l.b16 %v338
  %v1749 = vunpack.c.h.b16 %v338
  %v1750 = vunpack.c.l.b16 %v339
  %v1751 = vunpack.c.h.b16 %v339
  %v1752 = vunpack.c.l.b16 %v340
  %v1753 = vunpack.c.h.b16 %v340
  %v1754 = vunpack.c.l.b16 %v341
  %v1755 = vunpack.c.h.b16 %v341
  %v1756 = vunpack.c.l.b16 %v342
  %v1757 = vunpack.c.h.b16 %v342
  %v1758 = vunpack.c.l.b16 %v343
  %v1759 = vunpack.c.h.b16 %v343
  %v1760 = vunpack.c.l.b16 %v344
  %v1761 = vunpack.c.h.b16 %v344
  %v1762 = vunpack.c.l.b16 %v345
  %v1763 = vunpack.c.h.b16 %v345
  %v1764 = vunpack.c.l.b16 %v346
  %v1765 = vunpack.c.h.b16 %v346
  %v1766 = vunpack.c.l.b16 %v347
  %v1767 = vunpack.c.h.b16 %v347
  %v1768 = vunpack.c.l.b16 %v348
  %v1769 = vunpack.c.h.b16 %v348
  %v1770 = vunpack.c.l.b16 %v349
  %v1771 = vunpack.c.h.b16 %v349
  %v1772 = vunpack.c.l.b16 %v350
  %v1773 = vunpack.c.h.b16 %v350
  %v1774 = vunpack.c.l.b16 %v351
  %v1775 = vunpack.c.h.b16 %v351
  %v1776 = vunpack.c.l.b16 %v352
  %v1777 = vunpack.c.h.b16 %v352
  %v1778 = vunpack.c.l.b16 %v353
  %v1779 = vunpack.c.h.b16 %v353
  %v1780 = vunpack.c.l.b16 %v354
  %v1781 = vunpack.c.h.b16 %v354
  %v1782 = vunpack.c.l.b16 %v355
  %v1783 = vunpack.c.h.b16 %v355
  %v1784 = vunpack.c.l.b16 %v356
  %v1785 = vunpack.c.h.b16 %v356
  %v1786 = vunpack.c.l.b16 %v357
  %v1787 = vunpack.c.h.b16 %v357
  %v1788 = vunpack.c.l.b16 %v358
  %v1789 = vunpack.c.h.b16 %v358
  %v1790 = vunpack.c.l.b16 %v359
  %v1791 = vunpack.c.h.b16 %v359
  %v1792 = vunpack.c.l.b16 %v360
  %v1793 = vunpack.c.h.b16 %v360
  %v1794 = vunpack.c.l.b16 %v361
  %v1795 = vunpack.c.h.b16 %v361
  %v1796 = vunpack.c.l.b16 %v362
  %v1797 = vunpack.c.h.b16 %v362
  %v1798 = vunpack.c.l.b16 %v363
  %v1799 = vunpack.c.h.b16 %v363
  %v1800 = vunpack.c.l.b16 %v364
  %v1801 = vunpack.c.h.b16 %v364
  %v1802 = vunpack.c.l.b16 %v365
  %v1803 = vunpack.c.h.b16 %v365
  %v1804 = vunpack.c.l.b16 %v366
  %v1805 = vunpack.c.h.b16 %v366
  %v1806 = vunpack.c.l.b16 %v367
  %v1807 = vunpack.c.h.b16 %v367
  %v1808 = vunpack.c.l.b16 %v368
  %v1809 = vunpack.c.h.b16 %v368
  %v1810 = vunpack.c.l.b16 %v369
  %v1811 = vunpack.c.h.b16 %v369
  %v1812 = vunpack.c.l.b16 %v370
  %v1813 = vunpack.c.h.b16 %v370
  %v1814 = vunpack.c.l.b16 %v371
  %v1815 = vunpack.c.h.b16 %v371
  %v1816 = vunpack.c.l.b16 %v372
  %v1817 = vunpack.c.h.b16 %v372
  %v1818 = vunpack.c.l.b16 %v373
  %v1819 = vunpack.c.h.b16 %v373
  %v1820 = vunpack.c.l.b16 %v374
  %v1821 = vunpack.c.h.b16 %v374
  %v1822 = vunpack.c.l.b16 %v375
  %v1823 = vunpack.c.h.b16 %v375
  %v1824 = vunpack.c.l.b16 %v376
  %v1825 = vunpack.c.h.b16 %v376
  %v1826 = vunpack.c.l.b16 %v377
  %v1827 = vunpack.c.h.b16 %v377
  %v1828 = vunpack.c.l.b16 %v378
  %v1829 = vunpack.c.h.b16 %v378
  %v1830 = vunpack.c.l.b16 %v379
  %v1831 = vunpack.c.h.b16 %v379
  %v1832 = vunpack.c.l.b16 %v380
  %v1833 = vunpack.c.h.b16 %v380
  %v1834 = vunpack.c.l.b16 %v381
  %v1835 = vunpack.c.h.b16 %v381
  %v1836 = vunpack.c.l.b16 %v382
  %v1837 = vunpack.c.h.b16 %v382
  %v1838 = vunpack.c.l.b16 %v383
  %v1839 = vunpack.c.h.b16 %v383
  %v1840 = vunpack.c.l.b16 %v384
  %v1841 = vunpack.c.h.b16 %v384
  %v1842 = vunpack.c.l.b16 %v385
  %v1843 = vunpack.c.h.b16 %v385
  %v1844 = vunpack.c.l.b16 %v386
  %v1845 = vunpack.c.h.b16 %v386
  %v1846 = vunpack.c.l.b16 %v387
  %v1847 = vunpack.c.h.b16 %v387
  %v1848 = vunpack.c.l.b16 %v388
  %v1849 = vunpack.c.h.b16 %v388
  %v1850 = vunpack.c.l.b16 %v389
  %v1851 = vunpack.c.h.b16 %v389
  %v1852 = vunpack.c.l.b16 %v390
  %v1853 = vunpack.c.h.b16 %v390
  %v1854 = vunpack.c.l.b16 %v391
  %v1855 = vunpack.c.h.b16 %v391
  %v1856 = vunpack.c.l.b16 %v392
  %v1857 = vunpack.c.h.b16 %v392
  %v1858 = vunpack.c.l.b16 %v393
  %v1859 = vunpack.c.h.b16 %v393
  %v1860 = vunpack.c.l.b16 %v394
  %v1861 = vunpack.c.h.b16 %v394
  %v1862 = vunpack.c.l.b16 %v395
  %v1863 = vunpack.c.h.b16 %v395
  %v1864 = vunpack.c.l.b16 %v396
  %v1865 = vunpack.c.h.b16 %v396
  %v1866 = vunpack.c.l.b16 %v397
  %v1867 = vunpack.c.h.b16 %v397
  %v1868 = vunpack.c.l.b16 %v398
  %v1869 = vunpack.c.h.b16 %v398
  %v1870 = vunpack.c.l.b16 %v399
  %v1871 = vunpack.c.h.b16 %v399
  %v1872 = vunpack.c.l.b16 %v400
  %v1873 = vunpack.c.h.b16 %v400
  %v1874 = vunpack.c.l.b16 %v401
  %v1875 = vunpack.c.h.b16 %v401
  %v1876 = vunpack.c.l.b16 %v402
  %v1877 = vunpack.c.h.b16 %v402
  %v1878 = vunpack.c.l.b16 %v403
  %v1879 = vunpack.c.h.b16 %v403
  %v1880 = vunpack.c.l.b16 %v404
  %v1881 = vunpack.c.h.b16 %v404
  %v1882 = vunpack.c.l.b16 %v405
  %v1883 = vunpack.c.h.b16 %v405
  %v1884 = vunpack.c.l.b16 %v406
  %v1885 = vunpack.c.h.b16 %v406
  %v1886 = vunpack.c.l.b16 %v407
  %v1887 = vunpack.c.h.b16 %v407
  %v1888 = vunpack.c.l.b16 %v408
  %v1889 = vunpack.c.h.b16 %v408
  %v1890 = vunpack.c.l.b16 %v409
  %v1891 = vunpack.c.h.b16 %v409
  %v1892 = vunpack.c.l.b16 %v410
  %v1893 = vunpack.c.h.b16 %v410
  %v1894 = vunpack.c.l.b16 %v411
  %v1895 = vunpack.c.h.b16 %v411
  %v1896 = vunpack.c.l.b16 %v412
  %v1897 = vunpack.c.h.b16 %v412
  %v1898 = vunpack.c.l.b16 %v413
  %v1899 = vunpack.c.h.b16 %v413
  %v1900 = vunpack.c.l.b16 %v414
  %v1901 = vunpack.c.h.b16 %v414
  %v1902 = vunpack.c.l.b16 %v415
  %v1903 = vunpack.c.h.b16 %v415
  %v1904 = vunpack.c.l.b16 %v416
  %v1905 = vunpack.c.h.b16 %v416
  %v1906 = vunpack.c.l.b16 %v417
  %v1907 = vunpack.c.h.b16 %v417
  %v1908 = vunpack.c.l.b16 %v418
  %v1909 = vunpack.c.h.b16 %v418
  %v1910 = vunpack.c.l.b16 %v419
  %v1911 = vunpack.c.h.b16 %v419
  %v1912 = vunpack.c.l.b16 %v420
  %v1913 = vunpack.c.h.b16 %v420
  %v1914 = vunpack.c.l.b16 %v421
  %v1915 = vunpack.c.h.b16 %v421
  %v1916 = vunpack.c.l.b16 %v422
  %v1917 = vunpack.c.h.b16 %v422
  %v1918 = vunpack.c.l.b16 %v423
  %v1919 = vunpack.c.h.b16 %v423
  %v1920 = vunpack.c.l.b16 %v424
  %v1921 = vunpack.c.h.b16 %v424
  %v1922 = vunpack.c.l.b16 %v425
  %v1923 = vunpack.c.h.b16 %v425
  %v1924 = vunpack.c.l.b16 %v426
  %v1925 = vunpack.c.h.b16 %v426
  %v1926 = vunpack.c.l.b16 %v427
  %v1927 = vunpack.c.h.b16 %v427
  %v1928 = vunpack.c.l.b16 %v428
  %v1929 = vunpack.c.h.b16 %v428
  %v1930 = vunpack.c.l.b16 %v429
  %v1931 = vunpack.c.h.b16 %v429
  %v1932 = vunpack.c.l.b16 %v430
  %v1933 = vunpack.c.h.b16 %v430
  %v1934 = vunpack.c.l.b16 %v431
  %v1935 = vunpack.c.h.b16 %v431
  %v1936 = vunpack.c.l.b16 %v432
  %v1937 = vunpack.c.h.b16 %v432
  %v1938 = vunpack.c.l.b16 %v433
  %v1939 = vunpack.c.h.b16 %v433
  %v1940 = vunpack.c.l.b16 %v434
  %v1941 = vunpack.c.h.b16 %v434
  %v1942 = vunpack.c.l.b16 %v435
  %v1943 = vunpack.c.h.b16 %v435
  %v1944 = vunpack.c.l.b16 %v436
  %v1945 = vunpack.c.h.b16 %v436
  %v1946 = vunpack.c.l.b16 %v437
  %v1947 = vunpack.c.h.b16 %v437
  %v1948 = vunpack.c.l.b16 %v438
  %v1949 = vunpack.c.h.b16 %v438
  %v1950 = vunpack.c.l.b16 %v439
  %v1951 = vunpack.c.h.b16 %v439
  %v1952 = vunpack.c.l.b16 %v440
  %v1953 = vunpack.c.h.b16 %v440
  %v1954 = vunpack.c.l.b16 %v441
  %v1955 = vunpack.c.h.b16 %v441
  %v1956 = vunpack.c.l.b16 %v442
  %v1957 = vunpack.c.h.b16 %v442
  %v1958 = vunpack.c.l.b16 %v443
  %v1959 = vunpack.c.h.b16 %v443
  %v1960 = vunpack.c.l.b16 %v444
  %v1961 = vunpack.c.h.b16 %v444
  %v1962 = vunpack.c.l.b16 %v445
  %v1963 = vunpack.c.h.b16 %v445
  %v1964 = vunpack.c.l.b16 %v446
  %v1965 = vunpack.c.h.b16 %v446
  %v1966 = vunpack.c.l.b16 %v447
  %v1967 = vunpack.c.h.b16 %v447
  %v1968 = vunpack.c.l.b16 %v448
  %v1969 = vunpack.c.h.b16 %v448
  %v1970 = vunpack.c.l.b16 %v449
  %v1971 = vunpack.c.h.b16 %v449
  %v1972 = vunpack.c.l.b16 %v450
  %v1973 = vunpack.c.h.b16 %v450
  %v1974 = vunpack.c.l.b16 %v451
  %v1975 = vunpack.c.h.b16 %v451
  %v1976 = vunpack.c.l.b16 %v452
  %v1977 = vunpack.c.h.b16 %v452
  %v1978 = vunpack.c.l.b16 %v453
  %v1979 = vunpack.c.h.b16 %v453
  %v1980 = vunpack.c.l.b16 %v454
  %v1981 = vunpack.c.h.b16 %v454
  %v1982 = vunpack.c.l.b16 %v455
  %v1983 = vunpack.c.h.b16 %v455
  %v1984 = vunpack.c.l.b16 %v456
  %v1985 = vunpack.c.h.b16 %v456
  %v1986 = vunpack.c.l.b16 %v457
  %v1987 = vunpack.c.h.b16 %v457
  %v1988 = vunpack.c.l.b16 %v458
  %v1989 = vunpack.c.h.b16 %v458
  %v1990 = vunpack.c.l.b16 %v459
  %v1991 = vunpack.c.h.b16 %v459
  %v1992 = vunpack.c.l.b16 %v460
  %v1993 = vunpack.c.h.b16 %v460
  %v1994 = vunpack.c.l.b16 %v461
  %v1995 = vunpack.c.h.b16 %v461
  %v1996 = vunpack.c.l.b16 %v462
  %v1997 = vunpack.c.h.b16 %v462
  %v1998 = vunpack.c.l.b16 %v463
  %v1999 = vunpack.c.h.b16 %v463
  %v2000 = vunpack.c.l.b16 %v464
  %v2001 = vunpack.c.h.b16 %v464
  %v2002 = vunpack.c.l.b16 %v465
  %v2003 = vunpack.c.h.b16 %v465
  %v2004 = vunpack.c.l.b16 %v466
  %v2005 = vunpack.c.h.b16 %v466
  %v2006 = vunpack.c.l.b16 %v467
  %v2007 = vunpack.c.h.b16 %v467
  %v2008 = vunpack.c.l.b16 %v468
  %v2009 = vunpack.c.h.b16 %v468
  %v2010 = vunpack.c.l.b16 %v469
  %v2011 = vunpack.c.h.b16 %v469
  %v2012 = vunpack.c.l.b16 %v470
  %v2013 = vunpack.c.h.b16 %v470
  %v2014 = vunpack.c.l.b16 %v471
  %v2015 = vunpack.c.h.b16 %v471
  %v2016 = vunpack.c.l.b16 %v472
  %v2017 = vunpack.c.h.b16 %v472
  %v2018 = vunpack.c.l.b16 %v473
  %v2019 = vunpack.c.h.b16 %v473
  %v2020 = vunpack.c.l.b16 %v474
  %v2021 = vunpack.c.h.b16 %v474
  %v2022 = vunpack.c.l.b16 %v475
  %v2023 = vunpack.c.h.b16 %v475
  %v2024 = vunpack.c.l.b16 %v476
  %v2025 = vunpack.c.h.b16 %v476
  %v2026 = vunpack.c.l.b16 %v477
  %v2027 = vunpack.c.h.b16 %v477
  %v2028 = vunpack.c.l.b16 %v478
  %v2029 = vunpack.c.h.b16 %v478
  %v2030 = vunpack.c.l.b16 %v479
  %v2031 = vunpack.c.h.b16 %v479
  %v2032 = vunpack.c.l.b16 %v480
  %v2033 = vunpack.c.h.b16 %v480
  %v2034 = vunpack.c.l.b16 %v481
  %v2035 = vunpack.c.h.b16 %v481
  %v2036 = vunpack.c.l.b16 %v482
  %v2037 = vunpack.c.h.b16 %v482
  %v2038 = vunpack.c.l.b16 %v483
  %v2039 = vunpack.c.h.b16 %v483
  %v2040 = vunpack.c.l.b16 %v484
  %v2041 = vunpack.c.h.b16 %v484
  %v2042 = vunpack.c.l.b16 %v485
  %v2043 = vunpack.c.h.b16 %v485
  %v2044 = vunpack.c.l.b16 %v486
  %v2045 = vunpack.c.h.b16 %v486
  %v2046 = vunpack.c.l.b16 %v487
  %v2047 = vunpack.c.h.b16 %v487
  %v2048 = vunpack.c.l.b16 %v488
  %v2049 = vunpack.c.h.b16 %v488
  %v2050 = vunpack.c.l.b16 %v489
  %v2051 = vunpack.c.h.b16 %v489
  %v2052 = vunpack.c.l.b16 %v490
  %v2053 = vunpack.c.h.b16 %v490
  %v2054 = vunpack.c.l.b16 %v491
  %v2055 = vunpack.c.h.b16 %v491
  %v2056 = vunpack.c.l.b16 %v492
  %v2057 = vunpack.c.h.b16 %v492
  %v2058 = vunpack.c.l.b16 %v493
  %v2059 = vunpack.c.h.b16 %v493
  %v2060 = vunpack.c.l.b16 %v494
  %v2061 = vunpack.c.h.b16 %v494
  %v2062 = vunpack.c.l.b16 %v495
  %v2063 = vunpack.c.h.b16 %v495
  %v2064 = vunpack.c.l.b16 %v496
  %v2065 = vunpack.c.h.b16 %v496
  %v2066 = vunpack.c.l.b16 %v497
  %v2067 = vunpack.c.h.b16 %v497
  %v2068 = vunpack.c.l.b16 %v498
  %v2069 = vunpack.c.h.b16 %v498
  %v2070 = vunpack.c.l.b16 %v499
  %v2071 = vunpack.c.h.b16 %v499
  %v2072 = vunpack.c.l.b16 %v500
  %v2073 = vunpack.c.h.b16 %v500
  %v2074 = vunpack.c.l.b16 %v501
  %v2075 = vunpack.c.h.b16 %v501
  %v2076 = vunpack.c.l.b16 %v502
  %v2077 = vunpack.c.h.b16 %v502
  %v2078 = vunpack.c.l.b16 %v503
  %v2079 = vunpack.c.h.b16 %v503
  %v2080 = vunpack.c.l.b16 %v504
  %v2081 = vunpack.c.h.b16 %v504
  %v2082 = vunpack.c.l.b16 %v505
  %v2083 = vunpack.c.h.b16 %v505
  %v2084 = vunpack.c.l.b16 %v506
  %v2085 = vunpack.c.h.b16 %v506
  %v2086 = vunpack.c.l.b16 %v507
  %v2087 = vunpack.c.h.b16 %v507
  %v2088 = vunpack.c.l.b16 %v508
  %v2089 = vunpack.c.h.b16 %v508
  %v2090 = vunpack.c.l.b16 %v509
  %v2091 = vunpack.c.h.b16 %v509
  %v2092 = vunpack.c.l.b16 %v510
  %v2093 = vunpack.c.h.b16 %v510
  %v2094 = vunpack.c.l.b16 %v511
  %v2095 = vunpack.c.h.b16 %v511
  %v2096 = vunpack.c.l.b16 %v512
  %v2097 = vunpack.c.h.b16 %v512
  %v2098 = vunpack.c.l.b16 %v513
  %v2099 = vunpack.c.h.b16 %v513
  %v2100 = vunpack.c.l.b16 %v514
  %v2101 = vunpack.c.h.b16 %v514
  %v2102 = vunpack.c.l.b16 %v515
  %v2103 = vunpack.c.h.b16 %v515
  %v2104 = vunpack.c.l.b16 %v516
  %v2105 = vunpack.c.h.b16 %v516
  %v2106 = vunpack.c.l.b16 %v517
  %v2107 = vunpack.c.h.b16 %v517
  %v2108 = vunpack.c.l.b16 %v518
  %v2109 = vunpack.c.h.b16 %v518
  %v2110 = vunpack.c.l.b16 %v519
  %v2111 = vunpack.c.h.b16 %v519
  %v2112 = vunpack.c.l.b16 %v520
  %v2113 = vunpack.c.h.b16 %v520
  %v2114 = vunpack.c.l.b16 %v521
  %v2115 = vunpack.c.h.b16 %v521
  %v2116 = vunpack.c.l.b16 %v522
  %v2117 = vunpack.c.h.b16 %v522
  %v2118 = vunpack.c.l.b16 %v523
  %v2119 = vunpack.c.h.b16 %v523
  %v2120 = vunpack.c.l.b16 %v524
  %v2121 = vunpack.c.h.b16 %v524
  %v2122 = vunpack.c.l.b16 %v525
  %v2123 = vunpack.c.h.b16 %v525
  %v2124 = vunpack.c.l.b16 %v526
  %v2125 = vunpack.c.h.b16 %v526
  %v2126 = vunpack.c.l.b16 %v527
  %v2127 = vunpack.c.h.b16 %v527
  %v2128 = vunpack.c.l.b16 %v528
  %v2129 = vunpack.c.h.b16 %v528
  %v2130 = vunpack.c.l.b16 %v529
  %v2131 = vunpack.c.h.b16 %v529
  %v2132 = vunpack.c.l.b16 %v530
  %v2133 = vunpack.c.h.b16 %v530
  %v2134 = vunpack.c.l.b16 %v531
  %v2135 = vunpack.c.h.b16 %v531
  %v2136 = vunpack.c.l.b16 %v532
  %v2137 = vunpack.c.h.b16 %v532
  %v2138 = vunpack.c.l.b16 %v533
  %v2139 = vunpack.c.h.b16 %v533
  %v2140 = vunpack.c.l.b16 %v534
  %v2141 = vunpack.c.h.b16 %v534
  %v2142 = vunpack.c.l.b16 %v535
  %v2143 = vunpack.c.h.b16 %v535
  %v2144 = vunpack.c.l.b16 %v536
  %v2145 = vunpack.c.h.b16 %v536
  %v2146 = vunpack.c.l.b16 %v537
  %v2147 = vunpack.c.h.b16 %v537
  %v2148 = vunpack.c.l.b16 %v538
  %v2149 = vunpack.c.h.b16 %v538
  %v2150 = vunpack.c.l.b16 %v539
  %v2151 = vunpack.c.h.b16 %v539
  %v2152 = vunpack.c.l.b16 %v540
  %v2153 = vunpack.c.h.b16 %v540
  %v2154 = vunpack.c.l.b16 %v541
  %v2155 = vunpack.c.h.b16 %v541
  %v2156 = vunpack.c.l.b16 %v542
  %v2157 = vunpack.c.h.b16 %v542
  %v2158 = vunpack.c.l.b16 %v543
  %v2159 = vunpack.c.h.b16 %v543
  %v2160 = vunpack.c.l.b16 %v544
  %v2161 = vunpack.c.h.b16 %v544
  %v2162 = vunpack.c.l.b16 %v545
  %v2163 = vunpack.c.h.b16 %v545
  %v2164 = vpack.c.b16 %v1148, %v1140
  %v2165 = vpack.c.b16 %v1149, %v1141
  %v2166 = vpack.c.b16 %v1150, %v1142
  %v2167 = vpack.c.b16 %v1151, %v1143
  %v2168 = vpack.c.b16 %v1152, %v1144
  %v2169 = vpack.c.b16 %v1153, %v1145
  %v2170 = vpack.c.b16 %v1154, %v1146
  %v2171 = vpack.c.b16 %v1155, %v1147
  %v2172 = vpack.c.b16 %v1164, %v1156
  %v2173 = vpack.c.b16 %v1165, %v1157
  %v2174 = vpack.c.b16 %v1166, %v1158
  %v2175 = vpack.c.b16 %v1167, %v1159
  %v2176 = vpack.c.b16 %v1168, %v1160
  %v2177 = vpack.c.b16 %v1169, %v1161
  %v2178 = vpack.c.b16 %v1170, %v1162
  %v2179 = vpack.c.b16 %v1171, %v1163
  %v2180 = vpack.c.b16 %v1180, %v1172
  %v2181 = vpack.c.b16 %v1181, %v1173
  %v2182 = vpack.c.b16 %v1182, %v1174
  %v2183 = vpack.c.b16 %v1183, %v1175
  %v2184 = vpack.c.b16 %v1184, %v1176
  %v2185 = vpack.c.b16 %v1185, %v1177
  %v2186 = vpack.c.b16 %v1186, %v1178
  %v2187 = vpack.c.b16 %v1187, %v1179
  %v2188 = vpack.c.b16 %v1196, %v1188
  %v2189 = vpack.c.b16 %v1197, %v1189
  %v2190 = vpack.c.b16 %v1198, %v1190
  %v2191 = vpack.c.b16 %v1199, %v1191
  %v2192 = vpack.c.b16 %v1200, %v1192
  %v2193 = vpack.c.b16 %v1201, %v1193
  %v2194 = vpack.c.b16 %v1202, %v1194
  %v2195 = vpack.c.b16 %v1203, %v1195
  %v2196 = vpack.c.b16 %v1212, %v1204
  %v2197 = vpack.c.b16 %v1213, %v1205
  %v2198 = vpack.c.b16 %v1214, %v1206
  %v2199 = vpack.c.b16 %v1215, %v1207
  %v2200 = vpack.c.b16 %v1216, %v1208
  %v2201 = vpack.c.b16 %v1217, %v1209
  %v2202 = vpack.c.b16 %v1218, %v1210
  %v2203 = vpack.c.b16 %v1219, %v1211
  %v2204 = vpack.c.b16 %v1228, %v1220
  %v2205 = vpack.c.b16 %v1229, %v1221
  %v2206 = vpack.c.b16 %v1230, %v1222
  %v2207 = vpack.c.b16 %v1231, %v1223
  %v2208 = vpack.c.b16 %v1232, %v1224
  %v2209 = vpack.c.b16 %v1233, %v1225
  %v2210 = vpack.c.b16 %v1234, %v1226
  %v2211 = vpack.c.b16 %v1235, %v1227
  %v2212 = vpack.c.b16 %v1244, %v1236
  %v2213 = vpack.c.b16 %v1245, %v1237
  %v2214 = vpack.c.b16 %v1246, %v1238
  %v2215 = vpack.c.b16 %v1247, %v1239
  %v2216 = vpack.c.b16 %v1248, %v1240
  %v2217 = vpack.c.b16 %v1249, %v1241
  %v2218 = vpack.c.b16 %v1250, %v1242
  %v2219 = vpack.c.b16 %v1251, %v1243
  %v2220 = vpack.c.b16 %v1260, %v1252
  %v2221 = vpack.c.b16 %v1261, %v1253
  %v2222 = vpack.c.b16 %v1262, %v1254
  %v2223 = vpack.c.b16 %v1263, %v1255
  %v2224 = vpack.c.b16 %v1264, %v1256
  %v2225 = vpack.c.b16 %v1265, %v1257
  %v2226 = vpack.c.b16 %v1266, %v1258
  %v2227 = vpack.c.b16 %v1267, %v1259
  %v2228 = vpack.c.b16 %v1276, %v1268
  %v2229 = vpack.c.b16 %v1277, %v1269
  %v2230 = vpack.c.b16 %v1278, %v1270
  %v2231 = vpack.c.b16 %v1279, %v1271
  %v2232 = vpack.c.b16 %v1280, %v1272
  %v2233 = vpack.c.b16 %v1281, %v1273
  %v2234 = vpack.c.b16 %v1282, %v1274
  %v2235 = vpack.c.b16 %v1283, %v1275
  %v2236 = vpack.c.b16 %v1292, %v1284
  %v2237 = vpack.c.b16 %v1293, %v1285
  %v2238 = vpack.c.b16 %v1294, %v1286
  %v2239 = vpack.c.b16 %v1295, %v1287
  %v2240 = vpack.c.b16 %v1296, %v1288
  %v2241 = vpack.c.b16 %v1297, %v1289
  %v2242 = vpack.c.b16 %v1298, %v1290
  %v2243 = vpack.c.b16 %v1299, %v1291
  %v2244 = vpack.c.b16 %v1308, %v1300
  %v2245 = vpack.c.b16 %v1309, %v1301
  %v2246 = vpack.c.b16 %v1310, %v1302
  %v2247 = vpack.c.b16 %v1311, %v1303
  %v2248 = vpack.c.b16 %v1312, %v1304
  %v2249 = vpack.c.b16 %v1313, %v1305
  %v2250 = vpack.c.b16 %v1314, %v1306
  %v2251 = vpack.c.b16 %v1315, %v1307
  %v2252 = vpack.c.b16 %v1324, %v1316
  %v2253 = vpack.c.b16 %v1325, %v1317
  %v2254 = vpack.c.b16 %v1326, %v1318
  %v2255 = vpack.c.b16 %v1327, %v1319
  %v2256 = vpack.c.b16 %v1328, %v1320
  %v2257 = vpack.c.b16 %v1329, %v1321
  %v2258 = vpack.c.b16 %v1330, %v1322
  %v2259 = vpack.c.b16 %v1331, %v1323
  %v2260 = vpack.c.b16 %v1340, %v1332
  %v2261 = vpack.c.b16 %v1341, %v1333
  %v2262 = vpack.c.b16 %v1342, %v1334
  %v2263 = vpack.c.b16 %v1343, %v1335
  %v2264 = vpack.c.b16 %v1344, %v1336
  %v2265 = vpack.c.b16 %v1345, %v1337
  %v2266 = vpack.c.b16 %v1346, %v1338
  %v2267 = vpack.c.b16 %v1347, %v1339
  %v2268 = vpack.c.b16 %v1356, %v1348
  %v2269 = vpack.c.b16 %v1357, %v1349
  %v2270 = vpack.c.b16 %v1358, %v1350
  %v2271 = vpack.c.b16 %v1359, %v1351
  %v2272 = vpack.c.b16 %v1360, %v1352
  %v2273 = vpack.c.b16 %v1361, %v1353
  %v2274 = vpack.c.b16 %v1362, %v1354
  %v2275 = vpack.c.b16 %v1363, %v1355
  %v2276 = vpack.c.b16 %v1372, %v1364
  %v2277 = vpack.c.b16 %v1373, %v1365
  %v2278 = vpack.c.b16 %v1374, %v1366
  %v2279 = vpack.c.b16 %v1375, %v1367
  %v2280 = vpack.c.b16 %v1376, %v1368
  %v2281 = vpack.c.b16 %v1377, %v1369
  %v2282 = vpack.c.b16 %v1378, %v1370
  %v2283 = vpack.c.b16 %v1379, %v1371
  %v2284 = vpack.c.b16 %v1388, %v1380
  %v2285 = vpack.c.b16 %v1389, %v1381
  %v2286 = vpack.c.b16 %v1390, %v1382
  %v2287 = vpack.c.b16 %v1391, %v1383
  %v2288 = vpack.c.b16 %v1392, %v1384
  %v2289 = vpack.c.b16 %v1393, %v1385
  %v2290 = vpack.c.b16 %v1394, %v1386
  %v2291 = vpack.c.b16 %v1395, %v1387
  %v2292 = vpack.c.b16 %v1404, %v1396
  %v2293 = vpack.c.b16 %v1405, %v1397
  %v2294 = vpack.c.b16 %v1406, %v1398
  %v2295 = vpack.c.b16 %v1407, %v1399
  %v2296 = vpack.c.b16 %v1408, %v1400
  %v2297 = vpack.c.b16 %v1409, %v1401
  %v2298 = vpack.c.b16 %v1410, %v1402
  %v2299 = vpack.c.b16 %v1411, %v1403
  %v2300 = vpack.c.b16 %v1420, %v1412
  %v2301 = vpack.c.b16 %v1421, %v1413
  %v2302 = vpack.c.b16 %v1422, %v1414
  %v2303 = vpack.c.b16 %v1423, %v1415
  %v2304 = vpack.c.b16 %v1424, %v1416
  %v2305 = vpack.c.b16 %v1425, %v1417
  %v2306 = vpack.c.b16 %v1426, %v1418
  %v2307 = vpack.c.b16 %v1427, %v1419
  %v2308 = vpack.c.b16 %v1436, %v1428
  %v2309 = vpack.c.b16 %v1437, %v1429
  %v2310 = vpack.c.b16 %v1438, %v1430
  %v2311 = vpack.c.b16 %v1439, %v1431
  %v2312 = vpack.c.b16 %v1440, %v1432
  %v2313 = vpack.c.b16 %v1441, %v1433
  %v2314 = vpack.c.b16 %v1442, %v1434
  %v2315 = vpack.c.b16 %v1443, %v1435
  %v2316 = vpack.c.b16 %v1452, %v1444
  %v2317 = vpack.c.b16 %v1453, %v1445
  %v2318 = vpack.c.b16 %v1454, %v1446
  %v2319 = vpack.c.b16 %v1455, %v1447
  %v2320 = vpack.c.b16 %v1456, %v1448
  %v2321 = vpack.c.b16 %v1457, %v1449
  %v2322 = vpack.c.b16 %v1458, %v1450
  %v2323 = vpack.c.b16 %v1459, %v1451
  %v2324 = vpack.c.b16 %v1468, %v1460
  %v2325 = vpack.c.b16 %v1469, %v1461
  %v2326 = vpack.c.b16 %v1470, %v1462
  %v2327 = vpack.c.b16 %v1471, %v1463
  %v2328 = vpack.c.b16 %v1472, %v1464
  %v2329 = vpack.c.b16 %v1473, %v1465
  %v2330 = vpack.c.b16 %v1474, %v1466
  %v2331 = vpack.c.b16 %v1475, %v1467
  %v2332 = vpack.c.b16 %v1484, %v1476
  %v2333 = vpack.c.b16 %v1485, %v1477
  %v2334 = vpack.c.b16 %v1486, %v1478
  %v2335 = vpack.c.b16 %v1487, %v1479
  %v2336 = vpack.c.b16 %v1488, %v1480
  %v2337 = vpack.c.b16 %v1489, %v1481
  %v2338 = vpack.c.b16 %v1490, %v1482
  %v2339 = vpack.c.b16 %v1491, %v1483
  %v2340 = vpack.c.b16 %v1500, %v1492
  %v2341 = vpack.c.b16 %v1501, %v1493
  %v2342 = vpack.c.b16 %v1502, %v1494
  %v2343 = vpack.c.b16 %v1503, %v1495
  %v2344 = vpack.c.b16 %v1504, %v1496
  %v2345 = vpack.c.b16 %v1505, %v1497
  %v2346 = vpack.c.b16 %v1506, %v1498
  %v2347 = vpack.c.b16 %v1507, %v1499
  %v2348 = vpack.c.b16 %v1516, %v1508
  %v2349 = vpack.c.b16 %v1517, %v1509
  %v2350 = vpack.c.b16 %v1518, %v1510
  %v2351 = vpack.c.b16 %v1519, %v1511
  %v2352 = vpack.c.b16 %v1520, %v1512
  %v2353 = vpack.c.b16 %v1521, %v1513
  %v2354 = vpack.c.b16 %v1522, %v1514
  %v2355 = vpack.c.b16 %v1523, %v1515
  %v2356 = vpack.c.b16 %v1532, %v1524
  %v2357 = vpack.c.b16 %v1533, %v1525
  %v2358 = vpack.c.b16 %v1534, %v1526
  %v2359 = vpack.c.b16 %v1535, %v1527
  %v2360 = vpack.c.b16 %v1536, %v1528
  %v2361 = vpack.c.b16 %v1537, %v1529
  %v2362 = vpack.c.b16 %v1538, %v1530
  %v2363 = vpack.c.b16 %v1539, %v1531
  %v2364 = vpack.c.b16 %v1548, %v1540
  %v2365 = vpack.c.b16 %v1549, %v1541
  %v2366 = vpack.c.b16 %v1550, %v1542
  %v2367 = vpack.c.b16 %v1551, %v1543
  %v2368 = vpack.c.b16 %v1552, %v1544
  %v2369 = vpack.c.b16 %v1553, %v1545
  %v2370 = vpack.c.b16 %v1554, %v1546
  %v2371 = vpack.c.b16 %v1555, %v1547
  %v2372 = vpack.c.b16 %v1564, %v1556
  %v2373 = vpack.c.b16 %v1565, %v1557
  %v2374 = vpack.c.b16 %v1566, %v1558
  %v2375 = vpack.c.b16 %v1567, %v1559
  %v2376 = vpack.c.b16 %v1568, %v1560
  %v2377 = vpack.c.b16 %v1569, %v1561
  %v2378 = vpack.c.b16 %v1570, %v1562
  %v2379 = vpack.c.b16 %v1571, %v1563
  %v2380 = vpack.c.b16 %v1580, %v1572
  %v2381 = vpack.c.b16 %v1581, %v1573
  %v2382 = vpack.c.b16 %v1582, %v1574
  %v2383 = vpack.c.b16 %v1583, %v1575
  %v2384 = vpack.c.b16 %v1584, %v1576
  %v2385 = vpack.c.b16 %v1585, %v1577
  %v2386 = vpack.c.b16 %v1586, %v1578
  %v2387 = vpack.c.b16 %v1587, %v1579
  %v2388 = vpack.c.b16 %v1596, %v1588
  %v2389 = vpack.c.b16 %v1597, %v1589
  %v2390 = vpack.c.b16 %v1598, %v1590
  %v2391 = vpack.c.b16 %v1599, %v1591
  %v2392 = vpack.c.b16 %v1600, %v1592
  %v2393 = vpack.c.b16 %v1601, %v1593
  %v2394 = vpack.c.b16 %v1602, %v1594
  %v2395 = vpack.c.b16 %v1603, %v1595
  %v2396 = vpack.c.b16 %v1612, %v1604
  %v2397 = vpack.c.b16 %v1613, %v1605
  %v2398 = vpack.c.b16 %v1614, %v1606
  %v2399 = vpack.c.b16 %v1615, %v1607
  %v2400 = vpack.c.b16 %v1616, %v1608
  %v2401 = vpack.c.b16 %v1617, %v1609
  %v2402 = vpack.c.b16 %v1618, %v1610
  %v2403 = vpack.c.b16 %v1619, %v1611
  %v2404 = vpack.c.b16 %v1628, %v1620
  %v2405 = vpack.c.b16 %v1629, %v1621
  %v2406 = vpack.c.b16 %v1630, %v1622
  %v2407 = vpack.c.b16 %v1631, %v1623
  %v2408 = vpack.c.b16 %v1632, %v1624
  %v2409 = vpack.c.b16 %v1633, %v1625
  %v2410 = vpack.c.b16 %v1634, %v1626
  %v2411 = vpack.c.b16 %v1635, %v1627
  %v2412 = vpack.c.b16 %v1644, %v1636
  %v2413 = vpack.c.b16 %v1645, %v1637
  %v2414 = vpack.c.b16 %v1646, %v1638
  %v2415 = vpack.c.b16 %v1647, %v1639
  %v2416 = vpack.c.b16 %v1648, %v1640
  %v2417 = vpack.c.b16 %v1649, %v1641
  %v2418 = vpack.c.b16 %v1650, %v1642
  %v2419 = vpack.c.b16 %v1651, %v1643
  %v2420 = vpack.c.b16 %v1660, %v1652
  %v2421 = vpack.c.b16 %v1661, %v1653
  %v2422 = vpack.c.b16 %v1662, %v1654
  %v2423 = vpack.c.b16 %v1663, %v1655
  %v2424 = vpack.c.b16 %v1664, %v1656
  %v2425 = vpack.c.b16 %v1665, %v1657
  %v2426 = vpack.c.b16 %v1666, %v1658
  %v2427 = vpack.c.b16 %v1667, %v1659
  %v2428 = vpack.c.b16 %v1676, %v1668
  %v2429 = vpack.c.b16 %v1677, %v1669
  %v2430 = vpack.c.b16 %v1678, %v1670
  %v2431 = vpack.c.b16 %v1679, %v1671
  %v2432 = vpack.c.b16 %v1680, %v1672
  %v2433 = vpack.c.b16 %v1681, %v1673
  %v2434 = vpack.c.b16 %v1682, %v1674
  %v2435 = vpack.c.b16 %v1683, %v1675
  %v2436 = vpack.c.b16 %v1692, %v1684
  %v2437 = vpack.c.b16 %v1693, %v1685
  %v2438 = vpack.c.b16 %v1694, %v1686
  %v2439 = vpack.c.b16 %v1695, %v1687
  %v2440 = vpack.c.b16 %v1696, %v1688
  %v2441 = vpack.c.b16 %v1697, %v1689
  %v2442 = vpack.c.b16 %v1698, %v1690
  %v2443 = vpack.c.b16 %v1699, %v1691
  %v2444 = vpack.c.b16 %v1708, %v1700
  %v2445 = vpack.c.b16 %v1709, %v1701
  %v2446 = vpack.c.b16 %v1710, %v1702
  %v2447 = vpack.c.b16 %v1711, %v1703
  %v2448 = vpack.c.b16 %v1712, %v1704
  %v2449 = vpack.c.b16 %v1713, %v1705
  %v2450 = vpack.c.b16 %v1714, %v1706
  %v2451 = vpack.c.b16 %v1715, %v1707
  %v2452 = vpack.c.b16 %v1724, %v1716
  %v2453 = vpack.c.b16 %v1725, %v1717
  %v2454 = vpack.c.b16 %v1726, %v1718
  %v2455 = vpack.c.b16 %v1727, %v1719
  %v2456 = vpack.c.b16 %v1728, %v1720
  %v2457 = vpack.c.b16 %v1729, %v1721
  %v2458 = vpack.c.b16 %v1730, %v1722
  %v2459 = vpack.c.b16 %v1731, %v1723
  %v2460 = vpack.c.b16 %v1740, %v1732
  %v2461 = vpack.c.b16 %v1741, %v1733
  %v2462 = vpack.c.b16 %v1742, %v1734
  %v2463 = vpack.c.b16 %v1743, %v1735
  %v2464 = vpack.c.b16 %v1744, %v1736
  %v2465 = vpack.c.b16 %v1745, %v1737
  %v2466 = vpack.c.b16 %v1746, %v1738
  %v2467 = vpack.c.b16 %v1747, %v1739
  %v2468 = vpack.c.b16 %v1756, %v1748
  %v2469 = vpack.c.b16 %v1757, %v1749
  %v2470 = vpack.c.b16 %v1758, %v1750
  %v2471 = vpack.c.b16 %v1759, %v1751
  %v2472 = vpack.c.b16 %v1760, %v1752
  %v2473 = vpack.c.b16 %v1761, %v1753
  %v2474 = vpack.c.b16 %v1762, %v1754
  %v2475 = vpack.c.b16 %v1763, %v1755
  %v2476 = vpack.c.b16 %v1772, %v1764
  %v2477 = vpack.c.b16 %v1773, %v1765
  %v2478 = vpack.c.b16 %v1774, %v1766
  %v2479 = vpack.c.b16 %v1775, %v1767
  %v2480 = vpack.c.b16 %v1776, %v1768
  %v2481 = vpack.c.b16 %v1777, %v1769
  %v2482 = vpack.c.b16 %v1778, %v1770
  %v2483 = vpack.c.b16 %v1779, %v1771
  %v2484 = vpack.c.b16 %v1788, %v1780
  %v2485 = vpack.c.b16 %v1789, %v1781
  %v2486 = vpack.c.b16 %v1790, %v1782
  %v2487 = vpack.c.b16 %v1791, %v1783
  %v2488 = vpack.c.b16 %v1792, %v1784
  %v2489 = vpack.c.b16 %v1793, %v1785
  %v2490 = vpack.c.b16 %v1794, %v1786
  %v2491 = vpack.c.b16 %v1795, %v1787
  %v2492 = vpack.c.b16 %v1804, %v1796
  %v2493 = vpack.c.b16 %v1805, %v1797
  %v2494 = vpack.c.b16 %v1806, %v1798
  %v2495 = vpack.c.b16 %v1807, %v1799
  %v2496 = vpack.c.b16 %v1808, %v1800
  %v2497 = vpack.c.b16 %v1809, %v1801
  %v2498 = vpack.c.b16 %v1810, %v1802
  %v2499 = vpack.c.b16 %v1811, %v1803
  %v2500 = vpack.c.b16 %v1820, %v1812
  %v2501 = vpack.c.b16 %v1821, %v1813
  %v2502 = vpack.c.b16 %v1822, %v1814
  %v2503 = vpack.c.b16 %v1823, %v1815
  %v2504 = vpack.c.b16 %v1824, %v1816
  %v2505 = vpack.c.b16 %v1825, %v1817
  %v2506 = vpack.c.b16 %v1826, %v1818
  %v2507 = vpack.c.b16 %v1827, %v1819
  %v2508 = vpack.c.b16 %v1836, %v1828
  %v2509 = vpack.c.b16 %v1837, %v1829
  %v2510 = vpack.c.b16 %v1838, %v1830
  %v2511 = vpack.c.b16 %v1839, %v1831
  %v2512 = vpack.c.b16 %v1840, %v1832
  %v2513 = vpack.c.b16 %v1841, %v1833
  %v2514 = vpack.c.b16 %v1842, %v1834
  %v2515 = vpack.c.b16 %v1843, %v1835
  %v2516 = vpack.c.b16 %v1852, %v1844
  %v2517 = vpack.c.b16 %v1853, %v1845
  %v2518 = vpack.c.b16 %v1854, %v1846
  %v2519 = vpack.c.b16 %v1855, %v1847
  %v2520 = vpack.c.b16 %v1856, %v1848
  %v2521 = vpack.c.b16 %v1857, %v1849
  %v2522 = vpack.c.b16 %v1858, %v1850
  %v2523 = vpack.c.b16 %v1859, %v1851
  %v2524 = vpack.c.b16 %v1868, %v1860
  %v2525 = vpack.c.b16 %v1869, %v1861
  %v2526 = vpack.c.b16 %v1870, %v1862
  %v2527 = vpack.c.b16 %v1871, %v1863
  %v2528 = vpack.c.b16 %v1872, %v1864
  %v2529 = vpack.c.b16 %v1873, %v1865
  %v2530 = vpack.c.b16 %v1874, %v1866
  %v2531 = vpack.c.b16 %v1875, %v1867
  %v2532 = vpack.c.b16 %v1884, %v1876
  %v2533 = vpack.c.b16 %v1885, %v1877
  %v2534 = vpack.c.b16 %v1886, %v1878
  %v2535 = vpack.c.b16 %v1887, %v1879
  %v2536 = vpack.c.b16 %v1888, %v1880
  %v2537 = vpack.c.b16 %v1889, %v1881
  %v2538 = vpack.c.b16 %v1890, %v1882
  %v2539 = vpack.c.b16 %v1891, %v1883
  %v2540 = vpack.c.b16 %v1900, %v1892
  %v2541 = vpack.c.b16 %v1901, %v1893
  %v2542 = vpack.c.b16 %v1902, %v1894
  %v2543 = vpack.c.b16 %v1903, %v1895
  %v2544 = vpack.c.b16 %v1904, %v1896
  %v2545 = vpack.c.b16 %v1905, %v1897
  %v2546 = vpack.c.b16 %v1906, %v1898
  %v2547 = vpack.c.b16 %v1907, %v1899
  %v2548 = vpack.c.b16 %v1916, %v1908
  %v2549 = vpack.c.b16 %v1917, %v1909
  %v2550 = vpack.c.b16 %v1918, %v1910
  %v2551 = vpack.c.b16 %v1919, %v1911
  %v2552 = vpack.c.b16 %v1920, %v1912
  %v2553 = vpack.c.b16 %v1921, %v1913
  %v2554 = vpack.c.b16 %v1922, %v1914
  %v2555 = vpack.c.b16 %v1923, %v1915
  %v2556 = vpack.c.b16 %v1932, %v1924
  %v2557 = vpack.c.b16 %v1933, %v1925
  %v2558 = vpack.c.b16 %v1934, %v1926
  %v2559 = vpack.c.b16 %v1935, %v1927
  %v2560 = vpack.c.b16 %v1936, %v1928
  %v2561 = vpack.c.b16 %v1937, %v1929
  %v2562 = vpack.c.b16 %v1938, %v1930
  %v2563 = vpack.c.b16 %v1939, %v1931
  %v2564 = vpack.c.b16 %v1948, %v1940
  %v2565 = vpack.c.b16 %v1949, %v1941
  %v2566 = vpack.c.b16 %v1950, %v1942
  %v2567 = vpack.c.b16 %v1951, %v1943
  %v2568 = vpack.c.b16 %v1952, %v1944
  %v2569 = vpack.c.b16 %v1953, %v1945
  %v2570 = vpack.c.b16 %v1954, %v1946
  %v2571 = vpack.c.b16 %v1955, %v1947
  %v2572 = vpack.c.b16 %v1964, %v1956
  %v2573 = vpack.c.b16 %v1965, %v1957
  %v2574 = vpack.c.b16 %v1966, %v1958
  %v2575 = vpack.c.b16 %v1967, %v1959
  %v2576 = vpack.c.b16 %v1968, %v1960
  %v2577 = vpack.c.b16 %v1969, %v1961
  %v2578 = vpack.c.b16 %v1970, %v1962
  %v2579 = vpack.c.b16 %v1971, %v1963
  %v2580 = vpack.c.b16 %v1980, %v1972
  %v2581 = vpack.c.b16 %v1981, %v1973
  %v2582 = vpack.c.b16 %v1982, %v1974
  %v2583 = vpack.c.b16 %v1983, %v1975
  %v2584 = vpack.c.b16 %v1984, %v1976
  %v2585 = vpack.c.b16 %v1985, %v1977
  %v2586 = vpack.c.b16 %v1986, %v1978
  %v2587 = vpack.c.b16 %v1987, %v1979
  %v2588 = vpack.c.b16 %v1996, %v1988
  %v2589 = vpack.c.b16 %v1997, %v1989
  %v2590 = vpack.c.b16 %v1998, %v1990
  %v2591 = vpack.c.b16 %v1999, %v1991
  %v2592 = vpack.c.b16 %v2000, %v1992
  %v2593 = vpack.c.b16 %v2001, %v1993
  %v2594 = vpack.c.b16 %v2002, %v1994
  %v2595 = vpack.c.b16 %v2003, %v1995
  %v2596 = vpack.c.b16 %v2012, %v2004
  %v2597 = vpack.c.b16 %v2013, %v2005
  %v2598 = vpack.c.b16 %v2014, %v2006
  %v2599 = vpack.c.b16 %v2015, %v2007
  %v2600 = vpack.c.b16 %v2016, %v2008
  %v2601 = vpack.c.b16 %v2017, %v2009
  %v2602 = vpack.c.b16 %v2018, %v2010
  %v2603 = vpack.c.b16 %v2019, %v2011
  %v2604 = vpack.c.b16 %v2028, %v2020
  %v2605 = vpack.c.b16 %v2029, %v2021
  %v2606 = vpack.c.b16 %v2030, %v2022
  %v2607 = vpack.c.b16 %v2031, %v2023
  %v2608 = vpack.c.b16 %v2032, %v2024
  %v2609 = vpack.c.b16 %v2033, %v2025
  %v2610 = vpack.c.b16 %v2034, %v2026
  %v2611 = vpack.c.b16 %v2035, %v2027
  %v2612 = vpack.c.b16 %v2044, %v2036
  %v2613 = vpack.c.b16 %v2045, %v2037
  %v2614 = vpack.c.b16 %v2046, %v2038
  %v2615 = vpack.c.b16 %v2047, %v2039
  %v2616 = vpack.c.b16 %v2048, %v2040
  %v2617 = vpack.c.b16 %v2049, %v2041
  %v2618 = vpack.c.b16 %v2050, %v2042
  %v2619 = vpack.c.b16 %v2051, %v2043
  %v2620 = vpack.c.b16 %v2060, %v2052
  %v2621 = vpack.c.b16 %v2061, %v2053
  %v2622 = vpack.c.b16 %v2062, %v2054
  %v2623 = vpack.c.b16 %v2063, %v2055
  %v2624 = vpack.c.b16 %v2064, %v2056
  %v2625 = vpack.c.b16 %v2065, %v2057
  %v2626 = vpack.c.b16 %v2066, %v2058
  %v2627 = vpack.c.b16 %v2067, %v2059
  %v2628 = vpack.c.b16 %v2076, %v2068
  %v2629 = vpack.c.b16 %v2077, %v2069
  %v2630 = vpack.c.b16 %v2078, %v2070
  %v2631 = vpack.c.b16 %v2079, %v2071
  %v2632 = vpack.c.b16 %v2080, %v2072
  %v2633 = vpack.c.b16 %v2081, %v2073
  %v2634 = vpack.c.b16 %v2082, %v2074
  %v2635 = vpack.c.b16 %v2083, %v2075
  %v2636 = vpack.c.b16 %v2092, %v2084
  %v2637 = vpack.c.b16 %v2093, %v2085
  %v2638 = vpack.c.b16 %v2094, %v2086
  %v2639 = vpack.c.b16 %v2095, %v2087
  %v2640 = vpack.c.b16 %v2096, %v2088
  %v2641 = vpack.c.b16 %v2097, %v2089
  %v2642 = vpack.c.b16 %v2098, %v2090
  %v2643 = vpack.c.b16 %v2099, %v2091
  %v2644 = vpack.c.b16 %v2108, %v2100
  %v2645 = vpack.c.b16 %v2109, %v2101
  %v2646 = vpack.c.b16 %v2110, %v2102
  %v2647 = vpack.c.b16 %v2111, %v2103
  %v2648 = vpack.c.b16 %v2112, %v2104
  %v2649 = vpack.c.b16 %v2113, %v2105
  %v2650 = vpack.c.b16 %v2114, %v2106
  %v2651 = vpack.c.b16 %v2115, %v2107
  %v2652 = vpack.c.b16 %v2124, %v2116
  %v2653 = vpack.c.b16 %v2125, %v2117
  %v2654 = vpack.c.b16 %v2126, %v2118
  %v2655 = vpack.c.b16 %v2127, %v2119
  %v2656 = vpack.c.b16 %v2128, %v2120
  %v2657 = vpack.c.b16 %v2129, %v2121
  %v2658 = vpack.c.b16 %v2130, %v2122
  %v2659 = vpack.c.b16 %v2131, %v2123
  %v2660 = vpack.c.b16 %v2140, %v2132
  %v2661 = vpack.c.b16 %v2141, %v2133
  %v2662 = vpack.c.b16 %v2142, %v2134
  %v2663 = vpack.c.b16 %v2143, %v2135
  %v2664 = vpack.c.b16 %v2144, %v2136
  %v2665 = vpack.c.b16 %v2145, %v2137
  %v2666 = vpack.c.b16 %v2146, %v2138
  %v2667 = vpack.c.b16 %v2147, %v2139
  %v2668 = vpack.c.b16 %v2156, %v2148
  %v2669 = vpack.c.b16 %v2157, %v2149
  %v2670 = vpack.c.b16 %v2158, %v2150
  %v2671 = vpack.c.b16 %v2159, %v2151
  %v2672 = vpack.c.b16 %v2160, %v2152
  %v2673 = vpack.c.b16 %v2161, %v2153
  %v2674 = vpack.c.b16 %v2162, %v2154
  %v2675 = vpack.c.b16 %v2163, %v2155
  %3188 = vmatprep.subr.bf16.mxu0 %v2221
  %3189 = vmatpush1.bf16.msra.mxu0 %v2220
  %3190 = vmatprep.subr.bf16.mxu0 %v2213
  %3191 = vmatpush1.bf16.msra.mxu0 %v2212
  %3192 = vmatprep.subr.bf16.mxu0 %v2205
  %3193 = vmatpush1.bf16.msra.mxu0 %v2204
  %3194 = vmatprep.subr.bf16.mxu0 %v2197
  %3195 = vmatpush1.bf16.msra.mxu0 %v2196
  %3196 = vmatprep.subr.bf16.mxu0 %v2189
  %3197 = vmatpush1.bf16.msra.mxu0 %v2188
  %3198 = vmatprep.subr.bf16.mxu0 %v2181
  %3199 = vmatpush1.bf16.msra.mxu0 %v2180
  %3200 = vmatprep.subr.bf16.mxu0 %v2173
  %3201 = vmatpush1.bf16.msra.mxu0 %v2172
  %3202 = vmatprep.subr.bf16.mxu0 %v2165
  %3203 = vmatpush1.bf16.msra.mxu0 %v2164
  %3204 = vmatprep.subr.bf16.mxu0 %v2285
  %3205 = vmatpush2.bf16.msra.mxu0 %v2284
  %3206 = vmatprep.subr.bf16.mxu0 %v2277
  %3207 = vmatpush2.bf16.msra.mxu0 %v2276
  %3208 = vmatprep.subr.bf16.mxu0 %v2269
  %3209 = vmatpush2.bf16.msra.mxu0 %v2268
  %3210 = vmatprep.subr.bf16.mxu0 %v2261
  %3211 = vmatpush2.bf16.msra.mxu0 %v2260
  %3212 = vmatprep.subr.bf16.mxu0 %v2253
  %3213 = vmatpush2.bf16.msra.mxu0 %v2252
  %3214 = vmatprep.subr.bf16.mxu0 %v2245
  %3215 = vmatpush2.bf16.msra.mxu0 %v2244
  %3216 = vmatprep.subr.bf16.mxu0 %v2237
  %3217 = vmatpush2.bf16.msra.mxu0 %v2236
  %3218 = vmatprep.subr.bf16.mxu0 %v2229
  %3219 = vmatpush2.bf16.msra.mxu0 %v2228
  %3220 = vmatprep.mubr.bf16.mxu0 %v613
  %3221 = vmatmul.mubr.bf16.gmra.mxu0 %v612
  %v3222 = vpop.f32.mrf.mxu0
  %v3223 = vadd.f32 %v551, %v3222
  %v3224 = vpop.f32.mrf.mxu0
  %v3225 = vadd.f32 %v555, %v3224
  %v3226 = vpop.f32.mrf.mxu0
  %v3227 = vadd.f32 %v551, %v3226
  %v3228 = vpop.f32.mrf.mxu0
  %v3229 = vadd.f32 %v555, %v3228
  %3230 = vdwg.mxu0
  %3231 = vmatprep.subr.bf16.mxu0 %v2349
  %3232 = vmatpush1.bf16.msra.mxu0 %v2348
  %3233 = vmatprep.subr.bf16.mxu0 %v2341
  %3234 = vmatpush1.bf16.msra.mxu0 %v2340
  %3235 = vmatprep.subr.bf16.mxu0 %v2333
  %3236 = vmatpush1.bf16.msra.mxu0 %v2332
  %3237 = vmatprep.subr.bf16.mxu0 %v2325
  %3238 = vmatpush1.bf16.msra.mxu0 %v2324
  %3239 = vmatprep.subr.bf16.mxu0 %v2317
  %3240 = vmatpush1.bf16.msra.mxu0 %v2316
  %3241 = vmatprep.subr.bf16.mxu0 %v2309
  %3242 = vmatpush1.bf16.msra.mxu0 %v2308
  %3243 = vmatprep.subr.bf16.mxu0 %v2301
  %3244 = vmatpush1.bf16.msra.mxu0 %v2300
  %3245 = vmatprep.subr.bf16.mxu0 %v2293
  %3246 = vmatpush1.bf16.msra.mxu0 %v2292
  %3247 = vmatprep.subr.bf16.mxu0 %v2413
  %3248 = vmatpush2.bf16.msra.mxu0 %v2412
  %3249 = vmatprep.subr.bf16.mxu0 %v2405
  %3250 = vmatpush2.bf16.msra.mxu0 %v2404
  %3251 = vmatprep.subr.bf16.mxu0 %v2397
  %3252 = vmatpush2.bf16.msra.mxu0 %v2396
  %3253 = vmatprep.subr.bf16.mxu0 %v2389
  %3254 = vmatpush2.bf16.msra.mxu0 %v2388
  %3255 = vmatprep.subr.bf16.mxu0 %v2381
  %3256 = vmatpush2.bf16.msra.mxu0 %v2380
  %3257 = vmatprep.subr.bf16.mxu0 %v2373
  %3258 = vmatpush2.bf16.msra.mxu0 %v2372
  %3259 = vmatprep.subr.bf16.mxu0 %v2365
  %3260 = vmatpush2.bf16.msra.mxu0 %v2364
  %3261 = vmatprep.subr.bf16.mxu0 %v2357
  %3262 = vmatpush2.bf16.msra.mxu0 %v2356
  %3263 = vmatprep.mubr.bf16.mxu0 %v615
  %3264 = vmatmul.mubr.bf16.gmra.mxu0 %v614
  %v3265 = vpop.f32.mrf.mxu0
  %v3266 = vadd.f32 %v3223, %v3265
  %v3267 = vpop.f32.mrf.mxu0
  %v3268 = vadd.f32 %v3225, %v3267
  %v3269 = vpop.f32.mrf.mxu0
  %v3270 = vadd.f32 %v3227, %v3269
  %v3271 = vpop.f32.mrf.mxu0
  %v3272 = vadd.f32 %v3229, %v3271
  %3273 = vdwg.mxu0
  %3274 = vmatprep.subr.bf16.mxu0 %v2477
  %3275 = vmatpush1.bf16.msra.mxu0 %v2476
  %3276 = vmatprep.subr.bf16.mxu0 %v2469
  %3277 = vmatpush1.bf16.msra.mxu0 %v2468
  %3278 = vmatprep.subr.bf16.mxu0 %v2461
  %3279 = vmatpush1.bf16.msra.mxu0 %v2460
  %3280 = vmatprep.subr.bf16.mxu0 %v2453
  %3281 = vmatpush1.bf16.msra.mxu0 %v2452
  %3282 = vmatprep.subr.bf16.mxu0 %v2445
  %3283 = vmatpush1.bf16.msra.mxu0 %v2444
  %3284 = vmatprep.subr.bf16.mxu0 %v2437
  %3285 = vmatpush1.bf16.msra.mxu0 %v2436
  %3286 = vmatprep.subr.bf16.mxu0 %v2429
  %3287 = vmatpush1.bf16.msra.mxu0 %v2428
  %3288 = vmatprep.subr.bf16.mxu0 %v2421
  %3289 = vmatpush1.bf16.msra.mxu0 %v2420
  %3290 = vmatprep.subr.bf16.mxu0 %v2541
  %3291 = vmatpush2.bf16.msra.mxu0 %v2540
  %3292 = vmatprep.subr.bf16.mxu0 %v2533
  %3293 = vmatpush2.bf16.msra.mxu0 %v2532
  %3294 = vmatprep.subr.bf16.mxu0 %v2525
  %3295 = vmatpush2.bf16.msra.mxu0 %v2524
  %3296 = vmatprep.subr.bf16.mxu0 %v2517
  %3297 = vmatpush2.bf16.msra.mxu0 %v2516
  %3298 = vmatprep.subr.bf16.mxu0 %v2509
  %3299 = vmatpush2.bf16.msra.mxu0 %v2508
  %3300 = vmatprep.subr.bf16.mxu0 %v2501
  %3301 = vmatpush2.bf16.msra.mxu0 %v2500
  %3302 = vmatprep.subr.bf16.mxu0 %v2493
  %3303 = vmatpush2.bf16.msra.mxu0 %v2492
  %3304 = vmatprep.subr.bf16.mxu0 %v2485
  %3305 = vmatpush2.bf16.msra.mxu0 %v2484
  %3306 = vmatprep.mubr.bf16.mxu0 %v617
  %3307 = vmatmul.mubr.bf16.gmra.mxu0 %v616
  %v3308 = vpop.f32.mrf.mxu0
  %v3309 = vadd.f32 %v3266, %v3308
  %v3310 = vpop.f32.mrf.mxu0
  %v3311 = vadd.f32 %v3268, %v3310
  %v3312 = vpop.f32.mrf.mxu0
  %v3313 = vadd.f32 %v3270, %v3312
  %v3314 = vpop.f32.mrf.mxu0
  %v3315 = vadd.f32 %v3272, %v3314
  %3316 = vdwg.mxu0
  %3317 = vmatprep.subr.bf16.mxu0 %v2605
  %3318 = vmatpush1.bf16.msra.mxu0 %v2604
  %3319 = vmatprep.subr.bf16.mxu0 %v2597
  %3320 = vmatpush1.bf16.msra.mxu0 %v2596
  %3321 = vmatprep.subr.bf16.mxu0 %v2589
  %3322 = vmatpush1.bf16.msra.mxu0 %v2588
  %3323 = vmatprep.subr.bf16.mxu0 %v2581
  %3324 = vmatpush1.bf16.msra.mxu0 %v2580
  %3325 = vmatprep.subr.bf16.mxu0 %v2573
  %3326 = vmatpush1.bf16.msra.mxu0 %v2572
  %3327 = vmatprep.subr.bf16.mxu0 %v2565
  %3328 = vmatpush1.bf16.msra.mxu0 %v2564
  %3329 = vmatprep.subr.bf16.mxu0 %v2557
  %3330 = vmatpush1.bf16.msra.mxu0 %v2556
  %3331 = vmatprep.subr.bf16.mxu0 %v2549
  %3332 = vmatpush1.bf16.msra.mxu0 %v2548
  %3333 = vmatprep.subr.bf16.mxu0 %v2669
  %3334 = vmatpush2.bf16.msra.mxu0 %v2668
  %3335 = vmatprep.subr.bf16.mxu0 %v2661
  %3336 = vmatpush2.bf16.msra.mxu0 %v2660
  %3337 = vmatprep.subr.bf16.mxu0 %v2653
  %3338 = vmatpush2.bf16.msra.mxu0 %v2652
  %3339 = vmatprep.subr.bf16.mxu0 %v2645
  %3340 = vmatpush2.bf16.msra.mxu0 %v2644
  %3341 = vmatprep.subr.bf16.mxu0 %v2637
  %3342 = vmatpush2.bf16.msra.mxu0 %v2636
  %3343 = vmatprep.subr.bf16.mxu0 %v2629
  %3344 = vmatpush2.bf16.msra.mxu0 %v2628
  %3345 = vmatprep.subr.bf16.mxu0 %v2621
  %3346 = vmatpush2.bf16.msra.mxu0 %v2620
  %3347 = vmatprep.subr.bf16.mxu0 %v2613
  %3348 = vmatpush2.bf16.msra.mxu0 %v2612
  %3349 = vmatprep.mubr.bf16.mxu0 %v619
  %3350 = vmatmul.mubr.bf16.gmra.mxu0 %v618
  %v3351 = vpop.f32.mrf.mxu0
  %v3352 = vadd.f32 %v3309, %v3351
  %v3353 = vpop.f32.mrf.mxu0
  %v3354 = vadd.f32 %v3311, %v3353
  %v3355 = vpop.f32.mrf.mxu0
  %v3356 = vadd.f32 %v3313, %v3355
  %v3357 = vpop.f32.mrf.mxu0
  %v3358 = vadd.f32 %v3315, %v3357
  %3359 = vdwg.mxu0
  %3360 = vmatprep.subr.bf16.mxu0 %v2223
  %3361 = vmatpush1.bf16.msra.mxu0 %v2222
  %3362 = vmatprep.subr.bf16.mxu0 %v2215
  %3363 = vmatpush1.bf16.msra.mxu0 %v2214
  %3364 = vmatprep.subr.bf16.mxu0 %v2207
  %3365 = vmatpush1.bf16.msra.mxu0 %v2206
  %3366 = vmatprep.subr.bf16.mxu0 %v2199
  %3367 = vmatpush1.bf16.msra.mxu0 %v2198
  %3368 = vmatprep.subr.bf16.mxu0 %v2191
  %3369 = vmatpush1.bf16.msra.mxu0 %v2190
  %3370 = vmatprep.subr.bf16.mxu0 %v2183
  %3371 = vmatpush1.bf16.msra.mxu0 %v2182
  %3372 = vmatprep.subr.bf16.mxu0 %v2175
  %3373 = vmatpush1.bf16.msra.mxu0 %v2174
  %3374 = vmatprep.subr.bf16.mxu0 %v2167
  %3375 = vmatpush1.bf16.msra.mxu0 %v2166
  %3376 = vmatprep.subr.bf16.mxu0 %v2287
  %3377 = vmatpush2.bf16.msra.mxu0 %v2286
  %3378 = vmatprep.subr.bf16.mxu0 %v2279
  %3379 = vmatpush2.bf16.msra.mxu0 %v2278
  %3380 = vmatprep.subr.bf16.mxu0 %v2271
  %3381 = vmatpush2.bf16.msra.mxu0 %v2270
  %3382 = vmatprep.subr.bf16.mxu0 %v2263
  %3383 = vmatpush2.bf16.msra.mxu0 %v2262
  %3384 = vmatprep.subr.bf16.mxu0 %v2255
  %3385 = vmatpush2.bf16.msra.mxu0 %v2254
  %3386 = vmatprep.subr.bf16.mxu0 %v2247
  %3387 = vmatpush2.bf16.msra.mxu0 %v2246
  %3388 = vmatprep.subr.bf16.mxu0 %v2239
  %3389 = vmatpush2.bf16.msra.mxu0 %v2238
  %3390 = vmatprep.subr.bf16.mxu0 %v2231
  %3391 = vmatpush2.bf16.msra.mxu0 %v2230
  %3392 = vmatprep.mubr.bf16.mxu0 %v613
  %3393 = vmatmul.mubr.bf16.gmra.mxu0 %v612
  %v3394 = vpop.f32.mrf.mxu0
  %v3395 = vadd.f32 %v559, %v3394
  %v3396 = vpop.f32.mrf.mxu0
  %v3397 = vadd.f32 %v563, %v3396
  %v3398 = vpop.f32.mrf.mxu0
  %v3399 = vadd.f32 %v559, %v3398
  %v3400 = vpop.f32.mrf.mxu0
  %v3401 = vadd.f32 %v563, %v3400
  %3402 = vdwg.mxu0
  %3403 = vmatprep.subr.bf16.mxu0 %v2351
  %3404 = vmatpush1.bf16.msra.mxu0 %v2350
  %3405 = vmatprep.subr.bf16.mxu0 %v2343
  %3406 = vmatpush1.bf16.msra.mxu0 %v2342
  %3407 = vmatprep.subr.bf16.mxu0 %v2335
  %3408 = vmatpush1.bf16.msra.mxu0 %v2334
  %3409 = vmatprep.subr.bf16.mxu0 %v2327
  %3410 = vmatpush1.bf16.msra.mxu0 %v2326
  %3411 = vmatprep.subr.bf16.mxu0 %v2319
  %3412 = vmatpush1.bf16.msra.mxu0 %v2318
  %3413 = vmatprep.subr.bf16.mxu0 %v2311
  %3414 = vmatpush1.bf16.msra.mxu0 %v2310
  %3415 = vmatprep.subr.bf16.mxu0 %v2303
  %3416 = vmatpush1.bf16.msra.mxu0 %v2302
  %3417 = vmatprep.subr.bf16.mxu0 %v2295
  %3418 = vmatpush1.bf16.msra.mxu0 %v2294
  %3419 = vmatprep.subr.bf16.mxu0 %v2415
  %3420 = vmatpush2.bf16.msra.mxu0 %v2414
  %3421 = vmatprep.subr.bf16.mxu0 %v2407
  %3422 = vmatpush2.bf16.msra.mxu0 %v2406
  %3423 = vmatprep.subr.bf16.mxu0 %v2399
  %3424 = vmatpush2.bf16.msra.mxu0 %v2398
  %3425 = vmatprep.subr.bf16.mxu0 %v2391
  %3426 = vmatpush2.bf16.msra.mxu0 %v2390
  %3427 = vmatprep.subr.bf16.mxu0 %v2383
  %3428 = vmatpush2.bf16.msra.mxu0 %v2382
  %3429 = vmatprep.subr.bf16.mxu0 %v2375
  %3430 = vmatpush2.bf16.msra.mxu0 %v2374
  %3431 = vmatprep.subr.bf16.mxu0 %v2367
  %3432 = vmatpush2.bf16.msra.mxu0 %v2366
  %3433 = vmatprep.subr.bf16.mxu0 %v2359
  %3434 = vmatpush2.bf16.msra.mxu0 %v2358
  %3435 = vmatprep.mubr.bf16.mxu0 %v615
  %3436 = vmatmul.mubr.bf16.gmra.mxu0 %v614
  %v3437 = vpop.f32.mrf.mxu0
  %v3438 = vadd.f32 %v3395, %v3437
  %v3439 = vpop.f32.mrf.mxu0
  %v3440 = vadd.f32 %v3397, %v3439
  %v3441 = vpop.f32.mrf.mxu0
  %v3442 = vadd.f32 %v3399, %v3441
  %v3443 = vpop.f32.mrf.mxu0
  %v3444 = vadd.f32 %v3401, %v3443
  %3445 = vdwg.mxu0
  %3446 = vmatprep.subr.bf16.mxu0 %v2479
  %3447 = vmatpush1.bf16.msra.mxu0 %v2478
  %3448 = vmatprep.subr.bf16.mxu0 %v2471
  %3449 = vmatpush1.bf16.msra.mxu0 %v2470
  %3450 = vmatprep.subr.bf16.mxu0 %v2463
  %3451 = vmatpush1.bf16.msra.mxu0 %v2462
  %3452 = vmatprep.subr.bf16.mxu0 %v2455
  %3453 = vmatpush1.bf16.msra.mxu0 %v2454
  %3454 = vmatprep.subr.bf16.mxu0 %v2447
  %3455 = vmatpush1.bf16.msra.mxu0 %v2446
  %3456 = vmatprep.subr.bf16.mxu0 %v2439
  %3457 = vmatpush1.bf16.msra.mxu0 %v2438
  %3458 = vmatprep.subr.bf16.mxu0 %v2431
  %3459 = vmatpush1.bf16.msra.mxu0 %v2430
  %3460 = vmatprep.subr.bf16.mxu0 %v2423
  %3461 = vmatpush1.bf16.msra.mxu0 %v2422
  %3462 = vmatprep.subr.bf16.mxu0 %v2543
  %3463 = vmatpush2.bf16.msra.mxu0 %v2542
  %3464 = vmatprep.subr.bf16.mxu0 %v2535
  %3465 = vmatpush2.bf16.msra.mxu0 %v2534
  %3466 = vmatprep.subr.bf16.mxu0 %v2527
  %3467 = vmatpush2.bf16.msra.mxu0 %v2526
  %3468 = vmatprep.subr.bf16.mxu0 %v2519
  %3469 = vmatpush2.bf16.msra.mxu0 %v2518
  %3470 = vmatprep.subr.bf16.mxu0 %v2511
  %3471 = vmatpush2.bf16.msra.mxu0 %v2510
  %3472 = vmatprep.subr.bf16.mxu0 %v2503
  %3473 = vmatpush2.bf16.msra.mxu0 %v2502
  %3474 = vmatprep.subr.bf16.mxu0 %v2495
  %3475 = vmatpush2.bf16.msra.mxu0 %v2494
  %3476 = vmatprep.subr.bf16.mxu0 %v2487
  %3477 = vmatpush2.bf16.msra.mxu0 %v2486
  %3478 = vmatprep.mubr.bf16.mxu0 %v617
  %3479 = vmatmul.mubr.bf16.gmra.mxu0 %v616
  %v3480 = vpop.f32.mrf.mxu0
  %v3481 = vadd.f32 %v3438, %v3480
  %v3482 = vpop.f32.mrf.mxu0
  %v3483 = vadd.f32 %v3440, %v3482
  %v3484 = vpop.f32.mrf.mxu0
  %v3485 = vadd.f32 %v3442, %v3484
  %v3486 = vpop.f32.mrf.mxu0
  %v3487 = vadd.f32 %v3444, %v3486
  %3488 = vdwg.mxu0
  %3489 = vmatprep.subr.bf16.mxu0 %v2607
  %3490 = vmatpush1.bf16.msra.mxu0 %v2606
  %3491 = vmatprep.subr.bf16.mxu0 %v2599
  %3492 = vmatpush1.bf16.msra.mxu0 %v2598
  %3493 = vmatprep.subr.bf16.mxu0 %v2591
  %3494 = vmatpush1.bf16.msra.mxu0 %v2590
  %3495 = vmatprep.subr.bf16.mxu0 %v2583
  %3496 = vmatpush1.bf16.msra.mxu0 %v2582
  %3497 = vmatprep.subr.bf16.mxu0 %v2575
  %3498 = vmatpush1.bf16.msra.mxu0 %v2574
  %3499 = vmatprep.subr.bf16.mxu0 %v2567
  %3500 = vmatpush1.bf16.msra.mxu0 %v2566
  %3501 = vmatprep.subr.bf16.mxu0 %v2559
  %3502 = vmatpush1.bf16.msra.mxu0 %v2558
  %3503 = vmatprep.subr.bf16.mxu0 %v2551
  %3504 = vmatpush1.bf16.msra.mxu0 %v2550
  %3505 = vmatprep.subr.bf16.mxu0 %v2671
  %3506 = vmatpush2.bf16.msra.mxu0 %v2670
  %3507 = vmatprep.subr.bf16.mxu0 %v2663
  %3508 = vmatpush2.bf16.msra.mxu0 %v2662
  %3509 = vmatprep.subr.bf16.mxu0 %v2655
  %3510 = vmatpush2.bf16.msra.mxu0 %v2654
  %3511 = vmatprep.subr.bf16.mxu0 %v2647
  %3512 = vmatpush2.bf16.msra.mxu0 %v2646
  %3513 = vmatprep.subr.bf16.mxu0 %v2639
  %3514 = vmatpush2.bf16.msra.mxu0 %v2638
  %3515 = vmatprep.subr.bf16.mxu0 %v2631
  %3516 = vmatpush2.bf16.msra.mxu0 %v2630
  %3517 = vmatprep.subr.bf16.mxu0 %v2623
  %3518 = vmatpush2.bf16.msra.mxu0 %v2622
  %3519 = vmatprep.subr.bf16.mxu0 %v2615
  %3520 = vmatpush2.bf16.msra.mxu0 %v2614
  %3521 = vmatprep.mubr.bf16.mxu0 %v619
  %3522 = vmatmul.mubr.bf16.gmra.mxu0 %v618
  %v3523 = vpop.f32.mrf.mxu0
  %v3524 = vadd.f32 %v3481, %v3523
  %v3525 = vpop.f32.mrf.mxu0
  %v3526 = vadd.f32 %v3483, %v3525
  %v3527 = vpop.f32.mrf.mxu0
  %v3528 = vadd.f32 %v3485, %v3527
  %v3529 = vpop.f32.mrf.mxu0
  %v3530 = vadd.f32 %v3487, %v3529
  %3531 = vdwg.mxu0
  %3532 = vmatprep.subr.bf16.mxu0 %v2225
  %3533 = vmatpush1.bf16.msra.mxu0 %v2224
  %3534 = vmatprep.subr.bf16.mxu0 %v2217
  %3535 = vmatpush1.bf16.msra.mxu0 %v2216
  %3536 = vmatprep.subr.bf16.mxu0 %v2209
  %3537 = vmatpush1.bf16.msra.mxu0 %v2208
  %3538 = vmatprep.subr.bf16.mxu0 %v2201
  %3539 = vmatpush1.bf16.msra.mxu0 %v2200
  %3540 = vmatprep.subr.bf16.mxu0 %v2193
  %3541 = vmatpush1.bf16.msra.mxu0 %v2192
  %3542 = vmatprep.subr.bf16.mxu0 %v2185
  %3543 = vmatpush1.bf16.msra.mxu0 %v2184
  %3544 = vmatprep.subr.bf16.mxu0 %v2177
  %3545 = vmatpush1.bf16.msra.mxu0 %v2176
  %3546 = vmatprep.subr.bf16.mxu0 %v2169
  %3547 = vmatpush1.bf16.msra.mxu0 %v2168
  %3548 = vmatprep.subr.bf16.mxu0 %v2289
  %3549 = vmatpush2.bf16.msra.mxu0 %v2288
  %3550 = vmatprep.subr.bf16.mxu0 %v2281
  %3551 = vmatpush2.bf16.msra.mxu0 %v2280
  %3552 = vmatprep.subr.bf16.mxu0 %v2273
  %3553 = vmatpush2.bf16.msra.mxu0 %v2272
  %3554 = vmatprep.subr.bf16.mxu0 %v2265
  %3555 = vmatpush2.bf16.msra.mxu0 %v2264
  %3556 = vmatprep.subr.bf16.mxu0 %v2257
  %3557 = vmatpush2.bf16.msra.mxu0 %v2256
  %3558 = vmatprep.subr.bf16.mxu0 %v2249
  %3559 = vmatpush2.bf16.msra.mxu0 %v2248
  %3560 = vmatprep.subr.bf16.mxu0 %v2241
  %3561 = vmatpush2.bf16.msra.mxu0 %v2240
  %3562 = vmatprep.subr.bf16.mxu0 %v2233
  %3563 = vmatpush2.bf16.msra.mxu0 %v2232
  %3564 = vmatprep.mubr.bf16.mxu0 %v613
  %3565 = vmatmul.mubr.bf16.gmra.mxu0 %v612
  %v3566 = vpop.f32.mrf.mxu0
  %v3567 = vadd.f32 %v567, %v3566
  %v3568 = vpop.f32.mrf.mxu0
  %v3569 = vadd.f32 %v571, %v3568
  %v3570 = vpop.f32.mrf.mxu0
  %v3571 = vadd.f32 %v567, %v3570
  %v3572 = vpop.f32.mrf.mxu0
  %v3573 = vadd.f32 %v571, %v3572
  %3574 = vdwg.mxu0
  %3575 = vmatprep.subr.bf16.mxu0 %v2353
  %3576 = vmatpush1.bf16.msra.mxu0 %v2352
  %3577 = vmatprep.subr.bf16.mxu0 %v2345
  %3578 = vmatpush1.bf16.msra.mxu0 %v2344
  %3579 = vmatprep.subr.bf16.mxu0 %v2337
  %3580 = vmatpush1.bf16.msra.mxu0 %v2336
  %3581 = vmatprep.subr.bf16.mxu0 %v2329
  %3582 = vmatpush1.bf16.msra.mxu0 %v2328
  %3583 = vmatprep.subr.bf16.mxu0 %v2321
  %3584 = vmatpush1.bf16.msra.mxu0 %v2320
  %3585 = vmatprep.subr.bf16.mxu0 %v2313
  %3586 = vmatpush1.bf16.msra.mxu0 %v2312
  %3587 = vmatprep.subr.bf16.mxu0 %v2305
  %3588 = vmatpush1.bf16.msra.mxu0 %v2304
  %3589 = vmatprep.subr.bf16.mxu0 %v2297
  %3590 = vmatpush1.bf16.msra.mxu0 %v2296
  %3591 = vmatprep.subr.bf16.mxu0 %v2417
  %3592 = vmatpush2.bf16.msra.mxu0 %v2416
  %3593 = vmatprep.subr.bf16.mxu0 %v2409
  %3594 = vmatpush2.bf16.msra.mxu0 %v2408
  %3595 = vmatprep.subr.bf16.mxu0 %v2401
  %3596 = vmatpush2.bf16.msra.mxu0 %v2400
  %3597 = vmatprep.subr.bf16.mxu0 %v2393
  %3598 = vmatpush2.bf16.msra.mxu0 %v2392
  %3599 = vmatprep.subr.bf16.mxu0 %v2385
  %3600 = vmatpush2.bf16.msra.mxu0 %v2384
  %3601 = vmatprep.subr.bf16.mxu0 %v2377
  %3602 = vmatpush2.bf16.msra.mxu0 %v2376
  %3603 = vmatprep.subr.bf16.mxu0 %v2369
  %3604 = vmatpush2.bf16.msra.mxu0 %v2368
  %3605 = vmatprep.subr.bf16.mxu0 %v2361
  %3606 = vmatpush2.bf16.msra.mxu0 %v2360
  %3607 = vmatprep.mubr.bf16.mxu0 %v615
  %3608 = vmatmul.mubr.bf16.gmra.mxu0 %v614
  %v3609 = vpop.f32.mrf.mxu0
  %v3610 = vadd.f32 %v3567, %v3609
  %v3611 = vpop.f32.mrf.mxu0
  %v3612 = vadd.f32 %v3569, %v3611
  %v3613 = vpop.f32.mrf.mxu0
  %v3614 = vadd.f32 %v3571, %v3613
  %v3615 = vpop.f32.mrf.mxu0
  %v3616 = vadd.f32 %v3573, %v3615
  %3617 = vdwg.mxu0
  %3618 = vmatprep.subr.bf16.mxu0 %v2481
  %3619 = vmatpush1.bf16.msra.mxu0 %v2480
  %3620 = vmatprep.subr.bf16.mxu0 %v2473
  %3621 = vmatpush1.bf16.msra.mxu0 %v2472
  %3622 = vmatprep.subr.bf16.mxu0 %v2465
  %3623 = vmatpush1.bf16.msra.mxu0 %v2464
  %3624 = vmatprep.subr.bf16.mxu0 %v2457
  %3625 = vmatpush1.bf16.msra.mxu0 %v2456
  %3626 = vmatprep.subr.bf16.mxu0 %v2449
  %3627 = vmatpush1.bf16.msra.mxu0 %v2448
  %3628 = vmatprep.subr.bf16.mxu0 %v2441
  %3629 = vmatpush1.bf16.msra.mxu0 %v2440
  %3630 = vmatprep.subr.bf16.mxu0 %v2433
  %3631 = vmatpush1.bf16.msra.mxu0 %v2432
  %3632 = vmatprep.subr.bf16.mxu0 %v2425
  %3633 = vmatpush1.bf16.msra.mxu0 %v2424
  %3634 = vmatprep.subr.bf16.mxu0 %v2545
  %3635 = vmatpush2.bf16.msra.mxu0 %v2544
  %3636 = vmatprep.subr.bf16.mxu0 %v2537
  %3637 = vmatpush2.bf16.msra.mxu0 %v2536
  %3638 = vmatprep.subr.bf16.mxu0 %v2529
  %3639 = vmatpush2.bf16.msra.mxu0 %v2528
  %3640 = vmatprep.subr.bf16.mxu0 %v2521
  %3641 = vmatpush2.bf16.msra.mxu0 %v2520
  %3642 = vmatprep.subr.bf16.mxu0 %v2513
  %3643 = vmatpush2.bf16.msra.mxu0 %v2512
  %3644 = vmatprep.subr.bf16.mxu0 %v2505
  %3645 = vmatpush2.bf16.msra.mxu0 %v2504
  %3646 = vmatprep.subr.bf16.mxu0 %v2497
  %3647 = vmatpush2.bf16.msra.mxu0 %v2496
  %3648 = vmatprep.subr.bf16.mxu0 %v2489
  %3649 = vmatpush2.bf16.msra.mxu0 %v2488
  %3650 = vmatprep.mubr.bf16.mxu0 %v617
  %3651 = vmatmul.mubr.bf16.gmra.mxu0 %v616
  %v3652 = vpop.f32.mrf.mxu0
  %v3653 = vadd.f32 %v3610, %v3652
  %v3654 = vpop.f32.mrf.mxu0
  %v3655 = vadd.f32 %v3612, %v3654
  %v3656 = vpop.f32.mrf.mxu0
  %v3657 = vadd.f32 %v3614, %v3656
  %v3658 = vpop.f32.mrf.mxu0
  %v3659 = vadd.f32 %v3616, %v3658
  %3660 = vdwg.mxu0
  %3661 = vmatprep.subr.bf16.mxu0 %v2609
  %3662 = vmatpush1.bf16.msra.mxu0 %v2608
  %3663 = vmatprep.subr.bf16.mxu0 %v2601
  %3664 = vmatpush1.bf16.msra.mxu0 %v2600
  %3665 = vmatprep.subr.bf16.mxu0 %v2593
  %3666 = vmatpush1.bf16.msra.mxu0 %v2592
  %3667 = vmatprep.subr.bf16.mxu0 %v2585
  %3668 = vmatpush1.bf16.msra.mxu0 %v2584
  %3669 = vmatprep.subr.bf16.mxu0 %v2577
  %3670 = vmatpush1.bf16.msra.mxu0 %v2576
  %3671 = vmatprep.subr.bf16.mxu0 %v2569
  %3672 = vmatpush1.bf16.msra.mxu0 %v2568
  %3673 = vmatprep.subr.bf16.mxu0 %v2561
  %3674 = vmatpush1.bf16.msra.mxu0 %v2560
  %3675 = vmatprep.subr.bf16.mxu0 %v2553
  %3676 = vmatpush1.bf16.msra.mxu0 %v2552
  %3677 = vmatprep.subr.bf16.mxu0 %v2673
  %3678 = vmatpush2.bf16.msra.mxu0 %v2672
  %3679 = vmatprep.subr.bf16.mxu0 %v2665
  %3680 = vmatpush2.bf16.msra.mxu0 %v2664
  %3681 = vmatprep.subr.bf16.mxu0 %v2657
  %3682 = vmatpush2.bf16.msra.mxu0 %v2656
  %3683 = vmatprep.subr.bf16.mxu0 %v2649
  %3684 = vmatpush2.bf16.msra.mxu0 %v2648
  %3685 = vmatprep.subr.bf16.mxu0 %v2641
  %3686 = vmatpush2.bf16.msra.mxu0 %v2640
  %3687 = vmatprep.subr.bf16.mxu0 %v2633
  %3688 = vmatpush2.bf16.msra.mxu0 %v2632
  %3689 = vmatprep.subr.bf16.mxu0 %v2625
  %3690 = vmatpush2.bf16.msra.mxu0 %v2624
  %3691 = vmatprep.subr.bf16.mxu0 %v2617
  %3692 = vmatpush2.bf16.msra.mxu0 %v2616
  %3693 = vmatprep.mubr.bf16.mxu0 %v619
  %3694 = vmatmul.mubr.bf16.gmra.mxu0 %v618
  %v3695 = vpop.f32.mrf.mxu0
  %v3696 = vadd.f32 %v3653, %v3695
  %v3697 = vpop.f32.mrf.mxu0
  %v3698 = vadd.f32 %v3655, %v3697
  %v3699 = vpop.f32.mrf.mxu0
  %v3700 = vadd.f32 %v3657, %v3699
  %v3701 = vpop.f32.mrf.mxu0
  %v3702 = vadd.f32 %v3659, %v3701
  %3703 = vdwg.mxu0
  %3704 = vmatprep.subr.bf16.mxu0 %v2227
  %3705 = vmatpush1.bf16.msra.mxu0 %v2226
  %3706 = vmatprep.subr.bf16.mxu0 %v2219
  %3707 = vmatpush1.bf16.msra.mxu0 %v2218
  %3708 = vmatprep.subr.bf16.mxu0 %v2211
  %3709 = vmatpush1.bf16.msra.mxu0 %v2210
  %3710 = vmatprep.subr.bf16.mxu0 %v2203
  %3711 = vmatpush1.bf16.msra.mxu0 %v2202
  %3712 = vmatprep.subr.bf16.mxu0 %v2195
  %3713 = vmatpush1.bf16.msra.mxu0 %v2194
  %3714 = vmatprep.subr.bf16.mxu0 %v2187
  %3715 = vmatpush1.bf16.msra.mxu0 %v2186
  %3716 = vmatprep.subr.bf16.mxu0 %v2179
  %3717 = vmatpush1.bf16.msra.mxu0 %v2178
  %3718 = vmatprep.subr.bf16.mxu0 %v2171
  %3719 = vmatpush1.bf16.msra.mxu0 %v2170
  %3720 = vmatprep.subr.bf16.mxu0 %v2291
  %3721 = vmatpush2.bf16.msra.mxu0 %v2290
  %3722 = vmatprep.subr.bf16.mxu0 %v2283
  %3723 = vmatpush2.bf16.msra.mxu0 %v2282
  %3724 = vmatprep.subr.bf16.mxu0 %v2275
  %3725 = vmatpush2.bf16.msra.mxu0 %v2274
  %3726 = vmatprep.subr.bf16.mxu0 %v2267
  %3727 = vmatpush2.bf16.msra.mxu0 %v2266
  %3728 = vmatprep.subr.bf16.mxu0 %v2259
  %3729 = vmatpush2.bf16.msra.mxu0 %v2258
  %3730 = vmatprep.subr.bf16.mxu0 %v2251
  %3731 = vmatpush2.bf16.msra.mxu0 %v2250
  %3732 = vmatprep.subr.bf16.mxu0 %v2243
  %3733 = vmatpush2.bf16.msra.mxu0 %v2242
  %3734 = vmatprep.subr.bf16.mxu0 %v2235
  %3735 = vmatpush2.bf16.msra.mxu0 %v2234
  %3736 = vmatprep.mubr.bf16.mxu0 %v613
  %3737 = vmatmul.mubr.bf16.gmra.mxu0 %v612
  %v3738 = vpop.f32.mrf.mxu0
  %v3739 = vadd.f32 %v575, %v3738
  %v3740 = vpop.f32.mrf.mxu0
  %v3741 = vadd.f32 %v579, %v3740
  %v3742 = vpop.f32.mrf.mxu0
  %v3743 = vadd.f32 %v575, %v3742
  %v3744 = vpop.f32.mrf.mxu0
  %v3745 = vadd.f32 %v579, %v3744
  %3746 = vdwg.mxu0
  %3747 = vmatprep.subr.bf16.mxu0 %v2355
  %3748 = vmatpush1.bf16.msra.mxu0 %v2354
  %3749 = vmatprep.subr.bf16.mxu0 %v2347
  %3750 = vmatpush1.bf16.msra.mxu0 %v2346
  %3751 = vmatprep.subr.bf16.mxu0 %v2339
  %3752 = vmatpush1.bf16.msra.mxu0 %v2338
  %3753 = vmatprep.subr.bf16.mxu0 %v2331
  %3754 = vmatpush1.bf16.msra.mxu0 %v2330
  %3755 = vmatprep.subr.bf16.mxu0 %v2323
  %3756 = vmatpush1.bf16.msra.mxu0 %v2322
  %3757 = vmatprep.subr.bf16.mxu0 %v2315
  %3758 = vmatpush1.bf16.msra.mxu0 %v2314
  %3759 = vmatprep.subr.bf16.mxu0 %v2307
  %3760 = vmatpush1.bf16.msra.mxu0 %v2306
  %3761 = vmatprep.subr.bf16.mxu0 %v2299
  %3762 = vmatpush1.bf16.msra.mxu0 %v2298
  %3763 = vmatprep.subr.bf16.mxu0 %v2419
  %3764 = vmatpush2.bf16.msra.mxu0 %v2418
  %3765 = vmatprep.subr.bf16.mxu0 %v2411
  %3766 = vmatpush2.bf16.msra.mxu0 %v2410
  %3767 = vmatprep.subr.bf16.mxu0 %v2403
  %3768 = vmatpush2.bf16.msra.mxu0 %v2402
  %3769 = vmatprep.subr.bf16.mxu0 %v2395
  %3770 = vmatpush2.bf16.msra.mxu0 %v2394
  %3771 = vmatprep.subr.bf16.mxu0 %v2387
  %3772 = vmatpush2.bf16.msra.mxu0 %v2386
  %3773 = vmatprep.subr.bf16.mxu0 %v2379
  %3774 = vmatpush2.bf16.msra.mxu0 %v2378
  %3775 = vmatprep.subr.bf16.mxu0 %v2371
  %3776 = vmatpush2.bf16.msra.mxu0 %v2370
  %3777 = vmatprep.subr.bf16.mxu0 %v2363
  %3778 = vmatpush2.bf16.msra.mxu0 %v2362
  %3779 = vmatprep.mubr.bf16.mxu0 %v615
  %3780 = vmatmul.mubr.bf16.gmra.mxu0 %v614
  %v3781 = vpop.f32.mrf.mxu0
  %v3782 = vadd.f32 %v3739, %v3781
  %v3783 = vpop.f32.mrf.mxu0
  %v3784 = vadd.f32 %v3741, %v3783
  %v3785 = vpop.f32.mrf.mxu0
  %v3786 = vadd.f32 %v3743, %v3785
  %v3787 = vpop.f32.mrf.mxu0
  %v3788 = vadd.f32 %v3745, %v3787
  %3789 = vdwg.mxu0
  %3790 = vmatprep.subr.bf16.mxu0 %v2483
  %3791 = vmatpush1.bf16.msra.mxu0 %v2482
  %3792 = vmatprep.subr.bf16.mxu0 %v2475
  %3793 = vmatpush1.bf16.msra.mxu0 %v2474
  %3794 = vmatprep.subr.bf16.mxu0 %v2467
  %3795 = vmatpush1.bf16.msra.mxu0 %v2466
  %3796 = vmatprep.subr.bf16.mxu0 %v2459
  %3797 = vmatpush1.bf16.msra.mxu0 %v2458
  %3798 = vmatprep.subr.bf16.mxu0 %v2451
  %3799 = vmatpush1.bf16.msra.mxu0 %v2450
  %3800 = vmatprep.subr.bf16.mxu0 %v2443
  %3801 = vmatpush1.bf16.msra.mxu0 %v2442
  %3802 = vmatprep.subr.bf16.mxu0 %v2435
  %3803 = vmatpush1.bf16.msra.mxu0 %v2434
  %3804 = vmatprep.subr.bf16.mxu0 %v2427
  %3805 = vmatpush1.bf16.msra.mxu0 %v2426
  %3806 = vmatprep.subr.bf16.mxu0 %v2547
  %3807 = vmatpush2.bf16.msra.mxu0 %v2546
  %3808 = vmatprep.subr.bf16.mxu0 %v2539
  %3809 = vmatpush2.bf16.msra.mxu0 %v2538
  %3810 = vmatprep.subr.bf16.mxu0 %v2531
  %3811 = vmatpush2.bf16.msra.mxu0 %v2530
  %3812 = vmatprep.subr.bf16.mxu0 %v2523
  %3813 = vmatpush2.bf16.msra.mxu0 %v2522
  %3814 = vmatprep.subr.bf16.mxu0 %v2515
  %3815 = vmatpush2.bf16.msra.mxu0 %v2514
  %3816 = vmatprep.subr.bf16.mxu0 %v2507
  %3817 = vmatpush2.bf16.msra.mxu0 %v2506
  %3818 = vmatprep.subr.bf16.mxu0 %v2499
  %3819 = vmatpush2.bf16.msra.mxu0 %v2498
  %3820 = vmatprep.subr.bf16.mxu0 %v2491
  %3821 = vmatpush2.bf16.msra.mxu0 %v2490
  %3822 = vmatprep.mubr.bf16.mxu0 %v617
  %3823 = vmatmul.mubr.bf16.gmra.mxu0 %v616
  %v3824 = vpop.f32.mrf.mxu0
  %v3825 = vadd.f32 %v3782, %v3824
  %v3826 = vpop.f32.mrf.mxu0
  %v3827 = vadd.f32 %v3784, %v3826
  %v3828 = vpop.f32.mrf.mxu0
  %v3829 = vadd.f32 %v3786, %v3828
  %v3830 = vpop.f32.mrf.mxu0
  %v3831 = vadd.f32 %v3788, %v3830
  %3832 = vdwg.mxu0
  %3833 = vmatprep.subr.bf16.mxu0 %v2611
  %3834 = vmatpush1.bf16.msra.mxu0 %v2610
  %3835 = vmatprep.subr.bf16.mxu0 %v2603
  %3836 = vmatpush1.bf16.msra.mxu0 %v2602
  %3837 = vmatprep.subr.bf16.mxu0 %v2595
  %3838 = vmatpush1.bf16.msra.mxu0 %v2594
  %3839 = vmatprep.subr.bf16.mxu0 %v2587
  %3840 = vmatpush1.bf16.msra.mxu0 %v2586
  %3841 = vmatprep.subr.bf16.mxu0 %v2579
  %3842 = vmatpush1.bf16.msra.mxu0 %v2578
  %3843 = vmatprep.subr.bf16.mxu0 %v2571
  %3844 = vmatpush1.bf16.msra.mxu0 %v2570
  %3845 = vmatprep.subr.bf16.mxu0 %v2563
  %3846 = vmatpush1.bf16.msra.mxu0 %v2562
  %3847 = vmatprep.subr.bf16.mxu0 %v2555
  %3848 = vmatpush1.bf16.msra.mxu0 %v2554
  %3849 = vmatprep.subr.bf16.mxu0 %v2675
  %3850 = vmatpush2.bf16.msra.mxu0 %v2674
  %3851 = vmatprep.subr.bf16.mxu0 %v2667
  %3852 = vmatpush2.bf16.msra.mxu0 %v2666
  %3853 = vmatprep.subr.bf16.mxu0 %v2659
  %3854 = vmatpush2.bf16.msra.mxu0 %v2658
  %3855 = vmatprep.subr.bf16.mxu0 %v2651
  %3856 = vmatpush2.bf16.msra.mxu0 %v2650
  %3857 = vmatprep.subr.bf16.mxu0 %v2643
  %3858 = vmatpush2.bf16.msra.mxu0 %v2642
  %3859 = vmatprep.subr.bf16.mxu0 %v2635
  %3860 = vmatpush2.bf16.msra.mxu0 %v2634
  %3861 = vmatprep.subr.bf16.mxu0 %v2627
  %3862 = vmatpush2.bf16.msra.mxu0 %v2626
  %3863 = vmatprep.subr.bf16.mxu0 %v2619
  %3864 = vmatpush2.bf16.msra.mxu0 %v2618
  %3865 = vmatprep.mubr.bf16.mxu0 %v619
  %3866 = vmatmul.mubr.bf16.gmra.mxu0 %v618
  %v3867 = vpop.f32.mrf.mxu0
  %v3868 = vadd.f32 %v3825, %v3867
  %v3869 = vpop.f32.mrf.mxu0
  %v3870 = vadd.f32 %v3827, %v3869
  %v3871 = vpop.f32.mrf.mxu0
  %v3872 = vadd.f32 %v3829, %v3871
  %v3873 = vpop.f32.mrf.mxu0
  %v3874 = vadd.f32 %v3831, %v3873
  %3875 = vdwg.mxu0
  %v3876 = vmax.f32 %v3352, 0.0
  %v3877 = vmax.f32 %v3354, 0.0
  %v3878 = vmax.f32 %v3524, 0.0
  %v3879 = vmax.f32 %v3526, 0.0
  %v3880 = vmax.f32 %v3696, 0.0
  %v3881 = vmax.f32 %v3698, 0.0
  %v3882 = vmax.f32 %v3868, 0.0
  %v3883 = vmax.f32 %v3870, 0.0
  %v3884 = vmax.f32 %v3356, 0.0
  %v3885 = vmax.f32 %v3358, 0.0
  %v3886 = vmax.f32 %v3528, 0.0
  %v3887 = vmax.f32 %v3530, 0.0
  %v3888 = vmax.f32 %v3700, 0.0
  %v3889 = vmax.f32 %v3702, 0.0
  %v3890 = vmax.f32 %v3872, 0.0
  %v3891 = vmax.f32 %v3874, 0.0
  %v3892 = vpack.c.bf16 %v3884, %v3876
  %v3893 = vpack.c.bf16 %v3885, %v3877
  %v3894 = vpack.c.bf16 %v3886, %v3878
  %v3895 = vpack.c.bf16 %v3887, %v3879
  %v3896 = vpack.c.bf16 %v3888, %v3880
  %v3897 = vpack.c.bf16 %v3889, %v3881
  %v3898 = vpack.c.bf16 %v3890, %v3882
  %v3899 = vpack.c.bf16 %v3891, %v3883
  %v3900 = vld [vmem:[%s3] sm:$0xff]
  %v3901 = vld [vmem:[%s3 + $0x8] sm:$0xff]
  %v3902 = vld [vmem:[%s3 + $0x10] sm:$0xff]
  %v3903 = vld [vmem:[%s3 + $0x18] sm:$0xff]
  %v3904 = vld [vmem:[%s3 + $0x20] sm:$0xff]
  %v3905 = vld [vmem:[%s3 + $0x28] sm:$0xff]
  %v3906 = vld [vmem:[%s3 + $0x30] sm:$0xff]
  %v3907 = vld [vmem:[%s3 + $0x38] sm:$0xff]
  %v3908 = vld [vmem:[%s3 + $0x40] sm:$0xff]
  %v3909 = vld [vmem:[%s3 + $0x48] sm:$0xff]
  %v3910 = vld [vmem:[%s3 + $0x50] sm:$0xff]
  %v3911 = vld [vmem:[%s3 + $0x58] sm:$0xff]
  %v3912 = vld [vmem:[%s3 + $0x60] sm:$0xff]
  %v3913 = vld [vmem:[%s3 + $0x68] sm:$0xff]
  %v3914 = vld [vmem:[%s3 + $0x70] sm:$0xff]
  %v3915 = vld [vmem:[%s3 + $0x78] sm:$0xff]
  %v3916 = vld [vmem:[%s3 + $0x80] sm:$0xff]
  %v3917 = vld [vmem:[%s3 + $0x88] sm:$0xff]
  %v3918 = vld [vmem:[%s3 + $0x90] sm:$0xff]
  %v3919 = vld [vmem:[%s3 + $0x98] sm:$0xff]
  %v3920 = vld [vmem:[%s3 + $0xa0] sm:$0xff]
  %v3921 = vld [vmem:[%s3 + $0xa8] sm:$0xff]
  %v3922 = vld [vmem:[%s3 + $0xb0] sm:$0xff]
  %v3923 = vld [vmem:[%s3 + $0xb8] sm:$0xff]
  %v3924 = vld [vmem:[%s3 + $0xc0] sm:$0xff]
  %v3925 = vld [vmem:[%s3 + $0xc8] sm:$0xff]
  %v3926 = vld [vmem:[%s3 + $0xd0] sm:$0xff]
  %v3927 = vld [vmem:[%s3 + $0xd8] sm:$0xff]
  %v3928 = vld [vmem:[%s3 + $0xe0] sm:$0xff]
  %v3929 = vld [vmem:[%s3 + $0xe8] sm:$0xff]
  %v3930 = vld [vmem:[%s3 + $0xf0] sm:$0xff]
  %v3931 = vld [vmem:[%s3 + $0xf8] sm:$0xff]
  %v3932 = vld [vmem:[%s3 + $0x100] sm:$0xff]
  %v3933 = vld [vmem:[%s3 + $0x108] sm:$0xff]
  %v3934 = vld [vmem:[%s3 + $0x110] sm:$0xff]
  %v3935 = vld [vmem:[%s3 + $0x118] sm:$0xff]
  %v3936 = vld [vmem:[%s3 + $0x120] sm:$0xff]
  %v3937 = vld [vmem:[%s3 + $0x128] sm:$0xff]
  %v3938 = vld [vmem:[%s3 + $0x130] sm:$0xff]
  %v3939 = vld [vmem:[%s3 + $0x138] sm:$0xff]
  %v3940 = vld [vmem:[%s3 + $0x140] sm:$0xff]
  %v3941 = vld [vmem:[%s3 + $0x148] sm:$0xff]
  %v3942 = vld [vmem:[%s3 + $0x150] sm:$0xff]
  %v3943 = vld [vmem:[%s3 + $0x158] sm:$0xff]
  %v3944 = vld [vmem:[%s3 + $0x160] sm:$0xff]
  %v3945 = vld [vmem:[%s3 + $0x168] sm:$0xff]
  %v3946 = vld [vmem:[%s3 + $0x170] sm:$0xff]
  %v3947 = vld [vmem:[%s3 + $0x178] sm:$0xff]
  %v3948 = vld [vmem:[%s3 + $0x180] sm:$0xff]
  %v3949 = vld [vmem:[%s3 + $0x188] sm:$0xff]
  %v3950 = vld [vmem:[%s3 + $0x190] sm:$0xff]
  %v3951 = vld [vmem:[%s3 + $0x198] sm:$0xff]
  %v3952 = vld [vmem:[%s3 + $0x1a0] sm:$0xff]
  %v3953 = vld [vmem:[%s3 + $0x1a8] sm:$0xff]
  %v3954 = vld [vmem:[%s3 + $0x1b0] sm:$0xff]
  %v3955 = vld [vmem:[%s3 + $0x1b8] sm:$0xff]
  %v3956 = vld [vmem:[%s3 + $0x1c0] sm:$0xff]
  %v3957 = vld [vmem:[%s3 + $0x1c8] sm:$0xff]
  %v3958 = vld [vmem:[%s3 + $0x1d0] sm:$0xff]
  %v3959 = vld [vmem:[%s3 + $0x1d8] sm:$0xff]
  %v3960 = vld [vmem:[%s3 + $0x1e0] sm:$0xff]
  %v3961 = vld [vmem:[%s3 + $0x1e8] sm:$0xff]
  %v3962 = vld [vmem:[%s3 + $0x1f0] sm:$0xff]
  %v3963 = vld [vmem:[%s3 + $0x1f8] sm:$0xff]
  %v3964 = vld [vmem:[%s3 + $0x200] sm:$0xff]
  %v3965 = vld [vmem:[%s3 + $0x208] sm:$0xff]
  %v3966 = vld [vmem:[%s3 + $0x210] sm:$0xff]
  %v3967 = vld [vmem:[%s3 + $0x218] sm:$0xff]
  %v3968 = vld [vmem:[%s3 + $0x220] sm:$0xff]
  %v3969 = vld [vmem:[%s3 + $0x228] sm:$0xff]
  %v3970 = vld [vmem:[%s3 + $0x230] sm:$0xff]
  %v3971 = vld [vmem:[%s3 + $0x238] sm:$0xff]
  %v3972 = vld [vmem:[%s3 + $0x240] sm:$0xff]
  %v3973 = vld [vmem:[%s3 + $0x248] sm:$0xff]
  %v3974 = vld [vmem:[%s3 + $0x250] sm:$0xff]
  %v3975 = vld [vmem:[%s3 + $0x258] sm:$0xff]
  %v3976 = vld [vmem:[%s3 + $0x260] sm:$0xff]
  %v3977 = vld [vmem:[%s3 + $0x268] sm:$0xff]
  %v3978 = vld [vmem:[%s3 + $0x270] sm:$0xff]
  %v3979 = vld [vmem:[%s3 + $0x278] sm:$0xff]
  %v3980 = vld [vmem:[%s3 + $0x280] sm:$0xff]
  %v3981 = vld [vmem:[%s3 + $0x288] sm:$0xff]
  %v3982 = vld [vmem:[%s3 + $0x290] sm:$0xff]
  %v3983 = vld [vmem:[%s3 + $0x298] sm:$0xff]
  %v3984 = vld [vmem:[%s3 + $0x2a0] sm:$0xff]
  %v3985 = vld [vmem:[%s3 + $0x2a8] sm:$0xff]
  %v3986 = vld [vmem:[%s3 + $0x2b0] sm:$0xff]
  %v3987 = vld [vmem:[%s3 + $0x2b8] sm:$0xff]
  %v3988 = vld [vmem:[%s3 + $0x2c0] sm:$0xff]
  %v3989 = vld [vmem:[%s3 + $0x2c8] sm:$0xff]
  %v3990 = vld [vmem:[%s3 + $0x2d0] sm:$0xff]
  %v3991 = vld [vmem:[%s3 + $0x2d8] sm:$0xff]
  %v3992 = vld [vmem:[%s3 + $0x2e0] sm:$0xff]
  %v3993 = vld [vmem:[%s3 + $0x2e8] sm:$0xff]
  %v3994 = vld [vmem:[%s3 + $0x2f0] sm:$0xff]
  %v3995 = vld [vmem:[%s3 + $0x2f8] sm:$0xff]
  %v3996 = vld [vmem:[%s3 + $0x300] sm:$0xff]
  %v3997 = vld [vmem:[%s3 + $0x308] sm:$0xff]
  %v3998 = vld [vmem:[%s3 + $0x310] sm:$0xff]
  %v3999 = vld [vmem:[%s3 + $0x318] sm:$0xff]
  %v4000 = vld [vmem:[%s3 + $0x320] sm:$0xff]
  %v4001 = vld [vmem:[%s3 + $0x328] sm:$0xff]
  %v4002 = vld [vmem:[%s3 + $0x330] sm:$0xff]
  %v4003 = vld [vmem:[%s3 + $0x338] sm:$0xff]
  %v4004 = vld [vmem:[%s3 + $0x340] sm:$0xff]
  %v4005 = vld [vmem:[%s3 + $0x348] sm:$0xff]
  %v4006 = vld [vmem:[%s3 + $0x350] sm:$0xff]
  %v4007 = vld [vmem:[%s3 + $0x358] sm:$0xff]
  %v4008 = vld [vmem:[%s3 + $0x360] sm:$0xff]
  %v4009 = vld [vmem:[%s3 + $0x368] sm:$0xff]
  %v4010 = vld [vmem:[%s3 + $0x370] sm:$0xff]
  %v4011 = vld [vmem:[%s3 + $0x378] sm:$0xff]
  %v4012 = vld [vmem:[%s3 + $0x380] sm:$0xff]
  %v4013 = vld [vmem:[%s3 + $0x388] sm:$0xff]
  %v4014 = vld [vmem:[%s3 + $0x390] sm:$0xff]
  %v4015 = vld [vmem:[%s3 + $0x398] sm:$0xff]
  %v4016 = vld [vmem:[%s3 + $0x3a0] sm:$0xff]
  %v4017 = vld [vmem:[%s3 + $0x3a8] sm:$0xff]
  %v4018 = vld [vmem:[%s3 + $0x3b0] sm:$0xff]
  %v4019 = vld [vmem:[%s3 + $0x3b8] sm:$0xff]
  %v4020 = vld [vmem:[%s3 + $0x3c0] sm:$0xff]
  %v4021 = vld [vmem:[%s3 + $0x3c8] sm:$0xff]
  %v4022 = vld [vmem:[%s3 + $0x3d0] sm:$0xff]
  %v4023 = vld [vmem:[%s3 + $0x3d8] sm:$0xff]
  %v4024 = vld [vmem:[%s3 + $0x3e0] sm:$0xff]
  %v4025 = vld [vmem:[%s3 + $0x3e8] sm:$0xff]
  %v4026 = vld [vmem:[%s3 + $0x3f0] sm:$0xff]
  %v4027 = vld [vmem:[%s3 + $0x3f8] sm:$0xff]
  %v4028 = vld [vmem:[%s3 + $0x400] sm:$0xff]
  %v4029 = vld [vmem:[%s3 + $0x408] sm:$0xff]
  %v4030 = vld [vmem:[%s3 + $0x410] sm:$0xff]
  %v4031 = vld [vmem:[%s3 + $0x418] sm:$0xff]
  %v4032 = vld [vmem:[%s3 + $0x420] sm:$0xff]
  %v4033 = vld [vmem:[%s3 + $0x428] sm:$0xff]
  %v4034 = vld [vmem:[%s3 + $0x430] sm:$0xff]
  %v4035 = vld [vmem:[%s3 + $0x438] sm:$0xff]
  %v4036 = vld [vmem:[%s3 + $0x440] sm:$0xff]
  %v4037 = vld [vmem:[%s3 + $0x448] sm:$0xff]
  %v4038 = vld [vmem:[%s3 + $0x450] sm:$0xff]
  %v4039 = vld [vmem:[%s3 + $0x458] sm:$0xff]
  %v4040 = vld [vmem:[%s3 + $0x460] sm:$0xff]
  %v4041 = vld [vmem:[%s3 + $0x468] sm:$0xff]
  %v4042 = vld [vmem:[%s3 + $0x470] sm:$0xff]
  %v4043 = vld [vmem:[%s3 + $0x478] sm:$0xff]
  %v4044 = vld [vmem:[%s3 + $0x480] sm:$0xff]
  %v4045 = vld [vmem:[%s3 + $0x488] sm:$0xff]
  %v4046 = vld [vmem:[%s3 + $0x490] sm:$0xff]
  %v4047 = vld [vmem:[%s3 + $0x498] sm:$0xff]
  %v4048 = vld [vmem:[%s3 + $0x4a0] sm:$0xff]
  %v4049 = vld [vmem:[%s3 + $0x4a8] sm:$0xff]
  %v4050 = vld [vmem:[%s3 + $0x4b0] sm:$0xff]
  %v4051 = vld [vmem:[%s3 + $0x4b8] sm:$0xff]
  %v4052 = vld [vmem:[%s3 + $0x4c0] sm:$0xff]
  %v4053 = vld [vmem:[%s3 + $0x4c8] sm:$0xff]
  %v4054 = vld [vmem:[%s3 + $0x4d0] sm:$0xff]
  %v4055 = vld [vmem:[%s3 + $0x4d8] sm:$0xff]
  %v4056 = vld [vmem:[%s3 + $0x4e0] sm:$0xff]
  %v4057 = vld [vmem:[%s3 + $0x4e8] sm:$0xff]
  %v4058 = vld [vmem:[%s3 + $0x4f0] sm:$0xff]
  %v4059 = vld [vmem:[%s3 + $0x4f8] sm:$0xff]
  %v4060 = vld [vmem:[%s3 + $0x500] sm:$0xff]
  %v4061 = vld [vmem:[%s3 + $0x508] sm:$0xff]
  %v4062 = vld [vmem:[%s3 + $0x510] sm:$0xff]
  %v4063 = vld [vmem:[%s3 + $0x518] sm:$0xff]
  %v4064 = vld [vmem:[%s3 + $0x520] sm:$0xff]
  %v4065 = vld [vmem:[%s3 + $0x528] sm:$0xff]
  %v4066 = vld [vmem:[%s3 + $0x530] sm:$0xff]
  %v4067 = vld [vmem:[%s3 + $0x538] sm:$0xff]
  %v4068 = vld [vmem:[%s3 + $0x540] sm:$0xff]
  %v4069 = vld [vmem:[%s3 + $0x548] sm:$0xff]
  %v4070 = vld [vmem:[%s3 + $0x550] sm:$0xff]
  %v4071 = vld [vmem:[%s3 + $0x558] sm:$0xff]
  %v4072 = vld [vmem:[%s3 + $0x560] sm:$0xff]
  %v4073 = vld [vmem:[%s3 + $0x568] sm:$0xff]
  %v4074 = vld [vmem:[%s3 + $0x570] sm:$0xff]
  %v4075 = vld [vmem:[%s3 + $0x578] sm:$0xff]
  %v4076 = vld [vmem:[%s3 + $0x580] sm:$0xff]
  %v4077 = vld [vmem:[%s3 + $0x588] sm:$0xff]
  %v4078 = vld [vmem:[%s3 + $0x590] sm:$0xff]
  %v4079 = vld [vmem:[%s3 + $0x598] sm:$0xff]
  %v4080 = vld [vmem:[%s3 + $0x5a0] sm:$0xff]
  %v4081 = vld [vmem:[%s3 + $0x5a8] sm:$0xff]
  %v4082 = vld [vmem:[%s3 + $0x5b0] sm:$0xff]
  %v4083 = vld [vmem:[%s3 + $0x5b8] sm:$0xff]
  %v4084 = vld [vmem:[%s3 + $0x5c0] sm:$0xff]
  %v4085 = vld [vmem:[%s3 + $0x5c8] sm:$0xff]
  %v4086 = vld [vmem:[%s3 + $0x5d0] sm:$0xff]
  %v4087 = vld [vmem:[%s3 + $0x5d8] sm:$0xff]
  %v4088 = vld [vmem:[%s3 + $0x5e0] sm:$0xff]
  %v4089 = vld [vmem:[%s3 + $0x5e8] sm:$0xff]
  %v4090 = vld [vmem:[%s3 + $0x5f0] sm:$0xff]
  %v4091 = vld [vmem:[%s3 + $0x5f8] sm:$0xff]
  %v4092 = vld [vmem:[%s3 + $0x600] sm:$0xff]
  %v4093 = vld [vmem:[%s3 + $0x608] sm:$0xff]
  %v4094 = vld [vmem:[%s3 + $0x610] sm:$0xff]
  %v4095 = vld [vmem:[%s3 + $0x618] sm:$0xff]
  %v4096 = vld [vmem:[%s3 + $0x620] sm:$0xff]
  %v4097 = vld [vmem:[%s3 + $0x628] sm:$0xff]
  %v4098 = vld [vmem:[%s3 + $0x630] sm:$0xff]
  %v4099 = vld [vmem:[%s3 + $0x638] sm:$0xff]
  %v4100 = vld [vmem:[%s3 + $0x640] sm:$0xff]
  %v4101 = vld [vmem:[%s3 + $0x648] sm:$0xff]
  %v4102 = vld [vmem:[%s3 + $0x650] sm:$0xff]
  %v4103 = vld [vmem:[%s3 + $0x658] sm:$0xff]
  %v4104 = vld [vmem:[%s3 + $0x660] sm:$0xff]
  %v4105 = vld [vmem:[%s3 + $0x668] sm:$0xff]
  %v4106 = vld [vmem:[%s3 + $0x670] sm:$0xff]
  %v4107 = vld [vmem:[%s3 + $0x678] sm:$0xff]
  %v4108 = vld [vmem:[%s3 + $0x680] sm:$0xff]
  %v4109 = vld [vmem:[%s3 + $0x688] sm:$0xff]
  %v4110 = vld [vmem:[%s3 + $0x690] sm:$0xff]
  %v4111 = vld [vmem:[%s3 + $0x698] sm:$0xff]
  %v4112 = vld [vmem:[%s3 + $0x6a0] sm:$0xff]
  %v4113 = vld [vmem:[%s3 + $0x6a8] sm:$0xff]
  %v4114 = vld [vmem:[%s3 + $0x6b0] sm:$0xff]
  %v4115 = vld [vmem:[%s3 + $0x6b8] sm:$0xff]
  %v4116 = vld [vmem:[%s3 + $0x6c0] sm:$0xff]
  %v4117 = vld [vmem:[%s3 + $0x6c8] sm:$0xff]
  %v4118 = vld [vmem:[%s3 + $0x6d0] sm:$0xff]
  %v4119 = vld [vmem:[%s3 + $0x6d8] sm:$0xff]
  %v4120 = vld [vmem:[%s3 + $0x6e0] sm:$0xff]
  %v4121 = vld [vmem:[%s3 + $0x6e8] sm:$0xff]
  %v4122 = vld [vmem:[%s3 + $0x6f0] sm:$0xff]
  %v4123 = vld [vmem:[%s3 + $0x6f8] sm:$0xff]
  %v4124 = vld [vmem:[%s3 + $0x700] sm:$0xff]
  %v4125 = vld [vmem:[%s3 + $0x708] sm:$0xff]
  %v4126 = vld [vmem:[%s3 + $0x710] sm:$0xff]
  %v4127 = vld [vmem:[%s3 + $0x718] sm:$0xff]
  %v4128 = vld [vmem:[%s3 + $0x720] sm:$0xff]
  %v4129 = vld [vmem:[%s3 + $0x728] sm:$0xff]
  %v4130 = vld [vmem:[%s3 + $0x730] sm:$0xff]
  %v4131 = vld [vmem:[%s3 + $0x738] sm:$0xff]
  %v4132 = vld [vmem:[%s3 + $0x740] sm:$0xff]
  %v4133 = vld [vmem:[%s3 + $0x748] sm:$0xff]
  %v4134 = vld [vmem:[%s3 + $0x750] sm:$0xff]
  %v4135 = vld [vmem:[%s3 + $0x758] sm:$0xff]
  %v4136 = vld [vmem:[%s3 + $0x760] sm:$0xff]
  %v4137 = vld [vmem:[%s3 + $0x768] sm:$0xff]
  %v4138 = vld [vmem:[%s3 + $0x770] sm:$0xff]
  %v4139 = vld [vmem:[%s3 + $0x778] sm:$0xff]
  %v4140 = vld [vmem:[%s3 + $0x780] sm:$0xff]
  %v4141 = vld [vmem:[%s3 + $0x788] sm:$0xff]
  %v4142 = vld [vmem:[%s3 + $0x790] sm:$0xff]
  %v4143 = vld [vmem:[%s3 + $0x798] sm:$0xff]
  %v4144 = vld [vmem:[%s3 + $0x7a0] sm:$0xff]
  %v4145 = vld [vmem:[%s3 + $0x7a8] sm:$0xff]
  %v4146 = vld [vmem:[%s3 + $0x7b0] sm:$0xff]
  %v4147 = vld [vmem:[%s3 + $0x7b8] sm:$0xff]
  %v4148 = vld [vmem:[%s3 + $0x7c0] sm:$0xff]
  %v4149 = vld [vmem:[%s3 + $0x7c8] sm:$0xff]
  %v4150 = vld [vmem:[%s3 + $0x7d0] sm:$0xff]
  %v4151 = vld [vmem:[%s3 + $0x7d8] sm:$0xff]
  %v4152 = vld [vmem:[%s3 + $0x7e0] sm:$0xff]
  %v4153 = vld [vmem:[%s3 + $0x7e8] sm:$0xff]
  %v4154 = vld [vmem:[%s3 + $0x7f0] sm:$0xff]
  %v4155 = vld [vmem:[%s3 + $0x7f8] sm:$0xff]
  %v4156 = vld [vmem:[%s4] sm:$0xf]
  %v4158 = vlaneseq
  %v4159 = vshrl.u32 %v4158, 7
  %v4160 = vsub.s32 0, %v4159
  %v4161 = vrot.slane %v4156, %v4160
  %v4162 = vlaneseq
  %v4163 = vshrl.u32 %v4162, 7
  %v4164 = vsub.s32 1, %v4163
  %v4165 = vrot.slane %v4156, %v4164
  %v4166 = vlaneseq
  %v4167 = vshrl.u32 %v4166, 7
  %v4168 = vsub.s32 2, %v4167
  %v4169 = vrot.slane %v4156, %v4168
  %v4170 = vlaneseq
  %v4171 = vshrl.u32 %v4170, 7
  %v4172 = vsub.s32 3, %v4171
  %v4173 = vrot.slane %v4156, %v4172
  %v4434 = vunpack.c.l.b16 %v3900
  %v4435 = vunpack.c.h.b16 %v3900
  %v4436 = vunpack.c.l.b16 %v3901
  %v4437 = vunpack.c.h.b16 %v3901
  %v4438 = vunpack.c.l.b16 %v3902
  %v4439 = vunpack.c.h.b16 %v3902
  %v4440 = vunpack.c.l.b16 %v3903
  %v4441 = vunpack.c.h.b16 %v3903
  %v4442 = vunpack.c.l.b16 %v3904
  %v4443 = vunpack.c.h.b16 %v3904
  %v4444 = vunpack.c.l.b16 %v3905
  %v4445 = vunpack.c.h.b16 %v3905
  %v4446 = vunpack.c.l.b16 %v3906
  %v4447 = vunpack.c.h.b16 %v3906
  %v4448 = vunpack.c.l.b16 %v3907
  %v4449 = vunpack.c.h.b16 %v3907
  %v4450 = vunpack.c.l.b16 %v3908
  %v4451 = vunpack.c.h.b16 %v3908
  %v4452 = vunpack.c.l.b16 %v3909
  %v4453 = vunpack.c.h.b16 %v3909
  %v4454 = vunpack.c.l.b16 %v3910
  %v4455 = vunpack.c.h.b16 %v3910
  %v4456 = vunpack.c.l.b16 %v3911
  %v4457 = vunpack.c.h.b16 %v3911
  %v4458 = vunpack.c.l.b16 %v3912
  %v4459 = vunpack.c.h.b16 %v3912
  %v4460 = vunpack.c.l.b16 %v3913
  %v4461 = vunpack.c.h.b16 %v3913
  %v4462 = vunpack.c.l.b16 %v3914
  %v4463 = vunpack.c.h.b16 %v3914
  %v4464 = vunpack.c.l.b16 %v3915
  %v4465 = vunpack.c.h.b16 %v3915
  %v4466 = vunpack.c.l.b16 %v3916
  %v4467 = vunpack.c.h.b16 %v3916
  %v4468 = vunpack.c.l.b16 %v3917
  %v4469 = vunpack.c.h.b16 %v3917
  %v4470 = vunpack.c.l.b16 %v3918
  %v4471 = vunpack.c.h.b16 %v3918
  %v4472 = vunpack.c.l.b16 %v3919
  %v4473 = vunpack.c.h.b16 %v3919
  %v4474 = vunpack.c.l.b16 %v3920
  %v4475 = vunpack.c.h.b16 %v3920
  %v4476 = vunpack.c.l.b16 %v3921
  %v4477 = vunpack.c.h.b16 %v3921
  %v4478 = vunpack.c.l.b16 %v3922
  %v4479 = vunpack.c.h.b16 %v3922
  %v4480 = vunpack.c.l.b16 %v3923
  %v4481 = vunpack.c.h.b16 %v3923
  %v4482 = vunpack.c.l.b16 %v3924
  %v4483 = vunpack.c.h.b16 %v3924
  %v4484 = vunpack.c.l.b16 %v3925
  %v4485 = vunpack.c.h.b16 %v3925
  %v4486 = vunpack.c.l.b16 %v3926
  %v4487 = vunpack.c.h.b16 %v3926
  %v4488 = vunpack.c.l.b16 %v3927
  %v4489 = vunpack.c.h.b16 %v3927
  %v4490 = vunpack.c.l.b16 %v3928
  %v4491 = vunpack.c.h.b16 %v3928
  %v4492 = vunpack.c.l.b16 %v3929
  %v4493 = vunpack.c.h.b16 %v3929
  %v4494 = vunpack.c.l.b16 %v3930
  %v4495 = vunpack.c.h.b16 %v3930
  %v4496 = vunpack.c.l.b16 %v3931
  %v4497 = vunpack.c.h.b16 %v3931
  %v4498 = vunpack.c.l.b16 %v3932
  %v4499 = vunpack.c.h.b16 %v3932
  %v4500 = vunpack.c.l.b16 %v3933
  %v4501 = vunpack.c.h.b16 %v3933
  %v4502 = vunpack.c.l.b16 %v3934
  %v4503 = vunpack.c.h.b16 %v3934
  %v4504 = vunpack.c.l.b16 %v3935
  %v4505 = vunpack.c.h.b16 %v3935
  %v4506 = vunpack.c.l.b16 %v3936
  %v4507 = vunpack.c.h.b16 %v3936
  %v4508 = vunpack.c.l.b16 %v3937
  %v4509 = vunpack.c.h.b16 %v3937
  %v4510 = vunpack.c.l.b16 %v3938
  %v4511 = vunpack.c.h.b16 %v3938
  %v4512 = vunpack.c.l.b16 %v3939
  %v4513 = vunpack.c.h.b16 %v3939
  %v4514 = vunpack.c.l.b16 %v3940
  %v4515 = vunpack.c.h.b16 %v3940
  %v4516 = vunpack.c.l.b16 %v3941
  %v4517 = vunpack.c.h.b16 %v3941
  %v4518 = vunpack.c.l.b16 %v3942
  %v4519 = vunpack.c.h.b16 %v3942
  %v4520 = vunpack.c.l.b16 %v3943
  %v4521 = vunpack.c.h.b16 %v3943
  %v4522 = vunpack.c.l.b16 %v3944
  %v4523 = vunpack.c.h.b16 %v3944
  %v4524 = vunpack.c.l.b16 %v3945
  %v4525 = vunpack.c.h.b16 %v3945
  %v4526 = vunpack.c.l.b16 %v3946
  %v4527 = vunpack.c.h.b16 %v3946
  %v4528 = vunpack.c.l.b16 %v3947
  %v4529 = vunpack.c.h.b16 %v3947
  %v4530 = vunpack.c.l.b16 %v3948
  %v4531 = vunpack.c.h.b16 %v3948
  %v4532 = vunpack.c.l.b16 %v3949
  %v4533 = vunpack.c.h.b16 %v3949
  %v4534 = vunpack.c.l.b16 %v3950
  %v4535 = vunpack.c.h.b16 %v3950
  %v4536 = vunpack.c.l.b16 %v3951
  %v4537 = vunpack.c.h.b16 %v3951
  %v4538 = vunpack.c.l.b16 %v3952
  %v4539 = vunpack.c.h.b16 %v3952
  %v4540 = vunpack.c.l.b16 %v3953
  %v4541 = vunpack.c.h.b16 %v3953
  %v4542 = vunpack.c.l.b16 %v3954
  %v4543 = vunpack.c.h.b16 %v3954
  %v4544 = vunpack.c.l.b16 %v3955
  %v4545 = vunpack.c.h.b16 %v3955
  %v4546 = vunpack.c.l.b16 %v3956
  %v4547 = vunpack.c.h.b16 %v3956
  %v4548 = vunpack.c.l.b16 %v3957
  %v4549 = vunpack.c.h.b16 %v3957
  %v4550 = vunpack.c.l.b16 %v3958
  %v4551 = vunpack.c.h.b16 %v3958
  %v4552 = vunpack.c.l.b16 %v3959
  %v4553 = vunpack.c.h.b16 %v3959
  %v4554 = vunpack.c.l.b16 %v3960
  %v4555 = vunpack.c.h.b16 %v3960
  %v4556 = vunpack.c.l.b16 %v3961
  %v4557 = vunpack.c.h.b16 %v3961
  %v4558 = vunpack.c.l.b16 %v3962
  %v4559 = vunpack.c.h.b16 %v3962
  %v4560 = vunpack.c.l.b16 %v3963
  %v4561 = vunpack.c.h.b16 %v3963
  %v4562 = vunpack.c.l.b16 %v3964
  %v4563 = vunpack.c.h.b16 %v3964
  %v4564 = vunpack.c.l.b16 %v3965
  %v4565 = vunpack.c.h.b16 %v3965
  %v4566 = vunpack.c.l.b16 %v3966
  %v4567 = vunpack.c.h.b16 %v3966
  %v4568 = vunpack.c.l.b16 %v3967
  %v4569 = vunpack.c.h.b16 %v3967
  %v4570 = vunpack.c.l.b16 %v3968
  %v4571 = vunpack.c.h.b16 %v3968
  %v4572 = vunpack.c.l.b16 %v3969
  %v4573 = vunpack.c.h.b16 %v3969
  %v4574 = vunpack.c.l.b16 %v3970
  %v4575 = vunpack.c.h.b16 %v3970
  %v4576 = vunpack.c.l.b16 %v3971
  %v4577 = vunpack.c.h.b16 %v3971
  %v4578 = vunpack.c.l.b16 %v3972
  %v4579 = vunpack.c.h.b16 %v3972
  %v4580 = vunpack.c.l.b16 %v3973
  %v4581 = vunpack.c.h.b16 %v3973
  %v4582 = vunpack.c.l.b16 %v3974
  %v4583 = vunpack.c.h.b16 %v3974
  %v4584 = vunpack.c.l.b16 %v3975
  %v4585 = vunpack.c.h.b16 %v3975
  %v4586 = vunpack.c.l.b16 %v3976
  %v4587 = vunpack.c.h.b16 %v3976
  %v4588 = vunpack.c.l.b16 %v3977
  %v4589 = vunpack.c.h.b16 %v3977
  %v4590 = vunpack.c.l.b16 %v3978
  %v4591 = vunpack.c.h.b16 %v3978
  %v4592 = vunpack.c.l.b16 %v3979
  %v4593 = vunpack.c.h.b16 %v3979
  %v4594 = vunpack.c.l.b16 %v3980
  %v4595 = vunpack.c.h.b16 %v3980
  %v4596 = vunpack.c.l.b16 %v3981
  %v4597 = vunpack.c.h.b16 %v3981
  %v4598 = vunpack.c.l.b16 %v3982
  %v4599 = vunpack.c.h.b16 %v3982
  %v4600 = vunpack.c.l.b16 %v3983
  %v4601 = vunpack.c.h.b16 %v3983
  %v4602 = vunpack.c.l.b16 %v3984
  %v4603 = vunpack.c.h.b16 %v3984
  %v4604 = vunpack.c.l.b16 %v3985
  %v4605 = vunpack.c.h.b16 %v3985
  %v4606 = vunpack.c.l.b16 %v3986
  %v4607 = vunpack.c.h.b16 %v3986
  %v4608 = vunpack.c.l.b16 %v3987
  %v4609 = vunpack.c.h.b16 %v3987
  %v4610 = vunpack.c.l.b16 %v3988
  %v4611 = vunpack.c.h.b16 %v3988
  %v4612 = vunpack.c.l.b16 %v3989
  %v4613 = vunpack.c.h.b16 %v3989
  %v4614 = vunpack.c.l.b16 %v3990
  %v4615 = vunpack.c.h.b16 %v3990
  %v4616 = vunpack.c.l.b16 %v3991
  %v4617 = vunpack.c.h.b16 %v3991
  %v4618 = vunpack.c.l.b16 %v3992
  %v4619 = vunpack.c.h.b16 %v3992
  %v4620 = vunpack.c.l.b16 %v3993
  %v4621 = vunpack.c.h.b16 %v3993
  %v4622 = vunpack.c.l.b16 %v3994
  %v4623 = vunpack.c.h.b16 %v3994
  %v4624 = vunpack.c.l.b16 %v3995
  %v4625 = vunpack.c.h.b16 %v3995
  %v4626 = vunpack.c.l.b16 %v3996
  %v4627 = vunpack.c.h.b16 %v3996
  %v4628 = vunpack.c.l.b16 %v3997
  %v4629 = vunpack.c.h.b16 %v3997
  %v4630 = vunpack.c.l.b16 %v3998
  %v4631 = vunpack.c.h.b16 %v3998
  %v4632 = vunpack.c.l.b16 %v3999
  %v4633 = vunpack.c.h.b16 %v3999
  %v4634 = vunpack.c.l.b16 %v4000
  %v4635 = vunpack.c.h.b16 %v4000
  %v4636 = vunpack.c.l.b16 %v4001
  %v4637 = vunpack.c.h.b16 %v4001
  %v4638 = vunpack.c.l.b16 %v4002
  %v4639 = vunpack.c.h.b16 %v4002
  %v4640 = vunpack.c.l.b16 %v4003
  %v4641 = vunpack.c.h.b16 %v4003
  %v4642 = vunpack.c.l.b16 %v4004
  %v4643 = vunpack.c.h.b16 %v4004
  %v4644 = vunpack.c.l.b16 %v4005
  %v4645 = vunpack.c.h.b16 %v4005
  %v4646 = vunpack.c.l.b16 %v4006
  %v4647 = vunpack.c.h.b16 %v4006
  %v4648 = vunpack.c.l.b16 %v4007
  %v4649 = vunpack.c.h.b16 %v4007
  %v4650 = vunpack.c.l.b16 %v4008
  %v4651 = vunpack.c.h.b16 %v4008
  %v4652 = vunpack.c.l.b16 %v4009
  %v4653 = vunpack.c.h.b16 %v4009
  %v4654 = vunpack.c.l.b16 %v4010
  %v4655 = vunpack.c.h.b16 %v4010
  %v4656 = vunpack.c.l.b16 %v4011
  %v4657 = vunpack.c.h.b16 %v4011
  %v4658 = vunpack.c.l.b16 %v4012
  %v4659 = vunpack.c.h.b16 %v4012
  %v4660 = vunpack.c.l.b16 %v4013
  %v4661 = vunpack.c.h.b16 %v4013
  %v4662 = vunpack.c.l.b16 %v4014
  %v4663 = vunpack.c.h.b16 %v4014
  %v4664 = vunpack.c.l.b16 %v4015
  %v4665 = vunpack.c.h.b16 %v4015
  %v4666 = vunpack.c.l.b16 %v4016
  %v4667 = vunpack.c.h.b16 %v4016
  %v4668 = vunpack.c.l.b16 %v4017
  %v4669 = vunpack.c.h.b16 %v4017
  %v4670 = vunpack.c.l.b16 %v4018
  %v4671 = vunpack.c.h.b16 %v4018
  %v4672 = vunpack.c.l.b16 %v4019
  %v4673 = vunpack.c.h.b16 %v4019
  %v4674 = vunpack.c.l.b16 %v4020
  %v4675 = vunpack.c.h.b16 %v4020
  %v4676 = vunpack.c.l.b16 %v4021
  %v4677 = vunpack.c.h.b16 %v4021
  %v4678 = vunpack.c.l.b16 %v4022
  %v4679 = vunpack.c.h.b16 %v4022
  %v4680 = vunpack.c.l.b16 %v4023
  %v4681 = vunpack.c.h.b16 %v4023
  %v4682 = vunpack.c.l.b16 %v4024
  %v4683 = vunpack.c.h.b16 %v4024
  %v4684 = vunpack.c.l.b16 %v4025
  %v4685 = vunpack.c.h.b16 %v4025
  %v4686 = vunpack.c.l.b16 %v4026
  %v4687 = vunpack.c.h.b16 %v4026
  %v4688 = vunpack.c.l.b16 %v4027
  %v4689 = vunpack.c.h.b16 %v4027
  %v4690 = vunpack.c.l.b16 %v4028
  %v4691 = vunpack.c.h.b16 %v4028
  %v4692 = vunpack.c.l.b16 %v4029
  %v4693 = vunpack.c.h.b16 %v4029
  %v4694 = vunpack.c.l.b16 %v4030
  %v4695 = vunpack.c.h.b16 %v4030
  %v4696 = vunpack.c.l.b16 %v4031
  %v4697 = vunpack.c.h.b16 %v4031
  %v4698 = vunpack.c.l.b16 %v4032
  %v4699 = vunpack.c.h.b16 %v4032
  %v4700 = vunpack.c.l.b16 %v4033
  %v4701 = vunpack.c.h.b16 %v4033
  %v4702 = vunpack.c.l.b16 %v4034
  %v4703 = vunpack.c.h.b16 %v4034
  %v4704 = vunpack.c.l.b16 %v4035
  %v4705 = vunpack.c.h.b16 %v4035
  %v4706 = vunpack.c.l.b16 %v4036
  %v4707 = vunpack.c.h.b16 %v4036
  %v4708 = vunpack.c.l.b16 %v4037
  %v4709 = vunpack.c.h.b16 %v4037
  %v4710 = vunpack.c.l.b16 %v4038
  %v4711 = vunpack.c.h.b16 %v4038
  %v4712 = vunpack.c.l.b16 %v4039
  %v4713 = vunpack.c.h.b16 %v4039
  %v4714 = vunpack.c.l.b16 %v4040
  %v4715 = vunpack.c.h.b16 %v4040
  %v4716 = vunpack.c.l.b16 %v4041
  %v4717 = vunpack.c.h.b16 %v4041
  %v4718 = vunpack.c.l.b16 %v4042
  %v4719 = vunpack.c.h.b16 %v4042
  %v4720 = vunpack.c.l.b16 %v4043
  %v4721 = vunpack.c.h.b16 %v4043
  %v4722 = vunpack.c.l.b16 %v4044
  %v4723 = vunpack.c.h.b16 %v4044
  %v4724 = vunpack.c.l.b16 %v4045
  %v4725 = vunpack.c.h.b16 %v4045
  %v4726 = vunpack.c.l.b16 %v4046
  %v4727 = vunpack.c.h.b16 %v4046
  %v4728 = vunpack.c.l.b16 %v4047
  %v4729 = vunpack.c.h.b16 %v4047
  %v4730 = vunpack.c.l.b16 %v4048
  %v4731 = vunpack.c.h.b16 %v4048
  %v4732 = vunpack.c.l.b16 %v4049
  %v4733 = vunpack.c.h.b16 %v4049
  %v4734 = vunpack.c.l.b16 %v4050
  %v4735 = vunpack.c.h.b16 %v4050
  %v4736 = vunpack.c.l.b16 %v4051
  %v4737 = vunpack.c.h.b16 %v4051
  %v4738 = vunpack.c.l.b16 %v4052
  %v4739 = vunpack.c.h.b16 %v4052
  %v4740 = vunpack.c.l.b16 %v4053
  %v4741 = vunpack.c.h.b16 %v4053
  %v4742 = vunpack.c.l.b16 %v4054
  %v4743 = vunpack.c.h.b16 %v4054
  %v4744 = vunpack.c.l.b16 %v4055
  %v4745 = vunpack.c.h.b16 %v4055
  %v4746 = vunpack.c.l.b16 %v4056
  %v4747 = vunpack.c.h.b16 %v4056
  %v4748 = vunpack.c.l.b16 %v4057
  %v4749 = vunpack.c.h.b16 %v4057
  %v4750 = vunpack.c.l.b16 %v4058
  %v4751 = vunpack.c.h.b16 %v4058
  %v4752 = vunpack.c.l.b16 %v4059
  %v4753 = vunpack.c.h.b16 %v4059
  %v4754 = vunpack.c.l.b16 %v4060
  %v4755 = vunpack.c.h.b16 %v4060
  %v4756 = vunpack.c.l.b16 %v4061
  %v4757 = vunpack.c.h.b16 %v4061
  %v4758 = vunpack.c.l.b16 %v4062
  %v4759 = vunpack.c.h.b16 %v4062
  %v4760 = vunpack.c.l.b16 %v4063
  %v4761 = vunpack.c.h.b16 %v4063
  %v4762 = vunpack.c.l.b16 %v4064
  %v4763 = vunpack.c.h.b16 %v4064
  %v4764 = vunpack.c.l.b16 %v4065
  %v4765 = vunpack.c.h.b16 %v4065
  %v4766 = vunpack.c.l.b16 %v4066
  %v4767 = vunpack.c.h.b16 %v4066
  %v4768 = vunpack.c.l.b16 %v4067
  %v4769 = vunpack.c.h.b16 %v4067
  %v4770 = vunpack.c.l.b16 %v4068
  %v4771 = vunpack.c.h.b16 %v4068
  %v4772 = vunpack.c.l.b16 %v4069
  %v4773 = vunpack.c.h.b16 %v4069
  %v4774 = vunpack.c.l.b16 %v4070
  %v4775 = vunpack.c.h.b16 %v4070
  %v4776 = vunpack.c.l.b16 %v4071
  %v4777 = vunpack.c.h.b16 %v4071
  %v4778 = vunpack.c.l.b16 %v4072
  %v4779 = vunpack.c.h.b16 %v4072
  %v4780 = vunpack.c.l.b16 %v4073
  %v4781 = vunpack.c.h.b16 %v4073
  %v4782 = vunpack.c.l.b16 %v4074
  %v4783 = vunpack.c.h.b16 %v4074
  %v4784 = vunpack.c.l.b16 %v4075
  %v4785 = vunpack.c.h.b16 %v4075
  %v4786 = vunpack.c.l.b16 %v4076
  %v4787 = vunpack.c.h.b16 %v4076
  %v4788 = vunpack.c.l.b16 %v4077
  %v4789 = vunpack.c.h.b16 %v4077
  %v4790 = vunpack.c.l.b16 %v4078
  %v4791 = vunpack.c.h.b16 %v4078
  %v4792 = vunpack.c.l.b16 %v4079
  %v4793 = vunpack.c.h.b16 %v4079
  %v4794 = vunpack.c.l.b16 %v4080
  %v4795 = vunpack.c.h.b16 %v4080
  %v4796 = vunpack.c.l.b16 %v4081
  %v4797 = vunpack.c.h.b16 %v4081
  %v4798 = vunpack.c.l.b16 %v4082
  %v4799 = vunpack.c.h.b16 %v4082
  %v4800 = vunpack.c.l.b16 %v4083
  %v4801 = vunpack.c.h.b16 %v4083
  %v4802 = vunpack.c.l.b16 %v4084
  %v4803 = vunpack.c.h.b16 %v4084
  %v4804 = vunpack.c.l.b16 %v4085
  %v4805 = vunpack.c.h.b16 %v4085
  %v4806 = vunpack.c.l.b16 %v4086
  %v4807 = vunpack.c.h.b16 %v4086
  %v4808 = vunpack.c.l.b16 %v4087
  %v4809 = vunpack.c.h.b16 %v4087
  %v4810 = vunpack.c.l.b16 %v4088
  %v4811 = vunpack.c.h.b16 %v4088
  %v4812 = vunpack.c.l.b16 %v4089
  %v4813 = vunpack.c.h.b16 %v4089
  %v4814 = vunpack.c.l.b16 %v4090
  %v4815 = vunpack.c.h.b16 %v4090
  %v4816 = vunpack.c.l.b16 %v4091
  %v4817 = vunpack.c.h.b16 %v4091
  %v4818 = vunpack.c.l.b16 %v4092
  %v4819 = vunpack.c.h.b16 %v4092
  %v4820 = vunpack.c.l.b16 %v4093
  %v4821 = vunpack.c.h.b16 %v4093
  %v4822 = vunpack.c.l.b16 %v4094
  %v4823 = vunpack.c.h.b16 %v4094
  %v4824 = vunpack.c.l.b16 %v4095
  %v4825 = vunpack.c.h.b16 %v4095
  %v4826 = vunpack.c.l.b16 %v4096
  %v4827 = vunpack.c.h.b16 %v4096
  %v4828 = vunpack.c.l.b16 %v4097
  %v4829 = vunpack.c.h.b16 %v4097
  %v4830 = vunpack.c.l.b16 %v4098
  %v4831 = vunpack.c.h.b16 %v4098
  %v4832 = vunpack.c.l.b16 %v4099
  %v4833 = vunpack.c.h.b16 %v4099
  %v4834 = vunpack.c.l.b16 %v4100
  %v4835 = vunpack.c.h.b16 %v4100
  %v4836 = vunpack.c.l.b16 %v4101
  %v4837 = vunpack.c.h.b16 %v4101
  %v4838 = vunpack.c.l.b16 %v4102
  %v4839 = vunpack.c.h.b16 %v4102
  %v4840 = vunpack.c.l.b16 %v4103
  %v4841 = vunpack.c.h.b16 %v4103
  %v4842 = vunpack.c.l.b16 %v4104
  %v4843 = vunpack.c.h.b16 %v4104
  %v4844 = vunpack.c.l.b16 %v4105
  %v4845 = vunpack.c.h.b16 %v4105
  %v4846 = vunpack.c.l.b16 %v4106
  %v4847 = vunpack.c.h.b16 %v4106
  %v4848 = vunpack.c.l.b16 %v4107
  %v4849 = vunpack.c.h.b16 %v4107
  %v4850 = vunpack.c.l.b16 %v4108
  %v4851 = vunpack.c.h.b16 %v4108
  %v4852 = vunpack.c.l.b16 %v4109
  %v4853 = vunpack.c.h.b16 %v4109
  %v4854 = vunpack.c.l.b16 %v4110
  %v4855 = vunpack.c.h.b16 %v4110
  %v4856 = vunpack.c.l.b16 %v4111
  %v4857 = vunpack.c.h.b16 %v4111
  %v4858 = vunpack.c.l.b16 %v4112
  %v4859 = vunpack.c.h.b16 %v4112
  %v4860 = vunpack.c.l.b16 %v4113
  %v4861 = vunpack.c.h.b16 %v4113
  %v4862 = vunpack.c.l.b16 %v4114
  %v4863 = vunpack.c.h.b16 %v4114
  %v4864 = vunpack.c.l.b16 %v4115
  %v4865 = vunpack.c.h.b16 %v4115
  %v4866 = vunpack.c.l.b16 %v4116
  %v4867 = vunpack.c.h.b16 %v4116
  %v4868 = vunpack.c.l.b16 %v4117
  %v4869 = vunpack.c.h.b16 %v4117
  %v4870 = vunpack.c.l.b16 %v4118
  %v4871 = vunpack.c.h.b16 %v4118
  %v4872 = vunpack.c.l.b16 %v4119
  %v4873 = vunpack.c.h.b16 %v4119
  %v4874 = vunpack.c.l.b16 %v4120
  %v4875 = vunpack.c.h.b16 %v4120
  %v4876 = vunpack.c.l.b16 %v4121
  %v4877 = vunpack.c.h.b16 %v4121
  %v4878 = vunpack.c.l.b16 %v4122
  %v4879 = vunpack.c.h.b16 %v4122
  %v4880 = vunpack.c.l.b16 %v4123
  %v4881 = vunpack.c.h.b16 %v4123
  %v4882 = vunpack.c.l.b16 %v4124
  %v4883 = vunpack.c.h.b16 %v4124
  %v4884 = vunpack.c.l.b16 %v4125
  %v4885 = vunpack.c.h.b16 %v4125
  %v4886 = vunpack.c.l.b16 %v4126
  %v4887 = vunpack.c.h.b16 %v4126
  %v4888 = vunpack.c.l.b16 %v4127
  %v4889 = vunpack.c.h.b16 %v4127
  %v4890 = vunpack.c.l.b16 %v4128
  %v4891 = vunpack.c.h.b16 %v4128
  %v4892 = vunpack.c.l.b16 %v4129
  %v4893 = vunpack.c.h.b16 %v4129
  %v4894 = vunpack.c.l.b16 %v4130
  %v4895 = vunpack.c.h.b16 %v4130
  %v4896 = vunpack.c.l.b16 %v4131
  %v4897 = vunpack.c.h.b16 %v4131
  %v4898 = vunpack.c.l.b16 %v4132
  %v4899 = vunpack.c.h.b16 %v4132
  %v4900 = vunpack.c.l.b16 %v4133
  %v4901 = vunpack.c.h.b16 %v4133
  %v4902 = vunpack.c.l.b16 %v4134
  %v4903 = vunpack.c.h.b16 %v4134
  %v4904 = vunpack.c.l.b16 %v4135
  %v4905 = vunpack.c.h.b16 %v4135
  %v4906 = vunpack.c.l.b16 %v4136
  %v4907 = vunpack.c.h.b16 %v4136
  %v4908 = vunpack.c.l.b16 %v4137
  %v4909 = vunpack.c.h.b16 %v4137
  %v4910 = vunpack.c.l.b16 %v4138
  %v4911 = vunpack.c.h.b16 %v4138
  %v4912 = vunpack.c.l.b16 %v4139
  %v4913 = vunpack.c.h.b16 %v4139
  %v4914 = vunpack.c.l.b16 %v4140
  %v4915 = vunpack.c.h.b16 %v4140
  %v4916 = vunpack.c.l.b16 %v4141
  %v4917 = vunpack.c.h.b16 %v4141
  %v4918 = vunpack.c.l.b16 %v4142
  %v4919 = vunpack.c.h.b16 %v4142
  %v4920 = vunpack.c.l.b16 %v4143
  %v4921 = vunpack.c.h.b16 %v4143
  %v4922 = vunpack.c.l.b16 %v4144
  %v4923 = vunpack.c.h.b16 %v4144
  %v4924 = vunpack.c.l.b16 %v4145
  %v4925 = vunpack.c.h.b16 %v4145
  %v4926 = vunpack.c.l.b16 %v4146
  %v4927 = vunpack.c.h.b16 %v4146
  %v4928 = vunpack.c.l.b16 %v4147
  %v4929 = vunpack.c.h.b16 %v4147
  %v4930 = vunpack.c.l.b16 %v4148
  %v4931 = vunpack.c.h.b16 %v4148
  %v4932 = vunpack.c.l.b16 %v4149
  %v4933 = vunpack.c.h.b16 %v4149
  %v4934 = vunpack.c.l.b16 %v4150
  %v4935 = vunpack.c.h.b16 %v4150
  %v4936 = vunpack.c.l.b16 %v4151
  %v4937 = vunpack.c.h.b16 %v4151
  %v4938 = vunpack.c.l.b16 %v4152
  %v4939 = vunpack.c.h.b16 %v4152
  %v4940 = vunpack.c.l.b16 %v4153
  %v4941 = vunpack.c.h.b16 %v4153
  %v4942 = vunpack.c.l.b16 %v4154
  %v4943 = vunpack.c.h.b16 %v4154
  %v4944 = vunpack.c.l.b16 %v4155
  %v4945 = vunpack.c.h.b16 %v4155
  %v4946 = vpack.c.b16 %v4438, %v4434
  %v4947 = vpack.c.b16 %v4439, %v4435
  %v4948 = vpack.c.b16 %v4440, %v4436
  %v4949 = vpack.c.b16 %v4441, %v4437
  %v4950 = vpack.c.b16 %v4446, %v4442
  %v4951 = vpack.c.b16 %v4447, %v4443
  %v4952 = vpack.c.b16 %v4448, %v4444
  %v4953 = vpack.c.b16 %v4449, %v4445
  %v4954 = vpack.c.b16 %v4454, %v4450
  %v4955 = vpack.c.b16 %v4455, %v4451
  %v4956 = vpack.c.b16 %v4456, %v4452
  %v4957 = vpack.c.b16 %v4457, %v4453
  %v4958 = vpack.c.b16 %v4462, %v4458
  %v4959 = vpack.c.b16 %v4463, %v4459
  %v4960 = vpack.c.b16 %v4464, %v4460
  %v4961 = vpack.c.b16 %v4465, %v4461
  %v4962 = vpack.c.b16 %v4470, %v4466
  %v4963 = vpack.c.b16 %v4471, %v4467
  %v4964 = vpack.c.b16 %v4472, %v4468
  %v4965 = vpack.c.b16 %v4473, %v4469
  %v4966 = vpack.c.b16 %v4478, %v4474
  %v4967 = vpack.c.b16 %v4479, %v4475
  %v4968 = vpack.c.b16 %v4480, %v4476
  %v4969 = vpack.c.b16 %v4481, %v4477
  %v4970 = vpack.c.b16 %v4486, %v4482
  %v4971 = vpack.c.b16 %v4487, %v4483
  %v4972 = vpack.c.b16 %v4488, %v4484
  %v4973 = vpack.c.b16 %v4489, %v4485
  %v4974 = vpack.c.b16 %v4494, %v4490
  %v4975 = vpack.c.b16 %v4495, %v4491
  %v4976 = vpack.c.b16 %v4496, %v4492
  %v4977 = vpack.c.b16 %v4497, %v4493
  %v4978 = vpack.c.b16 %v4502, %v4498
  %v4979 = vpack.c.b16 %v4503, %v4499
  %v4980 = vpack.c.b16 %v4504, %v4500
  %v4981 = vpack.c.b16 %v4505, %v4501
  %v4982 = vpack.c.b16 %v4510, %v4506
  %v4983 = vpack.c.b16 %v4511, %v4507
  %v4984 = vpack.c.b16 %v4512, %v4508
  %v4985 = vpack.c.b16 %v4513, %v4509
  %v4986 = vpack.c.b16 %v4518, %v4514
  %v4987 = vpack.c.b16 %v4519, %v4515
  %v4988 = vpack.c.b16 %v4520, %v4516
  %v4989 = vpack.c.b16 %v4521, %v4517
  %v4990 = vpack.c.b16 %v4526, %v4522
  %v4991 = vpack.c.b16 %v4527, %v4523
  %v4992 = vpack.c.b16 %v4528, %v4524
  %v4993 = vpack.c.b16 %v4529, %v4525
  %v4994 = vpack.c.b16 %v4534, %v4530
  %v4995 = vpack.c.b16 %v4535, %v4531
  %v4996 = vpack.c.b16 %v4536, %v4532
  %v4997 = vpack.c.b16 %v4537, %v4533
  %v4998 = vpack.c.b16 %v4542, %v4538
  %v4999 = vpack.c.b16 %v4543, %v4539
  %v5000 = vpack.c.b16 %v4544, %v4540
  %v5001 = vpack.c.b16 %v4545, %v4541
  %v5002 = vpack.c.b16 %v4550, %v4546
  %v5003 = vpack.c.b16 %v4551, %v4547
  %v5004 = vpack.c.b16 %v4552, %v4548
  %v5005 = vpack.c.b16 %v4553, %v4549
  %v5006 = vpack.c.b16 %v4558, %v4554
  %v5007 = vpack.c.b16 %v4559, %v4555
  %v5008 = vpack.c.b16 %v4560, %v4556
  %v5009 = vpack.c.b16 %v4561, %v4557
  %v5010 = vpack.c.b16 %v4566, %v4562
  %v5011 = vpack.c.b16 %v4567, %v4563
  %v5012 = vpack.c.b16 %v4568, %v4564
  %v5013 = vpack.c.b16 %v4569, %v4565
  %v5014 = vpack.c.b16 %v4574, %v4570
  %v5015 = vpack.c.b16 %v4575, %v4571
  %v5016 = vpack.c.b16 %v4576, %v4572
  %v5017 = vpack.c.b16 %v4577, %v4573
  %v5018 = vpack.c.b16 %v4582, %v4578
  %v5019 = vpack.c.b16 %v4583, %v4579
  %v5020 = vpack.c.b16 %v4584, %v4580
  %v5021 = vpack.c.b16 %v4585, %v4581
  %v5022 = vpack.c.b16 %v4590, %v4586
  %v5023 = vpack.c.b16 %v4591, %v4587
  %v5024 = vpack.c.b16 %v4592, %v4588
  %v5025 = vpack.c.b16 %v4593, %v4589
  %v5026 = vpack.c.b16 %v4598, %v4594
  %v5027 = vpack.c.b16 %v4599, %v4595
  %v5028 = vpack.c.b16 %v4600, %v4596
  %v5029 = vpack.c.b16 %v4601, %v4597
  %v5030 = vpack.c.b16 %v4606, %v4602
  %v5031 = vpack.c.b16 %v4607, %v4603
  %v5032 = vpack.c.b16 %v4608, %v4604
  %v5033 = vpack.c.b16 %v4609, %v4605
  %v5034 = vpack.c.b16 %v4614, %v4610
  %v5035 = vpack.c.b16 %v4615, %v4611
  %v5036 = vpack.c.b16 %v4616, %v4612
  %v5037 = vpack.c.b16 %v4617, %v4613
  %v5038 = vpack.c.b16 %v4622, %v4618
  %v5039 = vpack.c.b16 %v4623, %v4619
  %v5040 = vpack.c.b16 %v4624, %v4620
  %v5041 = vpack.c.b16 %v4625, %v4621
  %v5042 = vpack.c.b16 %v4630, %v4626
  %v5043 = vpack.c.b16 %v4631, %v4627
  %v5044 = vpack.c.b16 %v4632, %v4628
  %v5045 = vpack.c.b16 %v4633, %v4629
  %v5046 = vpack.c.b16 %v4638, %v4634
  %v5047 = vpack.c.b16 %v4639, %v4635
  %v5048 = vpack.c.b16 %v4640, %v4636
  %v5049 = vpack.c.b16 %v4641, %v4637
  %v5050 = vpack.c.b16 %v4646, %v4642
  %v5051 = vpack.c.b16 %v4647, %v4643
  %v5052 = vpack.c.b16 %v4648, %v4644
  %v5053 = vpack.c.b16 %v4649, %v4645
  %v5054 = vpack.c.b16 %v4654, %v4650
  %v5055 = vpack.c.b16 %v4655, %v4651
  %v5056 = vpack.c.b16 %v4656, %v4652
  %v5057 = vpack.c.b16 %v4657, %v4653
  %v5058 = vpack.c.b16 %v4662, %v4658
  %v5059 = vpack.c.b16 %v4663, %v4659
  %v5060 = vpack.c.b16 %v4664, %v4660
  %v5061 = vpack.c.b16 %v4665, %v4661
  %v5062 = vpack.c.b16 %v4670, %v4666
  %v5063 = vpack.c.b16 %v4671, %v4667
  %v5064 = vpack.c.b16 %v4672, %v4668
  %v5065 = vpack.c.b16 %v4673, %v4669
  %v5066 = vpack.c.b16 %v4678, %v4674
  %v5067 = vpack.c.b16 %v4679, %v4675
  %v5068 = vpack.c.b16 %v4680, %v4676
  %v5069 = vpack.c.b16 %v4681, %v4677
  %v5070 = vpack.c.b16 %v4686, %v4682
  %v5071 = vpack.c.b16 %v4687, %v4683
  %v5072 = vpack.c.b16 %v4688, %v4684
  %v5073 = vpack.c.b16 %v4689, %v4685
  %v5074 = vpack.c.b16 %v4694, %v4690
  %v5075 = vpack.c.b16 %v4695, %v4691
  %v5076 = vpack.c.b16 %v4696, %v4692
  %v5077 = vpack.c.b16 %v4697, %v4693
  %v5078 = vpack.c.b16 %v4702, %v4698
  %v5079 = vpack.c.b16 %v4703, %v4699
  %v5080 = vpack.c.b16 %v4704, %v4700
  %v5081 = vpack.c.b16 %v4705, %v4701
  %v5082 = vpack.c.b16 %v4710, %v4706
  %v5083 = vpack.c.b16 %v4711, %v4707
  %v5084 = vpack.c.b16 %v4712, %v4708
  %v5085 = vpack.c.b16 %v4713, %v4709
  %v5086 = vpack.c.b16 %v4718, %v4714
  %v5087 = vpack.c.b16 %v4719, %v4715
  %v5088 = vpack.c.b16 %v4720, %v4716
  %v5089 = vpack.c.b16 %v4721, %v4717
  %v5090 = vpack.c.b16 %v4726, %v4722
  %v5091 = vpack.c.b16 %v4727, %v4723
  %v5092 = vpack.c.b16 %v4728, %v4724
  %v5093 = vpack.c.b16 %v4729, %v4725
  %v5094 = vpack.c.b16 %v4734, %v4730
  %v5095 = vpack.c.b16 %v4735, %v4731
  %v5096 = vpack.c.b16 %v4736, %v4732
  %v5097 = vpack.c.b16 %v4737, %v4733
  %v5098 = vpack.c.b16 %v4742, %v4738
  %v5099 = vpack.c.b16 %v4743, %v4739
  %v5100 = vpack.c.b16 %v4744, %v4740
  %v5101 = vpack.c.b16 %v4745, %v4741
  %v5102 = vpack.c.b16 %v4750, %v4746
  %v5103 = vpack.c.b16 %v4751, %v4747
  %v5104 = vpack.c.b16 %v4752, %v4748
  %v5105 = vpack.c.b16 %v4753, %v4749
  %v5106 = vpack.c.b16 %v4758, %v4754
  %v5107 = vpack.c.b16 %v4759, %v4755
  %v5108 = vpack.c.b16 %v4760, %v4756
  %v5109 = vpack.c.b16 %v4761, %v4757
  %v5110 = vpack.c.b16 %v4766, %v4762
  %v5111 = vpack.c.b16 %v4767, %v4763
  %v5112 = vpack.c.b16 %v4768, %v4764
  %v5113 = vpack.c.b16 %v4769, %v4765
  %v5114 = vpack.c.b16 %v4774, %v4770
  %v5115 = vpack.c.b16 %v4775, %v4771
  %v5116 = vpack.c.b16 %v4776, %v4772
  %v5117 = vpack.c.b16 %v4777, %v4773
  %v5118 = vpack.c.b16 %v4782, %v4778
  %v5119 = vpack.c.b16 %v4783, %v4779
  %v5120 = vpack.c.b16 %v4784, %v4780
  %v5121 = vpack.c.b16 %v4785, %v4781
  %v5122 = vpack.c.b16 %v4790, %v4786
  %v5123 = vpack.c.b16 %v4791, %v4787
  %v5124 = vpack.c.b16 %v4792, %v4788
  %v5125 = vpack.c.b16 %v4793, %v4789
  %v5126 = vpack.c.b16 %v4798, %v4794
  %v5127 = vpack.c.b16 %v4799, %v4795
  %v5128 = vpack.c.b16 %v4800, %v4796
  %v5129 = vpack.c.b16 %v4801, %v4797
  %v5130 = vpack.c.b16 %v4806, %v4802
  %v5131 = vpack.c.b16 %v4807, %v4803
  %v5132 = vpack.c.b16 %v4808, %v4804
  %v5133 = vpack.c.b16 %v4809, %v4805
  %v5134 = vpack.c.b16 %v4814, %v4810
  %v5135 = vpack.c.b16 %v4815, %v4811
  %v5136 = vpack.c.b16 %v4816, %v4812
  %v5137 = vpack.c.b16 %v4817, %v4813
  %v5138 = vpack.c.b16 %v4822, %v4818
  %v5139 = vpack.c.b16 %v4823, %v4819
  %v5140 = vpack.c.b16 %v4824, %v4820
  %v5141 = vpack.c.b16 %v4825, %v4821
  %v5142 = vpack.c.b16 %v4830, %v4826
  %v5143 = vpack.c.b16 %v4831, %v4827
  %v5144 = vpack.c.b16 %v4832, %v4828
  %v5145 = vpack.c.b16 %v4833, %v4829
  %v5146 = vpack.c.b16 %v4838, %v4834
  %v5147 = vpack.c.b16 %v4839, %v4835
  %v5148 = vpack.c.b16 %v4840, %v4836
  %v5149 = vpack.c.b16 %v4841, %v4837
  %v5150 = vpack.c.b16 %v4846, %v4842
  %v5151 = vpack.c.b16 %v4847, %v4843
  %v5152 = vpack.c.b16 %v4848, %v4844
  %v5153 = vpack.c.b16 %v4849, %v4845
  %v5154 = vpack.c.b16 %v4854, %v4850
  %v5155 = vpack.c.b16 %v4855, %v4851
  %v5156 = vpack.c.b16 %v4856, %v4852
  %v5157 = vpack.c.b16 %v4857, %v4853
  %v5158 = vpack.c.b16 %v4862, %v4858
  %v5159 = vpack.c.b16 %v4863, %v4859
  %v5160 = vpack.c.b16 %v4864, %v4860
  %v5161 = vpack.c.b16 %v4865, %v4861
  %v5162 = vpack.c.b16 %v4870, %v4866
  %v5163 = vpack.c.b16 %v4871, %v4867
  %v5164 = vpack.c.b16 %v4872, %v4868
  %v5165 = vpack.c.b16 %v4873, %v4869
  %v5166 = vpack.c.b16 %v4878, %v4874
  %v5167 = vpack.c.b16 %v4879, %v4875
  %v5168 = vpack.c.b16 %v4880, %v4876
  %v5169 = vpack.c.b16 %v4881, %v4877
  %v5170 = vpack.c.b16 %v4886, %v4882
  %v5171 = vpack.c.b16 %v4887, %v4883
  %v5172 = vpack.c.b16 %v4888, %v4884
  %v5173 = vpack.c.b16 %v4889, %v4885
  %v5174 = vpack.c.b16 %v4894, %v4890
  %v5175 = vpack.c.b16 %v4895, %v4891
  %v5176 = vpack.c.b16 %v4896, %v4892
  %v5177 = vpack.c.b16 %v4897, %v4893
  %v5178 = vpack.c.b16 %v4902, %v4898
  %v5179 = vpack.c.b16 %v4903, %v4899
  %v5180 = vpack.c.b16 %v4904, %v4900
  %v5181 = vpack.c.b16 %v4905, %v4901
  %v5182 = vpack.c.b16 %v4910, %v4906
  %v5183 = vpack.c.b16 %v4911, %v4907
  %v5184 = vpack.c.b16 %v4912, %v4908
  %v5185 = vpack.c.b16 %v4913, %v4909
  %v5186 = vpack.c.b16 %v4918, %v4914
  %v5187 = vpack.c.b16 %v4919, %v4915
  %v5188 = vpack.c.b16 %v4920, %v4916
  %v5189 = vpack.c.b16 %v4921, %v4917
  %v5190 = vpack.c.b16 %v4926, %v4922
  %v5191 = vpack.c.b16 %v4927, %v4923
  %v5192 = vpack.c.b16 %v4928, %v4924
  %v5193 = vpack.c.b16 %v4929, %v4925
  %v5194 = vpack.c.b16 %v4934, %v4930
  %v5195 = vpack.c.b16 %v4935, %v4931
  %v5196 = vpack.c.b16 %v4936, %v4932
  %v5197 = vpack.c.b16 %v4937, %v4933
  %v5198 = vpack.c.b16 %v4942, %v4938
  %v5199 = vpack.c.b16 %v4943, %v4939
  %v5200 = vpack.c.b16 %v4944, %v4940
  %v5201 = vpack.c.b16 %v4945, %v4941
  %5458 = vmatprep.subr.bf16.mxu0 %v4975
  %5459 = vmatpush1.bf16.msra.mxu0 %v4974
  %5460 = vmatprep.subr.bf16.mxu0 %v4971
  %5461 = vmatpush1.bf16.msra.mxu0 %v4970
  %5462 = vmatprep.subr.bf16.mxu0 %v4967
  %5463 = vmatpush1.bf16.msra.mxu0 %v4966
  %5464 = vmatprep.subr.bf16.mxu0 %v4963
  %5465 = vmatpush1.bf16.msra.mxu0 %v4962
  %5466 = vmatprep.subr.bf16.mxu0 %v4959
  %5467 = vmatpush1.bf16.msra.mxu0 %v4958
  %5468 = vmatprep.subr.bf16.mxu0 %v4955
  %5469 = vmatpush1.bf16.msra.mxu0 %v4954
  %5470 = vmatprep.subr.bf16.mxu0 %v4951
  %5471 = vmatpush1.bf16.msra.mxu0 %v4950
  %5472 = vmatprep.subr.bf16.mxu0 %v4947
  %5473 = vmatpush1.bf16.msra.mxu0 %v4946
  %5474 = vmatprep.subr.bf16.mxu0 %v5007
  %5475 = vmatpush2.bf16.msra.mxu0 %v5006
  %5476 = vmatprep.subr.bf16.mxu0 %v5003
  %5477 = vmatpush2.bf16.msra.mxu0 %v5002
  %5478 = vmatprep.subr.bf16.mxu0 %v4999
  %5479 = vmatpush2.bf16.msra.mxu0 %v4998
  %5480 = vmatprep.subr.bf16.mxu0 %v4995
  %5481 = vmatpush2.bf16.msra.mxu0 %v4994
  %5482 = vmatprep.subr.bf16.mxu0 %v4991
  %5483 = vmatpush2.bf16.msra.mxu0 %v4990
  %5484 = vmatprep.subr.bf16.mxu0 %v4987
  %5485 = vmatpush2.bf16.msra.mxu0 %v4986
  %5486 = vmatprep.subr.bf16.mxu0 %v4983
  %5487 = vmatpush2.bf16.msra.mxu0 %v4982
  %5488 = vmatprep.subr.bf16.mxu0 %v4979
  %5489 = vmatpush2.bf16.msra.mxu0 %v4978
  %5490 = vmatprep.mubr.bf16.mxu0 %v3893
  %5491 = vmatmul.mubr.bf16.gmra.mxu0 %v3892
  %v5492 = vpop.f32.mrf.mxu0
  %v5493 = vadd.f32 %v4161, %v5492
  %v5494 = vpop.f32.mrf.mxu0
  %v5495 = vadd.f32 %v4165, %v5494
  %v5496 = vpop.f32.mrf.mxu0
  %v5497 = vadd.f32 %v4161, %v5496
  %v5498 = vpop.f32.mrf.mxu0
  %v5499 = vadd.f32 %v4165, %v5498
  %5500 = vdwg.mxu0
  %5501 = vmatprep.subr.bf16.mxu0 %v5039
  %5502 = vmatpush1.bf16.msra.mxu0 %v5038
  %5503 = vmatprep.subr.bf16.mxu0 %v5035
  %5504 = vmatpush1.bf16.msra.mxu0 %v5034
  %5505 = vmatprep.subr.bf16.mxu0 %v5031
  %5506 = vmatpush1.bf16.msra.mxu0 %v5030
  %5507 = vmatprep.subr.bf16.mxu0 %v5027
  %5508 = vmatpush1.bf16.msra.mxu0 %v5026
  %5509 = vmatprep.subr.bf16.mxu0 %v5023
  %5510 = vmatpush1.bf16.msra.mxu0 %v5022
  %5511 = vmatprep.subr.bf16.mxu0 %v5019
  %5512 = vmatpush1.bf16.msra.mxu0 %v5018
  %5513 = vmatprep.subr.bf16.mxu0 %v5015
  %5514 = vmatpush1.bf16.msra.mxu0 %v5014
  %5515 = vmatprep.subr.bf16.mxu0 %v5011
  %5516 = vmatpush1.bf16.msra.mxu0 %v5010
  %5517 = vmatprep.subr.bf16.mxu0 %v5071
  %5518 = vmatpush2.bf16.msra.mxu0 %v5070
  %5519 = vmatprep.subr.bf16.mxu0 %v5067
  %5520 = vmatpush2.bf16.msra.mxu0 %v5066
  %5521 = vmatprep.subr.bf16.mxu0 %v5063
  %5522 = vmatpush2.bf16.msra.mxu0 %v5062
  %5523 = vmatprep.subr.bf16.mxu0 %v5059
  %5524 = vmatpush2.bf16.msra.mxu0 %v5058
  %5525 = vmatprep.subr.bf16.mxu0 %v5055
  %5526 = vmatpush2.bf16.msra.mxu0 %v5054
  %5527 = vmatprep.subr.bf16.mxu0 %v5051
  %5528 = vmatpush2.bf16.msra.mxu0 %v5050
  %5529 = vmatprep.subr.bf16.mxu0 %v5047
  %5530 = vmatpush2.bf16.msra.mxu0 %v5046
  %5531 = vmatprep.subr.bf16.mxu0 %v5043
  %5532 = vmatpush2.bf16.msra.mxu0 %v5042
  %5533 = vmatprep.mubr.bf16.mxu0 %v3895
  %5534 = vmatmul.mubr.bf16.gmra.mxu0 %v3894
  %v5535 = vpop.f32.mrf.mxu0
  %v5536 = vadd.f32 %v5493, %v5535
  %v5537 = vpop.f32.mrf.mxu0
  %v5538 = vadd.f32 %v5495, %v5537
  %v5539 = vpop.f32.mrf.mxu0
  %v5540 = vadd.f32 %v5497, %v5539
  %v5541 = vpop.f32.mrf.mxu0
  %v5542 = vadd.f32 %v5499, %v5541
  %5543 = vdwg.mxu0
  %5544 = vmatprep.subr.bf16.mxu0 %v5103
  %5545 = vmatpush1.bf16.msra.mxu0 %v5102
  %5546 = vmatprep.subr.bf16.mxu0 %v5099
  %5547 = vmatpush1.bf16.msra.mxu0 %v5098
  %5548 = vmatprep.subr.bf16.mxu0 %v5095
  %5549 = vmatpush1.bf16.msra.mxu0 %v5094
  %5550 = vmatprep.subr.bf16.mxu0 %v5091
  %5551 = vmatpush1.bf16.msra.mxu0 %v5090
  %5552 = vmatprep.subr.bf16.mxu0 %v5087
  %5553 = vmatpush1.bf16.msra.mxu0 %v5086
  %5554 = vmatprep.subr.bf16.mxu0 %v5083
  %5555 = vmatpush1.bf16.msra.mxu0 %v5082
  %5556 = vmatprep.subr.bf16.mxu0 %v5079
  %5557 = vmatpush1.bf16.msra.mxu0 %v5078
  %5558 = vmatprep.subr.bf16.mxu0 %v5075
  %5559 = vmatpush1.bf16.msra.mxu0 %v5074
  %5560 = vmatprep.subr.bf16.mxu0 %v5135
  %5561 = vmatpush2.bf16.msra.mxu0 %v5134
  %5562 = vmatprep.subr.bf16.mxu0 %v5131
  %5563 = vmatpush2.bf16.msra.mxu0 %v5130
  %5564 = vmatprep.subr.bf16.mxu0 %v5127
  %5565 = vmatpush2.bf16.msra.mxu0 %v5126
  %5566 = vmatprep.subr.bf16.mxu0 %v5123
  %5567 = vmatpush2.bf16.msra.mxu0 %v5122
  %5568 = vmatprep.subr.bf16.mxu0 %v5119
  %5569 = vmatpush2.bf16.msra.mxu0 %v5118
  %5570 = vmatprep.subr.bf16.mxu0 %v5115
  %5571 = vmatpush2.bf16.msra.mxu0 %v5114
  %5572 = vmatprep.subr.bf16.mxu0 %v5111
  %5573 = vmatpush2.bf16.msra.mxu0 %v5110
  %5574 = vmatprep.subr.bf16.mxu0 %v5107
  %5575 = vmatpush2.bf16.msra.mxu0 %v5106
  %5576 = vmatprep.mubr.bf16.mxu0 %v3897
  %5577 = vmatmul.mubr.bf16.gmra.mxu0 %v3896
  %v5578 = vpop.f32.mrf.mxu0
  %v5579 = vadd.f32 %v5536, %v5578
  %v5580 = vpop.f32.mrf.mxu0
  %v5581 = vadd.f32 %v5538, %v5580
  %v5582 = vpop.f32.mrf.mxu0
  %v5583 = vadd.f32 %v5540, %v5582
  %v5584 = vpop.f32.mrf.mxu0
  %v5585 = vadd.f32 %v5542, %v5584
  %5586 = vdwg.mxu0
  %5587 = vmatprep.subr.bf16.mxu0 %v5167
  %5588 = vmatpush1.bf16.msra.mxu0 %v5166
  %5589 = vmatprep.subr.bf16.mxu0 %v5163
  %5590 = vmatpush1.bf16.msra.mxu0 %v5162
  %5591 = vmatprep.subr.bf16.mxu0 %v5159
  %5592 = vmatpush1.bf16.msra.mxu0 %v5158
  %5593 = vmatprep.subr.bf16.mxu0 %v5155
  %5594 = vmatpush1.bf16.msra.mxu0 %v5154
  %5595 = vmatprep.subr.bf16.mxu0 %v5151
  %5596 = vmatpush1.bf16.msra.mxu0 %v5150
  %5597 = vmatprep.subr.bf16.mxu0 %v5147
  %5598 = vmatpush1.bf16.msra.mxu0 %v5146
  %5599 = vmatprep.subr.bf16.mxu0 %v5143
  %5600 = vmatpush1.bf16.msra.mxu0 %v5142
  %5601 = vmatprep.subr.bf16.mxu0 %v5139
  %5602 = vmatpush1.bf16.msra.mxu0 %v5138
  %5603 = vmatprep.subr.bf16.mxu0 %v5199
  %5604 = vmatpush2.bf16.msra.mxu0 %v5198
  %5605 = vmatprep.subr.bf16.mxu0 %v5195
  %5606 = vmatpush2.bf16.msra.mxu0 %v5194
  %5607 = vmatprep.subr.bf16.mxu0 %v5191
  %5608 = vmatpush2.bf16.msra.mxu0 %v5190
  %5609 = vmatprep.subr.bf16.mxu0 %v5187
  %5610 = vmatpush2.bf16.msra.mxu0 %v5186
  %5611 = vmatprep.subr.bf16.mxu0 %v5183
  %5612 = vmatpush2.bf16.msra.mxu0 %v5182
  %5613 = vmatprep.subr.bf16.mxu0 %v5179
  %5614 = vmatpush2.bf16.msra.mxu0 %v5178
  %5615 = vmatprep.subr.bf16.mxu0 %v5175
  %5616 = vmatpush2.bf16.msra.mxu0 %v5174
  %5617 = vmatprep.subr.bf16.mxu0 %v5171
  %5618 = vmatpush2.bf16.msra.mxu0 %v5170
  %5619 = vmatprep.mubr.bf16.mxu0 %v3899
  %5620 = vmatmul.mubr.bf16.gmra.mxu0 %v3898
  %v5621 = vpop.f32.mrf.mxu0
  %v5622 = vadd.f32 %v5579, %v5621
  %v5623 = vpop.f32.mrf.mxu0
  %v5624 = vadd.f32 %v5581, %v5623
  %v5625 = vpop.f32.mrf.mxu0
  %v5626 = vadd.f32 %v5583, %v5625
  %v5627 = vpop.f32.mrf.mxu0
  %v5628 = vadd.f32 %v5585, %v5627
  %5629 = vdwg.mxu0
  %5630 = vmatprep.subr.bf16.mxu0 %v4977
  %5631 = vmatpush1.bf16.msra.mxu0 %v4976
  %5632 = vmatprep.subr.bf16.mxu0 %v4973
  %5633 = vmatpush1.bf16.msra.mxu0 %v4972
  %5634 = vmatprep.subr.bf16.mxu0 %v4969
  %5635 = vmatpush1.bf16.msra.mxu0 %v4968
  %5636 = vmatprep.subr.bf16.mxu0 %v4965
  %5637 = vmatpush1.bf16.msra.mxu0 %v4964
  %5638 = vmatprep.subr.bf16.mxu0 %v4961
  %5639 = vmatpush1.bf16.msra.mxu0 %v4960
  %5640 = vmatprep.subr.bf16.mxu0 %v4957
  %5641 = vmatpush1.bf16.msra.mxu0 %v4956
  %5642 = vmatprep.subr.bf16.mxu0 %v4953
  %5643 = vmatpush1.bf16.msra.mxu0 %v4952
  %5644 = vmatprep.subr.bf16.mxu0 %v4949
  %5645 = vmatpush1.bf16.msra.mxu0 %v4948
  %5646 = vmatprep.subr.bf16.mxu0 %v5009
  %5647 = vmatpush2.bf16.msra.mxu0 %v5008
  %5648 = vmatprep.subr.bf16.mxu0 %v5005
  %5649 = vmatpush2.bf16.msra.mxu0 %v5004
  %5650 = vmatprep.subr.bf16.mxu0 %v5001
  %5651 = vmatpush2.bf16.msra.mxu0 %v5000
  %5652 = vmatprep.subr.bf16.mxu0 %v4997
  %5653 = vmatpush2.bf16.msra.mxu0 %v4996
  %5654 = vmatprep.subr.bf16.mxu0 %v4993
  %5655 = vmatpush2.bf16.msra.mxu0 %v4992
  %5656 = vmatprep.subr.bf16.mxu0 %v4989
  %5657 = vmatpush2.bf16.msra.mxu0 %v4988
  %5658 = vmatprep.subr.bf16.mxu0 %v4985
  %5659 = vmatpush2.bf16.msra.mxu0 %v4984
  %5660 = vmatprep.subr.bf16.mxu0 %v4981
  %5661 = vmatpush2.bf16.msra.mxu0 %v4980
  %5662 = vmatprep.mubr.bf16.mxu0 %v3893
  %5663 = vmatmul.mubr.bf16.gmra.mxu0 %v3892
  %v5664 = vpop.f32.mrf.mxu0
  %v5665 = vadd.f32 %v4169, %v5664
  %v5666 = vpop.f32.mrf.mxu0
  %v5667 = vadd.f32 %v4173, %v5666
  %v5668 = vpop.f32.mrf.mxu0
  %v5669 = vadd.f32 %v4169, %v5668
  %v5670 = vpop.f32.mrf.mxu0
  %v5671 = vadd.f32 %v4173, %v5670
  %5672 = vdwg.mxu0
  %5673 = vmatprep.subr.bf16.mxu0 %v5041
  %5674 = vmatpush1.bf16.msra.mxu0 %v5040
  %5675 = vmatprep.subr.bf16.mxu0 %v5037
  %5676 = vmatpush1.bf16.msra.mxu0 %v5036
  %5677 = vmatprep.subr.bf16.mxu0 %v5033
  %5678 = vmatpush1.bf16.msra.mxu0 %v5032
  %5679 = vmatprep.subr.bf16.mxu0 %v5029
  %5680 = vmatpush1.bf16.msra.mxu0 %v5028
  %5681 = vmatprep.subr.bf16.mxu0 %v5025
  %5682 = vmatpush1.bf16.msra.mxu0 %v5024
  %5683 = vmatprep.subr.bf16.mxu0 %v5021
  %5684 = vmatpush1.bf16.msra.mxu0 %v5020
  %5685 = vmatprep.subr.bf16.mxu0 %v5017
  %5686 = vmatpush1.bf16.msra.mxu0 %v5016
  %5687 = vmatprep.subr.bf16.mxu0 %v5013
  %5688 = vmatpush1.bf16.msra.mxu0 %v5012
  %5689 = vmatprep.subr.bf16.mxu0 %v5073
  %5690 = vmatpush2.bf16.msra.mxu0 %v5072
  %5691 = vmatprep.subr.bf16.mxu0 %v5069
  %5692 = vmatpush2.bf16.msra.mxu0 %v5068
  %5693 = vmatprep.subr.bf16.mxu0 %v5065
  %5694 = vmatpush2.bf16.msra.mxu0 %v5064
  %5695 = vmatprep.subr.bf16.mxu0 %v5061
  %5696 = vmatpush2.bf16.msra.mxu0 %v5060
  %5697 = vmatprep.subr.bf16.mxu0 %v5057
  %5698 = vmatpush2.bf16.msra.mxu0 %v5056
  %5699 = vmatprep.subr.bf16.mxu0 %v5053
  %5700 = vmatpush2.bf16.msra.mxu0 %v5052
  %5701 = vmatprep.subr.bf16.mxu0 %v5049
  %5702 = vmatpush2.bf16.msra.mxu0 %v5048
  %5703 = vmatprep.subr.bf16.mxu0 %v5045
  %5704 = vmatpush2.bf16.msra.mxu0 %v5044
  %5705 = vmatprep.mubr.bf16.mxu0 %v3895
  %5706 = vmatmul.mubr.bf16.gmra.mxu0 %v3894
  %v5707 = vpop.f32.mrf.mxu0
  %v5708 = vadd.f32 %v5665, %v5707
  %v5709 = vpop.f32.mrf.mxu0
  %v5710 = vadd.f32 %v5667, %v5709
  %v5711 = vpop.f32.mrf.mxu0
  %v5712 = vadd.f32 %v5669, %v5711
  %v5713 = vpop.f32.mrf.mxu0
  %v5714 = vadd.f32 %v5671, %v5713
  %5715 = vdwg.mxu0
  %5716 = vmatprep.subr.bf16.mxu0 %v5105
  %5717 = vmatpush1.bf16.msra.mxu0 %v5104
  %5718 = vmatprep.subr.bf16.mxu0 %v5101
  %5719 = vmatpush1.bf16.msra.mxu0 %v5100
  %5720 = vmatprep.subr.bf16.mxu0 %v5097
  %5721 = vmatpush1.bf16.msra.mxu0 %v5096
  %5722 = vmatprep.subr.bf16.mxu0 %v5093
  %5723 = vmatpush1.bf16.msra.mxu0 %v5092
  %5724 = vmatprep.subr.bf16.mxu0 %v5089
  %5725 = vmatpush1.bf16.msra.mxu0 %v5088
  %5726 = vmatprep.subr.bf16.mxu0 %v5085
  %5727 = vmatpush1.bf16.msra.mxu0 %v5084
  %5728 = vmatprep.subr.bf16.mxu0 %v5081
  %5729 = vmatpush1.bf16.msra.mxu0 %v5080
  %5730 = vmatprep.subr.bf16.mxu0 %v5077
  %5731 = vmatpush1.bf16.msra.mxu0 %v5076
  %5732 = vmatprep.subr.bf16.mxu0 %v5137
  %5733 = vmatpush2.bf16.msra.mxu0 %v5136
  %5734 = vmatprep.subr.bf16.mxu0 %v5133
  %5735 = vmatpush2.bf16.msra.mxu0 %v5132
  %5736 = vmatprep.subr.bf16.mxu0 %v5129
  %5737 = vmatpush2.bf16.msra.mxu0 %v5128
  %5738 = vmatprep.subr.bf16.mxu0 %v5125
  %5739 = vmatpush2.bf16.msra.mxu0 %v5124
  %5740 = vmatprep.subr.bf16.mxu0 %v5121
  %5741 = vmatpush2.bf16.msra.mxu0 %v5120
  %5742 = vmatprep.subr.bf16.mxu0 %v5117
  %5743 = vmatpush2.bf16.msra.mxu0 %v5116
  %5744 = vmatprep.subr.bf16.mxu0 %v5113
  %5745 = vmatpush2.bf16.msra.mxu0 %v5112
  %5746 = vmatprep.subr.bf16.mxu0 %v5109
  %5747 = vmatpush2.bf16.msra.mxu0 %v5108
  %5748 = vmatprep.mubr.bf16.mxu0 %v3897
  %5749 = vmatmul.mubr.bf16.gmra.mxu0 %v3896
  %v5750 = vpop.f32.mrf.mxu0
  %v5751 = vadd.f32 %v5708, %v5750
  %v5752 = vpop.f32.mrf.mxu0
  %v5753 = vadd.f32 %v5710, %v5752
  %v5754 = vpop.f32.mrf.mxu0
  %v5755 = vadd.f32 %v5712, %v5754
  %v5756 = vpop.f32.mrf.mxu0
  %v5757 = vadd.f32 %v5714, %v5756
  %5758 = vdwg.mxu0
  %5759 = vmatprep.subr.bf16.mxu0 %v5169
  %5760 = vmatpush1.bf16.msra.mxu0 %v5168
  %5761 = vmatprep.subr.bf16.mxu0 %v5165
  %5762 = vmatpush1.bf16.msra.mxu0 %v5164
  %5763 = vmatprep.subr.bf16.mxu0 %v5161
  %5764 = vmatpush1.bf16.msra.mxu0 %v5160
  %5765 = vmatprep.subr.bf16.mxu0 %v5157
  %5766 = vmatpush1.bf16.msra.mxu0 %v5156
  %5767 = vmatprep.subr.bf16.mxu0 %v5153
  %5768 = vmatpush1.bf16.msra.mxu0 %v5152
  %5769 = vmatprep.subr.bf16.mxu0 %v5149
  %5770 = vmatpush1.bf16.msra.mxu0 %v5148
  %5771 = vmatprep.subr.bf16.mxu0 %v5145
  %5772 = vmatpush1.bf16.msra.mxu0 %v5144
  %5773 = vmatprep.subr.bf16.mxu0 %v5141
  %5774 = vmatpush1.bf16.msra.mxu0 %v5140
  %5775 = vmatprep.subr.bf16.mxu0 %v5201
  %5776 = vmatpush2.bf16.msra.mxu0 %v5200
  %5777 = vmatprep.subr.bf16.mxu0 %v5197
  %5778 = vmatpush2.bf16.msra.mxu0 %v5196
  %5779 = vmatprep.subr.bf16.mxu0 %v5193
  %5780 = vmatpush2.bf16.msra.mxu0 %v5192
  %5781 = vmatprep.subr.bf16.mxu0 %v5189
  %5782 = vmatpush2.bf16.msra.mxu0 %v5188
  %5783 = vmatprep.subr.bf16.mxu0 %v5185
  %5784 = vmatpush2.bf16.msra.mxu0 %v5184
  %5785 = vmatprep.subr.bf16.mxu0 %v5181
  %5786 = vmatpush2.bf16.msra.mxu0 %v5180
  %5787 = vmatprep.subr.bf16.mxu0 %v5177
  %5788 = vmatpush2.bf16.msra.mxu0 %v5176
  %5789 = vmatprep.subr.bf16.mxu0 %v5173
  %5790 = vmatpush2.bf16.msra.mxu0 %v5172
  %5791 = vmatprep.mubr.bf16.mxu0 %v3899
  %5792 = vmatmul.mubr.bf16.gmra.mxu0 %v3898
  %v5793 = vpop.f32.mrf.mxu0
  %v5794 = vadd.f32 %v5751, %v5793
  %v5795 = vpop.f32.mrf.mxu0
  %v5796 = vadd.f32 %v5753, %v5795
  %v5797 = vpop.f32.mrf.mxu0
  %v5798 = vadd.f32 %v5755, %v5797
  %v5799 = vpop.f32.mrf.mxu0
  %v5800 = vadd.f32 %v5757, %v5799
  %5801 = vdwg.mxu0
  %v5802 = vmax.f32 %v5622, 0.0
  %v5803 = vmax.f32 %v5624, 0.0
  %v5804 = vmax.f32 %v5794, 0.0
  %v5805 = vmax.f32 %v5796, 0.0
  %v5806 = vmax.f32 %v5626, 0.0
  %v5807 = vmax.f32 %v5628, 0.0
  %v5808 = vmax.f32 %v5798, 0.0
  %v5809 = vmax.f32 %v5800, 0.0
  %v5810 = vpack.c.bf16 %v5806, %v5802
  %v5811 = vpack.c.bf16 %v5807, %v5803
  %v5812 = vpack.c.bf16 %v5808, %v5804
  %v5813 = vpack.c.bf16 %v5809, %v5805
  %v5814 = vld [vmem:[%s5] sm:$0xff]
  %v5815 = vld [vmem:[%s5 + $0x8] sm:$0xff]
  %v5816 = vld [vmem:[%s5 + $0x10] sm:$0xff]
  %v5817 = vld [vmem:[%s5 + $0x18] sm:$0xff]
  %v5818 = vld [vmem:[%s5 + $0x20] sm:$0xff]
  %v5819 = vld [vmem:[%s5 + $0x28] sm:$0xff]
  %v5820 = vld [vmem:[%s5 + $0x30] sm:$0xff]
  %v5821 = vld [vmem:[%s5 + $0x38] sm:$0xff]
  %v5822 = vld [vmem:[%s5 + $0x40] sm:$0xff]
  %v5823 = vld [vmem:[%s5 + $0x48] sm:$0xff]
  %v5824 = vld [vmem:[%s5 + $0x50] sm:$0xff]
  %v5825 = vld [vmem:[%s5 + $0x58] sm:$0xff]
  %v5826 = vld [vmem:[%s5 + $0x60] sm:$0xff]
  %v5827 = vld [vmem:[%s5 + $0x68] sm:$0xff]
  %v5828 = vld [vmem:[%s5 + $0x70] sm:$0xff]
  %v5829 = vld [vmem:[%s5 + $0x78] sm:$0xff]
  %v5830 = vld [vmem:[%s5 + $0x80] sm:$0xff]
  %v5831 = vld [vmem:[%s5 + $0x88] sm:$0xff]
  %v5832 = vld [vmem:[%s5 + $0x90] sm:$0xff]
  %v5833 = vld [vmem:[%s5 + $0x98] sm:$0xff]
  %v5834 = vld [vmem:[%s5 + $0xa0] sm:$0xff]
  %v5835 = vld [vmem:[%s5 + $0xa8] sm:$0xff]
  %v5836 = vld [vmem:[%s5 + $0xb0] sm:$0xff]
  %v5837 = vld [vmem:[%s5 + $0xb8] sm:$0xff]
  %v5838 = vld [vmem:[%s5 + $0xc0] sm:$0xff]
  %v5839 = vld [vmem:[%s5 + $0xc8] sm:$0xff]
  %v5840 = vld [vmem:[%s5 + $0xd0] sm:$0xff]
  %v5841 = vld [vmem:[%s5 + $0xd8] sm:$0xff]
  %v5842 = vld [vmem:[%s5 + $0xe0] sm:$0xff]
  %v5843 = vld [vmem:[%s5 + $0xe8] sm:$0xff]
  %v5844 = vld [vmem:[%s5 + $0xf0] sm:$0xff]
  %v5845 = vld [vmem:[%s5 + $0xf8] sm:$0xff]
  %v5846 = vld [vmem:[%s5 + $0x100] sm:$0xff]
  %v5847 = vld [vmem:[%s5 + $0x108] sm:$0xff]
  %v5848 = vld [vmem:[%s5 + $0x110] sm:$0xff]
  %v5849 = vld [vmem:[%s5 + $0x118] sm:$0xff]
  %v5850 = vld [vmem:[%s5 + $0x120] sm:$0xff]
  %v5851 = vld [vmem:[%s5 + $0x128] sm:$0xff]
  %v5852 = vld [vmem:[%s5 + $0x130] sm:$0xff]
  %v5853 = vld [vmem:[%s5 + $0x138] sm:$0xff]
  %v5854 = vld [vmem:[%s5 + $0x140] sm:$0xff]
  %v5855 = vld [vmem:[%s5 + $0x148] sm:$0xff]
  %v5856 = vld [vmem:[%s5 + $0x150] sm:$0xff]
  %v5857 = vld [vmem:[%s5 + $0x158] sm:$0xff]
  %v5858 = vld [vmem:[%s5 + $0x160] sm:$0xff]
  %v5859 = vld [vmem:[%s5 + $0x168] sm:$0xff]
  %v5860 = vld [vmem:[%s5 + $0x170] sm:$0xff]
  %v5861 = vld [vmem:[%s5 + $0x178] sm:$0xff]
  %v5862 = vld [vmem:[%s5 + $0x180] sm:$0xff]
  %v5863 = vld [vmem:[%s5 + $0x188] sm:$0xff]
  %v5864 = vld [vmem:[%s5 + $0x190] sm:$0xff]
  %v5865 = vld [vmem:[%s5 + $0x198] sm:$0xff]
  %v5866 = vld [vmem:[%s5 + $0x1a0] sm:$0xff]
  %v5867 = vld [vmem:[%s5 + $0x1a8] sm:$0xff]
  %v5868 = vld [vmem:[%s5 + $0x1b0] sm:$0xff]
  %v5869 = vld [vmem:[%s5 + $0x1b8] sm:$0xff]
  %v5870 = vld [vmem:[%s5 + $0x1c0] sm:$0xff]
  %v5871 = vld [vmem:[%s5 + $0x1c8] sm:$0xff]
  %v5872 = vld [vmem:[%s5 + $0x1d0] sm:$0xff]
  %v5873 = vld [vmem:[%s5 + $0x1d8] sm:$0xff]
  %v5874 = vld [vmem:[%s5 + $0x1e0] sm:$0xff]
  %v5875 = vld [vmem:[%s5 + $0x1e8] sm:$0xff]
  %v5876 = vld [vmem:[%s5 + $0x1f0] sm:$0xff]
  %v5877 = vld [vmem:[%s5 + $0x1f8] sm:$0xff]
  %v5878 = vld [vmem:[%s6] sm:$0x3]
  %v5880 = vlaneseq
  %v5881 = vshrl.u32 %v5880, 7
  %v5882 = vsub.s32 0, %v5881
  %v5883 = vrot.slane %v5878, %v5882
  %v5884 = vlaneseq
  %v5885 = vshrl.u32 %v5884, 7
  %v5886 = vsub.s32 1, %v5885
  %v5887 = vrot.slane %v5878, %v5886
  %v5954 = vunpack.c.l.b16 %v5814
  %v5955 = vunpack.c.h.b16 %v5814
  %v5956 = vunpack.c.l.b16 %v5815
  %v5957 = vunpack.c.h.b16 %v5815
  %v5958 = vunpack.c.l.b16 %v5816
  %v5959 = vunpack.c.h.b16 %v5816
  %v5960 = vunpack.c.l.b16 %v5817
  %v5961 = vunpack.c.h.b16 %v5817
  %v5962 = vunpack.c.l.b16 %v5818
  %v5963 = vunpack.c.h.b16 %v5818
  %v5964 = vunpack.c.l.b16 %v5819
  %v5965 = vunpack.c.h.b16 %v5819
  %v5966 = vunpack.c.l.b16 %v5820
  %v5967 = vunpack.c.h.b16 %v5820
  %v5968 = vunpack.c.l.b16 %v5821
  %v5969 = vunpack.c.h.b16 %v5821
  %v5970 = vunpack.c.l.b16 %v5822
  %v5971 = vunpack.c.h.b16 %v5822
  %v5972 = vunpack.c.l.b16 %v5823
  %v5973 = vunpack.c.h.b16 %v5823
  %v5974 = vunpack.c.l.b16 %v5824
  %v5975 = vunpack.c.h.b16 %v5824
  %v5976 = vunpack.c.l.b16 %v5825
  %v5977 = vunpack.c.h.b16 %v5825
  %v5978 = vunpack.c.l.b16 %v5826
  %v5979 = vunpack.c.h.b16 %v5826
  %v5980 = vunpack.c.l.b16 %v5827
  %v5981 = vunpack.c.h.b16 %v5827
  %v5982 = vunpack.c.l.b16 %v5828
  %v5983 = vunpack.c.h.b16 %v5828
  %v5984 = vunpack.c.l.b16 %v5829
  %v5985 = vunpack.c.h.b16 %v5829
  %v5986 = vunpack.c.l.b16 %v5830
  %v5987 = vunpack.c.h.b16 %v5830
  %v5988 = vunpack.c.l.b16 %v5831
  %v5989 = vunpack.c.h.b16 %v5831
  %v5990 = vunpack.c.l.b16 %v5832
  %v5991 = vunpack.c.h.b16 %v5832
  %v5992 = vunpack.c.l.b16 %v5833
  %v5993 = vunpack.c.h.b16 %v5833
  %v5994 = vunpack.c.l.b16 %v5834
  %v5995 = vunpack.c.h.b16 %v5834
  %v5996 = vunpack.c.l.b16 %v5835
  %v5997 = vunpack.c.h.b16 %v5835
  %v5998 = vunpack.c.l.b16 %v5836
  %v5999 = vunpack.c.h.b16 %v5836
  %v6000 = vunpack.c.l.b16 %v5837
  %v6001 = vunpack.c.h.b16 %v5837
  %v6002 = vunpack.c.l.b16 %v5838
  %v6003 = vunpack.c.h.b16 %v5838
  %v6004 = vunpack.c.l.b16 %v5839
  %v6005 = vunpack.c.h.b16 %v5839
  %v6006 = vunpack.c.l.b16 %v5840
  %v6007 = vunpack.c.h.b16 %v5840
  %v6008 = vunpack.c.l.b16 %v5841
  %v6009 = vunpack.c.h.b16 %v5841
  %v6010 = vunpack.c.l.b16 %v5842
  %v6011 = vunpack.c.h.b16 %v5842
  %v6012 = vunpack.c.l.b16 %v5843
  %v6013 = vunpack.c.h.b16 %v5843
  %v6014 = vunpack.c.l.b16 %v5844
  %v6015 = vunpack.c.h.b16 %v5844
  %v6016 = vunpack.c.l.b16 %v5845
  %v6017 = vunpack.c.h.b16 %v5845
  %v6018 = vunpack.c.l.b16 %v5846
  %v6019 = vunpack.c.h.b16 %v5846
  %v6020 = vunpack.c.l.b16 %v5847
  %v6021 = vunpack.c.h.b16 %v5847
  %v6022 = vunpack.c.l.b16 %v5848
  %v6023 = vunpack.c.h.b16 %v5848
  %v6024 = vunpack.c.l.b16 %v5849
  %v6025 = vunpack.c.h.b16 %v5849
  %v6026 = vunpack.c.l.b16 %v5850
  %v6027 = vunpack.c.h.b16 %v5850
  %v6028 = vunpack.c.l.b16 %v5851
  %v6029 = vunpack.c.h.b16 %v5851
  %v6030 = vunpack.c.l.b16 %v5852
  %v6031 = vunpack.c.h.b16 %v5852
  %v6032 = vunpack.c.l.b16 %v5853
  %v6033 = vunpack.c.h.b16 %v5853
  %v6034 = vunpack.c.l.b16 %v5854
  %v6035 = vunpack.c.h.b16 %v5854
  %v6036 = vunpack.c.l.b16 %v5855
  %v6037 = vunpack.c.h.b16 %v5855
  %v6038 = vunpack.c.l.b16 %v5856
  %v6039 = vunpack.c.h.b16 %v5856
  %v6040 = vunpack.c.l.b16 %v5857
  %v6041 = vunpack.c.h.b16 %v5857
  %v6042 = vunpack.c.l.b16 %v5858
  %v6043 = vunpack.c.h.b16 %v5858
  %v6044 = vunpack.c.l.b16 %v5859
  %v6045 = vunpack.c.h.b16 %v5859
  %v6046 = vunpack.c.l.b16 %v5860
  %v6047 = vunpack.c.h.b16 %v5860
  %v6048 = vunpack.c.l.b16 %v5861
  %v6049 = vunpack.c.h.b16 %v5861
  %v6050 = vunpack.c.l.b16 %v5862
  %v6051 = vunpack.c.h.b16 %v5862
  %v6052 = vunpack.c.l.b16 %v5863
  %v6053 = vunpack.c.h.b16 %v5863
  %v6054 = vunpack.c.l.b16 %v5864
  %v6055 = vunpack.c.h.b16 %v5864
  %v6056 = vunpack.c.l.b16 %v5865
  %v6057 = vunpack.c.h.b16 %v5865
  %v6058 = vunpack.c.l.b16 %v5866
  %v6059 = vunpack.c.h.b16 %v5866
  %v6060 = vunpack.c.l.b16 %v5867
  %v6061 = vunpack.c.h.b16 %v5867
  %v6062 = vunpack.c.l.b16 %v5868
  %v6063 = vunpack.c.h.b16 %v5868
  %v6064 = vunpack.c.l.b16 %v5869
  %v6065 = vunpack.c.h.b16 %v5869
  %v6066 = vunpack.c.l.b16 %v5870
  %v6067 = vunpack.c.h.b16 %v5870
  %v6068 = vunpack.c.l.b16 %v5871
  %v6069 = vunpack.c.h.b16 %v5871
  %v6070 = vunpack.c.l.b16 %v5872
  %v6071 = vunpack.c.h.b16 %v5872
  %v6072 = vunpack.c.l.b16 %v5873
  %v6073 = vunpack.c.h.b16 %v5873
  %v6074 = vunpack.c.l.b16 %v5874
  %v6075 = vunpack.c.h.b16 %v5874
  %v6076 = vunpack.c.l.b16 %v5875
  %v6077 = vunpack.c.h.b16 %v5875
  %v6078 = vunpack.c.l.b16 %v5876
  %v6079 = vunpack.c.h.b16 %v5876
  %v6080 = vunpack.c.l.b16 %v5877
  %v6081 = vunpack.c.h.b16 %v5877
  %v6082 = vpack.c.b16 %v5956, %v5954
  %v6083 = vpack.c.b16 %v5957, %v5955
  %v6084 = vpack.c.b16 %v5960, %v5958
  %v6085 = vpack.c.b16 %v5961, %v5959
  %v6086 = vpack.c.b16 %v5964, %v5962
  %v6087 = vpack.c.b16 %v5965, %v5963
  %v6088 = vpack.c.b16 %v5968, %v5966
  %v6089 = vpack.c.b16 %v5969, %v5967
  %v6090 = vpack.c.b16 %v5972, %v5970
  %v6091 = vpack.c.b16 %v5973, %v5971
  %v6092 = vpack.c.b16 %v5976, %v5974
  %v6093 = vpack.c.b16 %v5977, %v5975
  %v6094 = vpack.c.b16 %v5980, %v5978
  %v6095 = vpack.c.b16 %v5981, %v5979
  %v6096 = vpack.c.b16 %v5984, %v5982
  %v6097 = vpack.c.b16 %v5985, %v5983
  %v6098 = vpack.c.b16 %v5988, %v5986
  %v6099 = vpack.c.b16 %v5989, %v5987
  %v6100 = vpack.c.b16 %v5992, %v5990
  %v6101 = vpack.c.b16 %v5993, %v5991
  %v6102 = vpack.c.b16 %v5996, %v5994
  %v6103 = vpack.c.b16 %v5997, %v5995
  %v6104 = vpack.c.b16 %v6000, %v5998
  %v6105 = vpack.c.b16 %v6001, %v5999
  %v6106 = vpack.c.b16 %v6004, %v6002
  %v6107 = vpack.c.b16 %v6005, %v6003
  %v6108 = vpack.c.b16 %v6008, %v6006
  %v6109 = vpack.c.b16 %v6009, %v6007
  %v6110 = vpack.c.b16 %v6012, %v6010
  %v6111 = vpack.c.b16 %v6013, %v6011
  %v6112 = vpack.c.b16 %v6016, %v6014
  %v6113 = vpack.c.b16 %v6017, %v6015
  %v6114 = vpack.c.b16 %v6020, %v6018
  %v6115 = vpack.c.b16 %v6021, %v6019
  %v6116 = vpack.c.b16 %v6024, %v6022
  %v6117 = vpack.c.b16 %v6025, %v6023
  %v6118 = vpack.c.b16 %v6028, %v6026
  %v6119 = vpack.c.b16 %v6029, %v6027
  %v6120 = vpack.c.b16 %v6032, %v6030
  %v6121 = vpack.c.b16 %v6033, %v6031
  %v6122 = vpack.c.b16 %v6036, %v6034
  %v6123 = vpack.c.b16 %v6037, %v6035
  %v6124 = vpack.c.b16 %v6040, %v6038
  %v6125 = vpack.c.b16 %v6041, %v6039
  %v6126 = vpack.c.b16 %v6044, %v6042
  %v6127 = vpack.c.b16 %v6045, %v6043
  %v6128 = vpack.c.b16 %v6048, %v6046
  %v6129 = vpack.c.b16 %v6049, %v6047
  %v6130 = vpack.c.b16 %v6052, %v6050
  %v6131 = vpack.c.b16 %v6053, %v6051
  %v6132 = vpack.c.b16 %v6056, %v6054
  %v6133 = vpack.c.b16 %v6057, %v6055
  %v6134 = vpack.c.b16 %v6060, %v6058
  %v6135 = vpack.c.b16 %v6061, %v6059
  %v6136 = vpack.c.b16 %v6064, %v6062
  %v6137 = vpack.c.b16 %v6065, %v6063
  %v6138 = vpack.c.b16 %v6068, %v6066
  %v6139 = vpack.c.b16 %v6069, %v6067
  %v6140 = vpack.c.b16 %v6072, %v6070
  %v6141 = vpack.c.b16 %v6073, %v6071
  %v6142 = vpack.c.b16 %v6076, %v6074
  %v6143 = vpack.c.b16 %v6077, %v6075
  %v6144 = vpack.c.b16 %v6080, %v6078
  %v6145 = vpack.c.b16 %v6081, %v6079
  %6210 = vmatprep.subr.bf16.mxu0 %v6097
  %6211 = vmatpush1.bf16.msra.mxu0 %v6096
  %6212 = vmatprep.subr.bf16.mxu0 %v6095
  %6213 = vmatpush1.bf16.msra.mxu0 %v6094
  %6214 = vmatprep.subr.bf16.mxu0 %v6093
  %6215 = vmatpush1.bf16.msra.mxu0 %v6092
  %6216 = vmatprep.subr.bf16.mxu0 %v6091
  %6217 = vmatpush1.bf16.msra.mxu0 %v6090
  %6218 = vmatprep.subr.bf16.mxu0 %v6089
  %6219 = vmatpush1.bf16.msra.mxu0 %v6088
  %6220 = vmatprep.subr.bf16.mxu0 %v6087
  %6221 = vmatpush1.bf16.msra.mxu0 %v6086
  %6222 = vmatprep.subr.bf16.mxu0 %v6085
  %6223 = vmatpush1.bf16.msra.mxu0 %v6084
  %6224 = vmatprep.subr.bf16.mxu0 %v6083
  %6225 = vmatpush1.bf16.msra.mxu0 %v6082
  %6226 = vmatprep.subr.bf16.mxu0 %v6113
  %6227 = vmatpush2.bf16.msra.mxu0 %v6112
  %6228 = vmatprep.subr.bf16.mxu0 %v6111
  %6229 = vmatpush2.bf16.msra.mxu0 %v6110
  %6230 = vmatprep.subr.bf16.mxu0 %v6109
  %6231 = vmatpush2.bf16.msra.mxu0 %v6108
  %6232 = vmatprep.subr.bf16.mxu0 %v6107
  %6233 = vmatpush2.bf16.msra.mxu0 %v6106
  %6234 = vmatprep.subr.bf16.mxu0 %v6105
  %6235 = vmatpush2.bf16.msra.mxu0 %v6104
  %6236 = vmatprep.subr.bf16.mxu0 %v6103
  %6237 = vmatpush2.bf16.msra.mxu0 %v6102
  %6238 = vmatprep.subr.bf16.mxu0 %v6101
  %6239 = vmatpush2.bf16.msra.mxu0 %v6100
  %6240 = vmatprep.subr.bf16.mxu0 %v6099
  %6241 = vmatpush2.bf16.msra.mxu0 %v6098
  %6242 = vmatprep.mubr.bf16.mxu0 %v5811
  %6243 = vmatmul.mubr.bf16.gmra.mxu0 %v5810
  %v6244 = vpop.f32.mrf.mxu0
  %v6245 = vadd.f32 %v5883, %v6244
  %v6246 = vpop.f32.mrf.mxu0
  %v6247 = vadd.f32 %v5887, %v6246
  %v6248 = vpop.f32.mrf.mxu0
  %v6249 = vadd.f32 %v5883, %v6248
  %v6250 = vpop.f32.mrf.mxu0
  %v6251 = vadd.f32 %v5887, %v6250
  %6252 = vdwg.mxu0
  %6253 = vmatprep.subr.bf16.mxu0 %v6129
  %6254 = vmatpush1.bf16.msra.mxu0 %v6128
  %6255 = vmatprep.subr.bf16.mxu0 %v6127
  %6256 = vmatpush1.bf16.msra.mxu0 %v6126
  %6257 = vmatprep.subr.bf16.mxu0 %v6125
  %6258 = vmatpush1.bf16.msra.mxu0 %v6124
  %6259 = vmatprep.subr.bf16.mxu0 %v6123
  %6260 = vmatpush1.bf16.msra.mxu0 %v6122
  %6261 = vmatprep.subr.bf16.mxu0 %v6121
  %6262 = vmatpush1.bf16.msra.mxu0 %v6120
  %6263 = vmatprep.subr.bf16.mxu0 %v6119
  %6264 = vmatpush1.bf16.msra.mxu0 %v6118
  %6265 = vmatprep.subr.bf16.mxu0 %v6117
  %6266 = vmatpush1.bf16.msra.mxu0 %v6116
  %6267 = vmatprep.subr.bf16.mxu0 %v6115
  %6268 = vmatpush1.bf16.msra.mxu0 %v6114
  %6269 = vmatprep.subr.bf16.mxu0 %v6145
  %6270 = vmatpush2.bf16.msra.mxu0 %v6144
  %6271 = vmatprep.subr.bf16.mxu0 %v6143
  %6272 = vmatpush2.bf16.msra.mxu0 %v6142
  %6273 = vmatprep.subr.bf16.mxu0 %v6141
  %6274 = vmatpush2.bf16.msra.mxu0 %v6140
  %6275 = vmatprep.subr.bf16.mxu0 %v6139
  %6276 = vmatpush2.bf16.msra.mxu0 %v6138
  %6277 = vmatprep.subr.bf16.mxu0 %v6137
  %6278 = vmatpush2.bf16.msra.mxu0 %v6136
  %6279 = vmatprep.subr.bf16.mxu0 %v6135
  %6280 = vmatpush2.bf16.msra.mxu0 %v6134
  %6281 = vmatprep.subr.bf16.mxu0 %v6133
  %6282 = vmatpush2.bf16.msra.mxu0 %v6132
  %6283 = vmatprep.subr.bf16.mxu0 %v6131
  %6284 = vmatpush2.bf16.msra.mxu0 %v6130
  %6285 = vmatprep.mubr.bf16.mxu0 %v5813
  %6286 = vmatmul.mubr.bf16.gmra.mxu0 %v5812
  %v6287 = vpop.f32.mrf.mxu0
  %v6288 = vadd.f32 %v6245, %v6287
  %v6289 = vpop.f32.mrf.mxu0
  %v6290 = vadd.f32 %v6247, %v6289
  %v6291 = vpop.f32.mrf.mxu0
  %v6292 = vadd.f32 %v6249, %v6291
  %v6293 = vpop.f32.mrf.mxu0
  %v6294 = vadd.f32 %v6251, %v6293
  %6295 = vdwg.mxu0
  %6296 = vst [vmem:[%s7] sm:$0xff] %v6288
  %vm6297 = vcmask 39936
  %6298 = vst.msk [vmem:[%s7 + $0x8] sm:$0xff] %vm6297, %v6290
  %6299 = vst [vmem:[%s7 + $0x10] sm:$0xff] %v6292
  %6300 = vst.msk [vmem:[%s7 + $0x18] sm:$0xff] %vm6297, %v6294
  // Predicated region
  $region30: #{net_forward.9} parent=0 // pred_check
    _
  $region31: #{net_forward.9} parent=0 // pred_check_branch
    %6302 = sbr.rel (0) target = $region33
  $region32: #{net_forward.9} parent=0 // pred_region
    _
  $region33: #{net_forward.9} parent=0 // pred_fallthru
    _
  // Predicated region
  $region34: #{net_forward.9} parent=0 // pred_check
    _
  $region35: #{net_forward.9} parent=0 // pred_check_branch
    %6304 = sbr.rel (0) target = $region37
  $region36: #{net_forward.9} parent=0 // pred_region
    _
  $region37: #{net_forward.9} parent=0 // pred_fallthru
    _

</llo_original>
